<compile_context>
chip_gen: v7x
topology: tpu7x:2x2x1
jax: 0.10.0
libtpu: 0.0.40
codegen_flags: <defaults>
</compile_context>

<pallas_src>
import math
from functools import partial

import jax
import jax.numpy as jnp
from jax import lax
from jax.experimental import pallas as pl
from jax.experimental.pallas import tpu as pltpu


# ----------------------------- Pallas kernel ------------------------------- #

def _transformer_layer_kernel(x_ref, wqkv_ref, wtail_ref, bias_ref, o_ref, *,
                              num_heads):
    x = x_ref[0]                                    # [S, C] f32
    S, C = x.shape
    D = C // num_heads

    bias = bias_ref[...]                            # [1, 4C]  (qkv biases + out_proj bias)
    wqkv = wqkv_ref[...]                            # [C, 3C]  fused (q/k/v Linear ∘ in_proj)
    wtail = wtail_ref[...]                          # [C, 2C]  [:, :C]=out_proj.T, [:, C:]=(fc2∘fc1).T

    # fused QKV projection: one MXU matmul (scale already folded into Q part)
    qkv = jnp.dot(x, wqkv, preferred_element_type=jnp.float32) + bias[:, :3 * C]

    # attention + out_proj + residual; out_proj folded per head (no concat)
    y = x + bias[:, 3 * C:]
    for h in range(num_heads):                      # num_heads is small -> unroll
        qh = qkv[:, h * D:(h + 1) * D]              # [S, D]
        kh = qkv[:, C + h * D:C + (h + 1) * D]      # [S, D]
        vh = qkv[:, 2 * C + h * D:2 * C + (h + 1) * D]
        # q @ k^T without materializing a transpose (MXU "NT" form)
        s = lax.dot_general(qh, kh, (((1,), (1,)), ((), ())),
                            preferred_element_type=jnp.float32)      # [S, S]
        p = jnp.exp(s - jnp.max(s, axis=-1, keepdims=True))
        p = p * pl.reciprocal(jnp.sum(p, axis=-1, keepdims=True), approx=True)
        oh = jnp.dot(p, vh, preferred_element_type=jnp.float32)      # [S, D]
        # per-head slice of the output projection (rows h*D:(h+1)*D of Wo^T)
        y = y + jnp.dot(oh, wtail[h * D:(h + 1) * D, :C],
                        preferred_element_type=jnp.float32)

    # fc2(fc1(y)) fused into one matmul, plus residual
    out = jnp.dot(y, wtail[:, C:], preferred_element_type=jnp.float32) + y
    o_ref[0] = out.astype(o_ref.dtype)


# ------------------------------- wrapper ------------------------------------ #

def transformer_layer_pallas(x_sbc, p, num_heads):
    """x_sbc: (seq, batch, embed) like PyTorch nn.MultiheadAttention (batch_first=False)."""
    S, B, C = x_sbc.shape
    assert C % num_heads == 0
    D = C // num_heads
    scale = 1.0 / math.sqrt(D)

    wq_in, wk_in, wv_in = jnp.split(p["in_proj_w"], 3, axis=0)
    bq, bk, bv = jnp.split(p["in_proj_b"], 3)

    # Exact linear fusions (done once, outside the kernel).
    fq = (wq_in @ p["wq"]).T * scale                 # [C, C] kernel layout (in, out)
    fk = (wk_in @ p["wk"]).T
    fv = (wv_in @ p["wv"]).T
    w_qkv = jnp.concatenate([fq, fk, fv], axis=1)    # [C, 3C]
    w_o = p["out_proj_w"].T                          # [C, C]
    w_ffn = p["w_fc1"].T @ p["w_fc2"].T              # [C, C] = (W_fc2 @ W_fc1)^T
    w_tail = jnp.concatenate([w_o, w_ffn], axis=1)   # [C, 2C]
    bias = jnp.concatenate([bq * scale, bk, bv, p["out_proj_b"]]).reshape(1, 4 * C)

    x_bsc = jnp.transpose(x_sbc, (1, 0, 2))          # (S,B,C) -> (B,S,C)

    grid_spec = pltpu.PrefetchScalarGridSpec(
        num_scalar_prefetch=0,
        grid=(B,),
        in_specs=[
            pl.BlockSpec((1, S, C), lambda b: (b, 0, 0)),
            pl.BlockSpec((C, 3 * C), lambda b: (0, 0)),
            pl.BlockSpec((C, 2 * C), lambda b: (0, 0)),
            pl.BlockSpec((1, 4 * C), lambda b: (0, 0)),
        ],
        out_specs=pl.BlockSpec((1, S, C), lambda b: (b, 0, 0)),
    )

    out = pl.pallas_call(
        partial(_transformer_layer_kernel, num_heads=num_heads),
        out_shape=jax.ShapeDtypeStruct((B, S, C), jnp.float32),
        grid_spec=grid_spec,
        compiler_params=pltpu.CompilerParams(dimension_semantics=("parallel",)),
    )(x_bsc, w_qkv, w_tail, bias)
    return jnp.transpose(out, (1, 0, 2))             # (B,S,C) -> (S,B,C)


# ------------------------------ pure-JAX reference --------------------------- #

def transformer_layer_ref(x, p, num_heads):
    """Mirrors the PyTorch TransformerLayer forward (eval mode)."""
    S, B, C = x.shape
    D = C // num_heads
    q = x @ p["wq"].T
    k = x @ p["wk"].T
    v = x @ p["wv"].T
    wq_in, wk_in, wv_in = jnp.split(p["in_proj_w"], 3, axis=0)
    bq, bk, bv = jnp.split(p["in_proj_b"], 3)
    q = (q @ wq_in.T + bq).reshape(S, B, num_heads, D)
    k = (k @ wk_in.T + bk).reshape(S, B, num_heads, D)
    v = (v @ wv_in.T + bv).reshape(S, B, num_heads, D)
    scores = jnp.einsum("sbhd,tbhd->bhst", q, k,
                        precision=lax.Precision.HIGHEST) / math.sqrt(D)
    attn = jax.nn.softmax(scores, axis=-1)
    o = jnp.einsum("bhst,tbhd->sbhd", attn, v,
                   precision=lax.Precision.HIGHEST).reshape(S, B, C)
    o = o @ p["out_proj_w"].T + p["out_proj_b"]
    x = o + x
    x = (x @ p["w_fc1"].T) @ p["w_fc2"].T + x
    return x


# ----------------------------------- main ------------------------------------ #

if __name__ == "__main__":
    jax.config.update("jax_default_matmul_precision", "highest")

    key = jax.random.PRNGKey(0)
    S, B, C, H = 16, 2, 32, 4                        # seq, batch, embed, heads

    ks = jax.random.split(key, 10)
    x = jax.random.normal(ks[0], (S, B, C), jnp.float32)

    def w(k, shape, s=0.1):
        return jax.random.normal(k, shape, jnp.float32) * s

    p = {
        "wq": w(ks[1], (C, C)),                      # self.q (no bias)
        "wk": w(ks[2], (C, C)),                      # self.k
        "wv": w(ks[3], (C, C)),                      # self.v
        "in_proj_w": w(ks[4], (3 * C, C)),           # ma.in_proj_weight
        "in_proj_b": w(ks[5], (3 * C,)),             # ma.in_proj_bias
        "out_proj_w": w(ks[6], (C, C)),              # ma.out_proj.weight
        "out_proj_b": w(ks[7], (C,)),                # ma.out_proj.bias
        "w_fc1": w(ks[8], (C, C)),                   # self.fc1 (no bias)
        "w_fc2": w(ks[9], (C, C)),                   # self.fc2 (no bias)
    }

    y = transformer_layer_pallas(x, p, num_heads=H)
    y = jax.block_until_ready(y)

    y_ref = transformer_layer_ref(x, p, num_heads=H)
    assert y.shape == (S, B, C)
    err = float(jnp.max(jnp.abs(y - y_ref)))
    assert err < 2e-3, f"max abs err {err}"

    print("KERNEL_OK")
</pallas_src>

<mosaic_0001>
module attributes {stable_mosaic.version = 11 : i64} {
  func.func @_transformer_layer_kernel(%arg0: i32, %arg1: memref<1x16x32xf32, #tpu.memory_space<vmem>>, %arg2: memref<32x96xf32, #tpu.memory_space<vmem>>, %arg3: memref<32x64xf32, #tpu.memory_space<vmem>>, %arg4: memref<1x128xf32, #tpu.memory_space<vmem>>, %arg5: memref<1x16x32xf32, #tpu.memory_space<vmem>>) attributes {dimension_semantics = [#tpu.dimension_semantics<parallel>], iteration_bounds = array<i64: 2>, scalar_prefetch = 0 : i64, scratch_operands = 0 : i64, tpu.core_type = #tpu.core_type<tc>, window_params = [{transform_indices = @transform_0, window_bounds = array<i64: 1, 16, 32>}, {pipeline_mode = #tpu.pipeline_mode<synchronous>, transform_indices = @transform_1, window_bounds = array<i64: 32, 96>}, {pipeline_mode = #tpu.pipeline_mode<synchronous>, transform_indices = @transform_2, window_bounds = array<i64: 32, 64>}, {pipeline_mode = #tpu.pipeline_mode<synchronous>, transform_indices = @transform_3, window_bounds = array<i64: 1, 128>}, {transform_indices = @transform_4, window_bounds = array<i64: 1, 16, 32>}]} {
    %c0 = arith.constant 0 : index
    %c0_0 = arith.constant 0 : index
    %c0_1 = arith.constant 0 : index
    %0 = vector.load %arg1[%c0, %c0_0, %c0_1] : memref<1x16x32xf32, #tpu.memory_space<vmem>>, vector<1x16x32xf32>
    %1 = vector.shape_cast %0 : vector<1x16x32xf32> to vector<16x32xf32>
    %c0_2 = arith.constant 0 : index
    %c0_3 = arith.constant 0 : index
    %2 = vector.load %arg4[%c0_2, %c0_3] : memref<1x128xf32, #tpu.memory_space<vmem>>, vector<1x128xf32>
    %c0_4 = arith.constant 0 : index
    %c0_5 = arith.constant 0 : index
    %3 = vector.load %arg2[%c0_4, %c0_5] : memref<32x96xf32, #tpu.memory_space<vmem>>, vector<32x96xf32>
    %c0_6 = arith.constant 0 : index
    %c0_7 = arith.constant 0 : index
    %4 = vector.load %arg3[%c0_6, %c0_7] : memref<32x64xf32, #tpu.memory_space<vmem>>, vector<32x64xf32>
    %cst = arith.constant dense<0.000000e+00> : vector<16x96xf32>
    %5 = tpu.matmul %1, %3, %cst {dimension_numbers = #tpu.dot_dimension_numbers<[1], [0], [0], [1], [0, 0, 1, 1], [], []>, precision = #tpu.contract_precision<fp32>} : vector<16x32xf32>, vector<32x96xf32>, vector<16x96xf32> -> vector<16x96xf32>
    %6 = vector.extract_strided_slice %2 {offsets = [0, 0], sizes = [1, 96], strides = [1, 1]} : vector<1x128xf32> to vector<1x96xf32>
    %7 = vector.broadcast %6 : vector<1x96xf32> to vector<16x96xf32>
    %8 = arith.addf %5, %7 : vector<16x96xf32>
    %9 = vector.extract_strided_slice %2 {offsets = [0, 96], sizes = [1, 32], strides = [1, 1]} : vector<1x128xf32> to vector<1x32xf32>
    %10 = vector.broadcast %9 : vector<1x32xf32> to vector<16x32xf32>
    %11 = arith.addf %1, %10 : vector<16x32xf32>
    %12 = vector.extract_strided_slice %8 {offsets = [0, 0], sizes = [16, 8], strides = [1, 1]} : vector<16x96xf32> to vector<16x8xf32>
    %13 = vector.extract_strided_slice %8 {offsets = [0, 32], sizes = [16, 8], strides = [1, 1]} : vector<16x96xf32> to vector<16x8xf32>
    %14 = vector.extract_strided_slice %8 {offsets = [0, 64], sizes = [16, 8], strides = [1, 1]} : vector<16x96xf32> to vector<16x8xf32>
    %cst_8 = arith.constant dense<0.000000e+00> : vector<16x16xf32>
    %15 = tpu.matmul %12, %13, %cst_8 {dimension_numbers = #tpu.dot_dimension_numbers<[1], [1], [0], [0], [0, 0, 1, 0], [], []>, precision = #tpu.contract_precision<fp32>} : vector<16x8xf32>, vector<16x8xf32>, vector<16x16xf32> -> vector<16x16xf32>
    %cst_9 = arith.constant dense<0xFF800000> : vector<16xf32>
    %16 = vector.multi_reduction <maximumf>, %15, %cst_9 [1] : vector<16x16xf32> to vector<16xf32>
    %17 = vector.shape_cast %16 : vector<16xf32> to vector<16x1xf32>
    %18 = vector.broadcast %17 : vector<16x1xf32> to vector<16x16xf32>
    %19 = arith.subf %15, %18 : vector<16x16xf32>
    %20 = math.exp %19 : vector<16x16xf32>
    %cst_10 = arith.constant dense<0.000000e+00> : vector<16xf32>
    %21 = vector.multi_reduction <add>, %20, %cst_10 [1] : vector<16x16xf32> to vector<16xf32>
    %22 = vector.shape_cast %21 : vector<16xf32> to vector<16x1xf32>
    %23 = tpu.reciprocal %22 {approx = true} : vector<16x1xf32> -> vector<16x1xf32>
    %24 = vector.broadcast %23 : vector<16x1xf32> to vector<16x16xf32>
    %25 = arith.mulf %20, %24 : vector<16x16xf32>
    %cst_11 = arith.constant dense<0.000000e+00> : vector<16x8xf32>
    %26 = tpu.matmul %25, %14, %cst_11 {dimension_numbers = #tpu.dot_dimension_numbers<[1], [0], [0], [1], [0, 0, 1, 1], [], []>, precision = #tpu.contract_precision<fp32>} : vector<16x16xf32>, vector<16x8xf32>, vector<16x8xf32> -> vector<16x8xf32>
    %27 = vector.extract_strided_slice %4 {offsets = [0, 0], sizes = [8, 32], strides = [1, 1]} : vector<32x64xf32> to vector<8x32xf32>
    %cst_12 = arith.constant dense<0.000000e+00> : vector<16x32xf32>
    %28 = tpu.matmul %26, %27, %cst_12 {dimension_numbers = #tpu.dot_dimension_numbers<[1], [0], [0], [1], [0, 0, 1, 1], [], []>, precision = #tpu.contract_precision<fp32>} : vector<16x8xf32>, vector<8x32xf32>, vector<16x32xf32> -> vector<16x32xf32>
    %29 = arith.addf %11, %28 : vector<16x32xf32>
    %30 = vector.extract_strided_slice %8 {offsets = [0, 8], sizes = [16, 8], strides = [1, 1]} : vector<16x96xf32> to vector<16x8xf32>
    %31 = vector.extract_strided_slice %8 {offsets = [0, 40], sizes = [16, 8], strides = [1, 1]} : vector<16x96xf32> to vector<16x8xf32>
    %32 = vector.extract_strided_slice %8 {offsets = [0, 72], sizes = [16, 8], strides = [1, 1]} : vector<16x96xf32> to vector<16x8xf32>
    %cst_13 = arith.constant dense<0.000000e+00> : vector<16x16xf32>
    %33 = tpu.matmul %30, %31, %cst_13 {dimension_numbers = #tpu.dot_dimension_numbers<[1], [1], [0], [0], [0, 0, 1, 0], [], []>, precision = #tpu.contract_precision<fp32>} : vector<16x8xf32>, vector<16x8xf32>, vector<16x16xf32> -> vector<16x16xf32>
    %cst_14 = arith.constant dense<0xFF800000> : vector<16xf32>
    %34 = vector.multi_reduction <maximumf>, %33, %cst_14 [1] : vector<16x16xf32> to vector<16xf32>
    %35 = vector.shape_cast %34 : vector<16xf32> to vector<16x1xf32>
    %36 = vector.broadcast %35 : vector<16x1xf32> to vector<16x16xf32>
    %37 = arith.subf %33, %36 : vector<16x16xf32>
    %38 = math.exp %37 : vector<16x16xf32>
    %cst_15 = arith.constant dense<0.000000e+00> : vector<16xf32>
    %39 = vector.multi_reduction <add>, %38, %cst_15 [1] : vector<16x16xf32> to vector<16xf32>
    %40 = vector.shape_cast %39 : vector<16xf32> to vector<16x1xf32>
    %41 = tpu.reciprocal %40 {approx = true} : vector<16x1xf32> -> vector<16x1xf32>
    %42 = vector.broadcast %41 : vector<16x1xf32> to vector<16x16xf32>
    %43 = arith.mulf %38, %42 : vector<16x16xf32>
    %cst_16 = arith.constant dense<0.000000e+00> : vector<16x8xf32>
    %44 = tpu.matmul %43, %32, %cst_16 {dimension_numbers = #tpu.dot_dimension_numbers<[1], [0], [0], [1], [0, 0, 1, 1], [], []>, precision = #tpu.contract_precision<fp32>} : vector<16x16xf32>, vector<16x8xf32>, vector<16x8xf32> -> vector<16x8xf32>
    %45 = vector.extract_strided_slice %4 {offsets = [8, 0], sizes = [8, 32], strides = [1, 1]} : vector<32x64xf32> to vector<8x32xf32>
    %cst_17 = arith.constant dense<0.000000e+00> : vector<16x32xf32>
    %46 = tpu.matmul %44, %45, %cst_17 {dimension_numbers = #tpu.dot_dimension_numbers<[1], [0], [0], [1], [0, 0, 1, 1], [], []>, precision = #tpu.contract_precision<fp32>} : vector<16x8xf32>, vector<8x32xf32>, vector<16x32xf32> -> vector<16x32xf32>
    %47 = arith.addf %29, %46 : vector<16x32xf32>
    %48 = vector.extract_strided_slice %8 {offsets = [0, 16], sizes = [16, 8], strides = [1, 1]} : vector<16x96xf32> to vector<16x8xf32>
    %49 = vector.extract_strided_slice %8 {offsets = [0, 48], sizes = [16, 8], strides = [1, 1]} : vector<16x96xf32> to vector<16x8xf32>
    %50 = vector.extract_strided_slice %8 {offsets = [0, 80], sizes = [16, 8], strides = [1, 1]} : vector<16x96xf32> to vector<16x8xf32>
    %cst_18 = arith.constant dense<0.000000e+00> : vector<16x16xf32>
    %51 = tpu.matmul %48, %49, %cst_18 {dimension_numbers = #tpu.dot_dimension_numbers<[1], [1], [0], [0], [0, 0, 1, 0], [], []>, precision = #tpu.contract_precision<fp32>} : vector<16x8xf32>, vector<16x8xf32>, vector<16x16xf32> -> vector<16x16xf32>
    %cst_19 = arith.constant dense<0xFF800000> : vector<16xf32>
    %52 = vector.multi_reduction <maximumf>, %51, %cst_19 [1] : vector<16x16xf32> to vector<16xf32>
    %53 = vector.shape_cast %52 : vector<16xf32> to vector<16x1xf32>
    %54 = vector.broadcast %53 : vector<16x1xf32> to vector<16x16xf32>
    %55 = arith.subf %51, %54 : vector<16x16xf32>
    %56 = math.exp %55 : vector<16x16xf32>
    %cst_20 = arith.constant dense<0.000000e+00> : vector<16xf32>
    %57 = vector.multi_reduction <add>, %56, %cst_20 [1] : vector<16x16xf32> to vector<16xf32>
    %58 = vector.shape_cast %57 : vector<16xf32> to vector<16x1xf32>
    %59 = tpu.reciprocal %58 {approx = true} : vector<16x1xf32> -> vector<16x1xf32>
    %60 = vector.broadcast %59 : vector<16x1xf32> to vector<16x16xf32>
    %61 = arith.mulf %56, %60 : vector<16x16xf32>
    %cst_21 = arith.constant dense<0.000000e+00> : vector<16x8xf32>
    %62 = tpu.matmul %61, %50, %cst_21 {dimension_numbers = #tpu.dot_dimension_numbers<[1], [0], [0], [1], [0, 0, 1, 1], [], []>, precision = #tpu.contract_precision<fp32>} : vector<16x16xf32>, vector<16x8xf32>, vector<16x8xf32> -> vector<16x8xf32>
    %63 = vector.extract_strided_slice %4 {offsets = [16, 0], sizes = [8, 32], strides = [1, 1]} : vector<32x64xf32> to vector<8x32xf32>
    %cst_22 = arith.constant dense<0.000000e+00> : vector<16x32xf32>
    %64 = tpu.matmul %62, %63, %cst_22 {dimension_numbers = #tpu.dot_dimension_numbers<[1], [0], [0], [1], [0, 0, 1, 1], [], []>, precision = #tpu.contract_precision<fp32>} : vector<16x8xf32>, vector<8x32xf32>, vector<16x32xf32> -> vector<16x32xf32>
    %65 = arith.addf %47, %64 : vector<16x32xf32>
    %66 = vector.extract_strided_slice %8 {offsets = [0, 24], sizes = [16, 8], strides = [1, 1]} : vector<16x96xf32> to vector<16x8xf32>
    %67 = vector.extract_strided_slice %8 {offsets = [0, 56], sizes = [16, 8], strides = [1, 1]} : vector<16x96xf32> to vector<16x8xf32>
    %68 = vector.extract_strided_slice %8 {offsets = [0, 88], sizes = [16, 8], strides = [1, 1]} : vector<16x96xf32> to vector<16x8xf32>
    %cst_23 = arith.constant dense<0.000000e+00> : vector<16x16xf32>
    %69 = tpu.matmul %66, %67, %cst_23 {dimension_numbers = #tpu.dot_dimension_numbers<[1], [1], [0], [0], [0, 0, 1, 0], [], []>, precision = #tpu.contract_precision<fp32>} : vector<16x8xf32>, vector<16x8xf32>, vector<16x16xf32> -> vector<16x16xf32>
    %cst_24 = arith.constant dense<0xFF800000> : vector<16xf32>
    %70 = vector.multi_reduction <maximumf>, %69, %cst_24 [1] : vector<16x16xf32> to vector<16xf32>
    %71 = vector.shape_cast %70 : vector<16xf32> to vector<16x1xf32>
    %72 = vector.broadcast %71 : vector<16x1xf32> to vector<16x16xf32>
    %73 = arith.subf %69, %72 : vector<16x16xf32>
    %74 = math.exp %73 : vector<16x16xf32>
    %cst_25 = arith.constant dense<0.000000e+00> : vector<16xf32>
    %75 = vector.multi_reduction <add>, %74, %cst_25 [1] : vector<16x16xf32> to vector<16xf32>
    %76 = vector.shape_cast %75 : vector<16xf32> to vector<16x1xf32>
    %77 = tpu.reciprocal %76 {approx = true} : vector<16x1xf32> -> vector<16x1xf32>
    %78 = vector.broadcast %77 : vector<16x1xf32> to vector<16x16xf32>
    %79 = arith.mulf %74, %78 : vector<16x16xf32>
    %cst_26 = arith.constant dense<0.000000e+00> : vector<16x8xf32>
    %80 = tpu.matmul %79, %68, %cst_26 {dimension_numbers = #tpu.dot_dimension_numbers<[1], [0], [0], [1], [0, 0, 1, 1], [], []>, precision = #tpu.contract_precision<fp32>} : vector<16x16xf32>, vector<16x8xf32>, vector<16x8xf32> -> vector<16x8xf32>
    %81 = vector.extract_strided_slice %4 {offsets = [24, 0], sizes = [8, 32], strides = [1, 1]} : vector<32x64xf32> to vector<8x32xf32>
    %cst_27 = arith.constant dense<0.000000e+00> : vector<16x32xf32>
    %82 = tpu.matmul %80, %81, %cst_27 {dimension_numbers = #tpu.dot_dimension_numbers<[1], [0], [0], [1], [0, 0, 1, 1], [], []>, precision = #tpu.contract_precision<fp32>} : vector<16x8xf32>, vector<8x32xf32>, vector<16x32xf32> -> vector<16x32xf32>
    %83 = arith.addf %65, %82 : vector<16x32xf32>
    %84 = vector.extract_strided_slice %4 {offsets = [0, 32], sizes = [32, 32], strides = [1, 1]} : vector<32x64xf32> to vector<32x32xf32>
    %cst_28 = arith.constant dense<0.000000e+00> : vector<16x32xf32>
    %85 = tpu.matmul %83, %84, %cst_28 {dimension_numbers = #tpu.dot_dimension_numbers<[1], [0], [0], [1], [0, 0, 1, 1], [], []>, precision = #tpu.contract_precision<fp32>} : vector<16x32xf32>, vector<32x32xf32>, vector<16x32xf32> -> vector<16x32xf32>
    %86 = arith.addf %85, %83 : vector<16x32xf32>
    %c0_29 = arith.constant 0 : index
    %c0_30 = arith.constant 0 : index
    %c0_31 = arith.constant 0 : index
    %87 = vector.load %arg5[%c0_29, %c0_30, %c0_31] : memref<1x16x32xf32, #tpu.memory_space<vmem>>, vector<1x16x32xf32>
    %88 = vector.shape_cast %87 : vector<1x16x32xf32> to vector<16x32xf32>
    %89 = vector.shape_cast %86 : vector<16x32xf32> to vector<1x16x32xf32>
    tpu.vector_store %arg5[%c0_29, %c0_30, %c0_31], %89 {strides = array<i32>} : memref<1x16x32xf32, #tpu.memory_space<vmem>>, vector<1x16x32xf32>,
    return
  }
  func.func @transform_0(%arg0: i32) -> (i32, i32, i32) {
    %c0_i32 = arith.constant 0 : i32
    %c0_i32_0 = arith.constant 0 : i32
    %c0_i32_1 = arith.constant 0 : i32
    return %arg0, %c0_i32, %c0_i32_0 : i32, i32, i32
  }
  func.func @transform_1(%arg0: i32) -> (i32, i32) {
    %c0_i32 = arith.constant 0 : i32
    %c0_i32_0 = arith.constant 0 : i32
    %c0_i32_1 = arith.constant 0 : i32
    return %c0_i32, %c0_i32_0 : i32, i32
  }
  func.func @transform_2(%arg0: i32) -> (i32, i32) {
    %c0_i32 = arith.constant 0 : i32
    %c0_i32_0 = arith.constant 0 : i32
    %c0_i32_1 = arith.constant 0 : i32
    return %c0_i32, %c0_i32_0 : i32, i32
  }
  func.func @transform_3(%arg0: i32) -> (i32, i32) {
    %c0_i32 = arith.constant 0 : i32
    %c0_i32_0 = arith.constant 0 : i32
    %c0_i32_1 = arith.constant 0 : i32
    return %c0_i32, %c0_i32_0 : i32, i32
  }
  func.func @transform_4(%arg0: i32) -> (i32, i32, i32) {
    %c0_i32 = arith.constant 0 : i32
    %c0_i32_0 = arith.constant 0 : i32
    %c0_i32_1 = arith.constant 0 : i32
    return %arg0, %c0_i32, %c0_i32_0 : i32, i32, i32
  }
}

</mosaic_0001>

<llo_original>
// kernel: tpu_custom_call.1
$region0: #{tpu_custom_call.1}
  #allocation0 [shape = 'u32[]', space=smem, size = 0x4, offset = 0x4, fixed_abs, tag = 'smem constant byte address 0x4 - core index']
  #allocation1 [shape = 'u32[144,128]{1,0:T(1,128)}', space=vmem, size = 0x12000, scoped, tag = 'internal scratch']
  %s0 = inlined_call_operand.hbm [shape: f32[2,16,32], index: 0, kind: input, shape index: {}]
  %s1 = inlined_call_operand.hbm [shape: f32[32,96], index: 1, kind: input, shape index: {}]
  %s2 = inlined_call_operand.hbm [shape: f32[32,64], index: 2, kind: input, shape index: {}]
  %s3 = inlined_call_operand.vmem [shape: f32[1,128], index: 3, kind: input, shape index: {}]
  %s4 = inlined_call_operand.hbm [shape: f32[2,16,32], index: 4, kind: output, shape index: {}]
  %s5 = sld [smem:[#allocation0]]
  $region61: #{tpu_custom_call.1} parent=0
    _
  %s7 = ssub.s32 1, %s5
  %s8 = scalar_select 0, %s7, %s5
  $region1: #{tpu_custom_call.1} parent=0
    #allocation2 [shape = 'u8[16384]{0}', space=vmem, size = 0x4000, scoped, tag = 'input window, operand 0']
    #allocation3 [shape = 's32[2]{0}', space=sflag, size = 0x8, scoped, tag = 'scoped memory for tpu_custom_call.1']
    #allocation4 [shape = 's32[2]{0}', space=sflag, size = 0x8, scoped, tag = 'scoped memory for tpu_custom_call.1']
    #allocation5 [shape = 'u8[16384]{0}', space=vmem, size = 0x4000, scoped, tag = 'input window, operand 1, single buffered']
    #allocation6 [shape = 's32[1]{0}', space=sflag, size = 0x4, scoped, tag = 'scoped memory for tpu_custom_call.1']
    #allocation7 [shape = 'u8[16384]{0}', space=vmem, size = 0x4000, scoped, tag = 'input window, operand 2, single buffered']
    #allocation8 [shape = 'u8[16384]{0}', space=vmem, size = 0x4000, scoped, tag = 'output window, operand 0']
    %9 = vsyncpa [#allocation3], 0
    %s10 = scalar_lea.sflag [#allocation3], 1
    %11 = vsyncpa %s10, 0
    %12 = vsyncpa [#allocation6], 0
    %13 = vsyncpa [#allocation4], 0
    %s14 = scalar_lea.sflag [#allocation4], 1
    %15 = vsyncpa %s14, 0
    loop: start=0, step=1, limit=4
    $region2: #{tpu_custom_call.1} parent=1 // loop_pre_header
      _
    $region3: #{tpu_custom_call.1} parent=1 // loop_header
      %s17 = sphi 0, %s21
      %p18 = scmp.ge.s32.totalorder %s17, 4
      %s27 = sphi 0, %s29
      %s30 = sphi 0, %s27
      %s31 = sphi 0, %s30
      %s47 = sphi 0, %s31
      %s51 = sphi 0, %s51
      %s53 = sphi 0, %s51
      %s54 = sphi 0, %s53
      %s68 = sphi 0, %s54
      %s72 = sphi 0, %s72
      %s74 = sphi 0, %s72
      %s75 = sphi 0, %s74
      %s89 = sphi 0, %s75
      %s93 = sphi 0, %s93
      %s95 = sphi 0, %s93
      %s96 = sphi 0, %s95
      %s110 = sphi 0, %s96
      %s116 = sphi 0, %s118
      %s119 = sphi 0, %s116
      %s120 = sphi 0, %s119
      %s136 = sphi 0, %s120
    $region4: #{tpu_custom_call.1} parent=1 // loop_header_branch
      %20 = sbr.rel (%p18) target = $region8
    $region5: #{tpu_custom_call.1} parent=1 // loop_body
      %s22 = ssub.s32 %s17, 1
      %s23 = ssub.s32 %s17, 2
      %s24 = sadd.s32 %s17, 1
      %s25 = ssub.s32 %s17, %s24
      %p26 = scmp.eq.s32.totalorder %s25, 0
      %s28 = sadd.s32 %s27, 1
      %s29 = scalar_select %p26, %s27, %s28
      %p32 = pneg %p26
      %p33 = scmp.eq.s32.totalorder %s17, 1
      %p34 = por %p32, %p33
      %p35 = scmp.ne.s32.totalorder %s27, %s30
      %p36 = scmp.eq.s32.totalorder %s17, 0
      %p37 = por %p35, %p36
      %p38 = scmp.ne.s32.totalorder %s27, %s30
      %p39 = scmp.eq.s32.totalorder %s22, 1
      %p40 = por %p38, %p39
      %p41 = scmp.ne.s32.totalorder %s30, %s31
      %p42 = scmp.eq.s32.totalorder %s22, 0
      %p43 = por %p41, %p42
      %p44 = scmp.ne.s32.totalorder %s30, %s31
      %p45 = scmp.eq.s32.totalorder %s23, 1
      %p46 = por %p44, %p45
      %p48 = scmp.ne.s32.totalorder %s31, %s47
      %p49 = scmp.eq.s32.totalorder %s23, 0
      %p50 = por %p48, %p49
      %s52 = sadd.s32 %s51, 1
      %p55 = scmp.eq.s32.totalorder %s17, 1
      %p56 = scmp.ne.s32.totalorder %s51, %s53
      %p57 = scmp.eq.s32.totalorder %s17, 0
      %p58 = por %p56, %p57
      %p59 = scmp.ne.s32.totalorder %s51, %s53
      %p60 = scmp.eq.s32.totalorder %s22, 1
      %p61 = por %p59, %p60
      %p62 = scmp.ne.s32.totalorder %s53, %s54
      %p63 = scmp.eq.s32.totalorder %s22, 0
      %p64 = por %p62, %p63
      %p65 = scmp.ne.s32.totalorder %s53, %s54
      %p66 = scmp.eq.s32.totalorder %s23, 1
      %p67 = por %p65, %p66
      %p69 = scmp.ne.s32.totalorder %s54, %s68
      %p70 = scmp.eq.s32.totalorder %s23, 0
      %p71 = por %p69, %p70
      %s73 = sadd.s32 %s72, 1
      %p76 = scmp.eq.s32.totalorder %s17, 1
      %p77 = scmp.ne.s32.totalorder %s72, %s74
      %p78 = scmp.eq.s32.totalorder %s17, 0
      %p79 = por %p77, %p78
      %p80 = scmp.ne.s32.totalorder %s72, %s74
      %p81 = scmp.eq.s32.totalorder %s22, 1
      %p82 = por %p80, %p81
      %p83 = scmp.ne.s32.totalorder %s74, %s75
      %p84 = scmp.eq.s32.totalorder %s22, 0
      %p85 = por %p83, %p84
      %p86 = scmp.ne.s32.totalorder %s74, %s75
      %p87 = scmp.eq.s32.totalorder %s23, 1
      %p88 = por %p86, %p87
      %p90 = scmp.ne.s32.totalorder %s75, %s89
      %p91 = scmp.eq.s32.totalorder %s23, 0
      %p92 = por %p90, %p91
      %s94 = sadd.s32 %s93, 1
      %p97 = scmp.eq.s32.totalorder %s17, 1
      %p98 = scmp.ne.s32.totalorder %s93, %s95
      %p99 = scmp.eq.s32.totalorder %s17, 0
      %p100 = por %p98, %p99
      %p101 = scmp.ne.s32.totalorder %s93, %s95
      %p102 = scmp.eq.s32.totalorder %s22, 1
      %p103 = por %p101, %p102
      %p104 = scmp.ne.s32.totalorder %s95, %s96
      %p105 = scmp.eq.s32.totalorder %s22, 0
      %p106 = por %p104, %p105
      %p107 = scmp.ne.s32.totalorder %s95, %s96
      %p108 = scmp.eq.s32.totalorder %s23, 1
      %p109 = por %p107, %p108
      %p111 = scmp.ne.s32.totalorder %s96, %s110
      %p112 = scmp.eq.s32.totalorder %s23, 0
      %p113 = por %p111, %p112
      %s114 = ssub.s32 %s17, %s24
      %p115 = scmp.eq.s32.totalorder %s114, 0
      %s117 = sadd.s32 %s116, 1
      %s118 = scalar_select %p115, %s116, %s117
      %p121 = pneg %p115
      %p122 = scmp.eq.s32.totalorder %s17, 1
      %p123 = por %p121, %p122
      %p124 = scmp.ne.s32.totalorder %s116, %s119
      %p125 = scmp.eq.s32.totalorder %s17, 0
      %p126 = por %p124, %p125
      %p127 = scmp.ne.s32.totalorder %s116, %s119
      %p128 = scmp.eq.s32.totalorder %s22, 1
      %p129 = por %p127, %p128
      %p130 = scmp.ne.s32.totalorder %s119, %s120
      %p131 = scmp.eq.s32.totalorder %s22, 0
      %p132 = por %p130, %p131
      %p133 = scmp.ne.s32.totalorder %s119, %s120
      %p134 = scmp.eq.s32.totalorder %s23, 1
      %p135 = por %p133, %p134
      %p137 = scmp.ne.s32.totalorder %s120, %s136
      %p138 = scmp.eq.s32.totalorder %s23, 0
      %p139 = por %p137, %p138
      %p140 = scmp.le.s32.totalorder 1, %s17
      %p141 = scmp.lt.s32.totalorder %s17, 3
      %p142 = pnand %p140, %p141
      %p143 = pneg %p142
      // Predicated region
      $region9: #{tpu_custom_call.1} parent=5 // pred_check
        _
      $region10: #{tpu_custom_call.1} parent=5 // pred_check_branch
        %145 = sbr.rel (%p142) target = $region12
      $region11: #{tpu_custom_call.1} parent=5 // pred_region
        %s146 = ssub.s32 %s17, 1
        // Predicated region
        $region13: #{tpu_custom_call.1} parent=11 // pred_check
          %p147 = pneg %p64
        $region14: #{tpu_custom_call.1} parent=11 // pred_check_branch
          %149 = sbr.rel (%p147) target = $region16
        $region15: #{tpu_custom_call.1} parent=11 // pred_region
          %s151 = ssub.s32 512, 512
          %152 = vsyncadd [#allocation6], %s151
          %s153 = sshll.u32 [#allocation5], 4
          %s154 = int_to_ptr.vmem [resolvable:$true] %s153
          %159 = dma.hbm_to_vmem [thread:$0]  %s1, 512, %s154, [#allocation6], 128, 128, 8
        $region16: #{tpu_custom_call.1} parent=11 // pred_fallthru
          _
        // Predicated region
        $region17: #{tpu_custom_call.1} parent=11 // pred_check
          %p160 = pneg %p85
        $region18: #{tpu_custom_call.1} parent=11 // pred_check_branch
          %162 = sbr.rel (%p160) target = $region20
        $region19: #{tpu_custom_call.1} parent=11 // pred_region
          %s164 = ssub.s32 512, 512
          %165 = vsyncadd [#allocation6], %s164
          %s166 = sshll.u32 [#allocation7], 4
          %s167 = int_to_ptr.vmem [resolvable:$true] %s166
          %172 = dma.hbm_to_vmem [thread:$0]  %s2, 512, %s167, [#allocation6], 128, 128, 8
        $region20: #{tpu_custom_call.1} parent=11 // pred_fallthru
          _
        // Predicated region
        $region21: #{tpu_custom_call.1} parent=11 // pred_check
          %p173 = pneg %p106
        $region22: #{tpu_custom_call.1} parent=11 // pred_check_branch
          %175 = sbr.rel (%p173) target = $region24
        $region23: #{tpu_custom_call.1} parent=11 // pred_region
          _
        $region24: #{tpu_custom_call.1} parent=11 // pred_fallthru
          _
      $region12: #{tpu_custom_call.1} parent=5 // pred_fallthru
        _
      %p176 = scmp.lt.s32.totalorder %s17, 2
      // Predicated region
      $region25: #{tpu_custom_call.1} parent=5 // pred_check
        %p177 = pneg %p176
      $region26: #{tpu_custom_call.1} parent=5 // pred_check_branch
        %179 = sbr.rel (%p177) target = $region28
      $region27: #{tpu_custom_call.1} parent=5 // pred_region
        // Predicated region
        $region29: #{tpu_custom_call.1} parent=27 // pred_check
          %p180 = pneg %p37
        $region30: #{tpu_custom_call.1} parent=27 // pred_check_branch
          %182 = sbr.rel (%p180) target = $region32
        $region31: #{tpu_custom_call.1} parent=27 // pred_region
          %s183 = sand.u32 %s27, 1
          %s184 = scalar_lea.sflag [#allocation3], %s183
          %s185 = sand.u32 %s27, 1
          %s186 = smul.addr %s185, 16
          %s187 = scalar_lea.vmem [#allocation2], %s186
          %s189 = ssub.s32 256, 256
          %190 = vsyncadd %s184, %s189
          %s191 = smul.addr %s17, 2
          %s192 = smul.addr %s191, 128
          %s193 = scalar_lea.hbm %s0, %s192
          %s194 = sshll.u32 %s187, 4
          %s195 = int_to_ptr.vmem [resolvable:$true] %s194
          %200 = dma.hbm_to_vmem [thread:$0]  %s193, 256, %s195, %s184, 128, 128, 8
        $region32: #{tpu_custom_call.1} parent=27 // pred_fallthru
          _
      $region28: #{tpu_custom_call.1} parent=5 // pred_fallthru
        _
      %p201 = scmp.le.s32.totalorder 1, %s17
      %p202 = scmp.lt.s32.totalorder %s17, 3
      %p203 = pnand %p201, %p202
      %p204 = pneg %p203
      // Predicated region
      $region33: #{tpu_custom_call.1} parent=5 // pred_check
        _
      $region34: #{tpu_custom_call.1} parent=5 // pred_check_branch
        %206 = sbr.rel (%p203) target = $region36
      $region35: #{tpu_custom_call.1} parent=5 // pred_region
        %s207 = ssub.s32 %s17, 1
        %s208 = sand.u32 %s30, 1
        %s209 = scalar_lea.sflag [#allocation3], %s208
        %s210 = sand.u32 %s30, 1
        %s211 = smul.addr %s210, 16
        %s212 = scalar_lea.vmem [#allocation2], %s211
        // Predicated region
        $region37: #{tpu_custom_call.1} parent=35 // pred_check
          %p213 = pneg %p43
        $region38: #{tpu_custom_call.1} parent=35 // pred_check_branch
          %215 = sbr.rel (%p213) target = $region40
        $region39: #{tpu_custom_call.1} parent=35 // pred_region
          %216 = dma.done %s209, 256
        $region40: #{tpu_custom_call.1} parent=35 // pred_fallthru
          _
        // Predicated region
        $region41: #{tpu_custom_call.1} parent=35 // pred_check
          %p217 = pneg %p64
        $region42: #{tpu_custom_call.1} parent=35 // pred_check_branch
          %219 = sbr.rel (%p217) target = $region44
        $region43: #{tpu_custom_call.1} parent=35 // pred_region
          %220 = dma.done [#allocation6], 512
        $region44: #{tpu_custom_call.1} parent=35 // pred_fallthru
          _
        // Predicated region
        $region45: #{tpu_custom_call.1} parent=35 // pred_check
          %p221 = pneg %p85
        $region46: #{tpu_custom_call.1} parent=35 // pred_check_branch
          %223 = sbr.rel (%p221) target = $region48
        $region47: #{tpu_custom_call.1} parent=35 // pred_region
          %224 = dma.done [#allocation6], 512
        $region48: #{tpu_custom_call.1} parent=35 // pred_fallthru
          _
        %s225 = sand.u32 %s30, 1
        %s226 = scalar_lea.sflag [#allocation3], %s225
        %s227 = sand.u32 %s30, 1
        %s228 = smul.addr %s227, 16
        %s229 = scalar_lea.vmem [#allocation2], %s228
        %p230 = pneg %p43
        %p231 = pneg %p40
        %p232 = pneg %p64
        %p233 = pneg %p61
        %p234 = pneg %p85
        %p235 = pneg %p82
        %p236 = pneg %p106
        %p237 = pneg %p103
        %p238 = pneg %p132
        %p239 = pneg %p129
        %s240 = sand.u32 %s119, 1
        %s241 = scalar_lea.sflag [#allocation4], %s240
        %s242 = sand.u32 %s119, 1
        %s243 = smul.addr %s242, 16
        %s244 = scalar_lea.vmem [#allocation8], %s243
        %v245 = vld [vmem:[%s212] sm:$0xff]
        %v246 = vld [vmem:[%s212 + $0x8] sm:$0xff]
        %v247 = vld [vmem:[%s3] sm:$0x1]
        %v248 = vld [vmem:[#allocation5] sm:$0xff]
        %v249 = vld [vmem:[#allocation5 + $0x8] sm:$0xff]
        %v250 = vld [vmem:[#allocation5 + $0x10] sm:$0xff]
        %v251 = vld [vmem:[#allocation5 + $0x18] sm:$0xff]
        %v252 = vld [vmem:[#allocation7] sm:$0xff]
        %v253 = vld [vmem:[#allocation7 + $0x8] sm:$0xff]
        %v254 = vld [vmem:[#allocation7 + $0x10] sm:$0xff]
        %v255 = vld [vmem:[#allocation7 + $0x18] sm:$0xff]
        %v257 = vlaneseq
        %v258 = vshrl.u32 %v257, 7
        %v259 = vsub.s32 0, %v258
        %v260 = vrot.slane %v247, %v259
        %vm262 = vcmask 261120
        %v264 = vsel %vm262, %v245, 0
        %v267 = vsel %vm262, %v246, 0
        %269 = vmatprep.subr.mxu0 0.0
        %v270 = vand.u32 %v248, 4294901760
        %271 = vmatpush1.msra.mxu0 %v270
        %272 = vmatprep.subr.mxu0 0.0
        %v273 = vand.u32 %v249, 4294901760
        %274 = vmatpush1.msra.mxu0 %v273
        %275 = vmatprep.subr.mxu0 0.0
        %v276 = vand.u32 %v250, 4294901760
        %277 = vmatpush1.msra.mxu0 %v276
        %278 = vmatprep.subr.mxu0 0.0
        %v279 = vand.u32 %v251, 4294901760
        %280 = vmatpush1.msra.mxu0 %v279
        %281 = vmatprep.subr.mxu0 0.0
        %282 = vmatpush1.msra.mxu0 0.0
        %283 = vmatprep.subr.mxu0 0.0
        %284 = vmatpush1.msra.mxu0 0.0
        %285 = vmatprep.subr.mxu0 0.0
        %286 = vmatpush1.msra.mxu0 0.0
        %287 = vmatprep.subr.mxu0 0.0
        %288 = vmatpush1.msra.mxu0 0.0
        %289 = vmatprep.subr.mxu0 0.0
        %290 = vmatpush1.msra.mxu0 0.0
        %291 = vmatprep.subr.mxu0 0.0
        %292 = vmatpush1.msra.mxu0 0.0
        %293 = vmatprep.subr.mxu0 0.0
        %294 = vmatpush1.msra.mxu0 0.0
        %295 = vmatprep.subr.mxu0 0.0
        %296 = vmatpush1.msra.mxu0 0.0
        %297 = vmatprep.subr.mxu0 0.0
        %298 = vmatpush1.msra.mxu0 0.0
        %299 = vmatprep.subr.mxu0 0.0
        %300 = vmatpush1.msra.mxu0 0.0
        %301 = vmatprep.subr.mxu0 0.0
        %302 = vmatpush1.msra.mxu0 0.0
        %303 = vmatprep.subr.mxu0 0.0
        %304 = vmatpush1.msra.mxu0 0.0
        %305 = vmatprep.subr.mxu0 0.0
        %306 = vmatpush1.msra.mxu0 0.0
        %307 = vmatprep.subr.mxu0 0.0
        %308 = vmatpush1.msra.mxu0 0.0
        %309 = vmatprep.subr.mxu0 0.0
        %310 = vmatpush1.msra.mxu0 0.0
        %311 = vmatprep.subr.mxu0 0.0
        %312 = vmatpush1.msra.mxu0 0.0
        %313 = vmatprep.subr.mxu0 0.0
        %314 = vmatpush1.msra.mxu0 0.0
        %315 = vmatprep.subr.mxu0 0.0
        %316 = vmatpush1.msra.mxu0 0.0
        %317 = vmatprep.subr.mxu0 0.0
        %318 = vmatpush1.msra.mxu0 0.0
        %319 = vmatprep.subr.mxu0 0.0
        %320 = vmatpush1.msra.mxu0 0.0
        %321 = vmatprep.subr.mxu0 0.0
        %322 = vmatpush1.msra.mxu0 0.0
        %323 = vmatprep.subr.mxu0 0.0
        %324 = vmatpush1.msra.mxu0 0.0
        %325 = vmatprep.subr.mxu0 0.0
        %326 = vmatpush1.msra.mxu0 0.0
        %327 = vmatprep.subr.mxu0 0.0
        %328 = vmatpush1.msra.mxu0 0.0
        %329 = vmatprep.subr.mxu0 0.0
        %330 = vmatpush1.msra.mxu0 0.0
        %331 = vmatprep.subr.mxu0 0.0
        %332 = vmatpush1.msra.mxu0 0.0
        %333 = vmatprep.subr.mxu0 0.0
        %334 = vmatpush1.msra.mxu0 0.0
        %335 = vmatprep.subr.mxu0 0.0
        %336 = vmatpush1.msra.mxu0 0.0
        %337 = vmatprep.mubr.f32.mxu0 0.0
        %v338 = vand.u32 %v264, 4294901760
        %v339 = vsub.f32 %v264, %v338
        %v340 = vand.u32 %v339, 4294901760
        %v341 = vsub.f32 %v339, %v340
        %v342 = vand.u32 %v341, 4294901760
        %343 = vmatmul.mubr.f32.gmra.mrb[0].mxu0 %v342
        %v344 = vpop.f32.mrb[0].mxu0
        %v345 = vadd.f32 %v260, %v344
        %v346 = vpop.f32.mrb[0].mxu0
        %347 = vmatprep.mubr.f32.mxu0 0.0
        %v348 = vand.u32 %v267, 4294901760
        %v349 = vsub.f32 %v267, %v348
        %v350 = vand.u32 %v349, 4294901760
        %v351 = vsub.f32 %v349, %v350
        %v352 = vand.u32 %v351, 4294901760
        %353 = vmatmul.mubr.f32.gmra.mrb[0].mxu0 %v352
        %v354 = vpop.f32.mrb[0].mxu0
        %v355 = vadd.f32 %v260, %v354
        %v356 = vpop.f32.mrb[0].mxu0
        %357 = vdwg.mxu0
        %358 = vmatprep.subr.mxu0 0.0
        %v359 = vand.u32 %v248, 4294901760
        %v360 = vsub.f32 %v248, %v359
        %v361 = vand.u32 %v360, 4294901760
        %v362 = vsub.f32 %v360, %v361
        %v363 = vand.u32 %v362, 4294901760
        %364 = vmatpush1.msra.mxu0 %v363
        %365 = vmatprep.subr.mxu0 0.0
        %v366 = vand.u32 %v249, 4294901760
        %v367 = vsub.f32 %v249, %v366
        %v368 = vand.u32 %v367, 4294901760
        %v369 = vsub.f32 %v367, %v368
        %v370 = vand.u32 %v369, 4294901760
        %371 = vmatpush1.msra.mxu0 %v370
        %372 = vmatprep.subr.mxu0 0.0
        %v373 = vand.u32 %v250, 4294901760
        %v374 = vsub.f32 %v250, %v373
        %v375 = vand.u32 %v374, 4294901760
        %v376 = vsub.f32 %v374, %v375
        %v377 = vand.u32 %v376, 4294901760
        %378 = vmatpush1.msra.mxu0 %v377
        %379 = vmatprep.subr.mxu0 0.0
        %v380 = vand.u32 %v251, 4294901760
        %v381 = vsub.f32 %v251, %v380
        %v382 = vand.u32 %v381, 4294901760
        %v383 = vsub.f32 %v381, %v382
        %v384 = vand.u32 %v383, 4294901760
        %385 = vmatpush1.msra.mxu0 %v384
        %386 = vmatprep.subr.mxu0 0.0
        %387 = vmatpush1.msra.mxu0 0.0
        %388 = vmatprep.subr.mxu0 0.0
        %389 = vmatpush1.msra.mxu0 0.0
        %390 = vmatprep.subr.mxu0 0.0
        %391 = vmatpush1.msra.mxu0 0.0
        %392 = vmatprep.subr.mxu0 0.0
        %393 = vmatpush1.msra.mxu0 0.0
        %394 = vmatprep.subr.mxu0 0.0
        %395 = vmatpush1.msra.mxu0 0.0
        %396 = vmatprep.subr.mxu0 0.0
        %397 = vmatpush1.msra.mxu0 0.0
        %398 = vmatprep.subr.mxu0 0.0
        %399 = vmatpush1.msra.mxu0 0.0
        %400 = vmatprep.subr.mxu0 0.0
        %401 = vmatpush1.msra.mxu0 0.0
        %402 = vmatprep.subr.mxu0 0.0
        %403 = vmatpush1.msra.mxu0 0.0
        %404 = vmatprep.subr.mxu0 0.0
        %405 = vmatpush1.msra.mxu0 0.0
        %406 = vmatprep.subr.mxu0 0.0
        %407 = vmatpush1.msra.mxu0 0.0
        %408 = vmatprep.subr.mxu0 0.0
        %409 = vmatpush1.msra.mxu0 0.0
        %410 = vmatprep.subr.mxu0 0.0
        %411 = vmatpush1.msra.mxu0 0.0
        %412 = vmatprep.subr.mxu0 0.0
        %413 = vmatpush1.msra.mxu0 0.0
        %414 = vmatprep.subr.mxu0 0.0
        %415 = vmatpush1.msra.mxu0 0.0
        %416 = vmatprep.subr.mxu0 0.0
        %417 = vmatpush1.msra.mxu0 0.0
        %418 = vmatprep.subr.mxu0 0.0
        %419 = vmatpush1.msra.mxu0 0.0
        %420 = vmatprep.subr.mxu0 0.0
        %421 = vmatpush1.msra.mxu0 0.0
        %422 = vmatprep.subr.mxu0 0.0
        %423 = vmatpush1.msra.mxu0 0.0
        %424 = vmatprep.subr.mxu0 0.0
        %425 = vmatpush1.msra.mxu0 0.0
        %426 = vmatprep.subr.mxu0 0.0
        %427 = vmatpush1.msra.mxu0 0.0
        %428 = vmatprep.subr.mxu0 0.0
        %429 = vmatpush1.msra.mxu0 0.0
        %430 = vmatprep.subr.mxu0 0.0
        %431 = vmatpush1.msra.mxu0 0.0
        %432 = vmatprep.subr.mxu0 0.0
        %433 = vmatpush1.msra.mxu0 0.0
        %434 = vmatprep.subr.mxu0 0.0
        %435 = vmatpush1.msra.mxu0 0.0
        %436 = vmatprep.subr.mxu0 0.0
        %437 = vmatpush1.msra.mxu0 0.0
        %438 = vmatprep.subr.mxu0 0.0
        %439 = vmatpush1.msra.mxu0 0.0
        %440 = vmatprep.subr.mxu0 0.0
        %441 = vmatpush1.msra.mxu0 0.0
        %442 = vmatprep.mubr.f32.mxu0 0.0
        %v443 = vand.u32 %v264, 4294901760
        %444 = vmatmul.mubr.f32.gmra.mrb[0].mxu0 %v443
        %v445 = vpop.f32.mrb[0].mxu0
        %v446 = vadd.f32 %v345, %v445
        %v447 = vpop.f32.mrb[0].mxu0
        %448 = vmatprep.mubr.f32.mxu0 0.0
        %v449 = vand.u32 %v267, 4294901760
        %450 = vmatmul.mubr.f32.gmra.mrb[0].mxu0 %v449
        %v451 = vpop.f32.mrb[0].mxu0
        %v452 = vadd.f32 %v355, %v451
        %v453 = vpop.f32.mrb[0].mxu0
        %454 = vdwg.mxu0
        %455 = vmatprep.subr.mxu0 0.0
        %v456 = vand.u32 %v248, 4294901760
        %v457 = vsub.f32 %v248, %v456
        %458 = vmatpush1.msra.mxu0 %v457
        %459 = vmatprep.subr.mxu0 0.0
        %v460 = vand.u32 %v249, 4294901760
        %v461 = vsub.f32 %v249, %v460
        %462 = vmatpush1.msra.mxu0 %v461
        %463 = vmatprep.subr.mxu0 0.0
        %v464 = vand.u32 %v250, 4294901760
        %v465 = vsub.f32 %v250, %v464
        %466 = vmatpush1.msra.mxu0 %v465
        %467 = vmatprep.subr.mxu0 0.0
        %v468 = vand.u32 %v251, 4294901760
        %v469 = vsub.f32 %v251, %v468
        %470 = vmatpush1.msra.mxu0 %v469
        %471 = vmatprep.subr.mxu0 0.0
        %472 = vmatpush1.msra.mxu0 0.0
        %473 = vmatprep.subr.mxu0 0.0
        %474 = vmatpush1.msra.mxu0 0.0
        %475 = vmatprep.subr.mxu0 0.0
        %476 = vmatpush1.msra.mxu0 0.0
        %477 = vmatprep.subr.mxu0 0.0
        %478 = vmatpush1.msra.mxu0 0.0
        %479 = vmatprep.subr.mxu0 0.0
        %480 = vmatpush1.msra.mxu0 0.0
        %481 = vmatprep.subr.mxu0 0.0
        %482 = vmatpush1.msra.mxu0 0.0
        %483 = vmatprep.subr.mxu0 0.0
        %484 = vmatpush1.msra.mxu0 0.0
        %485 = vmatprep.subr.mxu0 0.0
        %486 = vmatpush1.msra.mxu0 0.0
        %487 = vmatprep.subr.mxu0 0.0
        %488 = vmatpush1.msra.mxu0 0.0
        %489 = vmatprep.subr.mxu0 0.0
        %490 = vmatpush1.msra.mxu0 0.0
        %491 = vmatprep.subr.mxu0 0.0
        %492 = vmatpush1.msra.mxu0 0.0
        %493 = vmatprep.subr.mxu0 0.0
        %494 = vmatpush1.msra.mxu0 0.0
        %495 = vmatprep.subr.mxu0 0.0
        %496 = vmatpush1.msra.mxu0 0.0
        %497 = vmatprep.subr.mxu0 0.0
        %498 = vmatpush1.msra.mxu0 0.0
        %499 = vmatprep.subr.mxu0 0.0
        %500 = vmatpush1.msra.mxu0 0.0
        %501 = vmatprep.subr.mxu0 0.0
        %502 = vmatpush1.msra.mxu0 0.0
        %503 = vmatprep.subr.mxu0 0.0
        %504 = vmatpush1.msra.mxu0 0.0
        %505 = vmatprep.subr.mxu0 0.0
        %506 = vmatpush1.msra.mxu0 0.0
        %507 = vmatprep.subr.mxu0 0.0
        %508 = vmatpush1.msra.mxu0 0.0
        %509 = vmatprep.subr.mxu0 0.0
        %510 = vmatpush1.msra.mxu0 0.0
        %511 = vmatprep.subr.mxu0 0.0
        %512 = vmatpush1.msra.mxu0 0.0
        %513 = vmatprep.subr.mxu0 0.0
        %514 = vmatpush1.msra.mxu0 0.0
        %515 = vmatprep.subr.mxu0 0.0
        %516 = vmatpush1.msra.mxu0 0.0
        %517 = vmatprep.subr.mxu0 0.0
        %518 = vmatpush1.msra.mxu0 0.0
        %519 = vmatprep.subr.mxu0 0.0
        %520 = vmatpush1.msra.mxu0 0.0
        %521 = vmatprep.subr.mxu0 0.0
        %522 = vmatpush1.msra.mxu0 0.0
        %523 = vmatprep.subr.mxu0 0.0
        %524 = vmatpush1.msra.mxu0 0.0
        %525 = vmatprep.subr.mxu0 0.0
        %526 = vmatpush1.msra.mxu0 0.0
        %527 = vmatprep.mubr.f32.mxu0 0.0
        %v528 = vand.u32 %v264, 4294901760
        %v529 = vsub.f32 %v264, %v528
        %530 = vmatmul.mubr.f32.gmra.mrb[0].mxu0 %v529
        %v531 = vpop.f32.mrb[0].mxu0
        %v532 = vadd.f32 %v446, %v531
        %v533 = vpop.f32.mrb[0].mxu0
        %534 = vmatprep.mubr.f32.mxu0 0.0
        %v535 = vand.u32 %v267, 4294901760
        %v536 = vsub.f32 %v267, %v535
        %537 = vmatmul.mubr.f32.gmra.mrb[0].mxu0 %v536
        %v538 = vpop.f32.mrb[0].mxu0
        %v539 = vadd.f32 %v452, %v538
        %v540 = vpop.f32.mrb[0].mxu0
        %541 = vdwg.mxu0
        %542 = vmatprep.subr.mxu0 0.0
        %v543 = vand.u32 %v248, 4294901760
        %544 = vmatpush1.msra.mxu0 %v543
        %545 = vmatprep.subr.mxu0 0.0
        %v546 = vand.u32 %v249, 4294901760
        %547 = vmatpush1.msra.mxu0 %v546
        %548 = vmatprep.subr.mxu0 0.0
        %v549 = vand.u32 %v250, 4294901760
        %550 = vmatpush1.msra.mxu0 %v549
        %551 = vmatprep.subr.mxu0 0.0
        %v552 = vand.u32 %v251, 4294901760
        %553 = vmatpush1.msra.mxu0 %v552
        %554 = vmatprep.subr.mxu0 0.0
        %555 = vmatpush1.msra.mxu0 0.0
        %556 = vmatprep.subr.mxu0 0.0
        %557 = vmatpush1.msra.mxu0 0.0
        %558 = vmatprep.subr.mxu0 0.0
        %559 = vmatpush1.msra.mxu0 0.0
        %560 = vmatprep.subr.mxu0 0.0
        %561 = vmatpush1.msra.mxu0 0.0
        %562 = vmatprep.subr.mxu0 0.0
        %563 = vmatpush1.msra.mxu0 0.0
        %564 = vmatprep.subr.mxu0 0.0
        %565 = vmatpush1.msra.mxu0 0.0
        %566 = vmatprep.subr.mxu0 0.0
        %567 = vmatpush1.msra.mxu0 0.0
        %568 = vmatprep.subr.mxu0 0.0
        %569 = vmatpush1.msra.mxu0 0.0
        %570 = vmatprep.subr.mxu0 0.0
        %571 = vmatpush1.msra.mxu0 0.0
        %572 = vmatprep.subr.mxu0 0.0
        %573 = vmatpush1.msra.mxu0 0.0
        %574 = vmatprep.subr.mxu0 0.0
        %575 = vmatpush1.msra.mxu0 0.0
        %576 = vmatprep.subr.mxu0 0.0
        %577 = vmatpush1.msra.mxu0 0.0
        %578 = vmatprep.subr.mxu0 0.0
        %579 = vmatpush1.msra.mxu0 0.0
        %580 = vmatprep.subr.mxu0 0.0
        %581 = vmatpush1.msra.mxu0 0.0
        %582 = vmatprep.subr.mxu0 0.0
        %583 = vmatpush1.msra.mxu0 0.0
        %584 = vmatprep.subr.mxu0 0.0
        %585 = vmatpush1.msra.mxu0 0.0
        %586 = vmatprep.subr.mxu0 0.0
        %587 = vmatpush1.msra.mxu0 0.0
        %588 = vmatprep.subr.mxu0 0.0
        %589 = vmatpush1.msra.mxu0 0.0
        %590 = vmatprep.subr.mxu0 0.0
        %591 = vmatpush1.msra.mxu0 0.0
        %592 = vmatprep.subr.mxu0 0.0
        %593 = vmatpush1.msra.mxu0 0.0
        %594 = vmatprep.subr.mxu0 0.0
        %595 = vmatpush1.msra.mxu0 0.0
        %596 = vmatprep.subr.mxu0 0.0
        %597 = vmatpush1.msra.mxu0 0.0
        %598 = vmatprep.subr.mxu0 0.0
        %599 = vmatpush1.msra.mxu0 0.0
        %600 = vmatprep.subr.mxu0 0.0
        %601 = vmatpush1.msra.mxu0 0.0
        %602 = vmatprep.subr.mxu0 0.0
        %603 = vmatpush1.msra.mxu0 0.0
        %604 = vmatprep.subr.mxu0 0.0
        %605 = vmatpush1.msra.mxu0 0.0
        %606 = vmatprep.subr.mxu0 0.0
        %607 = vmatpush1.msra.mxu0 0.0
        %608 = vmatprep.subr.mxu0 0.0
        %609 = vmatpush1.msra.mxu0 0.0
        %610 = vmatprep.mubr.f32.mxu0 0.0
        %v611 = vand.u32 %v264, 4294901760
        %v612 = vsub.f32 %v264, %v611
        %v613 = vand.u32 %v612, 4294901760
        %614 = vmatmul.mubr.f32.gmra.mrb[0].mxu0 %v613
        %v615 = vpop.f32.mrb[0].mxu0
        %v616 = vadd.f32 %v532, %v615
        %v617 = vpop.f32.mrb[0].mxu0
        %618 = vmatprep.mubr.f32.mxu0 0.0
        %v619 = vand.u32 %v267, 4294901760
        %v620 = vsub.f32 %v267, %v619
        %v621 = vand.u32 %v620, 4294901760
        %622 = vmatmul.mubr.f32.gmra.mrb[0].mxu0 %v621
        %v623 = vpop.f32.mrb[0].mxu0
        %v624 = vadd.f32 %v539, %v623
        %v625 = vpop.f32.mrb[0].mxu0
        %626 = vdwg.mxu0
        %627 = vmatprep.subr.mxu0 0.0
        %v628 = vand.u32 %v248, 4294901760
        %v629 = vsub.f32 %v248, %v628
        %v630 = vand.u32 %v629, 4294901760
        %631 = vmatpush1.msra.mxu0 %v630
        %632 = vmatprep.subr.mxu0 0.0
        %v633 = vand.u32 %v249, 4294901760
        %v634 = vsub.f32 %v249, %v633
        %v635 = vand.u32 %v634, 4294901760
        %636 = vmatpush1.msra.mxu0 %v635
        %637 = vmatprep.subr.mxu0 0.0
        %v638 = vand.u32 %v250, 4294901760
        %v639 = vsub.f32 %v250, %v638
        %v640 = vand.u32 %v639, 4294901760
        %641 = vmatpush1.msra.mxu0 %v640
        %642 = vmatprep.subr.mxu0 0.0
        %v643 = vand.u32 %v251, 4294901760
        %v644 = vsub.f32 %v251, %v643
        %v645 = vand.u32 %v644, 4294901760
        %646 = vmatpush1.msra.mxu0 %v645
        %647 = vmatprep.subr.mxu0 0.0
        %648 = vmatpush1.msra.mxu0 0.0
        %649 = vmatprep.subr.mxu0 0.0
        %650 = vmatpush1.msra.mxu0 0.0
        %651 = vmatprep.subr.mxu0 0.0
        %652 = vmatpush1.msra.mxu0 0.0
        %653 = vmatprep.subr.mxu0 0.0
        %654 = vmatpush1.msra.mxu0 0.0
        %655 = vmatprep.subr.mxu0 0.0
        %656 = vmatpush1.msra.mxu0 0.0
        %657 = vmatprep.subr.mxu0 0.0
        %658 = vmatpush1.msra.mxu0 0.0
        %659 = vmatprep.subr.mxu0 0.0
        %660 = vmatpush1.msra.mxu0 0.0
        %661 = vmatprep.subr.mxu0 0.0
        %662 = vmatpush1.msra.mxu0 0.0
        %663 = vmatprep.subr.mxu0 0.0
        %664 = vmatpush1.msra.mxu0 0.0
        %665 = vmatprep.subr.mxu0 0.0
        %666 = vmatpush1.msra.mxu0 0.0
        %667 = vmatprep.subr.mxu0 0.0
        %668 = vmatpush1.msra.mxu0 0.0
        %669 = vmatprep.subr.mxu0 0.0
        %670 = vmatpush1.msra.mxu0 0.0
        %671 = vmatprep.subr.mxu0 0.0
        %672 = vmatpush1.msra.mxu0 0.0
        %673 = vmatprep.subr.mxu0 0.0
        %674 = vmatpush1.msra.mxu0 0.0
        %675 = vmatprep.subr.mxu0 0.0
        %676 = vmatpush1.msra.mxu0 0.0
        %677 = vmatprep.subr.mxu0 0.0
        %678 = vmatpush1.msra.mxu0 0.0
        %679 = vmatprep.subr.mxu0 0.0
        %680 = vmatpush1.msra.mxu0 0.0
        %681 = vmatprep.subr.mxu0 0.0
        %682 = vmatpush1.msra.mxu0 0.0
        %683 = vmatprep.subr.mxu0 0.0
        %684 = vmatpush1.msra.mxu0 0.0
        %685 = vmatprep.subr.mxu0 0.0
        %686 = vmatpush1.msra.mxu0 0.0
        %687 = vmatprep.subr.mxu0 0.0
        %688 = vmatpush1.msra.mxu0 0.0
        %689 = vmatprep.subr.mxu0 0.0
        %690 = vmatpush1.msra.mxu0 0.0
        %691 = vmatprep.subr.mxu0 0.0
        %692 = vmatpush1.msra.mxu0 0.0
        %693 = vmatprep.subr.mxu0 0.0
        %694 = vmatpush1.msra.mxu0 0.0
        %695 = vmatprep.subr.mxu0 0.0
        %696 = vmatpush1.msra.mxu0 0.0
        %697 = vmatprep.subr.mxu0 0.0
        %698 = vmatpush1.msra.mxu0 0.0
        %699 = vmatprep.subr.mxu0 0.0
        %700 = vmatpush1.msra.mxu0 0.0
        %701 = vmatprep.subr.mxu0 0.0
        %702 = vmatpush1.msra.mxu0 0.0
        %703 = vmatprep.mubr.f32.mxu0 0.0
        %v704 = vand.u32 %v264, 4294901760
        %705 = vmatmul.mubr.f32.gmra.mrb[0].mxu0 %v704
        %v706 = vpop.f32.mrb[0].mxu0
        %v707 = vadd.f32 %v616, %v706
        %v708 = vpop.f32.mrb[0].mxu0
        %709 = vmatprep.mubr.f32.mxu0 0.0
        %v710 = vand.u32 %v267, 4294901760
        %711 = vmatmul.mubr.f32.gmra.mrb[0].mxu0 %v710
        %v712 = vpop.f32.mrb[0].mxu0
        %v713 = vadd.f32 %v624, %v712
        %v714 = vpop.f32.mrb[0].mxu0
        %715 = vdwg.mxu0
        %716 = vmatprep.subr.mxu0 0.0
        %v717 = vand.u32 %v248, 4294901760
        %718 = vmatpush1.msra.mxu0 %v717
        %719 = vmatprep.subr.mxu0 0.0
        %v720 = vand.u32 %v249, 4294901760
        %721 = vmatpush1.msra.mxu0 %v720
        %722 = vmatprep.subr.mxu0 0.0
        %v723 = vand.u32 %v250, 4294901760
        %724 = vmatpush1.msra.mxu0 %v723
        %725 = vmatprep.subr.mxu0 0.0
        %v726 = vand.u32 %v251, 4294901760
        %727 = vmatpush1.msra.mxu0 %v726
        %728 = vmatprep.subr.mxu0 0.0
        %729 = vmatpush1.msra.mxu0 0.0
        %730 = vmatprep.subr.mxu0 0.0
        %731 = vmatpush1.msra.mxu0 0.0
        %732 = vmatprep.subr.mxu0 0.0
        %733 = vmatpush1.msra.mxu0 0.0
        %734 = vmatprep.subr.mxu0 0.0
        %735 = vmatpush1.msra.mxu0 0.0
        %736 = vmatprep.subr.mxu0 0.0
        %737 = vmatpush1.msra.mxu0 0.0
        %738 = vmatprep.subr.mxu0 0.0
        %739 = vmatpush1.msra.mxu0 0.0
        %740 = vmatprep.subr.mxu0 0.0
        %741 = vmatpush1.msra.mxu0 0.0
        %742 = vmatprep.subr.mxu0 0.0
        %743 = vmatpush1.msra.mxu0 0.0
        %744 = vmatprep.subr.mxu0 0.0
        %745 = vmatpush1.msra.mxu0 0.0
        %746 = vmatprep.subr.mxu0 0.0
        %747 = vmatpush1.msra.mxu0 0.0
        %748 = vmatprep.subr.mxu0 0.0
        %749 = vmatpush1.msra.mxu0 0.0
        %750 = vmatprep.subr.mxu0 0.0
        %751 = vmatpush1.msra.mxu0 0.0
        %752 = vmatprep.subr.mxu0 0.0
        %753 = vmatpush1.msra.mxu0 0.0
        %754 = vmatprep.subr.mxu0 0.0
        %755 = vmatpush1.msra.mxu0 0.0
        %756 = vmatprep.subr.mxu0 0.0
        %757 = vmatpush1.msra.mxu0 0.0
        %758 = vmatprep.subr.mxu0 0.0
        %759 = vmatpush1.msra.mxu0 0.0
        %760 = vmatprep.subr.mxu0 0.0
        %761 = vmatpush1.msra.mxu0 0.0
        %762 = vmatprep.subr.mxu0 0.0
        %763 = vmatpush1.msra.mxu0 0.0
        %764 = vmatprep.subr.mxu0 0.0
        %765 = vmatpush1.msra.mxu0 0.0
        %766 = vmatprep.subr.mxu0 0.0
        %767 = vmatpush1.msra.mxu0 0.0
        %768 = vmatprep.subr.mxu0 0.0
        %769 = vmatpush1.msra.mxu0 0.0
        %770 = vmatprep.subr.mxu0 0.0
        %771 = vmatpush1.msra.mxu0 0.0
        %772 = vmatprep.subr.mxu0 0.0
        %773 = vmatpush1.msra.mxu0 0.0
        %774 = vmatprep.subr.mxu0 0.0
        %775 = vmatpush1.msra.mxu0 0.0
        %776 = vmatprep.subr.mxu0 0.0
        %777 = vmatpush1.msra.mxu0 0.0
        %778 = vmatprep.subr.mxu0 0.0
        %779 = vmatpush1.msra.mxu0 0.0
        %780 = vmatprep.subr.mxu0 0.0
        %781 = vmatpush1.msra.mxu0 0.0
        %782 = vmatprep.subr.mxu0 0.0
        %783 = vmatpush1.msra.mxu0 0.0
        %784 = vmatprep.mubr.f32.mxu0 0.0
        %v785 = vand.u32 %v264, 4294901760
        %786 = vmatmul.mubr.f32.gmra.mrb[0].mxu0 %v785
        %v787 = vpop.f32.mrb[0].mxu0
        %v788 = vadd.f32 %v707, %v787
        %v789 = vpop.f32.mrb[0].mxu0
        %790 = vmatprep.mubr.f32.mxu0 0.0
        %v791 = vand.u32 %v267, 4294901760
        %792 = vmatmul.mubr.f32.gmra.mrb[0].mxu0 %v791
        %v793 = vpop.f32.mrb[0].mxu0
        %v794 = vadd.f32 %v713, %v793
        %v795 = vpop.f32.mrb[0].mxu0
        %796 = vdwg.mxu0
        %797 = vrot.lane.b32.xlu0 %v260, 32
        %v798 = vpop.permute.xlu0 %797
        %v800 = vadd.f32 %v245, %v798
        %v801 = vadd.f32 %v246, %v798
        %804 = vrot.lane.b32.xlu0 %v788, 96
        %v805 = vpop.permute.xlu0 %804
        %806 = vrot.lane.b32.xlu0 %v794, 96
        %v807 = vpop.permute.xlu0 %806
        %vm808 = vcmask 64512
        %v809 = vsel %vm808, %v788, 0
        %v811 = vsel %vm808, %v794, 0
        %v813 = vsel %vm808, %v805, 0
        %v815 = vsel %vm808, %v807, 0
        %817 = vmatprep.subr.mxu0 0.0
        %v818 = vand.u32 %v813, 4294901760
        %819 = vmatpush1.xpose.msra.mxu0 %v818
        %820 = vmatprep.subr.mxu0 0.0
        %v821 = vand.u32 %v815, 4294901760
        %822 = vmatpush1.xpose.msra.mxu0 %v821
        %823 = vmatprep.subr.mxu0 0.0
        %824 = vmatpush1.xpose.msra.mxu0 0.0
        %825 = vmatprep.subr.mxu0 0.0
        %826 = vmatpush1.xpose.msra.mxu0 0.0
        %827 = vmatprep.subr.mxu0 0.0
        %828 = vmatpush1.xpose.msra.mxu0 0.0
        %829 = vmatprep.subr.mxu0 0.0
        %830 = vmatpush1.xpose.msra.mxu0 0.0
        %831 = vmatprep.subr.mxu0 0.0
        %832 = vmatpush1.xpose.msra.mxu0 0.0
        %833 = vmatprep.subr.mxu0 0.0
        %834 = vmatpush1.xpose.msra.mxu0 0.0
        %835 = vmatprep.subr.mxu0 0.0
        %836 = vmatpush1.xpose.msra.mxu0 0.0
        %837 = vmatprep.subr.mxu0 0.0
        %838 = vmatpush1.xpose.msra.mxu0 0.0
        %839 = vmatprep.subr.mxu0 0.0
        %840 = vmatpush1.xpose.msra.mxu0 0.0
        %841 = vmatprep.subr.mxu0 0.0
        %842 = vmatpush1.xpose.msra.mxu0 0.0
        %843 = vmatprep.subr.mxu0 0.0
        %844 = vmatpush1.xpose.msra.mxu0 0.0
        %845 = vmatprep.subr.mxu0 0.0
        %846 = vmatpush1.xpose.msra.mxu0 0.0
        %847 = vmatprep.subr.mxu0 0.0
        %848 = vmatpush1.xpose.msra.mxu0 0.0
        %849 = vmatprep.subr.mxu0 0.0
        %850 = vmatpush1.xpose.msra.mxu0 0.0
        %851 = vmatprep.subr.mxu0 0.0
        %852 = vmatpush1.xpose.msra.mxu0 0.0
        %853 = vmatprep.subr.mxu0 0.0
        %854 = vmatpush1.xpose.msra.mxu0 0.0
        %855 = vmatprep.subr.mxu0 0.0
        %856 = vmatpush1.xpose.msra.mxu0 0.0
        %857 = vmatprep.subr.mxu0 0.0
        %858 = vmatpush1.xpose.msra.mxu0 0.0
        %859 = vmatprep.subr.mxu0 0.0
        %860 = vmatpush1.xpose.msra.mxu0 0.0
        %861 = vmatprep.subr.mxu0 0.0
        %862 = vmatpush1.xpose.msra.mxu0 0.0
        %863 = vmatprep.subr.mxu0 0.0
        %864 = vmatpush1.xpose.msra.mxu0 0.0
        %865 = vmatprep.subr.mxu0 0.0
        %866 = vmatpush1.xpose.msra.mxu0 0.0
        %867 = vmatprep.subr.mxu0 0.0
        %868 = vmatpush1.xpose.msra.mxu0 0.0
        %869 = vmatprep.subr.mxu0 0.0
        %870 = vmatpush1.xpose.msra.mxu0 0.0
        %871 = vmatprep.subr.mxu0 0.0
        %872 = vmatpush1.xpose.msra.mxu0 0.0
        %873 = vmatprep.subr.mxu0 0.0
        %874 = vmatpush1.xpose.msra.mxu0 0.0
        %875 = vmatprep.subr.mxu0 0.0
        %876 = vmatpush1.xpose.msra.mxu0 0.0
        %877 = vmatprep.subr.mxu0 0.0
        %878 = vmatpush1.xpose.msra.mxu0 0.0
        %879 = vmatprep.subr.mxu0 0.0
        %880 = vmatpush1.xpose.msra.mxu0 0.0
        %881 = vmatprep.subr.mxu0 0.0
        %882 = vmatpush1.xpose.msra.mxu0 0.0
        %883 = vmatprep.mubr.f32.mxu0 0.0
        %v884 = vand.u32 %v809, 4294901760
        %v885 = vsub.f32 %v809, %v884
        %v886 = vand.u32 %v885, 4294901760
        %v887 = vsub.f32 %v885, %v886
        %v888 = vand.u32 %v887, 4294901760
        %889 = vmatmul.mubr.f32.gmra.mrb[0].mxu0 %v888
        %v890 = vpop.f32.mrb[0].mxu0
        %v891 = vadd.f32 0.0, %v890
        %v892 = vpop.f32.mrb[0].mxu0
        %893 = vmatprep.mubr.f32.mxu0 0.0
        %v894 = vand.u32 %v811, 4294901760
        %v895 = vsub.f32 %v811, %v894
        %v896 = vand.u32 %v895, 4294901760
        %v897 = vsub.f32 %v895, %v896
        %v898 = vand.u32 %v897, 4294901760
        %899 = vmatmul.mubr.f32.gmra.mrb[0].mxu0 %v898
        %v900 = vpop.f32.mrb[0].mxu0
        %v901 = vadd.f32 0.0, %v900
        %v902 = vpop.f32.mrb[0].mxu0
        %903 = vdwg.mxu0
        %904 = vmatprep.subr.mxu0 0.0
        %v905 = vand.u32 %v813, 4294901760
        %v906 = vsub.f32 %v813, %v905
        %v907 = vand.u32 %v906, 4294901760
        %v908 = vsub.f32 %v906, %v907
        %v909 = vand.u32 %v908, 4294901760
        %910 = vmatpush1.xpose.msra.mxu0 %v909
        %911 = vmatprep.subr.mxu0 0.0
        %v912 = vand.u32 %v815, 4294901760
        %v913 = vsub.f32 %v815, %v912
        %v914 = vand.u32 %v913, 4294901760
        %v915 = vsub.f32 %v913, %v914
        %v916 = vand.u32 %v915, 4294901760
        %917 = vmatpush1.xpose.msra.mxu0 %v916
        %918 = vmatprep.subr.mxu0 0.0
        %919 = vmatpush1.xpose.msra.mxu0 0.0
        %920 = vmatprep.subr.mxu0 0.0
        %921 = vmatpush1.xpose.msra.mxu0 0.0
        %922 = vmatprep.subr.mxu0 0.0
        %923 = vmatpush1.xpose.msra.mxu0 0.0
        %924 = vmatprep.subr.mxu0 0.0
        %925 = vmatpush1.xpose.msra.mxu0 0.0
        %926 = vmatprep.subr.mxu0 0.0
        %927 = vmatpush1.xpose.msra.mxu0 0.0
        %928 = vmatprep.subr.mxu0 0.0
        %929 = vmatpush1.xpose.msra.mxu0 0.0
        %930 = vmatprep.subr.mxu0 0.0
        %931 = vmatpush1.xpose.msra.mxu0 0.0
        %932 = vmatprep.subr.mxu0 0.0
        %933 = vmatpush1.xpose.msra.mxu0 0.0
        %934 = vmatprep.subr.mxu0 0.0
        %935 = vmatpush1.xpose.msra.mxu0 0.0
        %936 = vmatprep.subr.mxu0 0.0
        %937 = vmatpush1.xpose.msra.mxu0 0.0
        %938 = vmatprep.subr.mxu0 0.0
        %939 = vmatpush1.xpose.msra.mxu0 0.0
        %940 = vmatprep.subr.mxu0 0.0
        %941 = vmatpush1.xpose.msra.mxu0 0.0
        %942 = vmatprep.subr.mxu0 0.0
        %943 = vmatpush1.xpose.msra.mxu0 0.0
        %944 = vmatprep.subr.mxu0 0.0
        %945 = vmatpush1.xpose.msra.mxu0 0.0
        %946 = vmatprep.subr.mxu0 0.0
        %947 = vmatpush1.xpose.msra.mxu0 0.0
        %948 = vmatprep.subr.mxu0 0.0
        %949 = vmatpush1.xpose.msra.mxu0 0.0
        %950 = vmatprep.subr.mxu0 0.0
        %951 = vmatpush1.xpose.msra.mxu0 0.0
        %952 = vmatprep.subr.mxu0 0.0
        %953 = vmatpush1.xpose.msra.mxu0 0.0
        %954 = vmatprep.subr.mxu0 0.0
        %955 = vmatpush1.xpose.msra.mxu0 0.0
        %956 = vmatprep.subr.mxu0 0.0
        %957 = vmatpush1.xpose.msra.mxu0 0.0
        %958 = vmatprep.subr.mxu0 0.0
        %959 = vmatpush1.xpose.msra.mxu0 0.0
        %960 = vmatprep.subr.mxu0 0.0
        %961 = vmatpush1.xpose.msra.mxu0 0.0
        %962 = vmatprep.subr.mxu0 0.0
        %963 = vmatpush1.xpose.msra.mxu0 0.0
        %964 = vmatprep.subr.mxu0 0.0
        %965 = vmatpush1.xpose.msra.mxu0 0.0
        %966 = vmatprep.subr.mxu0 0.0
        %967 = vmatpush1.xpose.msra.mxu0 0.0
        %968 = vmatprep.subr.mxu0 0.0
        %969 = vmatpush1.xpose.msra.mxu0 0.0
        %970 = vmatprep.subr.mxu0 0.0
        %971 = vmatpush1.xpose.msra.mxu0 0.0
        %972 = vmatprep.subr.mxu0 0.0
        %973 = vmatpush1.xpose.msra.mxu0 0.0
        %974 = vmatprep.subr.mxu0 0.0
        %975 = vmatpush1.xpose.msra.mxu0 0.0
        %976 = vmatprep.subr.mxu0 0.0
        %977 = vmatpush1.xpose.msra.mxu0 0.0
        %978 = vmatprep.mubr.f32.mxu0 0.0
        %v979 = vand.u32 %v809, 4294901760
        %980 = vmatmul.mubr.f32.gmra.mrb[0].mxu0 %v979
        %v981 = vpop.f32.mrb[0].mxu0
        %v982 = vadd.f32 %v891, %v981
        %v983 = vpop.f32.mrb[0].mxu0
        %984 = vmatprep.mubr.f32.mxu0 0.0
        %v985 = vand.u32 %v811, 4294901760
        %986 = vmatmul.mubr.f32.gmra.mrb[0].mxu0 %v985
        %v987 = vpop.f32.mrb[0].mxu0
        %v988 = vadd.f32 %v901, %v987
        %v989 = vpop.f32.mrb[0].mxu0
        %990 = vdwg.mxu0
        %991 = vmatprep.subr.mxu0 0.0
        %v992 = vand.u32 %v813, 4294901760
        %v993 = vsub.f32 %v813, %v992
        %994 = vmatpush1.xpose.msra.mxu0 %v993
        %995 = vmatprep.subr.mxu0 0.0
        %v996 = vand.u32 %v815, 4294901760
        %v997 = vsub.f32 %v815, %v996
        %998 = vmatpush1.xpose.msra.mxu0 %v997
        %999 = vmatprep.subr.mxu0 0.0
        %1000 = vmatpush1.xpose.msra.mxu0 0.0
        %1001 = vmatprep.subr.mxu0 0.0
        %1002 = vmatpush1.xpose.msra.mxu0 0.0
        %1003 = vmatprep.subr.mxu0 0.0
        %1004 = vmatpush1.xpose.msra.mxu0 0.0
        %1005 = vmatprep.subr.mxu0 0.0
        %1006 = vmatpush1.xpose.msra.mxu0 0.0
        %1007 = vmatprep.subr.mxu0 0.0
        %1008 = vmatpush1.xpose.msra.mxu0 0.0
        %1009 = vmatprep.subr.mxu0 0.0
        %1010 = vmatpush1.xpose.msra.mxu0 0.0
        %1011 = vmatprep.subr.mxu0 0.0
        %1012 = vmatpush1.xpose.msra.mxu0 0.0
        %1013 = vmatprep.subr.mxu0 0.0
        %1014 = vmatpush1.xpose.msra.mxu0 0.0
        %1015 = vmatprep.subr.mxu0 0.0
        %1016 = vmatpush1.xpose.msra.mxu0 0.0
        %1017 = vmatprep.subr.mxu0 0.0
        %1018 = vmatpush1.xpose.msra.mxu0 0.0
        %1019 = vmatprep.subr.mxu0 0.0
        %1020 = vmatpush1.xpose.msra.mxu0 0.0
        %1021 = vmatprep.subr.mxu0 0.0
        %1022 = vmatpush1.xpose.msra.mxu0 0.0
        %1023 = vmatprep.subr.mxu0 0.0
        %1024 = vmatpush1.xpose.msra.mxu0 0.0
        %1025 = vmatprep.subr.mxu0 0.0
        %1026 = vmatpush1.xpose.msra.mxu0 0.0
        %1027 = vmatprep.subr.mxu0 0.0
        %1028 = vmatpush1.xpose.msra.mxu0 0.0
        %1029 = vmatprep.subr.mxu0 0.0
        %1030 = vmatpush1.xpose.msra.mxu0 0.0
        %1031 = vmatprep.subr.mxu0 0.0
        %1032 = vmatpush1.xpose.msra.mxu0 0.0
        %1033 = vmatprep.subr.mxu0 0.0
        %1034 = vmatpush1.xpose.msra.mxu0 0.0
        %1035 = vmatprep.subr.mxu0 0.0
        %1036 = vmatpush1.xpose.msra.mxu0 0.0
        %1037 = vmatprep.subr.mxu0 0.0
        %1038 = vmatpush1.xpose.msra.mxu0 0.0
        %1039 = vmatprep.subr.mxu0 0.0
        %1040 = vmatpush1.xpose.msra.mxu0 0.0
        %1041 = vmatprep.subr.mxu0 0.0
        %1042 = vmatpush1.xpose.msra.mxu0 0.0
        %1043 = vmatprep.subr.mxu0 0.0
        %1044 = vmatpush1.xpose.msra.mxu0 0.0
        %1045 = vmatprep.subr.mxu0 0.0
        %1046 = vmatpush1.xpose.msra.mxu0 0.0
        %1047 = vmatprep.subr.mxu0 0.0
        %1048 = vmatpush1.xpose.msra.mxu0 0.0
        %1049 = vmatprep.subr.mxu0 0.0
        %1050 = vmatpush1.xpose.msra.mxu0 0.0
        %1051 = vmatprep.subr.mxu0 0.0
        %1052 = vmatpush1.xpose.msra.mxu0 0.0
        %1053 = vmatprep.subr.mxu0 0.0
        %1054 = vmatpush1.xpose.msra.mxu0 0.0
        %1055 = vmatprep.subr.mxu0 0.0
        %1056 = vmatpush1.xpose.msra.mxu0 0.0
        %1057 = vmatprep.subr.mxu0 0.0
        %1058 = vmatpush1.xpose.msra.mxu0 0.0
        %1059 = vmatprep.mubr.f32.mxu0 0.0
        %v1060 = vand.u32 %v809, 4294901760
        %v1061 = vsub.f32 %v809, %v1060
        %1062 = vmatmul.mubr.f32.gmra.mrb[0].mxu0 %v1061
        %v1063 = vpop.f32.mrb[0].mxu0
        %v1064 = vadd.f32 %v982, %v1063
        %v1065 = vpop.f32.mrb[0].mxu0
        %1066 = vmatprep.mubr.f32.mxu0 0.0
        %v1067 = vand.u32 %v811, 4294901760
        %v1068 = vsub.f32 %v811, %v1067
        %1069 = vmatmul.mubr.f32.gmra.mrb[0].mxu0 %v1068
        %v1070 = vpop.f32.mrb[0].mxu0
        %v1071 = vadd.f32 %v988, %v1070
        %v1072 = vpop.f32.mrb[0].mxu0
        %1073 = vdwg.mxu0
        %1074 = vmatprep.subr.mxu0 0.0
        %v1075 = vand.u32 %v813, 4294901760
        %1076 = vmatpush1.xpose.msra.mxu0 %v1075
        %1077 = vmatprep.subr.mxu0 0.0
        %v1078 = vand.u32 %v815, 4294901760
        %1079 = vmatpush1.xpose.msra.mxu0 %v1078
        %1080 = vmatprep.subr.mxu0 0.0
        %1081 = vmatpush1.xpose.msra.mxu0 0.0
        %1082 = vmatprep.subr.mxu0 0.0
        %1083 = vmatpush1.xpose.msra.mxu0 0.0
        %1084 = vmatprep.subr.mxu0 0.0
        %1085 = vmatpush1.xpose.msra.mxu0 0.0
        %1086 = vmatprep.subr.mxu0 0.0
        %1087 = vmatpush1.xpose.msra.mxu0 0.0
        %1088 = vmatprep.subr.mxu0 0.0
        %1089 = vmatpush1.xpose.msra.mxu0 0.0
        %1090 = vmatprep.subr.mxu0 0.0
        %1091 = vmatpush1.xpose.msra.mxu0 0.0
        %1092 = vmatprep.subr.mxu0 0.0
        %1093 = vmatpush1.xpose.msra.mxu0 0.0
        %1094 = vmatprep.subr.mxu0 0.0
        %1095 = vmatpush1.xpose.msra.mxu0 0.0
        %1096 = vmatprep.subr.mxu0 0.0
        %1097 = vmatpush1.xpose.msra.mxu0 0.0
        %1098 = vmatprep.subr.mxu0 0.0
        %1099 = vmatpush1.xpose.msra.mxu0 0.0
        %1100 = vmatprep.subr.mxu0 0.0
        %1101 = vmatpush1.xpose.msra.mxu0 0.0
        %1102 = vmatprep.subr.mxu0 0.0
        %1103 = vmatpush1.xpose.msra.mxu0 0.0
        %1104 = vmatprep.subr.mxu0 0.0
        %1105 = vmatpush1.xpose.msra.mxu0 0.0
        %1106 = vmatprep.subr.mxu0 0.0
        %1107 = vmatpush1.xpose.msra.mxu0 0.0
        %1108 = vmatprep.subr.mxu0 0.0
        %1109 = vmatpush1.xpose.msra.mxu0 0.0
        %1110 = vmatprep.subr.mxu0 0.0
        %1111 = vmatpush1.xpose.msra.mxu0 0.0
        %1112 = vmatprep.subr.mxu0 0.0
        %1113 = vmatpush1.xpose.msra.mxu0 0.0
        %1114 = vmatprep.subr.mxu0 0.0
        %1115 = vmatpush1.xpose.msra.mxu0 0.0
        %1116 = vmatprep.subr.mxu0 0.0
        %1117 = vmatpush1.xpose.msra.mxu0 0.0
        %1118 = vmatprep.subr.mxu0 0.0
        %1119 = vmatpush1.xpose.msra.mxu0 0.0
        %1120 = vmatprep.subr.mxu0 0.0
        %1121 = vmatpush1.xpose.msra.mxu0 0.0
        %1122 = vmatprep.subr.mxu0 0.0
        %1123 = vmatpush1.xpose.msra.mxu0 0.0
        %1124 = vmatprep.subr.mxu0 0.0
        %1125 = vmatpush1.xpose.msra.mxu0 0.0
        %1126 = vmatprep.subr.mxu0 0.0
        %1127 = vmatpush1.xpose.msra.mxu0 0.0
        %1128 = vmatprep.subr.mxu0 0.0
        %1129 = vmatpush1.xpose.msra.mxu0 0.0
        %1130 = vmatprep.subr.mxu0 0.0
        %1131 = vmatpush1.xpose.msra.mxu0 0.0
        %1132 = vmatprep.subr.mxu0 0.0
        %1133 = vmatpush1.xpose.msra.mxu0 0.0
        %1134 = vmatprep.subr.mxu0 0.0
        %1135 = vmatpush1.xpose.msra.mxu0 0.0
        %1136 = vmatprep.subr.mxu0 0.0
        %1137 = vmatpush1.xpose.msra.mxu0 0.0
        %1138 = vmatprep.subr.mxu0 0.0
        %1139 = vmatpush1.xpose.msra.mxu0 0.0
        %1140 = vmatprep.mubr.f32.mxu0 0.0
        %v1141 = vand.u32 %v809, 4294901760
        %v1142 = vsub.f32 %v809, %v1141
        %v1143 = vand.u32 %v1142, 4294901760
        %1144 = vmatmul.mubr.f32.gmra.mrb[0].mxu0 %v1143
        %v1145 = vpop.f32.mrb[0].mxu0
        %v1146 = vadd.f32 %v1064, %v1145
        %v1147 = vpop.f32.mrb[0].mxu0
        %1148 = vmatprep.mubr.f32.mxu0 0.0
        %v1149 = vand.u32 %v811, 4294901760
        %v1150 = vsub.f32 %v811, %v1149
        %v1151 = vand.u32 %v1150, 4294901760
        %1152 = vmatmul.mubr.f32.gmra.mrb[0].mxu0 %v1151
        %v1153 = vpop.f32.mrb[0].mxu0
        %v1154 = vadd.f32 %v1071, %v1153
        %v1155 = vpop.f32.mrb[0].mxu0
        %1156 = vdwg.mxu0
        %1157 = vmatprep.subr.mxu0 0.0
        %v1158 = vand.u32 %v813, 4294901760
        %v1159 = vsub.f32 %v813, %v1158
        %v1160 = vand.u32 %v1159, 4294901760
        %1161 = vmatpush1.xpose.msra.mxu0 %v1160
        %1162 = vmatprep.subr.mxu0 0.0
        %v1163 = vand.u32 %v815, 4294901760
        %v1164 = vsub.f32 %v815, %v1163
        %v1165 = vand.u32 %v1164, 4294901760
        %1166 = vmatpush1.xpose.msra.mxu0 %v1165
        %1167 = vmatprep.subr.mxu0 0.0
        %1168 = vmatpush1.xpose.msra.mxu0 0.0
        %1169 = vmatprep.subr.mxu0 0.0
        %1170 = vmatpush1.xpose.msra.mxu0 0.0
        %1171 = vmatprep.subr.mxu0 0.0
        %1172 = vmatpush1.xpose.msra.mxu0 0.0
        %1173 = vmatprep.subr.mxu0 0.0
        %1174 = vmatpush1.xpose.msra.mxu0 0.0
        %1175 = vmatprep.subr.mxu0 0.0
        %1176 = vmatpush1.xpose.msra.mxu0 0.0
        %1177 = vmatprep.subr.mxu0 0.0
        %1178 = vmatpush1.xpose.msra.mxu0 0.0
        %1179 = vmatprep.subr.mxu0 0.0
        %1180 = vmatpush1.xpose.msra.mxu0 0.0
        %1181 = vmatprep.subr.mxu0 0.0
        %1182 = vmatpush1.xpose.msra.mxu0 0.0
        %1183 = vmatprep.subr.mxu0 0.0
        %1184 = vmatpush1.xpose.msra.mxu0 0.0
        %1185 = vmatprep.subr.mxu0 0.0
        %1186 = vmatpush1.xpose.msra.mxu0 0.0
        %1187 = vmatprep.subr.mxu0 0.0
        %1188 = vmatpush1.xpose.msra.mxu0 0.0
        %1189 = vmatprep.subr.mxu0 0.0
        %1190 = vmatpush1.xpose.msra.mxu0 0.0
        %1191 = vmatprep.subr.mxu0 0.0
        %1192 = vmatpush1.xpose.msra.mxu0 0.0
        %1193 = vmatprep.subr.mxu0 0.0
        %1194 = vmatpush1.xpose.msra.mxu0 0.0
        %1195 = vmatprep.subr.mxu0 0.0
        %1196 = vmatpush1.xpose.msra.mxu0 0.0
        %1197 = vmatprep.subr.mxu0 0.0
        %1198 = vmatpush1.xpose.msra.mxu0 0.0
        %1199 = vmatprep.subr.mxu0 0.0
        %1200 = vmatpush1.xpose.msra.mxu0 0.0
        %1201 = vmatprep.subr.mxu0 0.0
        %1202 = vmatpush1.xpose.msra.mxu0 0.0
        %1203 = vmatprep.subr.mxu0 0.0
        %1204 = vmatpush1.xpose.msra.mxu0 0.0
        %1205 = vmatprep.subr.mxu0 0.0
        %1206 = vmatpush1.xpose.msra.mxu0 0.0
        %1207 = vmatprep.subr.mxu0 0.0
        %1208 = vmatpush1.xpose.msra.mxu0 0.0
        %1209 = vmatprep.subr.mxu0 0.0
        %1210 = vmatpush1.xpose.msra.mxu0 0.0
        %1211 = vmatprep.subr.mxu0 0.0
        %1212 = vmatpush1.xpose.msra.mxu0 0.0
        %1213 = vmatprep.subr.mxu0 0.0
        %1214 = vmatpush1.xpose.msra.mxu0 0.0
        %1215 = vmatprep.subr.mxu0 0.0
        %1216 = vmatpush1.xpose.msra.mxu0 0.0
        %1217 = vmatprep.subr.mxu0 0.0
        %1218 = vmatpush1.xpose.msra.mxu0 0.0
        %1219 = vmatprep.subr.mxu0 0.0
        %1220 = vmatpush1.xpose.msra.mxu0 0.0
        %1221 = vmatprep.subr.mxu0 0.0
        %1222 = vmatpush1.xpose.msra.mxu0 0.0
        %1223 = vmatprep.subr.mxu0 0.0
        %1224 = vmatpush1.xpose.msra.mxu0 0.0
        %1225 = vmatprep.subr.mxu0 0.0
        %1226 = vmatpush1.xpose.msra.mxu0 0.0
        %1227 = vmatprep.mubr.f32.mxu0 0.0
        %v1228 = vand.u32 %v809, 4294901760
        %1229 = vmatmul.mubr.f32.gmra.mrb[0].mxu0 %v1228
        %v1230 = vpop.f32.mrb[0].mxu0
        %v1231 = vadd.f32 %v1146, %v1230
        %v1232 = vpop.f32.mrb[0].mxu0
        %1233 = vmatprep.mubr.f32.mxu0 0.0
        %v1234 = vand.u32 %v811, 4294901760
        %1235 = vmatmul.mubr.f32.gmra.mrb[0].mxu0 %v1234
        %v1236 = vpop.f32.mrb[0].mxu0
        %v1237 = vadd.f32 %v1154, %v1236
        %v1238 = vpop.f32.mrb[0].mxu0
        %1239 = vdwg.mxu0
        %1240 = vmatprep.subr.mxu0 0.0
        %v1241 = vand.u32 %v813, 4294901760
        %1242 = vmatpush1.xpose.msra.mxu0 %v1241
        %1243 = vmatprep.subr.mxu0 0.0
        %v1244 = vand.u32 %v815, 4294901760
        %1245 = vmatpush1.xpose.msra.mxu0 %v1244
        %1246 = vmatprep.subr.mxu0 0.0
        %1247 = vmatpush1.xpose.msra.mxu0 0.0
        %1248 = vmatprep.subr.mxu0 0.0
        %1249 = vmatpush1.xpose.msra.mxu0 0.0
        %1250 = vmatprep.subr.mxu0 0.0
        %1251 = vmatpush1.xpose.msra.mxu0 0.0
        %1252 = vmatprep.subr.mxu0 0.0
        %1253 = vmatpush1.xpose.msra.mxu0 0.0
        %1254 = vmatprep.subr.mxu0 0.0
        %1255 = vmatpush1.xpose.msra.mxu0 0.0
        %1256 = vmatprep.subr.mxu0 0.0
        %1257 = vmatpush1.xpose.msra.mxu0 0.0
        %1258 = vmatprep.subr.mxu0 0.0
        %1259 = vmatpush1.xpose.msra.mxu0 0.0
        %1260 = vmatprep.subr.mxu0 0.0
        %1261 = vmatpush1.xpose.msra.mxu0 0.0
        %1262 = vmatprep.subr.mxu0 0.0
        %1263 = vmatpush1.xpose.msra.mxu0 0.0
        %1264 = vmatprep.subr.mxu0 0.0
        %1265 = vmatpush1.xpose.msra.mxu0 0.0
        %1266 = vmatprep.subr.mxu0 0.0
        %1267 = vmatpush1.xpose.msra.mxu0 0.0
        %1268 = vmatprep.subr.mxu0 0.0
        %1269 = vmatpush1.xpose.msra.mxu0 0.0
        %1270 = vmatprep.subr.mxu0 0.0
        %1271 = vmatpush1.xpose.msra.mxu0 0.0
        %1272 = vmatprep.subr.mxu0 0.0
        %1273 = vmatpush1.xpose.msra.mxu0 0.0
        %1274 = vmatprep.subr.mxu0 0.0
        %1275 = vmatpush1.xpose.msra.mxu0 0.0
        %1276 = vmatprep.subr.mxu0 0.0
        %1277 = vmatpush1.xpose.msra.mxu0 0.0
        %1278 = vmatprep.subr.mxu0 0.0
        %1279 = vmatpush1.xpose.msra.mxu0 0.0
        %1280 = vmatprep.subr.mxu0 0.0
        %1281 = vmatpush1.xpose.msra.mxu0 0.0
        %1282 = vmatprep.subr.mxu0 0.0
        %1283 = vmatpush1.xpose.msra.mxu0 0.0
        %1284 = vmatprep.subr.mxu0 0.0
        %1285 = vmatpush1.xpose.msra.mxu0 0.0
        %1286 = vmatprep.subr.mxu0 0.0
        %1287 = vmatpush1.xpose.msra.mxu0 0.0
        %1288 = vmatprep.subr.mxu0 0.0
        %1289 = vmatpush1.xpose.msra.mxu0 0.0
        %1290 = vmatprep.subr.mxu0 0.0
        %1291 = vmatpush1.xpose.msra.mxu0 0.0
        %1292 = vmatprep.subr.mxu0 0.0
        %1293 = vmatpush1.xpose.msra.mxu0 0.0
        %1294 = vmatprep.subr.mxu0 0.0
        %1295 = vmatpush1.xpose.msra.mxu0 0.0
        %1296 = vmatprep.subr.mxu0 0.0
        %1297 = vmatpush1.xpose.msra.mxu0 0.0
        %1298 = vmatprep.subr.mxu0 0.0
        %1299 = vmatpush1.xpose.msra.mxu0 0.0
        %1300 = vmatprep.subr.mxu0 0.0
        %1301 = vmatpush1.xpose.msra.mxu0 0.0
        %1302 = vmatprep.subr.mxu0 0.0
        %1303 = vmatpush1.xpose.msra.mxu0 0.0
        %1304 = vmatprep.subr.mxu0 0.0
        %1305 = vmatpush1.xpose.msra.mxu0 0.0
        %1306 = vmatprep.mubr.f32.mxu0 0.0
        %v1307 = vand.u32 %v809, 4294901760
        %1308 = vmatmul.mubr.f32.gmra.mrb[0].mxu0 %v1307
        %v1309 = vpop.f32.mrb[0].mxu0
        %v1310 = vadd.f32 %v1231, %v1309
        %v1311 = vpop.f32.mrb[0].mxu0
        %1312 = vmatprep.mubr.f32.mxu0 0.0
        %v1313 = vand.u32 %v811, 4294901760
        %1314 = vmatmul.mubr.f32.gmra.mrb[0].mxu0 %v1313
        %v1315 = vpop.f32.mrb[0].mxu0
        %v1316 = vadd.f32 %v1237, %v1315
        %v1317 = vpop.f32.mrb[0].mxu0
        %1318 = vdwg.mxu0
        %vm1319 = vcmask 130048
        %v1320 = vsel %vm1319, %v1310, -inf
        %1321 = vmax.xlane.f32.xlu0 %v1320
        %v1322 = vpop.xlane.xlu0 %1321
        %v1323 = vsel %vm1319, %v1316, -inf
        %1324 = vmax.xlane.f32.xlu0 %v1323
        %v1325 = vpop.xlane.xlu0 %1324
        %v1326 = vsub.f32 %v1310, %v1322
        %v1327 = vsub.f32 %v1316, %v1325
        %v1328 = vmul.f32 %v1326, 1.442695
        %v1329 = vpow.pop %v1328
        %v1330 = vmul.f32 %v1327, 1.442695
        %v1331 = vpow.pop %v1330
        %v1332 = vsel %vm1319, %v1329, 0.0
        %1333 = vadd.xlane.f32.xlu0 %v1332
        %v1334 = vpop.xlane.xlu0 %1333
        %v1335 = vsel %vm1319, %v1331, 0.0
        %1336 = vadd.xlane.f32.xlu0 %v1335
        %v1337 = vpop.xlane.xlu0 %1336
        %v1338 = vrcp.pop %v1334
        %v1339 = vrcp.pop %v1337
        %v1340 = vmul.f32 %v1329, %v1338
        %v1341 = vmul.f32 %v1331, %v1339
        %1342 = vrot.lane.b32.xlu0 %v788, 64
        %v1343 = vpop.permute.xlu0 %1342
        %1344 = vrot.lane.b32.xlu0 %v794, 64
        %v1345 = vpop.permute.xlu0 %1344
        %v1349 = vsel %vm1319, %v1340, 0
        %v1352 = vsel %vm1319, %v1341, 0
        %1354 = vmatprep.subr.mxu0 0.0
        %v1355 = vand.u32 %v1343, 4294901760
        %1356 = vmatpush1.msra.mxu0 %v1355
        %1357 = vmatprep.subr.mxu0 0.0
        %v1358 = vand.u32 %v1345, 4294901760
        %1359 = vmatpush1.msra.mxu0 %v1358
        %1360 = vmatprep.subr.mxu0 0.0
        %1361 = vmatpush1.msra.mxu0 0.0
        %1362 = vmatprep.subr.mxu0 0.0
        %1363 = vmatpush1.msra.mxu0 0.0
        %1364 = vmatprep.subr.mxu0 0.0
        %1365 = vmatpush1.msra.mxu0 0.0
        %1366 = vmatprep.subr.mxu0 0.0
        %1367 = vmatpush1.msra.mxu0 0.0
        %1368 = vmatprep.subr.mxu0 0.0
        %1369 = vmatpush1.msra.mxu0 0.0
        %1370 = vmatprep.subr.mxu0 0.0
        %1371 = vmatpush1.msra.mxu0 0.0
        %1372 = vmatprep.subr.mxu0 0.0
        %1373 = vmatpush1.msra.mxu0 0.0
        %1374 = vmatprep.subr.mxu0 0.0
        %1375 = vmatpush1.msra.mxu0 0.0
        %1376 = vmatprep.subr.mxu0 0.0
        %1377 = vmatpush1.msra.mxu0 0.0
        %1378 = vmatprep.subr.mxu0 0.0
        %1379 = vmatpush1.msra.mxu0 0.0
        %1380 = vmatprep.subr.mxu0 0.0
        %1381 = vmatpush1.msra.mxu0 0.0
        %1382 = vmatprep.subr.mxu0 0.0
        %1383 = vmatpush1.msra.mxu0 0.0
        %1384 = vmatprep.subr.mxu0 0.0
        %1385 = vmatpush1.msra.mxu0 0.0
        %1386 = vmatprep.subr.mxu0 0.0
        %1387 = vmatpush1.msra.mxu0 0.0
        %1388 = vmatprep.subr.mxu0 0.0
        %1389 = vmatpush1.msra.mxu0 0.0
        %1390 = vmatprep.subr.mxu0 0.0
        %1391 = vmatpush1.msra.mxu0 0.0
        %1392 = vmatprep.subr.mxu0 0.0
        %1393 = vmatpush1.msra.mxu0 0.0
        %1394 = vmatprep.subr.mxu0 0.0
        %1395 = vmatpush1.msra.mxu0 0.0
        %1396 = vmatprep.subr.mxu0 0.0
        %1397 = vmatpush1.msra.mxu0 0.0
        %1398 = vmatprep.subr.mxu0 0.0
        %1399 = vmatpush1.msra.mxu0 0.0
        %1400 = vmatprep.subr.mxu0 0.0
        %1401 = vmatpush1.msra.mxu0 0.0
        %1402 = vmatprep.subr.mxu0 0.0
        %1403 = vmatpush1.msra.mxu0 0.0
        %1404 = vmatprep.subr.mxu0 0.0
        %1405 = vmatpush1.msra.mxu0 0.0
        %1406 = vmatprep.subr.mxu0 0.0
        %1407 = vmatpush1.msra.mxu0 0.0
        %1408 = vmatprep.subr.mxu0 0.0
        %1409 = vmatpush1.msra.mxu0 0.0
        %1410 = vmatprep.subr.mxu0 0.0
        %1411 = vmatpush1.msra.mxu0 0.0
        %1412 = vmatprep.subr.mxu0 0.0
        %1413 = vmatpush1.msra.mxu0 0.0
        %1414 = vmatprep.subr.mxu0 0.0
        %1415 = vmatpush1.msra.mxu0 0.0
        %1416 = vmatprep.subr.mxu0 0.0
        %1417 = vmatpush1.msra.mxu0 0.0
        %1418 = vmatprep.subr.mxu0 0.0
        %1419 = vmatpush1.msra.mxu0 0.0
        %1420 = vmatprep.mubr.f32.mxu0 0.0
        %v1421 = vand.u32 %v1349, 4294901760
        %v1422 = vsub.f32 %v1349, %v1421
        %v1423 = vand.u32 %v1422, 4294901760
        %v1424 = vsub.f32 %v1422, %v1423
        %v1425 = vand.u32 %v1424, 4294901760
        %1426 = vmatmul.mubr.f32.gmra.mrb[0].mxu0 %v1425
        %v1427 = vpop.f32.mrb[0].mxu0
        %v1428 = vadd.f32 0.0, %v1427
        %v1429 = vpop.f32.mrb[0].mxu0
        %1430 = vmatprep.mubr.f32.mxu0 0.0
        %v1431 = vand.u32 %v1352, 4294901760
        %v1432 = vsub.f32 %v1352, %v1431
        %v1433 = vand.u32 %v1432, 4294901760
        %v1434 = vsub.f32 %v1432, %v1433
        %v1435 = vand.u32 %v1434, 4294901760
        %1436 = vmatmul.mubr.f32.gmra.mrb[0].mxu0 %v1435
        %v1437 = vpop.f32.mrb[0].mxu0
        %v1438 = vadd.f32 0.0, %v1437
        %v1439 = vpop.f32.mrb[0].mxu0
        %1440 = vdwg.mxu0
        %1441 = vmatprep.subr.mxu0 0.0
        %v1442 = vand.u32 %v1343, 4294901760
        %v1443 = vsub.f32 %v1343, %v1442
        %v1444 = vand.u32 %v1443, 4294901760
        %v1445 = vsub.f32 %v1443, %v1444
        %v1446 = vand.u32 %v1445, 4294901760
        %1447 = vmatpush1.msra.mxu0 %v1446
        %1448 = vmatprep.subr.mxu0 0.0
        %v1449 = vand.u32 %v1345, 4294901760
        %v1450 = vsub.f32 %v1345, %v1449
        %v1451 = vand.u32 %v1450, 4294901760
        %v1452 = vsub.f32 %v1450, %v1451
        %v1453 = vand.u32 %v1452, 4294901760
        %1454 = vmatpush1.msra.mxu0 %v1453
        %1455 = vmatprep.subr.mxu0 0.0
        %1456 = vmatpush1.msra.mxu0 0.0
        %1457 = vmatprep.subr.mxu0 0.0
        %1458 = vmatpush1.msra.mxu0 0.0
        %1459 = vmatprep.subr.mxu0 0.0
        %1460 = vmatpush1.msra.mxu0 0.0
        %1461 = vmatprep.subr.mxu0 0.0
        %1462 = vmatpush1.msra.mxu0 0.0
        %1463 = vmatprep.subr.mxu0 0.0
        %1464 = vmatpush1.msra.mxu0 0.0
        %1465 = vmatprep.subr.mxu0 0.0
        %1466 = vmatpush1.msra.mxu0 0.0
        %1467 = vmatprep.subr.mxu0 0.0
        %1468 = vmatpush1.msra.mxu0 0.0
        %1469 = vmatprep.subr.mxu0 0.0
        %1470 = vmatpush1.msra.mxu0 0.0
        %1471 = vmatprep.subr.mxu0 0.0
        %1472 = vmatpush1.msra.mxu0 0.0
        %1473 = vmatprep.subr.mxu0 0.0
        %1474 = vmatpush1.msra.mxu0 0.0
        %1475 = vmatprep.subr.mxu0 0.0
        %1476 = vmatpush1.msra.mxu0 0.0
        %1477 = vmatprep.subr.mxu0 0.0
        %1478 = vmatpush1.msra.mxu0 0.0
        %1479 = vmatprep.subr.mxu0 0.0
        %1480 = vmatpush1.msra.mxu0 0.0
        %1481 = vmatprep.subr.mxu0 0.0
        %1482 = vmatpush1.msra.mxu0 0.0
        %1483 = vmatprep.subr.mxu0 0.0
        %1484 = vmatpush1.msra.mxu0 0.0
        %1485 = vmatprep.subr.mxu0 0.0
        %1486 = vmatpush1.msra.mxu0 0.0
        %1487 = vmatprep.subr.mxu0 0.0
        %1488 = vmatpush1.msra.mxu0 0.0
        %1489 = vmatprep.subr.mxu0 0.0
        %1490 = vmatpush1.msra.mxu0 0.0
        %1491 = vmatprep.subr.mxu0 0.0
        %1492 = vmatpush1.msra.mxu0 0.0
        %1493 = vmatprep.subr.mxu0 0.0
        %1494 = vmatpush1.msra.mxu0 0.0
        %1495 = vmatprep.subr.mxu0 0.0
        %1496 = vmatpush1.msra.mxu0 0.0
        %1497 = vmatprep.subr.mxu0 0.0
        %1498 = vmatpush1.msra.mxu0 0.0
        %1499 = vmatprep.subr.mxu0 0.0
        %1500 = vmatpush1.msra.mxu0 0.0
        %1501 = vmatprep.subr.mxu0 0.0
        %1502 = vmatpush1.msra.mxu0 0.0
        %1503 = vmatprep.subr.mxu0 0.0
        %1504 = vmatpush1.msra.mxu0 0.0
        %1505 = vmatprep.subr.mxu0 0.0
        %1506 = vmatpush1.msra.mxu0 0.0
        %1507 = vmatprep.subr.mxu0 0.0
        %1508 = vmatpush1.msra.mxu0 0.0
        %1509 = vmatprep.subr.mxu0 0.0
        %1510 = vmatpush1.msra.mxu0 0.0
        %1511 = vmatprep.subr.mxu0 0.0
        %1512 = vmatpush1.msra.mxu0 0.0
        %1513 = vmatprep.subr.mxu0 0.0
        %1514 = vmatpush1.msra.mxu0 0.0
        %1515 = vmatprep.mubr.f32.mxu0 0.0
        %v1516 = vand.u32 %v1349, 4294901760
        %1517 = vmatmul.mubr.f32.gmra.mrb[0].mxu0 %v1516
        %v1518 = vpop.f32.mrb[0].mxu0
        %v1519 = vadd.f32 %v1428, %v1518
        %v1520 = vpop.f32.mrb[0].mxu0
        %1521 = vmatprep.mubr.f32.mxu0 0.0
        %v1522 = vand.u32 %v1352, 4294901760
        %1523 = vmatmul.mubr.f32.gmra.mrb[0].mxu0 %v1522
        %v1524 = vpop.f32.mrb[0].mxu0
        %v1525 = vadd.f32 %v1438, %v1524
        %v1526 = vpop.f32.mrb[0].mxu0
        %1527 = vdwg.mxu0
        %1528 = vmatprep.subr.mxu0 0.0
        %v1529 = vand.u32 %v1343, 4294901760
        %v1530 = vsub.f32 %v1343, %v1529
        %1531 = vmatpush1.msra.mxu0 %v1530
        %1532 = vmatprep.subr.mxu0 0.0
        %v1533 = vand.u32 %v1345, 4294901760
        %v1534 = vsub.f32 %v1345, %v1533
        %1535 = vmatpush1.msra.mxu0 %v1534
        %1536 = vmatprep.subr.mxu0 0.0
        %1537 = vmatpush1.msra.mxu0 0.0
        %1538 = vmatprep.subr.mxu0 0.0
        %1539 = vmatpush1.msra.mxu0 0.0
        %1540 = vmatprep.subr.mxu0 0.0
        %1541 = vmatpush1.msra.mxu0 0.0
        %1542 = vmatprep.subr.mxu0 0.0
        %1543 = vmatpush1.msra.mxu0 0.0
        %1544 = vmatprep.subr.mxu0 0.0
        %1545 = vmatpush1.msra.mxu0 0.0
        %1546 = vmatprep.subr.mxu0 0.0
        %1547 = vmatpush1.msra.mxu0 0.0
        %1548 = vmatprep.subr.mxu0 0.0
        %1549 = vmatpush1.msra.mxu0 0.0
        %1550 = vmatprep.subr.mxu0 0.0
        %1551 = vmatpush1.msra.mxu0 0.0
        %1552 = vmatprep.subr.mxu0 0.0
        %1553 = vmatpush1.msra.mxu0 0.0
        %1554 = vmatprep.subr.mxu0 0.0
        %1555 = vmatpush1.msra.mxu0 0.0
        %1556 = vmatprep.subr.mxu0 0.0
        %1557 = vmatpush1.msra.mxu0 0.0
        %1558 = vmatprep.subr.mxu0 0.0
        %1559 = vmatpush1.msra.mxu0 0.0
        %1560 = vmatprep.subr.mxu0 0.0
        %1561 = vmatpush1.msra.mxu0 0.0
        %1562 = vmatprep.subr.mxu0 0.0
        %1563 = vmatpush1.msra.mxu0 0.0
        %1564 = vmatprep.subr.mxu0 0.0
        %1565 = vmatpush1.msra.mxu0 0.0
        %1566 = vmatprep.subr.mxu0 0.0
        %1567 = vmatpush1.msra.mxu0 0.0
        %1568 = vmatprep.subr.mxu0 0.0
        %1569 = vmatpush1.msra.mxu0 0.0
        %1570 = vmatprep.subr.mxu0 0.0
        %1571 = vmatpush1.msra.mxu0 0.0
        %1572 = vmatprep.subr.mxu0 0.0
        %1573 = vmatpush1.msra.mxu0 0.0
        %1574 = vmatprep.subr.mxu0 0.0
        %1575 = vmatpush1.msra.mxu0 0.0
        %1576 = vmatprep.subr.mxu0 0.0
        %1577 = vmatpush1.msra.mxu0 0.0
        %1578 = vmatprep.subr.mxu0 0.0
        %1579 = vmatpush1.msra.mxu0 0.0
        %1580 = vmatprep.subr.mxu0 0.0
        %1581 = vmatpush1.msra.mxu0 0.0
        %1582 = vmatprep.subr.mxu0 0.0
        %1583 = vmatpush1.msra.mxu0 0.0
        %1584 = vmatprep.subr.mxu0 0.0
        %1585 = vmatpush1.msra.mxu0 0.0
        %1586 = vmatprep.subr.mxu0 0.0
        %1587 = vmatpush1.msra.mxu0 0.0
        %1588 = vmatprep.subr.mxu0 0.0
        %1589 = vmatpush1.msra.mxu0 0.0
        %1590 = vmatprep.subr.mxu0 0.0
        %1591 = vmatpush1.msra.mxu0 0.0
        %1592 = vmatprep.subr.mxu0 0.0
        %1593 = vmatpush1.msra.mxu0 0.0
        %1594 = vmatprep.subr.mxu0 0.0
        %1595 = vmatpush1.msra.mxu0 0.0
        %1596 = vmatprep.mubr.f32.mxu0 0.0
        %v1597 = vand.u32 %v1349, 4294901760
        %v1598 = vsub.f32 %v1349, %v1597
        %1599 = vmatmul.mubr.f32.gmra.mrb[0].mxu0 %v1598
        %v1600 = vpop.f32.mrb[0].mxu0
        %v1601 = vadd.f32 %v1519, %v1600
        %v1602 = vpop.f32.mrb[0].mxu0
        %1603 = vmatprep.mubr.f32.mxu0 0.0
        %v1604 = vand.u32 %v1352, 4294901760
        %v1605 = vsub.f32 %v1352, %v1604
        %1606 = vmatmul.mubr.f32.gmra.mrb[0].mxu0 %v1605
        %v1607 = vpop.f32.mrb[0].mxu0
        %v1608 = vadd.f32 %v1525, %v1607
        %v1609 = vpop.f32.mrb[0].mxu0
        %1610 = vdwg.mxu0
        %1611 = vmatprep.subr.mxu0 0.0
        %v1612 = vand.u32 %v1343, 4294901760
        %1613 = vmatpush1.msra.mxu0 %v1612
        %1614 = vmatprep.subr.mxu0 0.0
        %v1615 = vand.u32 %v1345, 4294901760
        %1616 = vmatpush1.msra.mxu0 %v1615
        %1617 = vmatprep.subr.mxu0 0.0
        %1618 = vmatpush1.msra.mxu0 0.0
        %1619 = vmatprep.subr.mxu0 0.0
        %1620 = vmatpush1.msra.mxu0 0.0
        %1621 = vmatprep.subr.mxu0 0.0
        %1622 = vmatpush1.msra.mxu0 0.0
        %1623 = vmatprep.subr.mxu0 0.0
        %1624 = vmatpush1.msra.mxu0 0.0
        %1625 = vmatprep.subr.mxu0 0.0
        %1626 = vmatpush1.msra.mxu0 0.0
        %1627 = vmatprep.subr.mxu0 0.0
        %1628 = vmatpush1.msra.mxu0 0.0
        %1629 = vmatprep.subr.mxu0 0.0
        %1630 = vmatpush1.msra.mxu0 0.0
        %1631 = vmatprep.subr.mxu0 0.0
        %1632 = vmatpush1.msra.mxu0 0.0
        %1633 = vmatprep.subr.mxu0 0.0
        %1634 = vmatpush1.msra.mxu0 0.0
        %1635 = vmatprep.subr.mxu0 0.0
        %1636 = vmatpush1.msra.mxu0 0.0
        %1637 = vmatprep.subr.mxu0 0.0
        %1638 = vmatpush1.msra.mxu0 0.0
        %1639 = vmatprep.subr.mxu0 0.0
        %1640 = vmatpush1.msra.mxu0 0.0
        %1641 = vmatprep.subr.mxu0 0.0
        %1642 = vmatpush1.msra.mxu0 0.0
        %1643 = vmatprep.subr.mxu0 0.0
        %1644 = vmatpush1.msra.mxu0 0.0
        %1645 = vmatprep.subr.mxu0 0.0
        %1646 = vmatpush1.msra.mxu0 0.0
        %1647 = vmatprep.subr.mxu0 0.0
        %1648 = vmatpush1.msra.mxu0 0.0
        %1649 = vmatprep.subr.mxu0 0.0
        %1650 = vmatpush1.msra.mxu0 0.0
        %1651 = vmatprep.subr.mxu0 0.0
        %1652 = vmatpush1.msra.mxu0 0.0
        %1653 = vmatprep.subr.mxu0 0.0
        %1654 = vmatpush1.msra.mxu0 0.0
        %1655 = vmatprep.subr.mxu0 0.0
        %1656 = vmatpush1.msra.mxu0 0.0
        %1657 = vmatprep.subr.mxu0 0.0
        %1658 = vmatpush1.msra.mxu0 0.0
        %1659 = vmatprep.subr.mxu0 0.0
        %1660 = vmatpush1.msra.mxu0 0.0
        %1661 = vmatprep.subr.mxu0 0.0
        %1662 = vmatpush1.msra.mxu0 0.0
        %1663 = vmatprep.subr.mxu0 0.0
        %1664 = vmatpush1.msra.mxu0 0.0
        %1665 = vmatprep.subr.mxu0 0.0
        %1666 = vmatpush1.msra.mxu0 0.0
        %1667 = vmatprep.subr.mxu0 0.0
        %1668 = vmatpush1.msra.mxu0 0.0
        %1669 = vmatprep.subr.mxu0 0.0
        %1670 = vmatpush1.msra.mxu0 0.0
        %1671 = vmatprep.subr.mxu0 0.0
        %1672 = vmatpush1.msra.mxu0 0.0
        %1673 = vmatprep.subr.mxu0 0.0
        %1674 = vmatpush1.msra.mxu0 0.0
        %1675 = vmatprep.subr.mxu0 0.0
        %1676 = vmatpush1.msra.mxu0 0.0
        %1677 = vmatprep.mubr.f32.mxu0 0.0
        %v1678 = vand.u32 %v1349, 4294901760
        %v1679 = vsub.f32 %v1349, %v1678
        %v1680 = vand.u32 %v1679, 4294901760
        %1681 = vmatmul.mubr.f32.gmra.mrb[0].mxu0 %v1680
        %v1682 = vpop.f32.mrb[0].mxu0
        %v1683 = vadd.f32 %v1601, %v1682
        %v1684 = vpop.f32.mrb[0].mxu0
        %1685 = vmatprep.mubr.f32.mxu0 0.0
        %v1686 = vand.u32 %v1352, 4294901760
        %v1687 = vsub.f32 %v1352, %v1686
        %v1688 = vand.u32 %v1687, 4294901760
        %1689 = vmatmul.mubr.f32.gmra.mrb[0].mxu0 %v1688
        %v1690 = vpop.f32.mrb[0].mxu0
        %v1691 = vadd.f32 %v1608, %v1690
        %v1692 = vpop.f32.mrb[0].mxu0
        %1693 = vdwg.mxu0
        %1694 = vmatprep.subr.mxu0 0.0
        %v1695 = vand.u32 %v1343, 4294901760
        %v1696 = vsub.f32 %v1343, %v1695
        %v1697 = vand.u32 %v1696, 4294901760
        %1698 = vmatpush1.msra.mxu0 %v1697
        %1699 = vmatprep.subr.mxu0 0.0
        %v1700 = vand.u32 %v1345, 4294901760
        %v1701 = vsub.f32 %v1345, %v1700
        %v1702 = vand.u32 %v1701, 4294901760
        %1703 = vmatpush1.msra.mxu0 %v1702
        %1704 = vmatprep.subr.mxu0 0.0
        %1705 = vmatpush1.msra.mxu0 0.0
        %1706 = vmatprep.subr.mxu0 0.0
        %1707 = vmatpush1.msra.mxu0 0.0
        %1708 = vmatprep.subr.mxu0 0.0
        %1709 = vmatpush1.msra.mxu0 0.0
        %1710 = vmatprep.subr.mxu0 0.0
        %1711 = vmatpush1.msra.mxu0 0.0
        %1712 = vmatprep.subr.mxu0 0.0
        %1713 = vmatpush1.msra.mxu0 0.0
        %1714 = vmatprep.subr.mxu0 0.0
        %1715 = vmatpush1.msra.mxu0 0.0
        %1716 = vmatprep.subr.mxu0 0.0
        %1717 = vmatpush1.msra.mxu0 0.0
        %1718 = vmatprep.subr.mxu0 0.0
        %1719 = vmatpush1.msra.mxu0 0.0
        %1720 = vmatprep.subr.mxu0 0.0
        %1721 = vmatpush1.msra.mxu0 0.0
        %1722 = vmatprep.subr.mxu0 0.0
        %1723 = vmatpush1.msra.mxu0 0.0
        %1724 = vmatprep.subr.mxu0 0.0
        %1725 = vmatpush1.msra.mxu0 0.0
        %1726 = vmatprep.subr.mxu0 0.0
        %1727 = vmatpush1.msra.mxu0 0.0
        %1728 = vmatprep.subr.mxu0 0.0
        %1729 = vmatpush1.msra.mxu0 0.0
        %1730 = vmatprep.subr.mxu0 0.0
        %1731 = vmatpush1.msra.mxu0 0.0
        %1732 = vmatprep.subr.mxu0 0.0
        %1733 = vmatpush1.msra.mxu0 0.0
        %1734 = vmatprep.subr.mxu0 0.0
        %1735 = vmatpush1.msra.mxu0 0.0
        %1736 = vmatprep.subr.mxu0 0.0
        %1737 = vmatpush1.msra.mxu0 0.0
        %1738 = vmatprep.subr.mxu0 0.0
        %1739 = vmatpush1.msra.mxu0 0.0
        %1740 = vmatprep.subr.mxu0 0.0
        %1741 = vmatpush1.msra.mxu0 0.0
        %1742 = vmatprep.subr.mxu0 0.0
        %1743 = vmatpush1.msra.mxu0 0.0
        %1744 = vmatprep.subr.mxu0 0.0
        %1745 = vmatpush1.msra.mxu0 0.0
        %1746 = vmatprep.subr.mxu0 0.0
        %1747 = vmatpush1.msra.mxu0 0.0
        %1748 = vmatprep.subr.mxu0 0.0
        %1749 = vmatpush1.msra.mxu0 0.0
        %1750 = vmatprep.subr.mxu0 0.0
        %1751 = vmatpush1.msra.mxu0 0.0
        %1752 = vmatprep.subr.mxu0 0.0
        %1753 = vmatpush1.msra.mxu0 0.0
        %1754 = vmatprep.subr.mxu0 0.0
        %1755 = vmatpush1.msra.mxu0 0.0
        %1756 = vmatprep.subr.mxu0 0.0
        %1757 = vmatpush1.msra.mxu0 0.0
        %1758 = vmatprep.subr.mxu0 0.0
        %1759 = vmatpush1.msra.mxu0 0.0
        %1760 = vmatprep.subr.mxu0 0.0
        %1761 = vmatpush1.msra.mxu0 0.0
        %1762 = vmatprep.subr.mxu0 0.0
        %1763 = vmatpush1.msra.mxu0 0.0
        %1764 = vmatprep.mubr.f32.mxu0 0.0
        %v1765 = vand.u32 %v1349, 4294901760
        %1766 = vmatmul.mubr.f32.gmra.mrb[0].mxu0 %v1765
        %v1767 = vpop.f32.mrb[0].mxu0
        %v1768 = vadd.f32 %v1683, %v1767
        %v1769 = vpop.f32.mrb[0].mxu0
        %1770 = vmatprep.mubr.f32.mxu0 0.0
        %v1771 = vand.u32 %v1352, 4294901760
        %1772 = vmatmul.mubr.f32.gmra.mrb[0].mxu0 %v1771
        %v1773 = vpop.f32.mrb[0].mxu0
        %v1774 = vadd.f32 %v1691, %v1773
        %v1775 = vpop.f32.mrb[0].mxu0
        %1776 = vdwg.mxu0
        %1777 = vmatprep.subr.mxu0 0.0
        %v1778 = vand.u32 %v1343, 4294901760
        %1779 = vmatpush1.msra.mxu0 %v1778
        %1780 = vmatprep.subr.mxu0 0.0
        %v1781 = vand.u32 %v1345, 4294901760
        %1782 = vmatpush1.msra.mxu0 %v1781
        %1783 = vmatprep.subr.mxu0 0.0
        %1784 = vmatpush1.msra.mxu0 0.0
        %1785 = vmatprep.subr.mxu0 0.0
        %1786 = vmatpush1.msra.mxu0 0.0
        %1787 = vmatprep.subr.mxu0 0.0
        %1788 = vmatpush1.msra.mxu0 0.0
        %1789 = vmatprep.subr.mxu0 0.0
        %1790 = vmatpush1.msra.mxu0 0.0
        %1791 = vmatprep.subr.mxu0 0.0
        %1792 = vmatpush1.msra.mxu0 0.0
        %1793 = vmatprep.subr.mxu0 0.0
        %1794 = vmatpush1.msra.mxu0 0.0
        %1795 = vmatprep.subr.mxu0 0.0
        %1796 = vmatpush1.msra.mxu0 0.0
        %1797 = vmatprep.subr.mxu0 0.0
        %1798 = vmatpush1.msra.mxu0 0.0
        %1799 = vmatprep.subr.mxu0 0.0
        %1800 = vmatpush1.msra.mxu0 0.0
        %1801 = vmatprep.subr.mxu0 0.0
        %1802 = vmatpush1.msra.mxu0 0.0
        %1803 = vmatprep.subr.mxu0 0.0
        %1804 = vmatpush1.msra.mxu0 0.0
        %1805 = vmatprep.subr.mxu0 0.0
        %1806 = vmatpush1.msra.mxu0 0.0
        %1807 = vmatprep.subr.mxu0 0.0
        %1808 = vmatpush1.msra.mxu0 0.0
        %1809 = vmatprep.subr.mxu0 0.0
        %1810 = vmatpush1.msra.mxu0 0.0
        %1811 = vmatprep.subr.mxu0 0.0
        %1812 = vmatpush1.msra.mxu0 0.0
        %1813 = vmatprep.subr.mxu0 0.0
        %1814 = vmatpush1.msra.mxu0 0.0
        %1815 = vmatprep.subr.mxu0 0.0
        %1816 = vmatpush1.msra.mxu0 0.0
        %1817 = vmatprep.subr.mxu0 0.0
        %1818 = vmatpush1.msra.mxu0 0.0
        %1819 = vmatprep.subr.mxu0 0.0
        %1820 = vmatpush1.msra.mxu0 0.0
        %1821 = vmatprep.subr.mxu0 0.0
        %1822 = vmatpush1.msra.mxu0 0.0
        %1823 = vmatprep.subr.mxu0 0.0
        %1824 = vmatpush1.msra.mxu0 0.0
        %1825 = vmatprep.subr.mxu0 0.0
        %1826 = vmatpush1.msra.mxu0 0.0
        %1827 = vmatprep.subr.mxu0 0.0
        %1828 = vmatpush1.msra.mxu0 0.0
        %1829 = vmatprep.subr.mxu0 0.0
        %1830 = vmatpush1.msra.mxu0 0.0
        %1831 = vmatprep.subr.mxu0 0.0
        %1832 = vmatpush1.msra.mxu0 0.0
        %1833 = vmatprep.subr.mxu0 0.0
        %1834 = vmatpush1.msra.mxu0 0.0
        %1835 = vmatprep.subr.mxu0 0.0
        %1836 = vmatpush1.msra.mxu0 0.0
        %1837 = vmatprep.subr.mxu0 0.0
        %1838 = vmatpush1.msra.mxu0 0.0
        %1839 = vmatprep.subr.mxu0 0.0
        %1840 = vmatpush1.msra.mxu0 0.0
        %1841 = vmatprep.subr.mxu0 0.0
        %1842 = vmatpush1.msra.mxu0 0.0
        %1843 = vmatprep.mubr.f32.mxu0 0.0
        %v1844 = vand.u32 %v1349, 4294901760
        %1845 = vmatmul.mubr.f32.gmra.mrb[0].mxu0 %v1844
        %v1846 = vpop.f32.mrb[0].mxu0
        %v1847 = vadd.f32 %v1768, %v1846
        %v1848 = vpop.f32.mrb[0].mxu0
        %1849 = vmatprep.mubr.f32.mxu0 0.0
        %v1850 = vand.u32 %v1352, 4294901760
        %1851 = vmatmul.mubr.f32.gmra.mrb[0].mxu0 %v1850
        %v1852 = vpop.f32.mrb[0].mxu0
        %v1853 = vadd.f32 %v1774, %v1852
        %v1854 = vpop.f32.mrb[0].mxu0
        %1855 = vdwg.mxu0
        %v1857 = vsel %vm808, %v1847, 0
        %v1860 = vsel %vm808, %v1853, 0
        %1862 = vmatprep.subr.mxu0 0.0
        %v1863 = vand.u32 %v252, 4294901760
        %1864 = vmatpush1.msra.mxu0 %v1863
        %1865 = vmatprep.subr.mxu0 0.0
        %1866 = vmatpush1.msra.mxu0 0.0
        %1867 = vmatprep.subr.mxu0 0.0
        %1868 = vmatpush1.msra.mxu0 0.0
        %1869 = vmatprep.subr.mxu0 0.0
        %1870 = vmatpush1.msra.mxu0 0.0
        %1871 = vmatprep.subr.mxu0 0.0
        %1872 = vmatpush1.msra.mxu0 0.0
        %1873 = vmatprep.subr.mxu0 0.0
        %1874 = vmatpush1.msra.mxu0 0.0
        %1875 = vmatprep.subr.mxu0 0.0
        %1876 = vmatpush1.msra.mxu0 0.0
        %1877 = vmatprep.subr.mxu0 0.0
        %1878 = vmatpush1.msra.mxu0 0.0
        %1879 = vmatprep.subr.mxu0 0.0
        %1880 = vmatpush1.msra.mxu0 0.0
        %1881 = vmatprep.subr.mxu0 0.0
        %1882 = vmatpush1.msra.mxu0 0.0
        %1883 = vmatprep.subr.mxu0 0.0
        %1884 = vmatpush1.msra.mxu0 0.0
        %1885 = vmatprep.subr.mxu0 0.0
        %1886 = vmatpush1.msra.mxu0 0.0
        %1887 = vmatprep.subr.mxu0 0.0
        %1888 = vmatpush1.msra.mxu0 0.0
        %1889 = vmatprep.subr.mxu0 0.0
        %1890 = vmatpush1.msra.mxu0 0.0
        %1891 = vmatprep.subr.mxu0 0.0
        %1892 = vmatpush1.msra.mxu0 0.0
        %1893 = vmatprep.subr.mxu0 0.0
        %1894 = vmatpush1.msra.mxu0 0.0
        %1895 = vmatprep.subr.mxu0 0.0
        %1896 = vmatpush1.msra.mxu0 0.0
        %1897 = vmatprep.subr.mxu0 0.0
        %1898 = vmatpush1.msra.mxu0 0.0
        %1899 = vmatprep.subr.mxu0 0.0
        %1900 = vmatpush1.msra.mxu0 0.0
        %1901 = vmatprep.subr.mxu0 0.0
        %1902 = vmatpush1.msra.mxu0 0.0
        %1903 = vmatprep.subr.mxu0 0.0
        %1904 = vmatpush1.msra.mxu0 0.0
        %1905 = vmatprep.subr.mxu0 0.0
        %1906 = vmatpush1.msra.mxu0 0.0
        %1907 = vmatprep.subr.mxu0 0.0
        %1908 = vmatpush1.msra.mxu0 0.0
        %1909 = vmatprep.subr.mxu0 0.0
        %1910 = vmatpush1.msra.mxu0 0.0
        %1911 = vmatprep.subr.mxu0 0.0
        %1912 = vmatpush1.msra.mxu0 0.0
        %1913 = vmatprep.subr.mxu0 0.0
        %1914 = vmatpush1.msra.mxu0 0.0
        %1915 = vmatprep.subr.mxu0 0.0
        %1916 = vmatpush1.msra.mxu0 0.0
        %1917 = vmatprep.subr.mxu0 0.0
        %1918 = vmatpush1.msra.mxu0 0.0
        %1919 = vmatprep.subr.mxu0 0.0
        %1920 = vmatpush1.msra.mxu0 0.0
        %1921 = vmatprep.subr.mxu0 0.0
        %1922 = vmatpush1.msra.mxu0 0.0
        %1923 = vmatprep.subr.mxu0 0.0
        %1924 = vmatpush1.msra.mxu0 0.0
        %1925 = vmatprep.subr.mxu0 0.0
        %1926 = vmatpush1.msra.mxu0 0.0
        %1927 = vmatprep.mubr.f32.mxu0 0.0
        %v1928 = vand.u32 %v1857, 4294901760
        %v1929 = vsub.f32 %v1857, %v1928
        %v1930 = vand.u32 %v1929, 4294901760
        %v1931 = vsub.f32 %v1929, %v1930
        %v1932 = vand.u32 %v1931, 4294901760
        %1933 = vmatmul.mubr.f32.gmra.mrb[0].mxu0 %v1932
        %v1934 = vpop.f32.mrb[0].mxu0
        %v1935 = vadd.f32 0.0, %v1934
        %v1936 = vpop.f32.mrb[0].mxu0
        %1937 = vmatprep.mubr.f32.mxu0 0.0
        %v1938 = vand.u32 %v1860, 4294901760
        %v1939 = vsub.f32 %v1860, %v1938
        %v1940 = vand.u32 %v1939, 4294901760
        %v1941 = vsub.f32 %v1939, %v1940
        %v1942 = vand.u32 %v1941, 4294901760
        %1943 = vmatmul.mubr.f32.gmra.mrb[0].mxu0 %v1942
        %v1944 = vpop.f32.mrb[0].mxu0
        %v1945 = vadd.f32 0.0, %v1944
        %v1946 = vpop.f32.mrb[0].mxu0
        %1947 = vdwg.mxu0
        %1948 = vmatprep.subr.mxu0 0.0
        %v1949 = vand.u32 %v252, 4294901760
        %v1950 = vsub.f32 %v252, %v1949
        %v1951 = vand.u32 %v1950, 4294901760
        %v1952 = vsub.f32 %v1950, %v1951
        %v1953 = vand.u32 %v1952, 4294901760
        %1954 = vmatpush1.msra.mxu0 %v1953
        %1955 = vmatprep.subr.mxu0 0.0
        %1956 = vmatpush1.msra.mxu0 0.0
        %1957 = vmatprep.subr.mxu0 0.0
        %1958 = vmatpush1.msra.mxu0 0.0
        %1959 = vmatprep.subr.mxu0 0.0
        %1960 = vmatpush1.msra.mxu0 0.0
        %1961 = vmatprep.subr.mxu0 0.0
        %1962 = vmatpush1.msra.mxu0 0.0
        %1963 = vmatprep.subr.mxu0 0.0
        %1964 = vmatpush1.msra.mxu0 0.0
        %1965 = vmatprep.subr.mxu0 0.0
        %1966 = vmatpush1.msra.mxu0 0.0
        %1967 = vmatprep.subr.mxu0 0.0
        %1968 = vmatpush1.msra.mxu0 0.0
        %1969 = vmatprep.subr.mxu0 0.0
        %1970 = vmatpush1.msra.mxu0 0.0
        %1971 = vmatprep.subr.mxu0 0.0
        %1972 = vmatpush1.msra.mxu0 0.0
        %1973 = vmatprep.subr.mxu0 0.0
        %1974 = vmatpush1.msra.mxu0 0.0
        %1975 = vmatprep.subr.mxu0 0.0
        %1976 = vmatpush1.msra.mxu0 0.0
        %1977 = vmatprep.subr.mxu0 0.0
        %1978 = vmatpush1.msra.mxu0 0.0
        %1979 = vmatprep.subr.mxu0 0.0
        %1980 = vmatpush1.msra.mxu0 0.0
        %1981 = vmatprep.subr.mxu0 0.0
        %1982 = vmatpush1.msra.mxu0 0.0
        %1983 = vmatprep.subr.mxu0 0.0
        %1984 = vmatpush1.msra.mxu0 0.0
        %1985 = vmatprep.subr.mxu0 0.0
        %1986 = vmatpush1.msra.mxu0 0.0
        %1987 = vmatprep.subr.mxu0 0.0
        %1988 = vmatpush1.msra.mxu0 0.0
        %1989 = vmatprep.subr.mxu0 0.0
        %1990 = vmatpush1.msra.mxu0 0.0
        %1991 = vmatprep.subr.mxu0 0.0
        %1992 = vmatpush1.msra.mxu0 0.0
        %1993 = vmatprep.subr.mxu0 0.0
        %1994 = vmatpush1.msra.mxu0 0.0
        %1995 = vmatprep.subr.mxu0 0.0
        %1996 = vmatpush1.msra.mxu0 0.0
        %1997 = vmatprep.subr.mxu0 0.0
        %1998 = vmatpush1.msra.mxu0 0.0
        %1999 = vmatprep.subr.mxu0 0.0
        %2000 = vmatpush1.msra.mxu0 0.0
        %2001 = vmatprep.subr.mxu0 0.0
        %2002 = vmatpush1.msra.mxu0 0.0
        %2003 = vmatprep.subr.mxu0 0.0
        %2004 = vmatpush1.msra.mxu0 0.0
        %2005 = vmatprep.subr.mxu0 0.0
        %2006 = vmatpush1.msra.mxu0 0.0
        %2007 = vmatprep.subr.mxu0 0.0
        %2008 = vmatpush1.msra.mxu0 0.0
        %2009 = vmatprep.subr.mxu0 0.0
        %2010 = vmatpush1.msra.mxu0 0.0
        %2011 = vmatprep.subr.mxu0 0.0
        %2012 = vmatpush1.msra.mxu0 0.0
        %2013 = vmatprep.subr.mxu0 0.0
        %2014 = vmatpush1.msra.mxu0 0.0
        %2015 = vmatprep.subr.mxu0 0.0
        %2016 = vmatpush1.msra.mxu0 0.0
        %2017 = vmatprep.mubr.f32.mxu0 0.0
        %v2018 = vand.u32 %v1857, 4294901760
        %2019 = vmatmul.mubr.f32.gmra.mrb[0].mxu0 %v2018
        %v2020 = vpop.f32.mrb[0].mxu0
        %v2021 = vadd.f32 %v1935, %v2020
        %v2022 = vpop.f32.mrb[0].mxu0
        %2023 = vmatprep.mubr.f32.mxu0 0.0
        %v2024 = vand.u32 %v1860, 4294901760
        %2025 = vmatmul.mubr.f32.gmra.mrb[0].mxu0 %v2024
        %v2026 = vpop.f32.mrb[0].mxu0
        %v2027 = vadd.f32 %v1945, %v2026
        %v2028 = vpop.f32.mrb[0].mxu0
        %2029 = vdwg.mxu0
        %2030 = vmatprep.subr.mxu0 0.0
        %v2031 = vand.u32 %v252, 4294901760
        %v2032 = vsub.f32 %v252, %v2031
        %2033 = vmatpush1.msra.mxu0 %v2032
        %2034 = vmatprep.subr.mxu0 0.0
        %2035 = vmatpush1.msra.mxu0 0.0
        %2036 = vmatprep.subr.mxu0 0.0
        %2037 = vmatpush1.msra.mxu0 0.0
        %2038 = vmatprep.subr.mxu0 0.0
        %2039 = vmatpush1.msra.mxu0 0.0
        %2040 = vmatprep.subr.mxu0 0.0
        %2041 = vmatpush1.msra.mxu0 0.0
        %2042 = vmatprep.subr.mxu0 0.0
        %2043 = vmatpush1.msra.mxu0 0.0
        %2044 = vmatprep.subr.mxu0 0.0
        %2045 = vmatpush1.msra.mxu0 0.0
        %2046 = vmatprep.subr.mxu0 0.0
        %2047 = vmatpush1.msra.mxu0 0.0
        %2048 = vmatprep.subr.mxu0 0.0
        %2049 = vmatpush1.msra.mxu0 0.0
        %2050 = vmatprep.subr.mxu0 0.0
        %2051 = vmatpush1.msra.mxu0 0.0
        %2052 = vmatprep.subr.mxu0 0.0
        %2053 = vmatpush1.msra.mxu0 0.0
        %2054 = vmatprep.subr.mxu0 0.0
        %2055 = vmatpush1.msra.mxu0 0.0
        %2056 = vmatprep.subr.mxu0 0.0
        %2057 = vmatpush1.msra.mxu0 0.0
        %2058 = vmatprep.subr.mxu0 0.0
        %2059 = vmatpush1.msra.mxu0 0.0
        %2060 = vmatprep.subr.mxu0 0.0
        %2061 = vmatpush1.msra.mxu0 0.0
        %2062 = vmatprep.subr.mxu0 0.0
        %2063 = vmatpush1.msra.mxu0 0.0
        %2064 = vmatprep.subr.mxu0 0.0
        %2065 = vmatpush1.msra.mxu0 0.0
        %2066 = vmatprep.subr.mxu0 0.0
        %2067 = vmatpush1.msra.mxu0 0.0
        %2068 = vmatprep.subr.mxu0 0.0
        %2069 = vmatpush1.msra.mxu0 0.0
        %2070 = vmatprep.subr.mxu0 0.0
        %2071 = vmatpush1.msra.mxu0 0.0
        %2072 = vmatprep.subr.mxu0 0.0
        %2073 = vmatpush1.msra.mxu0 0.0
        %2074 = vmatprep.subr.mxu0 0.0
        %2075 = vmatpush1.msra.mxu0 0.0
        %2076 = vmatprep.subr.mxu0 0.0
        %2077 = vmatpush1.msra.mxu0 0.0
        %2078 = vmatprep.subr.mxu0 0.0
        %2079 = vmatpush1.msra.mxu0 0.0
        %2080 = vmatprep.subr.mxu0 0.0
        %2081 = vmatpush1.msra.mxu0 0.0
        %2082 = vmatprep.subr.mxu0 0.0
        %2083 = vmatpush1.msra.mxu0 0.0
        %2084 = vmatprep.subr.mxu0 0.0
        %2085 = vmatpush1.msra.mxu0 0.0
        %2086 = vmatprep.subr.mxu0 0.0
        %2087 = vmatpush1.msra.mxu0 0.0
        %2088 = vmatprep.subr.mxu0 0.0
        %2089 = vmatpush1.msra.mxu0 0.0
        %2090 = vmatprep.subr.mxu0 0.0
        %2091 = vmatpush1.msra.mxu0 0.0
        %2092 = vmatprep.subr.mxu0 0.0
        %2093 = vmatpush1.msra.mxu0 0.0
        %2094 = vmatprep.subr.mxu0 0.0
        %2095 = vmatpush1.msra.mxu0 0.0
        %2096 = vmatprep.mubr.f32.mxu0 0.0
        %v2097 = vand.u32 %v1857, 4294901760
        %v2098 = vsub.f32 %v1857, %v2097
        %2099 = vmatmul.mubr.f32.gmra.mrb[0].mxu0 %v2098
        %v2100 = vpop.f32.mrb[0].mxu0
        %v2101 = vadd.f32 %v2021, %v2100
        %v2102 = vpop.f32.mrb[0].mxu0
        %2103 = vmatprep.mubr.f32.mxu0 0.0
        %v2104 = vand.u32 %v1860, 4294901760
        %v2105 = vsub.f32 %v1860, %v2104
        %2106 = vmatmul.mubr.f32.gmra.mrb[0].mxu0 %v2105
        %v2107 = vpop.f32.mrb[0].mxu0
        %v2108 = vadd.f32 %v2027, %v2107
        %v2109 = vpop.f32.mrb[0].mxu0
        %2110 = vdwg.mxu0
        %2111 = vmatprep.subr.mxu0 0.0
        %v2112 = vand.u32 %v252, 4294901760
        %2113 = vmatpush1.msra.mxu0 %v2112
        %2114 = vmatprep.subr.mxu0 0.0
        %2115 = vmatpush1.msra.mxu0 0.0
        %2116 = vmatprep.subr.mxu0 0.0
        %2117 = vmatpush1.msra.mxu0 0.0
        %2118 = vmatprep.subr.mxu0 0.0
        %2119 = vmatpush1.msra.mxu0 0.0
        %2120 = vmatprep.subr.mxu0 0.0
        %2121 = vmatpush1.msra.mxu0 0.0
        %2122 = vmatprep.subr.mxu0 0.0
        %2123 = vmatpush1.msra.mxu0 0.0
        %2124 = vmatprep.subr.mxu0 0.0
        %2125 = vmatpush1.msra.mxu0 0.0
        %2126 = vmatprep.subr.mxu0 0.0
        %2127 = vmatpush1.msra.mxu0 0.0
        %2128 = vmatprep.subr.mxu0 0.0
        %2129 = vmatpush1.msra.mxu0 0.0
        %2130 = vmatprep.subr.mxu0 0.0
        %2131 = vmatpush1.msra.mxu0 0.0
        %2132 = vmatprep.subr.mxu0 0.0
        %2133 = vmatpush1.msra.mxu0 0.0
        %2134 = vmatprep.subr.mxu0 0.0
        %2135 = vmatpush1.msra.mxu0 0.0
        %2136 = vmatprep.subr.mxu0 0.0
        %2137 = vmatpush1.msra.mxu0 0.0
        %2138 = vmatprep.subr.mxu0 0.0
        %2139 = vmatpush1.msra.mxu0 0.0
        %2140 = vmatprep.subr.mxu0 0.0
        %2141 = vmatpush1.msra.mxu0 0.0
        %2142 = vmatprep.subr.mxu0 0.0
        %2143 = vmatpush1.msra.mxu0 0.0
        %2144 = vmatprep.subr.mxu0 0.0
        %2145 = vmatpush1.msra.mxu0 0.0
        %2146 = vmatprep.subr.mxu0 0.0
        %2147 = vmatpush1.msra.mxu0 0.0
        %2148 = vmatprep.subr.mxu0 0.0
        %2149 = vmatpush1.msra.mxu0 0.0
        %2150 = vmatprep.subr.mxu0 0.0
        %2151 = vmatpush1.msra.mxu0 0.0
        %2152 = vmatprep.subr.mxu0 0.0
        %2153 = vmatpush1.msra.mxu0 0.0
        %2154 = vmatprep.subr.mxu0 0.0
        %2155 = vmatpush1.msra.mxu0 0.0
        %2156 = vmatprep.subr.mxu0 0.0
        %2157 = vmatpush1.msra.mxu0 0.0
        %2158 = vmatprep.subr.mxu0 0.0
        %2159 = vmatpush1.msra.mxu0 0.0
        %2160 = vmatprep.subr.mxu0 0.0
        %2161 = vmatpush1.msra.mxu0 0.0
        %2162 = vmatprep.subr.mxu0 0.0
        %2163 = vmatpush1.msra.mxu0 0.0
        %2164 = vmatprep.subr.mxu0 0.0
        %2165 = vmatpush1.msra.mxu0 0.0
        %2166 = vmatprep.subr.mxu0 0.0
        %2167 = vmatpush1.msra.mxu0 0.0
        %2168 = vmatprep.subr.mxu0 0.0
        %2169 = vmatpush1.msra.mxu0 0.0
        %2170 = vmatprep.subr.mxu0 0.0
        %2171 = vmatpush1.msra.mxu0 0.0
        %2172 = vmatprep.subr.mxu0 0.0
        %2173 = vmatpush1.msra.mxu0 0.0
        %2174 = vmatprep.subr.mxu0 0.0
        %2175 = vmatpush1.msra.mxu0 0.0
        %2176 = vmatprep.mubr.f32.mxu0 0.0
        %v2177 = vand.u32 %v1857, 4294901760
        %v2178 = vsub.f32 %v1857, %v2177
        %v2179 = vand.u32 %v2178, 4294901760
        %2180 = vmatmul.mubr.f32.gmra.mrb[0].mxu0 %v2179
        %v2181 = vpop.f32.mrb[0].mxu0
        %v2182 = vadd.f32 %v2101, %v2181
        %v2183 = vpop.f32.mrb[0].mxu0
        %2184 = vmatprep.mubr.f32.mxu0 0.0
        %v2185 = vand.u32 %v1860, 4294901760
        %v2186 = vsub.f32 %v1860, %v2185
        %v2187 = vand.u32 %v2186, 4294901760
        %2188 = vmatmul.mubr.f32.gmra.mrb[0].mxu0 %v2187
        %v2189 = vpop.f32.mrb[0].mxu0
        %v2190 = vadd.f32 %v2108, %v2189
        %v2191 = vpop.f32.mrb[0].mxu0
        %2192 = vdwg.mxu0
        %2193 = vmatprep.subr.mxu0 0.0
        %v2194 = vand.u32 %v252, 4294901760
        %v2195 = vsub.f32 %v252, %v2194
        %v2196 = vand.u32 %v2195, 4294901760
        %2197 = vmatpush1.msra.mxu0 %v2196
        %2198 = vmatprep.subr.mxu0 0.0
        %2199 = vmatpush1.msra.mxu0 0.0
        %2200 = vmatprep.subr.mxu0 0.0
        %2201 = vmatpush1.msra.mxu0 0.0
        %2202 = vmatprep.subr.mxu0 0.0
        %2203 = vmatpush1.msra.mxu0 0.0
        %2204 = vmatprep.subr.mxu0 0.0
        %2205 = vmatpush1.msra.mxu0 0.0
        %2206 = vmatprep.subr.mxu0 0.0
        %2207 = vmatpush1.msra.mxu0 0.0
        %2208 = vmatprep.subr.mxu0 0.0
        %2209 = vmatpush1.msra.mxu0 0.0
        %2210 = vmatprep.subr.mxu0 0.0
        %2211 = vmatpush1.msra.mxu0 0.0
        %2212 = vmatprep.subr.mxu0 0.0
        %2213 = vmatpush1.msra.mxu0 0.0
        %2214 = vmatprep.subr.mxu0 0.0
        %2215 = vmatpush1.msra.mxu0 0.0
        %2216 = vmatprep.subr.mxu0 0.0
        %2217 = vmatpush1.msra.mxu0 0.0
        %2218 = vmatprep.subr.mxu0 0.0
        %2219 = vmatpush1.msra.mxu0 0.0
        %2220 = vmatprep.subr.mxu0 0.0
        %2221 = vmatpush1.msra.mxu0 0.0
        %2222 = vmatprep.subr.mxu0 0.0
        %2223 = vmatpush1.msra.mxu0 0.0
        %2224 = vmatprep.subr.mxu0 0.0
        %2225 = vmatpush1.msra.mxu0 0.0
        %2226 = vmatprep.subr.mxu0 0.0
        %2227 = vmatpush1.msra.mxu0 0.0
        %2228 = vmatprep.subr.mxu0 0.0
        %2229 = vmatpush1.msra.mxu0 0.0
        %2230 = vmatprep.subr.mxu0 0.0
        %2231 = vmatpush1.msra.mxu0 0.0
        %2232 = vmatprep.subr.mxu0 0.0
        %2233 = vmatpush1.msra.mxu0 0.0
        %2234 = vmatprep.subr.mxu0 0.0
        %2235 = vmatpush1.msra.mxu0 0.0
        %2236 = vmatprep.subr.mxu0 0.0
        %2237 = vmatpush1.msra.mxu0 0.0
        %2238 = vmatprep.subr.mxu0 0.0
        %2239 = vmatpush1.msra.mxu0 0.0
        %2240 = vmatprep.subr.mxu0 0.0
        %2241 = vmatpush1.msra.mxu0 0.0
        %2242 = vmatprep.subr.mxu0 0.0
        %2243 = vmatpush1.msra.mxu0 0.0
        %2244 = vmatprep.subr.mxu0 0.0
        %2245 = vmatpush1.msra.mxu0 0.0
        %2246 = vmatprep.subr.mxu0 0.0
        %2247 = vmatpush1.msra.mxu0 0.0
        %2248 = vmatprep.subr.mxu0 0.0
        %2249 = vmatpush1.msra.mxu0 0.0
        %2250 = vmatprep.subr.mxu0 0.0
        %2251 = vmatpush1.msra.mxu0 0.0
        %2252 = vmatprep.subr.mxu0 0.0
        %2253 = vmatpush1.msra.mxu0 0.0
        %2254 = vmatprep.subr.mxu0 0.0
        %2255 = vmatpush1.msra.mxu0 0.0
        %2256 = vmatprep.subr.mxu0 0.0
        %2257 = vmatpush1.msra.mxu0 0.0
        %2258 = vmatprep.subr.mxu0 0.0
        %2259 = vmatpush1.msra.mxu0 0.0
        %2260 = vmatprep.mubr.f32.mxu0 0.0
        %v2261 = vand.u32 %v1857, 4294901760
        %2262 = vmatmul.mubr.f32.gmra.mrb[0].mxu0 %v2261
        %v2263 = vpop.f32.mrb[0].mxu0
        %v2264 = vadd.f32 %v2182, %v2263
        %v2265 = vpop.f32.mrb[0].mxu0
        %2266 = vmatprep.mubr.f32.mxu0 0.0
        %v2267 = vand.u32 %v1860, 4294901760
        %2268 = vmatmul.mubr.f32.gmra.mrb[0].mxu0 %v2267
        %v2269 = vpop.f32.mrb[0].mxu0
        %v2270 = vadd.f32 %v2190, %v2269
        %v2271 = vpop.f32.mrb[0].mxu0
        %2272 = vdwg.mxu0
        %2273 = vmatprep.subr.mxu0 0.0
        %v2274 = vand.u32 %v252, 4294901760
        %2275 = vmatpush1.msra.mxu0 %v2274
        %2276 = vmatprep.subr.mxu0 0.0
        %2277 = vmatpush1.msra.mxu0 0.0
        %2278 = vmatprep.subr.mxu0 0.0
        %2279 = vmatpush1.msra.mxu0 0.0
        %2280 = vmatprep.subr.mxu0 0.0
        %2281 = vmatpush1.msra.mxu0 0.0
        %2282 = vmatprep.subr.mxu0 0.0
        %2283 = vmatpush1.msra.mxu0 0.0
        %2284 = vmatprep.subr.mxu0 0.0
        %2285 = vmatpush1.msra.mxu0 0.0
        %2286 = vmatprep.subr.mxu0 0.0
        %2287 = vmatpush1.msra.mxu0 0.0
        %2288 = vmatprep.subr.mxu0 0.0
        %2289 = vmatpush1.msra.mxu0 0.0
        %2290 = vmatprep.subr.mxu0 0.0
        %2291 = vmatpush1.msra.mxu0 0.0
        %2292 = vmatprep.subr.mxu0 0.0
        %2293 = vmatpush1.msra.mxu0 0.0
        %2294 = vmatprep.subr.mxu0 0.0
        %2295 = vmatpush1.msra.mxu0 0.0
        %2296 = vmatprep.subr.mxu0 0.0
        %2297 = vmatpush1.msra.mxu0 0.0
        %2298 = vmatprep.subr.mxu0 0.0
        %2299 = vmatpush1.msra.mxu0 0.0
        %2300 = vmatprep.subr.mxu0 0.0
        %2301 = vmatpush1.msra.mxu0 0.0
        %2302 = vmatprep.subr.mxu0 0.0
        %2303 = vmatpush1.msra.mxu0 0.0
        %2304 = vmatprep.subr.mxu0 0.0
        %2305 = vmatpush1.msra.mxu0 0.0
        %2306 = vmatprep.subr.mxu0 0.0
        %2307 = vmatpush1.msra.mxu0 0.0
        %2308 = vmatprep.subr.mxu0 0.0
        %2309 = vmatpush1.msra.mxu0 0.0
        %2310 = vmatprep.subr.mxu0 0.0
        %2311 = vmatpush1.msra.mxu0 0.0
        %2312 = vmatprep.subr.mxu0 0.0
        %2313 = vmatpush1.msra.mxu0 0.0
        %2314 = vmatprep.subr.mxu0 0.0
        %2315 = vmatpush1.msra.mxu0 0.0
        %2316 = vmatprep.subr.mxu0 0.0
        %2317 = vmatpush1.msra.mxu0 0.0
        %2318 = vmatprep.subr.mxu0 0.0
        %2319 = vmatpush1.msra.mxu0 0.0
        %2320 = vmatprep.subr.mxu0 0.0
        %2321 = vmatpush1.msra.mxu0 0.0
        %2322 = vmatprep.subr.mxu0 0.0
        %2323 = vmatpush1.msra.mxu0 0.0
        %2324 = vmatprep.subr.mxu0 0.0
        %2325 = vmatpush1.msra.mxu0 0.0
        %2326 = vmatprep.subr.mxu0 0.0
        %2327 = vmatpush1.msra.mxu0 0.0
        %2328 = vmatprep.subr.mxu0 0.0
        %2329 = vmatpush1.msra.mxu0 0.0
        %2330 = vmatprep.subr.mxu0 0.0
        %2331 = vmatpush1.msra.mxu0 0.0
        %2332 = vmatprep.subr.mxu0 0.0
        %2333 = vmatpush1.msra.mxu0 0.0
        %2334 = vmatprep.subr.mxu0 0.0
        %2335 = vmatpush1.msra.mxu0 0.0
        %2336 = vmatprep.subr.mxu0 0.0
        %2337 = vmatpush1.msra.mxu0 0.0
        %2338 = vmatprep.mubr.f32.mxu0 0.0
        %v2339 = vand.u32 %v1857, 4294901760
        %2340 = vmatmul.mubr.f32.gmra.mrb[0].mxu0 %v2339
        %v2341 = vpop.f32.mrb[0].mxu0
        %v2342 = vadd.f32 %v2264, %v2341
        %v2343 = vpop.f32.mrb[0].mxu0
        %2344 = vmatprep.mubr.f32.mxu0 0.0
        %v2345 = vand.u32 %v1860, 4294901760
        %2346 = vmatmul.mubr.f32.gmra.mrb[0].mxu0 %v2345
        %v2347 = vpop.f32.mrb[0].mxu0
        %v2348 = vadd.f32 %v2270, %v2347
        %v2349 = vpop.f32.mrb[0].mxu0
        %2350 = vdwg.mxu0
        %v2351 = vadd.f32 %v800, %v2342
        %v2352 = vadd.f32 %v801, %v2348
        %2353 = vrot.lane.b32.xlu0 %v788, 120
        %v2354 = vpop.permute.xlu0 %2353
        %2355 = vrot.lane.b32.xlu0 %v794, 120
        %v2356 = vpop.permute.xlu0 %2355
        %2357 = vrot.lane.b32.xlu0 %v788, 88
        %v2358 = vpop.permute.xlu0 %2357
        %2359 = vrot.lane.b32.xlu0 %v794, 88
        %v2360 = vpop.permute.xlu0 %2359
        %v2361 = vsel %vm808, %v2354, 0
        %v2363 = vsel %vm808, %v2356, 0
        %v2365 = vsel %vm808, %v2358, 0
        %v2367 = vsel %vm808, %v2360, 0
        %2369 = vmatprep.subr.mxu0 0.0
        %v2370 = vand.u32 %v2365, 4294901760
        %2371 = vmatpush1.xpose.msra.mxu0 %v2370
        %2372 = vmatprep.subr.mxu0 0.0
        %v2373 = vand.u32 %v2367, 4294901760
        %2374 = vmatpush1.xpose.msra.mxu0 %v2373
        %2375 = vmatprep.subr.mxu0 0.0
        %2376 = vmatpush1.xpose.msra.mxu0 0.0
        %2377 = vmatprep.subr.mxu0 0.0
        %2378 = vmatpush1.xpose.msra.mxu0 0.0
        %2379 = vmatprep.subr.mxu0 0.0
        %2380 = vmatpush1.xpose.msra.mxu0 0.0
        %2381 = vmatprep.subr.mxu0 0.0
        %2382 = vmatpush1.xpose.msra.mxu0 0.0
        %2383 = vmatprep.subr.mxu0 0.0
        %2384 = vmatpush1.xpose.msra.mxu0 0.0
        %2385 = vmatprep.subr.mxu0 0.0
        %2386 = vmatpush1.xpose.msra.mxu0 0.0
        %2387 = vmatprep.subr.mxu0 0.0
        %2388 = vmatpush1.xpose.msra.mxu0 0.0
        %2389 = vmatprep.subr.mxu0 0.0
        %2390 = vmatpush1.xpose.msra.mxu0 0.0
        %2391 = vmatprep.subr.mxu0 0.0
        %2392 = vmatpush1.xpose.msra.mxu0 0.0
        %2393 = vmatprep.subr.mxu0 0.0
        %2394 = vmatpush1.xpose.msra.mxu0 0.0
        %2395 = vmatprep.subr.mxu0 0.0
        %2396 = vmatpush1.xpose.msra.mxu0 0.0
        %2397 = vmatprep.subr.mxu0 0.0
        %2398 = vmatpush1.xpose.msra.mxu0 0.0
        %2399 = vmatprep.subr.mxu0 0.0
        %2400 = vmatpush1.xpose.msra.mxu0 0.0
        %2401 = vmatprep.subr.mxu0 0.0
        %2402 = vmatpush1.xpose.msra.mxu0 0.0
        %2403 = vmatprep.subr.mxu0 0.0
        %2404 = vmatpush1.xpose.msra.mxu0 0.0
        %2405 = vmatprep.subr.mxu0 0.0
        %2406 = vmatpush1.xpose.msra.mxu0 0.0
        %2407 = vmatprep.subr.mxu0 0.0
        %2408 = vmatpush1.xpose.msra.mxu0 0.0
        %2409 = vmatprep.subr.mxu0 0.0
        %2410 = vmatpush1.xpose.msra.mxu0 0.0
        %2411 = vmatprep.subr.mxu0 0.0
        %2412 = vmatpush1.xpose.msra.mxu0 0.0
        %2413 = vmatprep.subr.mxu0 0.0
        %2414 = vmatpush1.xpose.msra.mxu0 0.0
        %2415 = vmatprep.subr.mxu0 0.0
        %2416 = vmatpush1.xpose.msra.mxu0 0.0
        %2417 = vmatprep.subr.mxu0 0.0
        %2418 = vmatpush1.xpose.msra.mxu0 0.0
        %2419 = vmatprep.subr.mxu0 0.0
        %2420 = vmatpush1.xpose.msra.mxu0 0.0
        %2421 = vmatprep.subr.mxu0 0.0
        %2422 = vmatpush1.xpose.msra.mxu0 0.0
        %2423 = vmatprep.subr.mxu0 0.0
        %2424 = vmatpush1.xpose.msra.mxu0 0.0
        %2425 = vmatprep.subr.mxu0 0.0
        %2426 = vmatpush1.xpose.msra.mxu0 0.0
        %2427 = vmatprep.subr.mxu0 0.0
        %2428 = vmatpush1.xpose.msra.mxu0 0.0
        %2429 = vmatprep.subr.mxu0 0.0
        %2430 = vmatpush1.xpose.msra.mxu0 0.0
        %2431 = vmatprep.subr.mxu0 0.0
        %2432 = vmatpush1.xpose.msra.mxu0 0.0
        %2433 = vmatprep.subr.mxu0 0.0
        %2434 = vmatpush1.xpose.msra.mxu0 0.0
        %2435 = vmatprep.mubr.f32.mxu0 0.0
        %v2436 = vand.u32 %v2361, 4294901760
        %v2437 = vsub.f32 %v2361, %v2436
        %v2438 = vand.u32 %v2437, 4294901760
        %v2439 = vsub.f32 %v2437, %v2438
        %v2440 = vand.u32 %v2439, 4294901760
        %2441 = vmatmul.mubr.f32.gmra.mrb[0].mxu0 %v2440
        %v2442 = vpop.f32.mrb[0].mxu0
        %v2443 = vadd.f32 0.0, %v2442
        %v2444 = vpop.f32.mrb[0].mxu0
        %2445 = vmatprep.mubr.f32.mxu0 0.0
        %v2446 = vand.u32 %v2363, 4294901760
        %v2447 = vsub.f32 %v2363, %v2446
        %v2448 = vand.u32 %v2447, 4294901760
        %v2449 = vsub.f32 %v2447, %v2448
        %v2450 = vand.u32 %v2449, 4294901760
        %2451 = vmatmul.mubr.f32.gmra.mrb[0].mxu0 %v2450
        %v2452 = vpop.f32.mrb[0].mxu0
        %v2453 = vadd.f32 0.0, %v2452
        %v2454 = vpop.f32.mrb[0].mxu0
        %2455 = vdwg.mxu0
        %2456 = vmatprep.subr.mxu0 0.0
        %v2457 = vand.u32 %v2365, 4294901760
        %v2458 = vsub.f32 %v2365, %v2457
        %v2459 = vand.u32 %v2458, 4294901760
        %v2460 = vsub.f32 %v2458, %v2459
        %v2461 = vand.u32 %v2460, 4294901760
        %2462 = vmatpush1.xpose.msra.mxu0 %v2461
        %2463 = vmatprep.subr.mxu0 0.0
        %v2464 = vand.u32 %v2367, 4294901760
        %v2465 = vsub.f32 %v2367, %v2464
        %v2466 = vand.u32 %v2465, 4294901760
        %v2467 = vsub.f32 %v2465, %v2466
        %v2468 = vand.u32 %v2467, 4294901760
        %2469 = vmatpush1.xpose.msra.mxu0 %v2468
        %2470 = vmatprep.subr.mxu0 0.0
        %2471 = vmatpush1.xpose.msra.mxu0 0.0
        %2472 = vmatprep.subr.mxu0 0.0
        %2473 = vmatpush1.xpose.msra.mxu0 0.0
        %2474 = vmatprep.subr.mxu0 0.0
        %2475 = vmatpush1.xpose.msra.mxu0 0.0
        %2476 = vmatprep.subr.mxu0 0.0
        %2477 = vmatpush1.xpose.msra.mxu0 0.0
        %2478 = vmatprep.subr.mxu0 0.0
        %2479 = vmatpush1.xpose.msra.mxu0 0.0
        %2480 = vmatprep.subr.mxu0 0.0
        %2481 = vmatpush1.xpose.msra.mxu0 0.0
        %2482 = vmatprep.subr.mxu0 0.0
        %2483 = vmatpush1.xpose.msra.mxu0 0.0
        %2484 = vmatprep.subr.mxu0 0.0
        %2485 = vmatpush1.xpose.msra.mxu0 0.0
        %2486 = vmatprep.subr.mxu0 0.0
        %2487 = vmatpush1.xpose.msra.mxu0 0.0
        %2488 = vmatprep.subr.mxu0 0.0
        %2489 = vmatpush1.xpose.msra.mxu0 0.0
        %2490 = vmatprep.subr.mxu0 0.0
        %2491 = vmatpush1.xpose.msra.mxu0 0.0
        %2492 = vmatprep.subr.mxu0 0.0
        %2493 = vmatpush1.xpose.msra.mxu0 0.0
        %2494 = vmatprep.subr.mxu0 0.0
        %2495 = vmatpush1.xpose.msra.mxu0 0.0
        %2496 = vmatprep.subr.mxu0 0.0
        %2497 = vmatpush1.xpose.msra.mxu0 0.0
        %2498 = vmatprep.subr.mxu0 0.0
        %2499 = vmatpush1.xpose.msra.mxu0 0.0
        %2500 = vmatprep.subr.mxu0 0.0
        %2501 = vmatpush1.xpose.msra.mxu0 0.0
        %2502 = vmatprep.subr.mxu0 0.0
        %2503 = vmatpush1.xpose.msra.mxu0 0.0
        %2504 = vmatprep.subr.mxu0 0.0
        %2505 = vmatpush1.xpose.msra.mxu0 0.0
        %2506 = vmatprep.subr.mxu0 0.0
        %2507 = vmatpush1.xpose.msra.mxu0 0.0
        %2508 = vmatprep.subr.mxu0 0.0
        %2509 = vmatpush1.xpose.msra.mxu0 0.0
        %2510 = vmatprep.subr.mxu0 0.0
        %2511 = vmatpush1.xpose.msra.mxu0 0.0
        %2512 = vmatprep.subr.mxu0 0.0
        %2513 = vmatpush1.xpose.msra.mxu0 0.0
        %2514 = vmatprep.subr.mxu0 0.0
        %2515 = vmatpush1.xpose.msra.mxu0 0.0
        %2516 = vmatprep.subr.mxu0 0.0
        %2517 = vmatpush1.xpose.msra.mxu0 0.0
        %2518 = vmatprep.subr.mxu0 0.0
        %2519 = vmatpush1.xpose.msra.mxu0 0.0
        %2520 = vmatprep.subr.mxu0 0.0
        %2521 = vmatpush1.xpose.msra.mxu0 0.0
        %2522 = vmatprep.subr.mxu0 0.0
        %2523 = vmatpush1.xpose.msra.mxu0 0.0
        %2524 = vmatprep.subr.mxu0 0.0
        %2525 = vmatpush1.xpose.msra.mxu0 0.0
        %2526 = vmatprep.subr.mxu0 0.0
        %2527 = vmatpush1.xpose.msra.mxu0 0.0
        %2528 = vmatprep.subr.mxu0 0.0
        %2529 = vmatpush1.xpose.msra.mxu0 0.0
        %2530 = vmatprep.mubr.f32.mxu0 0.0
        %v2531 = vand.u32 %v2361, 4294901760
        %2532 = vmatmul.mubr.f32.gmra.mrb[0].mxu0 %v2531
        %v2533 = vpop.f32.mrb[0].mxu0
        %v2534 = vadd.f32 %v2443, %v2533
        %v2535 = vpop.f32.mrb[0].mxu0
        %2536 = vmatprep.mubr.f32.mxu0 0.0
        %v2537 = vand.u32 %v2363, 4294901760
        %2538 = vmatmul.mubr.f32.gmra.mrb[0].mxu0 %v2537
        %v2539 = vpop.f32.mrb[0].mxu0
        %v2540 = vadd.f32 %v2453, %v2539
        %v2541 = vpop.f32.mrb[0].mxu0
        %2542 = vdwg.mxu0
        %2543 = vmatprep.subr.mxu0 0.0
        %v2544 = vand.u32 %v2365, 4294901760
        %v2545 = vsub.f32 %v2365, %v2544
        %2546 = vmatpush1.xpose.msra.mxu0 %v2545
        %2547 = vmatprep.subr.mxu0 0.0
        %v2548 = vand.u32 %v2367, 4294901760
        %v2549 = vsub.f32 %v2367, %v2548
        %2550 = vmatpush1.xpose.msra.mxu0 %v2549
        %2551 = vmatprep.subr.mxu0 0.0
        %2552 = vmatpush1.xpose.msra.mxu0 0.0
        %2553 = vmatprep.subr.mxu0 0.0
        %2554 = vmatpush1.xpose.msra.mxu0 0.0
        %2555 = vmatprep.subr.mxu0 0.0
        %2556 = vmatpush1.xpose.msra.mxu0 0.0
        %2557 = vmatprep.subr.mxu0 0.0
        %2558 = vmatpush1.xpose.msra.mxu0 0.0
        %2559 = vmatprep.subr.mxu0 0.0
        %2560 = vmatpush1.xpose.msra.mxu0 0.0
        %2561 = vmatprep.subr.mxu0 0.0
        %2562 = vmatpush1.xpose.msra.mxu0 0.0
        %2563 = vmatprep.subr.mxu0 0.0
        %2564 = vmatpush1.xpose.msra.mxu0 0.0
        %2565 = vmatprep.subr.mxu0 0.0
        %2566 = vmatpush1.xpose.msra.mxu0 0.0
        %2567 = vmatprep.subr.mxu0 0.0
        %2568 = vmatpush1.xpose.msra.mxu0 0.0
        %2569 = vmatprep.subr.mxu0 0.0
        %2570 = vmatpush1.xpose.msra.mxu0 0.0
        %2571 = vmatprep.subr.mxu0 0.0
        %2572 = vmatpush1.xpose.msra.mxu0 0.0
        %2573 = vmatprep.subr.mxu0 0.0
        %2574 = vmatpush1.xpose.msra.mxu0 0.0
        %2575 = vmatprep.subr.mxu0 0.0
        %2576 = vmatpush1.xpose.msra.mxu0 0.0
        %2577 = vmatprep.subr.mxu0 0.0
        %2578 = vmatpush1.xpose.msra.mxu0 0.0
        %2579 = vmatprep.subr.mxu0 0.0
        %2580 = vmatpush1.xpose.msra.mxu0 0.0
        %2581 = vmatprep.subr.mxu0 0.0
        %2582 = vmatpush1.xpose.msra.mxu0 0.0
        %2583 = vmatprep.subr.mxu0 0.0
        %2584 = vmatpush1.xpose.msra.mxu0 0.0
        %2585 = vmatprep.subr.mxu0 0.0
        %2586 = vmatpush1.xpose.msra.mxu0 0.0
        %2587 = vmatprep.subr.mxu0 0.0
        %2588 = vmatpush1.xpose.msra.mxu0 0.0
        %2589 = vmatprep.subr.mxu0 0.0
        %2590 = vmatpush1.xpose.msra.mxu0 0.0
        %2591 = vmatprep.subr.mxu0 0.0
        %2592 = vmatpush1.xpose.msra.mxu0 0.0
        %2593 = vmatprep.subr.mxu0 0.0
        %2594 = vmatpush1.xpose.msra.mxu0 0.0
        %2595 = vmatprep.subr.mxu0 0.0
        %2596 = vmatpush1.xpose.msra.mxu0 0.0
        %2597 = vmatprep.subr.mxu0 0.0
        %2598 = vmatpush1.xpose.msra.mxu0 0.0
        %2599 = vmatprep.subr.mxu0 0.0
        %2600 = vmatpush1.xpose.msra.mxu0 0.0
        %2601 = vmatprep.subr.mxu0 0.0
        %2602 = vmatpush1.xpose.msra.mxu0 0.0
        %2603 = vmatprep.subr.mxu0 0.0
        %2604 = vmatpush1.xpose.msra.mxu0 0.0
        %2605 = vmatprep.subr.mxu0 0.0
        %2606 = vmatpush1.xpose.msra.mxu0 0.0
        %2607 = vmatprep.subr.mxu0 0.0
        %2608 = vmatpush1.xpose.msra.mxu0 0.0
        %2609 = vmatprep.subr.mxu0 0.0
        %2610 = vmatpush1.xpose.msra.mxu0 0.0
        %2611 = vmatprep.mubr.f32.mxu0 0.0
        %v2612 = vand.u32 %v2361, 4294901760
        %v2613 = vsub.f32 %v2361, %v2612
        %2614 = vmatmul.mubr.f32.gmra.mrb[0].mxu0 %v2613
        %v2615 = vpop.f32.mrb[0].mxu0
        %v2616 = vadd.f32 %v2534, %v2615
        %v2617 = vpop.f32.mrb[0].mxu0
        %2618 = vmatprep.mubr.f32.mxu0 0.0
        %v2619 = vand.u32 %v2363, 4294901760
        %v2620 = vsub.f32 %v2363, %v2619
        %2621 = vmatmul.mubr.f32.gmra.mrb[0].mxu0 %v2620
        %v2622 = vpop.f32.mrb[0].mxu0
        %v2623 = vadd.f32 %v2540, %v2622
        %v2624 = vpop.f32.mrb[0].mxu0
        %2625 = vdwg.mxu0
        %2626 = vmatprep.subr.mxu0 0.0
        %v2627 = vand.u32 %v2365, 4294901760
        %2628 = vmatpush1.xpose.msra.mxu0 %v2627
        %2629 = vmatprep.subr.mxu0 0.0
        %v2630 = vand.u32 %v2367, 4294901760
        %2631 = vmatpush1.xpose.msra.mxu0 %v2630
        %2632 = vmatprep.subr.mxu0 0.0
        %2633 = vmatpush1.xpose.msra.mxu0 0.0
        %2634 = vmatprep.subr.mxu0 0.0
        %2635 = vmatpush1.xpose.msra.mxu0 0.0
        %2636 = vmatprep.subr.mxu0 0.0
        %2637 = vmatpush1.xpose.msra.mxu0 0.0
        %2638 = vmatprep.subr.mxu0 0.0
        %2639 = vmatpush1.xpose.msra.mxu0 0.0
        %2640 = vmatprep.subr.mxu0 0.0
        %2641 = vmatpush1.xpose.msra.mxu0 0.0
        %2642 = vmatprep.subr.mxu0 0.0
        %2643 = vmatpush1.xpose.msra.mxu0 0.0
        %2644 = vmatprep.subr.mxu0 0.0
        %2645 = vmatpush1.xpose.msra.mxu0 0.0
        %2646 = vmatprep.subr.mxu0 0.0
        %2647 = vmatpush1.xpose.msra.mxu0 0.0
        %2648 = vmatprep.subr.mxu0 0.0
        %2649 = vmatpush1.xpose.msra.mxu0 0.0
        %2650 = vmatprep.subr.mxu0 0.0
        %2651 = vmatpush1.xpose.msra.mxu0 0.0
        %2652 = vmatprep.subr.mxu0 0.0
        %2653 = vmatpush1.xpose.msra.mxu0 0.0
        %2654 = vmatprep.subr.mxu0 0.0
        %2655 = vmatpush1.xpose.msra.mxu0 0.0
        %2656 = vmatprep.subr.mxu0 0.0
        %2657 = vmatpush1.xpose.msra.mxu0 0.0
        %2658 = vmatprep.subr.mxu0 0.0
        %2659 = vmatpush1.xpose.msra.mxu0 0.0
        %2660 = vmatprep.subr.mxu0 0.0
        %2661 = vmatpush1.xpose.msra.mxu0 0.0
        %2662 = vmatprep.subr.mxu0 0.0
        %2663 = vmatpush1.xpose.msra.mxu0 0.0
        %2664 = vmatprep.subr.mxu0 0.0
        %2665 = vmatpush1.xpose.msra.mxu0 0.0
        %2666 = vmatprep.subr.mxu0 0.0
        %2667 = vmatpush1.xpose.msra.mxu0 0.0
        %2668 = vmatprep.subr.mxu0 0.0
        %2669 = vmatpush1.xpose.msra.mxu0 0.0
        %2670 = vmatprep.subr.mxu0 0.0
        %2671 = vmatpush1.xpose.msra.mxu0 0.0
        %2672 = vmatprep.subr.mxu0 0.0
        %2673 = vmatpush1.xpose.msra.mxu0 0.0
        %2674 = vmatprep.subr.mxu0 0.0
        %2675 = vmatpush1.xpose.msra.mxu0 0.0
        %2676 = vmatprep.subr.mxu0 0.0
        %2677 = vmatpush1.xpose.msra.mxu0 0.0
        %2678 = vmatprep.subr.mxu0 0.0
        %2679 = vmatpush1.xpose.msra.mxu0 0.0
        %2680 = vmatprep.subr.mxu0 0.0
        %2681 = vmatpush1.xpose.msra.mxu0 0.0
        %2682 = vmatprep.subr.mxu0 0.0
        %2683 = vmatpush1.xpose.msra.mxu0 0.0
        %2684 = vmatprep.subr.mxu0 0.0
        %2685 = vmatpush1.xpose.msra.mxu0 0.0
        %2686 = vmatprep.subr.mxu0 0.0
        %2687 = vmatpush1.xpose.msra.mxu0 0.0
        %2688 = vmatprep.subr.mxu0 0.0
        %2689 = vmatpush1.xpose.msra.mxu0 0.0
        %2690 = vmatprep.subr.mxu0 0.0
        %2691 = vmatpush1.xpose.msra.mxu0 0.0
        %2692 = vmatprep.mubr.f32.mxu0 0.0
        %v2693 = vand.u32 %v2361, 4294901760
        %v2694 = vsub.f32 %v2361, %v2693
        %v2695 = vand.u32 %v2694, 4294901760
        %2696 = vmatmul.mubr.f32.gmra.mrb[0].mxu0 %v2695
        %v2697 = vpop.f32.mrb[0].mxu0
        %v2698 = vadd.f32 %v2616, %v2697
        %v2699 = vpop.f32.mrb[0].mxu0
        %2700 = vmatprep.mubr.f32.mxu0 0.0
        %v2701 = vand.u32 %v2363, 4294901760
        %v2702 = vsub.f32 %v2363, %v2701
        %v2703 = vand.u32 %v2702, 4294901760
        %2704 = vmatmul.mubr.f32.gmra.mrb[0].mxu0 %v2703
        %v2705 = vpop.f32.mrb[0].mxu0
        %v2706 = vadd.f32 %v2623, %v2705
        %v2707 = vpop.f32.mrb[0].mxu0
        %2708 = vdwg.mxu0
        %2709 = vmatprep.subr.mxu0 0.0
        %v2710 = vand.u32 %v2365, 4294901760
        %v2711 = vsub.f32 %v2365, %v2710
        %v2712 = vand.u32 %v2711, 4294901760
        %2713 = vmatpush1.xpose.msra.mxu0 %v2712
        %2714 = vmatprep.subr.mxu0 0.0
        %v2715 = vand.u32 %v2367, 4294901760
        %v2716 = vsub.f32 %v2367, %v2715
        %v2717 = vand.u32 %v2716, 4294901760
        %2718 = vmatpush1.xpose.msra.mxu0 %v2717
        %2719 = vmatprep.subr.mxu0 0.0
        %2720 = vmatpush1.xpose.msra.mxu0 0.0
        %2721 = vmatprep.subr.mxu0 0.0
        %2722 = vmatpush1.xpose.msra.mxu0 0.0
        %2723 = vmatprep.subr.mxu0 0.0
        %2724 = vmatpush1.xpose.msra.mxu0 0.0
        %2725 = vmatprep.subr.mxu0 0.0
        %2726 = vmatpush1.xpose.msra.mxu0 0.0
        %2727 = vmatprep.subr.mxu0 0.0
        %2728 = vmatpush1.xpose.msra.mxu0 0.0
        %2729 = vmatprep.subr.mxu0 0.0
        %2730 = vmatpush1.xpose.msra.mxu0 0.0
        %2731 = vmatprep.subr.mxu0 0.0
        %2732 = vmatpush1.xpose.msra.mxu0 0.0
        %2733 = vmatprep.subr.mxu0 0.0
        %2734 = vmatpush1.xpose.msra.mxu0 0.0
        %2735 = vmatprep.subr.mxu0 0.0
        %2736 = vmatpush1.xpose.msra.mxu0 0.0
        %2737 = vmatprep.subr.mxu0 0.0
        %2738 = vmatpush1.xpose.msra.mxu0 0.0
        %2739 = vmatprep.subr.mxu0 0.0
        %2740 = vmatpush1.xpose.msra.mxu0 0.0
        %2741 = vmatprep.subr.mxu0 0.0
        %2742 = vmatpush1.xpose.msra.mxu0 0.0
        %2743 = vmatprep.subr.mxu0 0.0
        %2744 = vmatpush1.xpose.msra.mxu0 0.0
        %2745 = vmatprep.subr.mxu0 0.0
        %2746 = vmatpush1.xpose.msra.mxu0 0.0
        %2747 = vmatprep.subr.mxu0 0.0
        %2748 = vmatpush1.xpose.msra.mxu0 0.0
        %2749 = vmatprep.subr.mxu0 0.0
        %2750 = vmatpush1.xpose.msra.mxu0 0.0
        %2751 = vmatprep.subr.mxu0 0.0
        %2752 = vmatpush1.xpose.msra.mxu0 0.0
        %2753 = vmatprep.subr.mxu0 0.0
        %2754 = vmatpush1.xpose.msra.mxu0 0.0
        %2755 = vmatprep.subr.mxu0 0.0
        %2756 = vmatpush1.xpose.msra.mxu0 0.0
        %2757 = vmatprep.subr.mxu0 0.0
        %2758 = vmatpush1.xpose.msra.mxu0 0.0
        %2759 = vmatprep.subr.mxu0 0.0
        %2760 = vmatpush1.xpose.msra.mxu0 0.0
        %2761 = vmatprep.subr.mxu0 0.0
        %2762 = vmatpush1.xpose.msra.mxu0 0.0
        %2763 = vmatprep.subr.mxu0 0.0
        %2764 = vmatpush1.xpose.msra.mxu0 0.0
        %2765 = vmatprep.subr.mxu0 0.0
        %2766 = vmatpush1.xpose.msra.mxu0 0.0
        %2767 = vmatprep.subr.mxu0 0.0
        %2768 = vmatpush1.xpose.msra.mxu0 0.0
        %2769 = vmatprep.subr.mxu0 0.0
        %2770 = vmatpush1.xpose.msra.mxu0 0.0
        %2771 = vmatprep.subr.mxu0 0.0
        %2772 = vmatpush1.xpose.msra.mxu0 0.0
        %2773 = vmatprep.subr.mxu0 0.0
        %2774 = vmatpush1.xpose.msra.mxu0 0.0
        %2775 = vmatprep.subr.mxu0 0.0
        %2776 = vmatpush1.xpose.msra.mxu0 0.0
        %2777 = vmatprep.subr.mxu0 0.0
        %2778 = vmatpush1.xpose.msra.mxu0 0.0
        %2779 = vmatprep.mubr.f32.mxu0 0.0
        %v2780 = vand.u32 %v2361, 4294901760
        %2781 = vmatmul.mubr.f32.gmra.mrb[0].mxu0 %v2780
        %v2782 = vpop.f32.mrb[0].mxu0
        %v2783 = vadd.f32 %v2698, %v2782
        %v2784 = vpop.f32.mrb[0].mxu0
        %2785 = vmatprep.mubr.f32.mxu0 0.0
        %v2786 = vand.u32 %v2363, 4294901760
        %2787 = vmatmul.mubr.f32.gmra.mrb[0].mxu0 %v2786
        %v2788 = vpop.f32.mrb[0].mxu0
        %v2789 = vadd.f32 %v2706, %v2788
        %v2790 = vpop.f32.mrb[0].mxu0
        %2791 = vdwg.mxu0
        %2792 = vmatprep.subr.mxu0 0.0
        %v2793 = vand.u32 %v2365, 4294901760
        %2794 = vmatpush1.xpose.msra.mxu0 %v2793
        %2795 = vmatprep.subr.mxu0 0.0
        %v2796 = vand.u32 %v2367, 4294901760
        %2797 = vmatpush1.xpose.msra.mxu0 %v2796
        %2798 = vmatprep.subr.mxu0 0.0
        %2799 = vmatpush1.xpose.msra.mxu0 0.0
        %2800 = vmatprep.subr.mxu0 0.0
        %2801 = vmatpush1.xpose.msra.mxu0 0.0
        %2802 = vmatprep.subr.mxu0 0.0
        %2803 = vmatpush1.xpose.msra.mxu0 0.0
        %2804 = vmatprep.subr.mxu0 0.0
        %2805 = vmatpush1.xpose.msra.mxu0 0.0
        %2806 = vmatprep.subr.mxu0 0.0
        %2807 = vmatpush1.xpose.msra.mxu0 0.0
        %2808 = vmatprep.subr.mxu0 0.0
        %2809 = vmatpush1.xpose.msra.mxu0 0.0
        %2810 = vmatprep.subr.mxu0 0.0
        %2811 = vmatpush1.xpose.msra.mxu0 0.0
        %2812 = vmatprep.subr.mxu0 0.0
        %2813 = vmatpush1.xpose.msra.mxu0 0.0
        %2814 = vmatprep.subr.mxu0 0.0
        %2815 = vmatpush1.xpose.msra.mxu0 0.0
        %2816 = vmatprep.subr.mxu0 0.0
        %2817 = vmatpush1.xpose.msra.mxu0 0.0
        %2818 = vmatprep.subr.mxu0 0.0
        %2819 = vmatpush1.xpose.msra.mxu0 0.0
        %2820 = vmatprep.subr.mxu0 0.0
        %2821 = vmatpush1.xpose.msra.mxu0 0.0
        %2822 = vmatprep.subr.mxu0 0.0
        %2823 = vmatpush1.xpose.msra.mxu0 0.0
        %2824 = vmatprep.subr.mxu0 0.0
        %2825 = vmatpush1.xpose.msra.mxu0 0.0
        %2826 = vmatprep.subr.mxu0 0.0
        %2827 = vmatpush1.xpose.msra.mxu0 0.0
        %2828 = vmatprep.subr.mxu0 0.0
        %2829 = vmatpush1.xpose.msra.mxu0 0.0
        %2830 = vmatprep.subr.mxu0 0.0
        %2831 = vmatpush1.xpose.msra.mxu0 0.0
        %2832 = vmatprep.subr.mxu0 0.0
        %2833 = vmatpush1.xpose.msra.mxu0 0.0
        %2834 = vmatprep.subr.mxu0 0.0
        %2835 = vmatpush1.xpose.msra.mxu0 0.0
        %2836 = vmatprep.subr.mxu0 0.0
        %2837 = vmatpush1.xpose.msra.mxu0 0.0
        %2838 = vmatprep.subr.mxu0 0.0
        %2839 = vmatpush1.xpose.msra.mxu0 0.0
        %2840 = vmatprep.subr.mxu0 0.0
        %2841 = vmatpush1.xpose.msra.mxu0 0.0
        %2842 = vmatprep.subr.mxu0 0.0
        %2843 = vmatpush1.xpose.msra.mxu0 0.0
        %2844 = vmatprep.subr.mxu0 0.0
        %2845 = vmatpush1.xpose.msra.mxu0 0.0
        %2846 = vmatprep.subr.mxu0 0.0
        %2847 = vmatpush1.xpose.msra.mxu0 0.0
        %2848 = vmatprep.subr.mxu0 0.0
        %2849 = vmatpush1.xpose.msra.mxu0 0.0
        %2850 = vmatprep.subr.mxu0 0.0
        %2851 = vmatpush1.xpose.msra.mxu0 0.0
        %2852 = vmatprep.subr.mxu0 0.0
        %2853 = vmatpush1.xpose.msra.mxu0 0.0
        %2854 = vmatprep.subr.mxu0 0.0
        %2855 = vmatpush1.xpose.msra.mxu0 0.0
        %2856 = vmatprep.subr.mxu0 0.0
        %2857 = vmatpush1.xpose.msra.mxu0 0.0
        %2858 = vmatprep.mubr.f32.mxu0 0.0
        %v2859 = vand.u32 %v2361, 4294901760
        %2860 = vmatmul.mubr.f32.gmra.mrb[0].mxu0 %v2859
        %v2861 = vpop.f32.mrb[0].mxu0
        %v2862 = vadd.f32 %v2783, %v2861
        %v2863 = vpop.f32.mrb[0].mxu0
        %2864 = vmatprep.mubr.f32.mxu0 0.0
        %v2865 = vand.u32 %v2363, 4294901760
        %2866 = vmatmul.mubr.f32.gmra.mrb[0].mxu0 %v2865
        %v2867 = vpop.f32.mrb[0].mxu0
        %v2868 = vadd.f32 %v2789, %v2867
        %v2869 = vpop.f32.mrb[0].mxu0
        %2870 = vdwg.mxu0
        %v2871 = vsel %vm1319, %v2862, -inf
        %2872 = vmax.xlane.f32.xlu0 %v2871
        %v2873 = vpop.xlane.xlu0 %2872
        %v2874 = vsel %vm1319, %v2868, -inf
        %2875 = vmax.xlane.f32.xlu0 %v2874
        %v2876 = vpop.xlane.xlu0 %2875
        %v2877 = vsub.f32 %v2862, %v2873
        %v2878 = vsub.f32 %v2868, %v2876
        %v2879 = vmul.f32 %v2877, 1.442695
        %v2880 = vpow.pop %v2879
        %v2881 = vmul.f32 %v2878, 1.442695
        %v2882 = vpow.pop %v2881
        %v2883 = vsel %vm1319, %v2880, 0.0
        %2884 = vadd.xlane.f32.xlu0 %v2883
        %v2885 = vpop.xlane.xlu0 %2884
        %v2886 = vsel %vm1319, %v2882, 0.0
        %2887 = vadd.xlane.f32.xlu0 %v2886
        %v2888 = vpop.xlane.xlu0 %2887
        %v2889 = vrcp.pop %v2885
        %v2890 = vrcp.pop %v2888
        %v2891 = vmul.f32 %v2880, %v2889
        %v2892 = vmul.f32 %v2882, %v2890
        %2893 = vrot.lane.b32.xlu0 %v788, 56
        %v2894 = vpop.permute.xlu0 %2893
        %2895 = vrot.lane.b32.xlu0 %v794, 56
        %v2896 = vpop.permute.xlu0 %2895
        %v2900 = vsel %vm1319, %v2891, 0
        %v2903 = vsel %vm1319, %v2892, 0
        %2905 = vmatprep.subr.mxu0 0.0
        %v2906 = vand.u32 %v2894, 4294901760
        %2907 = vmatpush1.msra.mxu0 %v2906
        %2908 = vmatprep.subr.mxu0 0.0
        %v2909 = vand.u32 %v2896, 4294901760
        %2910 = vmatpush1.msra.mxu0 %v2909
        %2911 = vmatprep.subr.mxu0 0.0
        %2912 = vmatpush1.msra.mxu0 0.0
        %2913 = vmatprep.subr.mxu0 0.0
        %2914 = vmatpush1.msra.mxu0 0.0
        %2915 = vmatprep.subr.mxu0 0.0
        %2916 = vmatpush1.msra.mxu0 0.0
        %2917 = vmatprep.subr.mxu0 0.0
        %2918 = vmatpush1.msra.mxu0 0.0
        %2919 = vmatprep.subr.mxu0 0.0
        %2920 = vmatpush1.msra.mxu0 0.0
        %2921 = vmatprep.subr.mxu0 0.0
        %2922 = vmatpush1.msra.mxu0 0.0
        %2923 = vmatprep.subr.mxu0 0.0
        %2924 = vmatpush1.msra.mxu0 0.0
        %2925 = vmatprep.subr.mxu0 0.0
        %2926 = vmatpush1.msra.mxu0 0.0
        %2927 = vmatprep.subr.mxu0 0.0
        %2928 = vmatpush1.msra.mxu0 0.0
        %2929 = vmatprep.subr.mxu0 0.0
        %2930 = vmatpush1.msra.mxu0 0.0
        %2931 = vmatprep.subr.mxu0 0.0
        %2932 = vmatpush1.msra.mxu0 0.0
        %2933 = vmatprep.subr.mxu0 0.0
        %2934 = vmatpush1.msra.mxu0 0.0
        %2935 = vmatprep.subr.mxu0 0.0
        %2936 = vmatpush1.msra.mxu0 0.0
        %2937 = vmatprep.subr.mxu0 0.0
        %2938 = vmatpush1.msra.mxu0 0.0
        %2939 = vmatprep.subr.mxu0 0.0
        %2940 = vmatpush1.msra.mxu0 0.0
        %2941 = vmatprep.subr.mxu0 0.0
        %2942 = vmatpush1.msra.mxu0 0.0
        %2943 = vmatprep.subr.mxu0 0.0
        %2944 = vmatpush1.msra.mxu0 0.0
        %2945 = vmatprep.subr.mxu0 0.0
        %2946 = vmatpush1.msra.mxu0 0.0
        %2947 = vmatprep.subr.mxu0 0.0
        %2948 = vmatpush1.msra.mxu0 0.0
        %2949 = vmatprep.subr.mxu0 0.0
        %2950 = vmatpush1.msra.mxu0 0.0
        %2951 = vmatprep.subr.mxu0 0.0
        %2952 = vmatpush1.msra.mxu0 0.0
        %2953 = vmatprep.subr.mxu0 0.0
        %2954 = vmatpush1.msra.mxu0 0.0
        %2955 = vmatprep.subr.mxu0 0.0
        %2956 = vmatpush1.msra.mxu0 0.0
        %2957 = vmatprep.subr.mxu0 0.0
        %2958 = vmatpush1.msra.mxu0 0.0
        %2959 = vmatprep.subr.mxu0 0.0
        %2960 = vmatpush1.msra.mxu0 0.0
        %2961 = vmatprep.subr.mxu0 0.0
        %2962 = vmatpush1.msra.mxu0 0.0
        %2963 = vmatprep.subr.mxu0 0.0
        %2964 = vmatpush1.msra.mxu0 0.0
        %2965 = vmatprep.subr.mxu0 0.0
        %2966 = vmatpush1.msra.mxu0 0.0
        %2967 = vmatprep.subr.mxu0 0.0
        %2968 = vmatpush1.msra.mxu0 0.0
        %2969 = vmatprep.subr.mxu0 0.0
        %2970 = vmatpush1.msra.mxu0 0.0
        %2971 = vmatprep.mubr.f32.mxu0 0.0
        %v2972 = vand.u32 %v2900, 4294901760
        %v2973 = vsub.f32 %v2900, %v2972
        %v2974 = vand.u32 %v2973, 4294901760
        %v2975 = vsub.f32 %v2973, %v2974
        %v2976 = vand.u32 %v2975, 4294901760
        %2977 = vmatmul.mubr.f32.gmra.mrb[0].mxu0 %v2976
        %v2978 = vpop.f32.mrb[0].mxu0
        %v2979 = vadd.f32 0.0, %v2978
        %v2980 = vpop.f32.mrb[0].mxu0
        %2981 = vmatprep.mubr.f32.mxu0 0.0
        %v2982 = vand.u32 %v2903, 4294901760
        %v2983 = vsub.f32 %v2903, %v2982
        %v2984 = vand.u32 %v2983, 4294901760
        %v2985 = vsub.f32 %v2983, %v2984
        %v2986 = vand.u32 %v2985, 4294901760
        %2987 = vmatmul.mubr.f32.gmra.mrb[0].mxu0 %v2986
        %v2988 = vpop.f32.mrb[0].mxu0
        %v2989 = vadd.f32 0.0, %v2988
        %v2990 = vpop.f32.mrb[0].mxu0
        %2991 = vdwg.mxu0
        %2992 = vmatprep.subr.mxu0 0.0
        %v2993 = vand.u32 %v2894, 4294901760
        %v2994 = vsub.f32 %v2894, %v2993
        %v2995 = vand.u32 %v2994, 4294901760
        %v2996 = vsub.f32 %v2994, %v2995
        %v2997 = vand.u32 %v2996, 4294901760
        %2998 = vmatpush1.msra.mxu0 %v2997
        %2999 = vmatprep.subr.mxu0 0.0
        %v3000 = vand.u32 %v2896, 4294901760
        %v3001 = vsub.f32 %v2896, %v3000
        %v3002 = vand.u32 %v3001, 4294901760
        %v3003 = vsub.f32 %v3001, %v3002
        %v3004 = vand.u32 %v3003, 4294901760
        %3005 = vmatpush1.msra.mxu0 %v3004
        %3006 = vmatprep.subr.mxu0 0.0
        %3007 = vmatpush1.msra.mxu0 0.0
        %3008 = vmatprep.subr.mxu0 0.0
        %3009 = vmatpush1.msra.mxu0 0.0
        %3010 = vmatprep.subr.mxu0 0.0
        %3011 = vmatpush1.msra.mxu0 0.0
        %3012 = vmatprep.subr.mxu0 0.0
        %3013 = vmatpush1.msra.mxu0 0.0
        %3014 = vmatprep.subr.mxu0 0.0
        %3015 = vmatpush1.msra.mxu0 0.0
        %3016 = vmatprep.subr.mxu0 0.0
        %3017 = vmatpush1.msra.mxu0 0.0
        %3018 = vmatprep.subr.mxu0 0.0
        %3019 = vmatpush1.msra.mxu0 0.0
        %3020 = vmatprep.subr.mxu0 0.0
        %3021 = vmatpush1.msra.mxu0 0.0
        %3022 = vmatprep.subr.mxu0 0.0
        %3023 = vmatpush1.msra.mxu0 0.0
        %3024 = vmatprep.subr.mxu0 0.0
        %3025 = vmatpush1.msra.mxu0 0.0
        %3026 = vmatprep.subr.mxu0 0.0
        %3027 = vmatpush1.msra.mxu0 0.0
        %3028 = vmatprep.subr.mxu0 0.0
        %3029 = vmatpush1.msra.mxu0 0.0
        %3030 = vmatprep.subr.mxu0 0.0
        %3031 = vmatpush1.msra.mxu0 0.0
        %3032 = vmatprep.subr.mxu0 0.0
        %3033 = vmatpush1.msra.mxu0 0.0
        %3034 = vmatprep.subr.mxu0 0.0
        %3035 = vmatpush1.msra.mxu0 0.0
        %3036 = vmatprep.subr.mxu0 0.0
        %3037 = vmatpush1.msra.mxu0 0.0
        %3038 = vmatprep.subr.mxu0 0.0
        %3039 = vmatpush1.msra.mxu0 0.0
        %3040 = vmatprep.subr.mxu0 0.0
        %3041 = vmatpush1.msra.mxu0 0.0
        %3042 = vmatprep.subr.mxu0 0.0
        %3043 = vmatpush1.msra.mxu0 0.0
        %3044 = vmatprep.subr.mxu0 0.0
        %3045 = vmatpush1.msra.mxu0 0.0
        %3046 = vmatprep.subr.mxu0 0.0
        %3047 = vmatpush1.msra.mxu0 0.0
        %3048 = vmatprep.subr.mxu0 0.0
        %3049 = vmatpush1.msra.mxu0 0.0
        %3050 = vmatprep.subr.mxu0 0.0
        %3051 = vmatpush1.msra.mxu0 0.0
        %3052 = vmatprep.subr.mxu0 0.0
        %3053 = vmatpush1.msra.mxu0 0.0
        %3054 = vmatprep.subr.mxu0 0.0
        %3055 = vmatpush1.msra.mxu0 0.0
        %3056 = vmatprep.subr.mxu0 0.0
        %3057 = vmatpush1.msra.mxu0 0.0
        %3058 = vmatprep.subr.mxu0 0.0
        %3059 = vmatpush1.msra.mxu0 0.0
        %3060 = vmatprep.subr.mxu0 0.0
        %3061 = vmatpush1.msra.mxu0 0.0
        %3062 = vmatprep.subr.mxu0 0.0
        %3063 = vmatpush1.msra.mxu0 0.0
        %3064 = vmatprep.subr.mxu0 0.0
        %3065 = vmatpush1.msra.mxu0 0.0
        %3066 = vmatprep.mubr.f32.mxu0 0.0
        %v3067 = vand.u32 %v2900, 4294901760
        %3068 = vmatmul.mubr.f32.gmra.mrb[0].mxu0 %v3067
        %v3069 = vpop.f32.mrb[0].mxu0
        %v3070 = vadd.f32 %v2979, %v3069
        %v3071 = vpop.f32.mrb[0].mxu0
        %3072 = vmatprep.mubr.f32.mxu0 0.0
        %v3073 = vand.u32 %v2903, 4294901760
        %3074 = vmatmul.mubr.f32.gmra.mrb[0].mxu0 %v3073
        %v3075 = vpop.f32.mrb[0].mxu0
        %v3076 = vadd.f32 %v2989, %v3075
        %v3077 = vpop.f32.mrb[0].mxu0
        %3078 = vdwg.mxu0
        %3079 = vmatprep.subr.mxu0 0.0
        %v3080 = vand.u32 %v2894, 4294901760
        %v3081 = vsub.f32 %v2894, %v3080
        %3082 = vmatpush1.msra.mxu0 %v3081
        %3083 = vmatprep.subr.mxu0 0.0
        %v3084 = vand.u32 %v2896, 4294901760
        %v3085 = vsub.f32 %v2896, %v3084
        %3086 = vmatpush1.msra.mxu0 %v3085
        %3087 = vmatprep.subr.mxu0 0.0
        %3088 = vmatpush1.msra.mxu0 0.0
        %3089 = vmatprep.subr.mxu0 0.0
        %3090 = vmatpush1.msra.mxu0 0.0
        %3091 = vmatprep.subr.mxu0 0.0
        %3092 = vmatpush1.msra.mxu0 0.0
        %3093 = vmatprep.subr.mxu0 0.0
        %3094 = vmatpush1.msra.mxu0 0.0
        %3095 = vmatprep.subr.mxu0 0.0
        %3096 = vmatpush1.msra.mxu0 0.0
        %3097 = vmatprep.subr.mxu0 0.0
        %3098 = vmatpush1.msra.mxu0 0.0
        %3099 = vmatprep.subr.mxu0 0.0
        %3100 = vmatpush1.msra.mxu0 0.0
        %3101 = vmatprep.subr.mxu0 0.0
        %3102 = vmatpush1.msra.mxu0 0.0
        %3103 = vmatprep.subr.mxu0 0.0
        %3104 = vmatpush1.msra.mxu0 0.0
        %3105 = vmatprep.subr.mxu0 0.0
        %3106 = vmatpush1.msra.mxu0 0.0
        %3107 = vmatprep.subr.mxu0 0.0
        %3108 = vmatpush1.msra.mxu0 0.0
        %3109 = vmatprep.subr.mxu0 0.0
        %3110 = vmatpush1.msra.mxu0 0.0
        %3111 = vmatprep.subr.mxu0 0.0
        %3112 = vmatpush1.msra.mxu0 0.0
        %3113 = vmatprep.subr.mxu0 0.0
        %3114 = vmatpush1.msra.mxu0 0.0
        %3115 = vmatprep.subr.mxu0 0.0
        %3116 = vmatpush1.msra.mxu0 0.0
        %3117 = vmatprep.subr.mxu0 0.0
        %3118 = vmatpush1.msra.mxu0 0.0
        %3119 = vmatprep.subr.mxu0 0.0
        %3120 = vmatpush1.msra.mxu0 0.0
        %3121 = vmatprep.subr.mxu0 0.0
        %3122 = vmatpush1.msra.mxu0 0.0
        %3123 = vmatprep.subr.mxu0 0.0
        %3124 = vmatpush1.msra.mxu0 0.0
        %3125 = vmatprep.subr.mxu0 0.0
        %3126 = vmatpush1.msra.mxu0 0.0
        %3127 = vmatprep.subr.mxu0 0.0
        %3128 = vmatpush1.msra.mxu0 0.0
        %3129 = vmatprep.subr.mxu0 0.0
        %3130 = vmatpush1.msra.mxu0 0.0
        %3131 = vmatprep.subr.mxu0 0.0
        %3132 = vmatpush1.msra.mxu0 0.0
        %3133 = vmatprep.subr.mxu0 0.0
        %3134 = vmatpush1.msra.mxu0 0.0
        %3135 = vmatprep.subr.mxu0 0.0
        %3136 = vmatpush1.msra.mxu0 0.0
        %3137 = vmatprep.subr.mxu0 0.0
        %3138 = vmatpush1.msra.mxu0 0.0
        %3139 = vmatprep.subr.mxu0 0.0
        %3140 = vmatpush1.msra.mxu0 0.0
        %3141 = vmatprep.subr.mxu0 0.0
        %3142 = vmatpush1.msra.mxu0 0.0
        %3143 = vmatprep.subr.mxu0 0.0
        %3144 = vmatpush1.msra.mxu0 0.0
        %3145 = vmatprep.subr.mxu0 0.0
        %3146 = vmatpush1.msra.mxu0 0.0
        %3147 = vmatprep.mubr.f32.mxu0 0.0
        %v3148 = vand.u32 %v2900, 4294901760
        %v3149 = vsub.f32 %v2900, %v3148
        %3150 = vmatmul.mubr.f32.gmra.mrb[0].mxu0 %v3149
        %v3151 = vpop.f32.mrb[0].mxu0
        %v3152 = vadd.f32 %v3070, %v3151
        %v3153 = vpop.f32.mrb[0].mxu0
        %3154 = vmatprep.mubr.f32.mxu0 0.0
        %v3155 = vand.u32 %v2903, 4294901760
        %v3156 = vsub.f32 %v2903, %v3155
        %3157 = vmatmul.mubr.f32.gmra.mrb[0].mxu0 %v3156
        %v3158 = vpop.f32.mrb[0].mxu0
        %v3159 = vadd.f32 %v3076, %v3158
        %v3160 = vpop.f32.mrb[0].mxu0
        %3161 = vdwg.mxu0
        %3162 = vmatprep.subr.mxu0 0.0
        %v3163 = vand.u32 %v2894, 4294901760
        %3164 = vmatpush1.msra.mxu0 %v3163
        %3165 = vmatprep.subr.mxu0 0.0
        %v3166 = vand.u32 %v2896, 4294901760
        %3167 = vmatpush1.msra.mxu0 %v3166
        %3168 = vmatprep.subr.mxu0 0.0
        %3169 = vmatpush1.msra.mxu0 0.0
        %3170 = vmatprep.subr.mxu0 0.0
        %3171 = vmatpush1.msra.mxu0 0.0
        %3172 = vmatprep.subr.mxu0 0.0
        %3173 = vmatpush1.msra.mxu0 0.0
        %3174 = vmatprep.subr.mxu0 0.0
        %3175 = vmatpush1.msra.mxu0 0.0
        %3176 = vmatprep.subr.mxu0 0.0
        %3177 = vmatpush1.msra.mxu0 0.0
        %3178 = vmatprep.subr.mxu0 0.0
        %3179 = vmatpush1.msra.mxu0 0.0
        %3180 = vmatprep.subr.mxu0 0.0
        %3181 = vmatpush1.msra.mxu0 0.0
        %3182 = vmatprep.subr.mxu0 0.0
        %3183 = vmatpush1.msra.mxu0 0.0
        %3184 = vmatprep.subr.mxu0 0.0
        %3185 = vmatpush1.msra.mxu0 0.0
        %3186 = vmatprep.subr.mxu0 0.0
        %3187 = vmatpush1.msra.mxu0 0.0
        %3188 = vmatprep.subr.mxu0 0.0
        %3189 = vmatpush1.msra.mxu0 0.0
        %3190 = vmatprep.subr.mxu0 0.0
        %3191 = vmatpush1.msra.mxu0 0.0
        %3192 = vmatprep.subr.mxu0 0.0
        %3193 = vmatpush1.msra.mxu0 0.0
        %3194 = vmatprep.subr.mxu0 0.0
        %3195 = vmatpush1.msra.mxu0 0.0
        %3196 = vmatprep.subr.mxu0 0.0
        %3197 = vmatpush1.msra.mxu0 0.0
        %3198 = vmatprep.subr.mxu0 0.0
        %3199 = vmatpush1.msra.mxu0 0.0
        %3200 = vmatprep.subr.mxu0 0.0
        %3201 = vmatpush1.msra.mxu0 0.0
        %3202 = vmatprep.subr.mxu0 0.0
        %3203 = vmatpush1.msra.mxu0 0.0
        %3204 = vmatprep.subr.mxu0 0.0
        %3205 = vmatpush1.msra.mxu0 0.0
        %3206 = vmatprep.subr.mxu0 0.0
        %3207 = vmatpush1.msra.mxu0 0.0
        %3208 = vmatprep.subr.mxu0 0.0
        %3209 = vmatpush1.msra.mxu0 0.0
        %3210 = vmatprep.subr.mxu0 0.0
        %3211 = vmatpush1.msra.mxu0 0.0
        %3212 = vmatprep.subr.mxu0 0.0
        %3213 = vmatpush1.msra.mxu0 0.0
        %3214 = vmatprep.subr.mxu0 0.0
        %3215 = vmatpush1.msra.mxu0 0.0
        %3216 = vmatprep.subr.mxu0 0.0
        %3217 = vmatpush1.msra.mxu0 0.0
        %3218 = vmatprep.subr.mxu0 0.0
        %3219 = vmatpush1.msra.mxu0 0.0
        %3220 = vmatprep.subr.mxu0 0.0
        %3221 = vmatpush1.msra.mxu0 0.0
        %3222 = vmatprep.subr.mxu0 0.0
        %3223 = vmatpush1.msra.mxu0 0.0
        %3224 = vmatprep.subr.mxu0 0.0
        %3225 = vmatpush1.msra.mxu0 0.0
        %3226 = vmatprep.subr.mxu0 0.0
        %3227 = vmatpush1.msra.mxu0 0.0
        %3228 = vmatprep.mubr.f32.mxu0 0.0
        %v3229 = vand.u32 %v2900, 4294901760
        %v3230 = vsub.f32 %v2900, %v3229
        %v3231 = vand.u32 %v3230, 4294901760
        %3232 = vmatmul.mubr.f32.gmra.mrb[0].mxu0 %v3231
        %v3233 = vpop.f32.mrb[0].mxu0
        %v3234 = vadd.f32 %v3152, %v3233
        %v3235 = vpop.f32.mrb[0].mxu0
        %3236 = vmatprep.mubr.f32.mxu0 0.0
        %v3237 = vand.u32 %v2903, 4294901760
        %v3238 = vsub.f32 %v2903, %v3237
        %v3239 = vand.u32 %v3238, 4294901760
        %3240 = vmatmul.mubr.f32.gmra.mrb[0].mxu0 %v3239
        %v3241 = vpop.f32.mrb[0].mxu0
        %v3242 = vadd.f32 %v3159, %v3241
        %v3243 = vpop.f32.mrb[0].mxu0
        %3244 = vdwg.mxu0
        %3245 = vmatprep.subr.mxu0 0.0
        %v3246 = vand.u32 %v2894, 4294901760
        %v3247 = vsub.f32 %v2894, %v3246
        %v3248 = vand.u32 %v3247, 4294901760
        %3249 = vmatpush1.msra.mxu0 %v3248
        %3250 = vmatprep.subr.mxu0 0.0
        %v3251 = vand.u32 %v2896, 4294901760
        %v3252 = vsub.f32 %v2896, %v3251
        %v3253 = vand.u32 %v3252, 4294901760
        %3254 = vmatpush1.msra.mxu0 %v3253
        %3255 = vmatprep.subr.mxu0 0.0
        %3256 = vmatpush1.msra.mxu0 0.0
        %3257 = vmatprep.subr.mxu0 0.0
        %3258 = vmatpush1.msra.mxu0 0.0
        %3259 = vmatprep.subr.mxu0 0.0
        %3260 = vmatpush1.msra.mxu0 0.0
        %3261 = vmatprep.subr.mxu0 0.0
        %3262 = vmatpush1.msra.mxu0 0.0
        %3263 = vmatprep.subr.mxu0 0.0
        %3264 = vmatpush1.msra.mxu0 0.0
        %3265 = vmatprep.subr.mxu0 0.0
        %3266 = vmatpush1.msra.mxu0 0.0
        %3267 = vmatprep.subr.mxu0 0.0
        %3268 = vmatpush1.msra.mxu0 0.0
        %3269 = vmatprep.subr.mxu0 0.0
        %3270 = vmatpush1.msra.mxu0 0.0
        %3271 = vmatprep.subr.mxu0 0.0
        %3272 = vmatpush1.msra.mxu0 0.0
        %3273 = vmatprep.subr.mxu0 0.0
        %3274 = vmatpush1.msra.mxu0 0.0
        %3275 = vmatprep.subr.mxu0 0.0
        %3276 = vmatpush1.msra.mxu0 0.0
        %3277 = vmatprep.subr.mxu0 0.0
        %3278 = vmatpush1.msra.mxu0 0.0
        %3279 = vmatprep.subr.mxu0 0.0
        %3280 = vmatpush1.msra.mxu0 0.0
        %3281 = vmatprep.subr.mxu0 0.0
        %3282 = vmatpush1.msra.mxu0 0.0
        %3283 = vmatprep.subr.mxu0 0.0
        %3284 = vmatpush1.msra.mxu0 0.0
        %3285 = vmatprep.subr.mxu0 0.0
        %3286 = vmatpush1.msra.mxu0 0.0
        %3287 = vmatprep.subr.mxu0 0.0
        %3288 = vmatpush1.msra.mxu0 0.0
        %3289 = vmatprep.subr.mxu0 0.0
        %3290 = vmatpush1.msra.mxu0 0.0
        %3291 = vmatprep.subr.mxu0 0.0
        %3292 = vmatpush1.msra.mxu0 0.0
        %3293 = vmatprep.subr.mxu0 0.0
        %3294 = vmatpush1.msra.mxu0 0.0
        %3295 = vmatprep.subr.mxu0 0.0
        %3296 = vmatpush1.msra.mxu0 0.0
        %3297 = vmatprep.subr.mxu0 0.0
        %3298 = vmatpush1.msra.mxu0 0.0
        %3299 = vmatprep.subr.mxu0 0.0
        %3300 = vmatpush1.msra.mxu0 0.0
        %3301 = vmatprep.subr.mxu0 0.0
        %3302 = vmatpush1.msra.mxu0 0.0
        %3303 = vmatprep.subr.mxu0 0.0
        %3304 = vmatpush1.msra.mxu0 0.0
        %3305 = vmatprep.subr.mxu0 0.0
        %3306 = vmatpush1.msra.mxu0 0.0
        %3307 = vmatprep.subr.mxu0 0.0
        %3308 = vmatpush1.msra.mxu0 0.0
        %3309 = vmatprep.subr.mxu0 0.0
        %3310 = vmatpush1.msra.mxu0 0.0
        %3311 = vmatprep.subr.mxu0 0.0
        %3312 = vmatpush1.msra.mxu0 0.0
        %3313 = vmatprep.subr.mxu0 0.0
        %3314 = vmatpush1.msra.mxu0 0.0
        %3315 = vmatprep.mubr.f32.mxu0 0.0
        %v3316 = vand.u32 %v2900, 4294901760
        %3317 = vmatmul.mubr.f32.gmra.mrb[0].mxu0 %v3316
        %v3318 = vpop.f32.mrb[0].mxu0
        %v3319 = vadd.f32 %v3234, %v3318
        %v3320 = vpop.f32.mrb[0].mxu0
        %3321 = vmatprep.mubr.f32.mxu0 0.0
        %v3322 = vand.u32 %v2903, 4294901760
        %3323 = vmatmul.mubr.f32.gmra.mrb[0].mxu0 %v3322
        %v3324 = vpop.f32.mrb[0].mxu0
        %v3325 = vadd.f32 %v3242, %v3324
        %v3326 = vpop.f32.mrb[0].mxu0
        %3327 = vdwg.mxu0
        %3328 = vmatprep.subr.mxu0 0.0
        %v3329 = vand.u32 %v2894, 4294901760
        %3330 = vmatpush1.msra.mxu0 %v3329
        %3331 = vmatprep.subr.mxu0 0.0
        %v3332 = vand.u32 %v2896, 4294901760
        %3333 = vmatpush1.msra.mxu0 %v3332
        %3334 = vmatprep.subr.mxu0 0.0
        %3335 = vmatpush1.msra.mxu0 0.0
        %3336 = vmatprep.subr.mxu0 0.0
        %3337 = vmatpush1.msra.mxu0 0.0
        %3338 = vmatprep.subr.mxu0 0.0
        %3339 = vmatpush1.msra.mxu0 0.0
        %3340 = vmatprep.subr.mxu0 0.0
        %3341 = vmatpush1.msra.mxu0 0.0
        %3342 = vmatprep.subr.mxu0 0.0
        %3343 = vmatpush1.msra.mxu0 0.0
        %3344 = vmatprep.subr.mxu0 0.0
        %3345 = vmatpush1.msra.mxu0 0.0
        %3346 = vmatprep.subr.mxu0 0.0
        %3347 = vmatpush1.msra.mxu0 0.0
        %3348 = vmatprep.subr.mxu0 0.0
        %3349 = vmatpush1.msra.mxu0 0.0
        %3350 = vmatprep.subr.mxu0 0.0
        %3351 = vmatpush1.msra.mxu0 0.0
        %3352 = vmatprep.subr.mxu0 0.0
        %3353 = vmatpush1.msra.mxu0 0.0
        %3354 = vmatprep.subr.mxu0 0.0
        %3355 = vmatpush1.msra.mxu0 0.0
        %3356 = vmatprep.subr.mxu0 0.0
        %3357 = vmatpush1.msra.mxu0 0.0
        %3358 = vmatprep.subr.mxu0 0.0
        %3359 = vmatpush1.msra.mxu0 0.0
        %3360 = vmatprep.subr.mxu0 0.0
        %3361 = vmatpush1.msra.mxu0 0.0
        %3362 = vmatprep.subr.mxu0 0.0
        %3363 = vmatpush1.msra.mxu0 0.0
        %3364 = vmatprep.subr.mxu0 0.0
        %3365 = vmatpush1.msra.mxu0 0.0
        %3366 = vmatprep.subr.mxu0 0.0
        %3367 = vmatpush1.msra.mxu0 0.0
        %3368 = vmatprep.subr.mxu0 0.0
        %3369 = vmatpush1.msra.mxu0 0.0
        %3370 = vmatprep.subr.mxu0 0.0
        %3371 = vmatpush1.msra.mxu0 0.0
        %3372 = vmatprep.subr.mxu0 0.0
        %3373 = vmatpush1.msra.mxu0 0.0
        %3374 = vmatprep.subr.mxu0 0.0
        %3375 = vmatpush1.msra.mxu0 0.0
        %3376 = vmatprep.subr.mxu0 0.0
        %3377 = vmatpush1.msra.mxu0 0.0
        %3378 = vmatprep.subr.mxu0 0.0
        %3379 = vmatpush1.msra.mxu0 0.0
        %3380 = vmatprep.subr.mxu0 0.0
        %3381 = vmatpush1.msra.mxu0 0.0
        %3382 = vmatprep.subr.mxu0 0.0
        %3383 = vmatpush1.msra.mxu0 0.0
        %3384 = vmatprep.subr.mxu0 0.0
        %3385 = vmatpush1.msra.mxu0 0.0
        %3386 = vmatprep.subr.mxu0 0.0
        %3387 = vmatpush1.msra.mxu0 0.0
        %3388 = vmatprep.subr.mxu0 0.0
        %3389 = vmatpush1.msra.mxu0 0.0
        %3390 = vmatprep.subr.mxu0 0.0
        %3391 = vmatpush1.msra.mxu0 0.0
        %3392 = vmatprep.subr.mxu0 0.0
        %3393 = vmatpush1.msra.mxu0 0.0
        %3394 = vmatprep.mubr.f32.mxu0 0.0
        %v3395 = vand.u32 %v2900, 4294901760
        %3396 = vmatmul.mubr.f32.gmra.mrb[0].mxu0 %v3395
        %v3397 = vpop.f32.mrb[0].mxu0
        %v3398 = vadd.f32 %v3319, %v3397
        %v3399 = vpop.f32.mrb[0].mxu0
        %3400 = vmatprep.mubr.f32.mxu0 0.0
        %v3401 = vand.u32 %v2903, 4294901760
        %3402 = vmatmul.mubr.f32.gmra.mrb[0].mxu0 %v3401
        %v3403 = vpop.f32.mrb[0].mxu0
        %v3404 = vadd.f32 %v3325, %v3403
        %v3405 = vpop.f32.mrb[0].mxu0
        %3406 = vdwg.mxu0
        %v3408 = vsel %vm808, %v3398, 0
        %v3411 = vsel %vm808, %v3404, 0
        %3413 = vmatprep.subr.mxu0 0.0
        %v3414 = vand.u32 %v253, 4294901760
        %3415 = vmatpush1.msra.mxu0 %v3414
        %3416 = vmatprep.subr.mxu0 0.0
        %3417 = vmatpush1.msra.mxu0 0.0
        %3418 = vmatprep.subr.mxu0 0.0
        %3419 = vmatpush1.msra.mxu0 0.0
        %3420 = vmatprep.subr.mxu0 0.0
        %3421 = vmatpush1.msra.mxu0 0.0
        %3422 = vmatprep.subr.mxu0 0.0
        %3423 = vmatpush1.msra.mxu0 0.0
        %3424 = vmatprep.subr.mxu0 0.0
        %3425 = vmatpush1.msra.mxu0 0.0
        %3426 = vmatprep.subr.mxu0 0.0
        %3427 = vmatpush1.msra.mxu0 0.0
        %3428 = vmatprep.subr.mxu0 0.0
        %3429 = vmatpush1.msra.mxu0 0.0
        %3430 = vmatprep.subr.mxu0 0.0
        %3431 = vmatpush1.msra.mxu0 0.0
        %3432 = vmatprep.subr.mxu0 0.0
        %3433 = vmatpush1.msra.mxu0 0.0
        %3434 = vmatprep.subr.mxu0 0.0
        %3435 = vmatpush1.msra.mxu0 0.0
        %3436 = vmatprep.subr.mxu0 0.0
        %3437 = vmatpush1.msra.mxu0 0.0
        %3438 = vmatprep.subr.mxu0 0.0
        %3439 = vmatpush1.msra.mxu0 0.0
        %3440 = vmatprep.subr.mxu0 0.0
        %3441 = vmatpush1.msra.mxu0 0.0
        %3442 = vmatprep.subr.mxu0 0.0
        %3443 = vmatpush1.msra.mxu0 0.0
        %3444 = vmatprep.subr.mxu0 0.0
        %3445 = vmatpush1.msra.mxu0 0.0
        %3446 = vmatprep.subr.mxu0 0.0
        %3447 = vmatpush1.msra.mxu0 0.0
        %3448 = vmatprep.subr.mxu0 0.0
        %3449 = vmatpush1.msra.mxu0 0.0
        %3450 = vmatprep.subr.mxu0 0.0
        %3451 = vmatpush1.msra.mxu0 0.0
        %3452 = vmatprep.subr.mxu0 0.0
        %3453 = vmatpush1.msra.mxu0 0.0
        %3454 = vmatprep.subr.mxu0 0.0
        %3455 = vmatpush1.msra.mxu0 0.0
        %3456 = vmatprep.subr.mxu0 0.0
        %3457 = vmatpush1.msra.mxu0 0.0
        %3458 = vmatprep.subr.mxu0 0.0
        %3459 = vmatpush1.msra.mxu0 0.0
        %3460 = vmatprep.subr.mxu0 0.0
        %3461 = vmatpush1.msra.mxu0 0.0
        %3462 = vmatprep.subr.mxu0 0.0
        %3463 = vmatpush1.msra.mxu0 0.0
        %3464 = vmatprep.subr.mxu0 0.0
        %3465 = vmatpush1.msra.mxu0 0.0
        %3466 = vmatprep.subr.mxu0 0.0
        %3467 = vmatpush1.msra.mxu0 0.0
        %3468 = vmatprep.subr.mxu0 0.0
        %3469 = vmatpush1.msra.mxu0 0.0
        %3470 = vmatprep.subr.mxu0 0.0
        %3471 = vmatpush1.msra.mxu0 0.0
        %3472 = vmatprep.subr.mxu0 0.0
        %3473 = vmatpush1.msra.mxu0 0.0
        %3474 = vmatprep.subr.mxu0 0.0
        %3475 = vmatpush1.msra.mxu0 0.0
        %3476 = vmatprep.subr.mxu0 0.0
        %3477 = vmatpush1.msra.mxu0 0.0
        %3478 = vmatprep.mubr.f32.mxu0 0.0
        %v3479 = vand.u32 %v3408, 4294901760
        %v3480 = vsub.f32 %v3408, %v3479
        %v3481 = vand.u32 %v3480, 4294901760
        %v3482 = vsub.f32 %v3480, %v3481
        %v3483 = vand.u32 %v3482, 4294901760
        %3484 = vmatmul.mubr.f32.gmra.mrb[0].mxu0 %v3483
        %v3485 = vpop.f32.mrb[0].mxu0
        %v3486 = vadd.f32 0.0, %v3485
        %v3487 = vpop.f32.mrb[0].mxu0
        %3488 = vmatprep.mubr.f32.mxu0 0.0
        %v3489 = vand.u32 %v3411, 4294901760
        %v3490 = vsub.f32 %v3411, %v3489
        %v3491 = vand.u32 %v3490, 4294901760
        %v3492 = vsub.f32 %v3490, %v3491
        %v3493 = vand.u32 %v3492, 4294901760
        %3494 = vmatmul.mubr.f32.gmra.mrb[0].mxu0 %v3493
        %v3495 = vpop.f32.mrb[0].mxu0
        %v3496 = vadd.f32 0.0, %v3495
        %v3497 = vpop.f32.mrb[0].mxu0
        %3498 = vdwg.mxu0
        %3499 = vmatprep.subr.mxu0 0.0
        %v3500 = vand.u32 %v253, 4294901760
        %v3501 = vsub.f32 %v253, %v3500
        %v3502 = vand.u32 %v3501, 4294901760
        %v3503 = vsub.f32 %v3501, %v3502
        %v3504 = vand.u32 %v3503, 4294901760
        %3505 = vmatpush1.msra.mxu0 %v3504
        %3506 = vmatprep.subr.mxu0 0.0
        %3507 = vmatpush1.msra.mxu0 0.0
        %3508 = vmatprep.subr.mxu0 0.0
        %3509 = vmatpush1.msra.mxu0 0.0
        %3510 = vmatprep.subr.mxu0 0.0
        %3511 = vmatpush1.msra.mxu0 0.0
        %3512 = vmatprep.subr.mxu0 0.0
        %3513 = vmatpush1.msra.mxu0 0.0
        %3514 = vmatprep.subr.mxu0 0.0
        %3515 = vmatpush1.msra.mxu0 0.0
        %3516 = vmatprep.subr.mxu0 0.0
        %3517 = vmatpush1.msra.mxu0 0.0
        %3518 = vmatprep.subr.mxu0 0.0
        %3519 = vmatpush1.msra.mxu0 0.0
        %3520 = vmatprep.subr.mxu0 0.0
        %3521 = vmatpush1.msra.mxu0 0.0
        %3522 = vmatprep.subr.mxu0 0.0
        %3523 = vmatpush1.msra.mxu0 0.0
        %3524 = vmatprep.subr.mxu0 0.0
        %3525 = vmatpush1.msra.mxu0 0.0
        %3526 = vmatprep.subr.mxu0 0.0
        %3527 = vmatpush1.msra.mxu0 0.0
        %3528 = vmatprep.subr.mxu0 0.0
        %3529 = vmatpush1.msra.mxu0 0.0
        %3530 = vmatprep.subr.mxu0 0.0
        %3531 = vmatpush1.msra.mxu0 0.0
        %3532 = vmatprep.subr.mxu0 0.0
        %3533 = vmatpush1.msra.mxu0 0.0
        %3534 = vmatprep.subr.mxu0 0.0
        %3535 = vmatpush1.msra.mxu0 0.0
        %3536 = vmatprep.subr.mxu0 0.0
        %3537 = vmatpush1.msra.mxu0 0.0
        %3538 = vmatprep.subr.mxu0 0.0
        %3539 = vmatpush1.msra.mxu0 0.0
        %3540 = vmatprep.subr.mxu0 0.0
        %3541 = vmatpush1.msra.mxu0 0.0
        %3542 = vmatprep.subr.mxu0 0.0
        %3543 = vmatpush1.msra.mxu0 0.0
        %3544 = vmatprep.subr.mxu0 0.0
        %3545 = vmatpush1.msra.mxu0 0.0
        %3546 = vmatprep.subr.mxu0 0.0
        %3547 = vmatpush1.msra.mxu0 0.0
        %3548 = vmatprep.subr.mxu0 0.0
        %3549 = vmatpush1.msra.mxu0 0.0
        %3550 = vmatprep.subr.mxu0 0.0
        %3551 = vmatpush1.msra.mxu0 0.0
        %3552 = vmatprep.subr.mxu0 0.0
        %3553 = vmatpush1.msra.mxu0 0.0
        %3554 = vmatprep.subr.mxu0 0.0
        %3555 = vmatpush1.msra.mxu0 0.0
        %3556 = vmatprep.subr.mxu0 0.0
        %3557 = vmatpush1.msra.mxu0 0.0
        %3558 = vmatprep.subr.mxu0 0.0
        %3559 = vmatpush1.msra.mxu0 0.0
        %3560 = vmatprep.subr.mxu0 0.0
        %3561 = vmatpush1.msra.mxu0 0.0
        %3562 = vmatprep.subr.mxu0 0.0
        %3563 = vmatpush1.msra.mxu0 0.0
        %3564 = vmatprep.subr.mxu0 0.0
        %3565 = vmatpush1.msra.mxu0 0.0
        %3566 = vmatprep.subr.mxu0 0.0
        %3567 = vmatpush1.msra.mxu0 0.0
        %3568 = vmatprep.mubr.f32.mxu0 0.0
        %v3569 = vand.u32 %v3408, 4294901760
        %3570 = vmatmul.mubr.f32.gmra.mrb[0].mxu0 %v3569
        %v3571 = vpop.f32.mrb[0].mxu0
        %v3572 = vadd.f32 %v3486, %v3571
        %v3573 = vpop.f32.mrb[0].mxu0
        %3574 = vmatprep.mubr.f32.mxu0 0.0
        %v3575 = vand.u32 %v3411, 4294901760
        %3576 = vmatmul.mubr.f32.gmra.mrb[0].mxu0 %v3575
        %v3577 = vpop.f32.mrb[0].mxu0
        %v3578 = vadd.f32 %v3496, %v3577
        %v3579 = vpop.f32.mrb[0].mxu0
        %3580 = vdwg.mxu0
        %3581 = vmatprep.subr.mxu0 0.0
        %v3582 = vand.u32 %v253, 4294901760
        %v3583 = vsub.f32 %v253, %v3582
        %3584 = vmatpush1.msra.mxu0 %v3583
        %3585 = vmatprep.subr.mxu0 0.0
        %3586 = vmatpush1.msra.mxu0 0.0
        %3587 = vmatprep.subr.mxu0 0.0
        %3588 = vmatpush1.msra.mxu0 0.0
        %3589 = vmatprep.subr.mxu0 0.0
        %3590 = vmatpush1.msra.mxu0 0.0
        %3591 = vmatprep.subr.mxu0 0.0
        %3592 = vmatpush1.msra.mxu0 0.0
        %3593 = vmatprep.subr.mxu0 0.0
        %3594 = vmatpush1.msra.mxu0 0.0
        %3595 = vmatprep.subr.mxu0 0.0
        %3596 = vmatpush1.msra.mxu0 0.0
        %3597 = vmatprep.subr.mxu0 0.0
        %3598 = vmatpush1.msra.mxu0 0.0
        %3599 = vmatprep.subr.mxu0 0.0
        %3600 = vmatpush1.msra.mxu0 0.0
        %3601 = vmatprep.subr.mxu0 0.0
        %3602 = vmatpush1.msra.mxu0 0.0
        %3603 = vmatprep.subr.mxu0 0.0
        %3604 = vmatpush1.msra.mxu0 0.0
        %3605 = vmatprep.subr.mxu0 0.0
        %3606 = vmatpush1.msra.mxu0 0.0
        %3607 = vmatprep.subr.mxu0 0.0
        %3608 = vmatpush1.msra.mxu0 0.0
        %3609 = vmatprep.subr.mxu0 0.0
        %3610 = vmatpush1.msra.mxu0 0.0
        %3611 = vmatprep.subr.mxu0 0.0
        %3612 = vmatpush1.msra.mxu0 0.0
        %3613 = vmatprep.subr.mxu0 0.0
        %3614 = vmatpush1.msra.mxu0 0.0
        %3615 = vmatprep.subr.mxu0 0.0
        %3616 = vmatpush1.msra.mxu0 0.0
        %3617 = vmatprep.subr.mxu0 0.0
        %3618 = vmatpush1.msra.mxu0 0.0
        %3619 = vmatprep.subr.mxu0 0.0
        %3620 = vmatpush1.msra.mxu0 0.0
        %3621 = vmatprep.subr.mxu0 0.0
        %3622 = vmatpush1.msra.mxu0 0.0
        %3623 = vmatprep.subr.mxu0 0.0
        %3624 = vmatpush1.msra.mxu0 0.0
        %3625 = vmatprep.subr.mxu0 0.0
        %3626 = vmatpush1.msra.mxu0 0.0
        %3627 = vmatprep.subr.mxu0 0.0
        %3628 = vmatpush1.msra.mxu0 0.0
        %3629 = vmatprep.subr.mxu0 0.0
        %3630 = vmatpush1.msra.mxu0 0.0
        %3631 = vmatprep.subr.mxu0 0.0
        %3632 = vmatpush1.msra.mxu0 0.0
        %3633 = vmatprep.subr.mxu0 0.0
        %3634 = vmatpush1.msra.mxu0 0.0
        %3635 = vmatprep.subr.mxu0 0.0
        %3636 = vmatpush1.msra.mxu0 0.0
        %3637 = vmatprep.subr.mxu0 0.0
        %3638 = vmatpush1.msra.mxu0 0.0
        %3639 = vmatprep.subr.mxu0 0.0
        %3640 = vmatpush1.msra.mxu0 0.0
        %3641 = vmatprep.subr.mxu0 0.0
        %3642 = vmatpush1.msra.mxu0 0.0
        %3643 = vmatprep.subr.mxu0 0.0
        %3644 = vmatpush1.msra.mxu0 0.0
        %3645 = vmatprep.subr.mxu0 0.0
        %3646 = vmatpush1.msra.mxu0 0.0
        %3647 = vmatprep.mubr.f32.mxu0 0.0
        %v3648 = vand.u32 %v3408, 4294901760
        %v3649 = vsub.f32 %v3408, %v3648
        %3650 = vmatmul.mubr.f32.gmra.mrb[0].mxu0 %v3649
        %v3651 = vpop.f32.mrb[0].mxu0
        %v3652 = vadd.f32 %v3572, %v3651
        %v3653 = vpop.f32.mrb[0].mxu0
        %3654 = vmatprep.mubr.f32.mxu0 0.0
        %v3655 = vand.u32 %v3411, 4294901760
        %v3656 = vsub.f32 %v3411, %v3655
        %3657 = vmatmul.mubr.f32.gmra.mrb[0].mxu0 %v3656
        %v3658 = vpop.f32.mrb[0].mxu0
        %v3659 = vadd.f32 %v3578, %v3658
        %v3660 = vpop.f32.mrb[0].mxu0
        %3661 = vdwg.mxu0
        %3662 = vmatprep.subr.mxu0 0.0
        %v3663 = vand.u32 %v253, 4294901760
        %3664 = vmatpush1.msra.mxu0 %v3663
        %3665 = vmatprep.subr.mxu0 0.0
        %3666 = vmatpush1.msra.mxu0 0.0
        %3667 = vmatprep.subr.mxu0 0.0
        %3668 = vmatpush1.msra.mxu0 0.0
        %3669 = vmatprep.subr.mxu0 0.0
        %3670 = vmatpush1.msra.mxu0 0.0
        %3671 = vmatprep.subr.mxu0 0.0
        %3672 = vmatpush1.msra.mxu0 0.0
        %3673 = vmatprep.subr.mxu0 0.0
        %3674 = vmatpush1.msra.mxu0 0.0
        %3675 = vmatprep.subr.mxu0 0.0
        %3676 = vmatpush1.msra.mxu0 0.0
        %3677 = vmatprep.subr.mxu0 0.0
        %3678 = vmatpush1.msra.mxu0 0.0
        %3679 = vmatprep.subr.mxu0 0.0
        %3680 = vmatpush1.msra.mxu0 0.0
        %3681 = vmatprep.subr.mxu0 0.0
        %3682 = vmatpush1.msra.mxu0 0.0
        %3683 = vmatprep.subr.mxu0 0.0
        %3684 = vmatpush1.msra.mxu0 0.0
        %3685 = vmatprep.subr.mxu0 0.0
        %3686 = vmatpush1.msra.mxu0 0.0
        %3687 = vmatprep.subr.mxu0 0.0
        %3688 = vmatpush1.msra.mxu0 0.0
        %3689 = vmatprep.subr.mxu0 0.0
        %3690 = vmatpush1.msra.mxu0 0.0
        %3691 = vmatprep.subr.mxu0 0.0
        %3692 = vmatpush1.msra.mxu0 0.0
        %3693 = vmatprep.subr.mxu0 0.0
        %3694 = vmatpush1.msra.mxu0 0.0
        %3695 = vmatprep.subr.mxu0 0.0
        %3696 = vmatpush1.msra.mxu0 0.0
        %3697 = vmatprep.subr.mxu0 0.0
        %3698 = vmatpush1.msra.mxu0 0.0
        %3699 = vmatprep.subr.mxu0 0.0
        %3700 = vmatpush1.msra.mxu0 0.0
        %3701 = vmatprep.subr.mxu0 0.0
        %3702 = vmatpush1.msra.mxu0 0.0
        %3703 = vmatprep.subr.mxu0 0.0
        %3704 = vmatpush1.msra.mxu0 0.0
        %3705 = vmatprep.subr.mxu0 0.0
        %3706 = vmatpush1.msra.mxu0 0.0
        %3707 = vmatprep.subr.mxu0 0.0
        %3708 = vmatpush1.msra.mxu0 0.0
        %3709 = vmatprep.subr.mxu0 0.0
        %3710 = vmatpush1.msra.mxu0 0.0
        %3711 = vmatprep.subr.mxu0 0.0
        %3712 = vmatpush1.msra.mxu0 0.0
        %3713 = vmatprep.subr.mxu0 0.0
        %3714 = vmatpush1.msra.mxu0 0.0
        %3715 = vmatprep.subr.mxu0 0.0
        %3716 = vmatpush1.msra.mxu0 0.0
        %3717 = vmatprep.subr.mxu0 0.0
        %3718 = vmatpush1.msra.mxu0 0.0
        %3719 = vmatprep.subr.mxu0 0.0
        %3720 = vmatpush1.msra.mxu0 0.0
        %3721 = vmatprep.subr.mxu0 0.0
        %3722 = vmatpush1.msra.mxu0 0.0
        %3723 = vmatprep.subr.mxu0 0.0
        %3724 = vmatpush1.msra.mxu0 0.0
        %3725 = vmatprep.subr.mxu0 0.0
        %3726 = vmatpush1.msra.mxu0 0.0
        %3727 = vmatprep.mubr.f32.mxu0 0.0
        %v3728 = vand.u32 %v3408, 4294901760
        %v3729 = vsub.f32 %v3408, %v3728
        %v3730 = vand.u32 %v3729, 4294901760
        %3731 = vmatmul.mubr.f32.gmra.mrb[0].mxu0 %v3730
        %v3732 = vpop.f32.mrb[0].mxu0
        %v3733 = vadd.f32 %v3652, %v3732
        %v3734 = vpop.f32.mrb[0].mxu0
        %3735 = vmatprep.mubr.f32.mxu0 0.0
        %v3736 = vand.u32 %v3411, 4294901760
        %v3737 = vsub.f32 %v3411, %v3736
        %v3738 = vand.u32 %v3737, 4294901760
        %3739 = vmatmul.mubr.f32.gmra.mrb[0].mxu0 %v3738
        %v3740 = vpop.f32.mrb[0].mxu0
        %v3741 = vadd.f32 %v3659, %v3740
        %v3742 = vpop.f32.mrb[0].mxu0
        %3743 = vdwg.mxu0
        %3744 = vmatprep.subr.mxu0 0.0
        %v3745 = vand.u32 %v253, 4294901760
        %v3746 = vsub.f32 %v253, %v3745
        %v3747 = vand.u32 %v3746, 4294901760
        %3748 = vmatpush1.msra.mxu0 %v3747
        %3749 = vmatprep.subr.mxu0 0.0
        %3750 = vmatpush1.msra.mxu0 0.0
        %3751 = vmatprep.subr.mxu0 0.0
        %3752 = vmatpush1.msra.mxu0 0.0
        %3753 = vmatprep.subr.mxu0 0.0
        %3754 = vmatpush1.msra.mxu0 0.0
        %3755 = vmatprep.subr.mxu0 0.0
        %3756 = vmatpush1.msra.mxu0 0.0
        %3757 = vmatprep.subr.mxu0 0.0
        %3758 = vmatpush1.msra.mxu0 0.0
        %3759 = vmatprep.subr.mxu0 0.0
        %3760 = vmatpush1.msra.mxu0 0.0
        %3761 = vmatprep.subr.mxu0 0.0
        %3762 = vmatpush1.msra.mxu0 0.0
        %3763 = vmatprep.subr.mxu0 0.0
        %3764 = vmatpush1.msra.mxu0 0.0
        %3765 = vmatprep.subr.mxu0 0.0
        %3766 = vmatpush1.msra.mxu0 0.0
        %3767 = vmatprep.subr.mxu0 0.0
        %3768 = vmatpush1.msra.mxu0 0.0
        %3769 = vmatprep.subr.mxu0 0.0
        %3770 = vmatpush1.msra.mxu0 0.0
        %3771 = vmatprep.subr.mxu0 0.0
        %3772 = vmatpush1.msra.mxu0 0.0
        %3773 = vmatprep.subr.mxu0 0.0
        %3774 = vmatpush1.msra.mxu0 0.0
        %3775 = vmatprep.subr.mxu0 0.0
        %3776 = vmatpush1.msra.mxu0 0.0
        %3777 = vmatprep.subr.mxu0 0.0
        %3778 = vmatpush1.msra.mxu0 0.0
        %3779 = vmatprep.subr.mxu0 0.0
        %3780 = vmatpush1.msra.mxu0 0.0
        %3781 = vmatprep.subr.mxu0 0.0
        %3782 = vmatpush1.msra.mxu0 0.0
        %3783 = vmatprep.subr.mxu0 0.0
        %3784 = vmatpush1.msra.mxu0 0.0
        %3785 = vmatprep.subr.mxu0 0.0
        %3786 = vmatpush1.msra.mxu0 0.0
        %3787 = vmatprep.subr.mxu0 0.0
        %3788 = vmatpush1.msra.mxu0 0.0
        %3789 = vmatprep.subr.mxu0 0.0
        %3790 = vmatpush1.msra.mxu0 0.0
        %3791 = vmatprep.subr.mxu0 0.0
        %3792 = vmatpush1.msra.mxu0 0.0
        %3793 = vmatprep.subr.mxu0 0.0
        %3794 = vmatpush1.msra.mxu0 0.0
        %3795 = vmatprep.subr.mxu0 0.0
        %3796 = vmatpush1.msra.mxu0 0.0
        %3797 = vmatprep.subr.mxu0 0.0
        %3798 = vmatpush1.msra.mxu0 0.0
        %3799 = vmatprep.subr.mxu0 0.0
        %3800 = vmatpush1.msra.mxu0 0.0
        %3801 = vmatprep.subr.mxu0 0.0
        %3802 = vmatpush1.msra.mxu0 0.0
        %3803 = vmatprep.subr.mxu0 0.0
        %3804 = vmatpush1.msra.mxu0 0.0
        %3805 = vmatprep.subr.mxu0 0.0
        %3806 = vmatpush1.msra.mxu0 0.0
        %3807 = vmatprep.subr.mxu0 0.0
        %3808 = vmatpush1.msra.mxu0 0.0
        %3809 = vmatprep.subr.mxu0 0.0
        %3810 = vmatpush1.msra.mxu0 0.0
        %3811 = vmatprep.mubr.f32.mxu0 0.0
        %v3812 = vand.u32 %v3408, 4294901760
        %3813 = vmatmul.mubr.f32.gmra.mrb[0].mxu0 %v3812
        %v3814 = vpop.f32.mrb[0].mxu0
        %v3815 = vadd.f32 %v3733, %v3814
        %v3816 = vpop.f32.mrb[0].mxu0
        %3817 = vmatprep.mubr.f32.mxu0 0.0
        %v3818 = vand.u32 %v3411, 4294901760
        %3819 = vmatmul.mubr.f32.gmra.mrb[0].mxu0 %v3818
        %v3820 = vpop.f32.mrb[0].mxu0
        %v3821 = vadd.f32 %v3741, %v3820
        %v3822 = vpop.f32.mrb[0].mxu0
        %3823 = vdwg.mxu0
        %3824 = vmatprep.subr.mxu0 0.0
        %v3825 = vand.u32 %v253, 4294901760
        %3826 = vmatpush1.msra.mxu0 %v3825
        %3827 = vmatprep.subr.mxu0 0.0
        %3828 = vmatpush1.msra.mxu0 0.0
        %3829 = vmatprep.subr.mxu0 0.0
        %3830 = vmatpush1.msra.mxu0 0.0
        %3831 = vmatprep.subr.mxu0 0.0
        %3832 = vmatpush1.msra.mxu0 0.0
        %3833 = vmatprep.subr.mxu0 0.0
        %3834 = vmatpush1.msra.mxu0 0.0
        %3835 = vmatprep.subr.mxu0 0.0
        %3836 = vmatpush1.msra.mxu0 0.0
        %3837 = vmatprep.subr.mxu0 0.0
        %3838 = vmatpush1.msra.mxu0 0.0
        %3839 = vmatprep.subr.mxu0 0.0
        %3840 = vmatpush1.msra.mxu0 0.0
        %3841 = vmatprep.subr.mxu0 0.0
        %3842 = vmatpush1.msra.mxu0 0.0
        %3843 = vmatprep.subr.mxu0 0.0
        %3844 = vmatpush1.msra.mxu0 0.0
        %3845 = vmatprep.subr.mxu0 0.0
        %3846 = vmatpush1.msra.mxu0 0.0
        %3847 = vmatprep.subr.mxu0 0.0
        %3848 = vmatpush1.msra.mxu0 0.0
        %3849 = vmatprep.subr.mxu0 0.0
        %3850 = vmatpush1.msra.mxu0 0.0
        %3851 = vmatprep.subr.mxu0 0.0
        %3852 = vmatpush1.msra.mxu0 0.0
        %3853 = vmatprep.subr.mxu0 0.0
        %3854 = vmatpush1.msra.mxu0 0.0
        %3855 = vmatprep.subr.mxu0 0.0
        %3856 = vmatpush1.msra.mxu0 0.0
        %3857 = vmatprep.subr.mxu0 0.0
        %3858 = vmatpush1.msra.mxu0 0.0
        %3859 = vmatprep.subr.mxu0 0.0
        %3860 = vmatpush1.msra.mxu0 0.0
        %3861 = vmatprep.subr.mxu0 0.0
        %3862 = vmatpush1.msra.mxu0 0.0
        %3863 = vmatprep.subr.mxu0 0.0
        %3864 = vmatpush1.msra.mxu0 0.0
        %3865 = vmatprep.subr.mxu0 0.0
        %3866 = vmatpush1.msra.mxu0 0.0
        %3867 = vmatprep.subr.mxu0 0.0
        %3868 = vmatpush1.msra.mxu0 0.0
        %3869 = vmatprep.subr.mxu0 0.0
        %3870 = vmatpush1.msra.mxu0 0.0
        %3871 = vmatprep.subr.mxu0 0.0
        %3872 = vmatpush1.msra.mxu0 0.0
        %3873 = vmatprep.subr.mxu0 0.0
        %3874 = vmatpush1.msra.mxu0 0.0
        %3875 = vmatprep.subr.mxu0 0.0
        %3876 = vmatpush1.msra.mxu0 0.0
        %3877 = vmatprep.subr.mxu0 0.0
        %3878 = vmatpush1.msra.mxu0 0.0
        %3879 = vmatprep.subr.mxu0 0.0
        %3880 = vmatpush1.msra.mxu0 0.0
        %3881 = vmatprep.subr.mxu0 0.0
        %3882 = vmatpush1.msra.mxu0 0.0
        %3883 = vmatprep.subr.mxu0 0.0
        %3884 = vmatpush1.msra.mxu0 0.0
        %3885 = vmatprep.subr.mxu0 0.0
        %3886 = vmatpush1.msra.mxu0 0.0
        %3887 = vmatprep.subr.mxu0 0.0
        %3888 = vmatpush1.msra.mxu0 0.0
        %3889 = vmatprep.mubr.f32.mxu0 0.0
        %v3890 = vand.u32 %v3408, 4294901760
        %3891 = vmatmul.mubr.f32.gmra.mrb[0].mxu0 %v3890
        %v3892 = vpop.f32.mrb[0].mxu0
        %v3893 = vadd.f32 %v3815, %v3892
        %v3894 = vpop.f32.mrb[0].mxu0
        %3895 = vmatprep.mubr.f32.mxu0 0.0
        %v3896 = vand.u32 %v3411, 4294901760
        %3897 = vmatmul.mubr.f32.gmra.mrb[0].mxu0 %v3896
        %v3898 = vpop.f32.mrb[0].mxu0
        %v3899 = vadd.f32 %v3821, %v3898
        %v3900 = vpop.f32.mrb[0].mxu0
        %3901 = vdwg.mxu0
        %v3902 = vadd.f32 %v2351, %v3893
        %v3903 = vadd.f32 %v2352, %v3899
        %3904 = vrot.lane.b32.xlu0 %v788, 112
        %v3905 = vpop.permute.xlu0 %3904
        %3906 = vrot.lane.b32.xlu0 %v794, 112
        %v3907 = vpop.permute.xlu0 %3906
        %3908 = vrot.lane.b32.xlu0 %v788, 80
        %v3909 = vpop.permute.xlu0 %3908
        %3910 = vrot.lane.b32.xlu0 %v794, 80
        %v3911 = vpop.permute.xlu0 %3910
        %v3912 = vsel %vm808, %v3905, 0
        %v3914 = vsel %vm808, %v3907, 0
        %v3916 = vsel %vm808, %v3909, 0
        %v3918 = vsel %vm808, %v3911, 0
        %3920 = vmatprep.subr.mxu0 0.0
        %v3921 = vand.u32 %v3916, 4294901760
        %3922 = vmatpush1.xpose.msra.mxu0 %v3921
        %3923 = vmatprep.subr.mxu0 0.0
        %v3924 = vand.u32 %v3918, 4294901760
        %3925 = vmatpush1.xpose.msra.mxu0 %v3924
        %3926 = vmatprep.subr.mxu0 0.0
        %3927 = vmatpush1.xpose.msra.mxu0 0.0
        %3928 = vmatprep.subr.mxu0 0.0
        %3929 = vmatpush1.xpose.msra.mxu0 0.0
        %3930 = vmatprep.subr.mxu0 0.0
        %3931 = vmatpush1.xpose.msra.mxu0 0.0
        %3932 = vmatprep.subr.mxu0 0.0
        %3933 = vmatpush1.xpose.msra.mxu0 0.0
        %3934 = vmatprep.subr.mxu0 0.0
        %3935 = vmatpush1.xpose.msra.mxu0 0.0
        %3936 = vmatprep.subr.mxu0 0.0
        %3937 = vmatpush1.xpose.msra.mxu0 0.0
        %3938 = vmatprep.subr.mxu0 0.0
        %3939 = vmatpush1.xpose.msra.mxu0 0.0
        %3940 = vmatprep.subr.mxu0 0.0
        %3941 = vmatpush1.xpose.msra.mxu0 0.0
        %3942 = vmatprep.subr.mxu0 0.0
        %3943 = vmatpush1.xpose.msra.mxu0 0.0
        %3944 = vmatprep.subr.mxu0 0.0
        %3945 = vmatpush1.xpose.msra.mxu0 0.0
        %3946 = vmatprep.subr.mxu0 0.0
        %3947 = vmatpush1.xpose.msra.mxu0 0.0
        %3948 = vmatprep.subr.mxu0 0.0
        %3949 = vmatpush1.xpose.msra.mxu0 0.0
        %3950 = vmatprep.subr.mxu0 0.0
        %3951 = vmatpush1.xpose.msra.mxu0 0.0
        %3952 = vmatprep.subr.mxu0 0.0
        %3953 = vmatpush1.xpose.msra.mxu0 0.0
        %3954 = vmatprep.subr.mxu0 0.0
        %3955 = vmatpush1.xpose.msra.mxu0 0.0
        %3956 = vmatprep.subr.mxu0 0.0
        %3957 = vmatpush1.xpose.msra.mxu0 0.0
        %3958 = vmatprep.subr.mxu0 0.0
        %3959 = vmatpush1.xpose.msra.mxu0 0.0
        %3960 = vmatprep.subr.mxu0 0.0
        %3961 = vmatpush1.xpose.msra.mxu0 0.0
        %3962 = vmatprep.subr.mxu0 0.0
        %3963 = vmatpush1.xpose.msra.mxu0 0.0
        %3964 = vmatprep.subr.mxu0 0.0
        %3965 = vmatpush1.xpose.msra.mxu0 0.0
        %3966 = vmatprep.subr.mxu0 0.0
        %3967 = vmatpush1.xpose.msra.mxu0 0.0
        %3968 = vmatprep.subr.mxu0 0.0
        %3969 = vmatpush1.xpose.msra.mxu0 0.0
        %3970 = vmatprep.subr.mxu0 0.0
        %3971 = vmatpush1.xpose.msra.mxu0 0.0
        %3972 = vmatprep.subr.mxu0 0.0
        %3973 = vmatpush1.xpose.msra.mxu0 0.0
        %3974 = vmatprep.subr.mxu0 0.0
        %3975 = vmatpush1.xpose.msra.mxu0 0.0
        %3976 = vmatprep.subr.mxu0 0.0
        %3977 = vmatpush1.xpose.msra.mxu0 0.0
        %3978 = vmatprep.subr.mxu0 0.0
        %3979 = vmatpush1.xpose.msra.mxu0 0.0
        %3980 = vmatprep.subr.mxu0 0.0
        %3981 = vmatpush1.xpose.msra.mxu0 0.0
        %3982 = vmatprep.subr.mxu0 0.0
        %3983 = vmatpush1.xpose.msra.mxu0 0.0
        %3984 = vmatprep.subr.mxu0 0.0
        %3985 = vmatpush1.xpose.msra.mxu0 0.0
        %3986 = vmatprep.mubr.f32.mxu0 0.0
        %v3987 = vand.u32 %v3912, 4294901760
        %v3988 = vsub.f32 %v3912, %v3987
        %v3989 = vand.u32 %v3988, 4294901760
        %v3990 = vsub.f32 %v3988, %v3989
        %v3991 = vand.u32 %v3990, 4294901760
        %3992 = vmatmul.mubr.f32.gmra.mrb[0].mxu0 %v3991
        %v3993 = vpop.f32.mrb[0].mxu0
        %v3994 = vadd.f32 0.0, %v3993
        %v3995 = vpop.f32.mrb[0].mxu0
        %3996 = vmatprep.mubr.f32.mxu0 0.0
        %v3997 = vand.u32 %v3914, 4294901760
        %v3998 = vsub.f32 %v3914, %v3997
        %v3999 = vand.u32 %v3998, 4294901760
        %v4000 = vsub.f32 %v3998, %v3999
        %v4001 = vand.u32 %v4000, 4294901760
        %4002 = vmatmul.mubr.f32.gmra.mrb[0].mxu0 %v4001
        %v4003 = vpop.f32.mrb[0].mxu0
        %v4004 = vadd.f32 0.0, %v4003
        %v4005 = vpop.f32.mrb[0].mxu0
        %4006 = vdwg.mxu0
        %4007 = vmatprep.subr.mxu0 0.0
        %v4008 = vand.u32 %v3916, 4294901760
        %v4009 = vsub.f32 %v3916, %v4008
        %v4010 = vand.u32 %v4009, 4294901760
        %v4011 = vsub.f32 %v4009, %v4010
        %v4012 = vand.u32 %v4011, 4294901760
        %4013 = vmatpush1.xpose.msra.mxu0 %v4012
        %4014 = vmatprep.subr.mxu0 0.0
        %v4015 = vand.u32 %v3918, 4294901760
        %v4016 = vsub.f32 %v3918, %v4015
        %v4017 = vand.u32 %v4016, 4294901760
        %v4018 = vsub.f32 %v4016, %v4017
        %v4019 = vand.u32 %v4018, 4294901760
        %4020 = vmatpush1.xpose.msra.mxu0 %v4019
        %4021 = vmatprep.subr.mxu0 0.0
        %4022 = vmatpush1.xpose.msra.mxu0 0.0
        %4023 = vmatprep.subr.mxu0 0.0
        %4024 = vmatpush1.xpose.msra.mxu0 0.0
        %4025 = vmatprep.subr.mxu0 0.0
        %4026 = vmatpush1.xpose.msra.mxu0 0.0
        %4027 = vmatprep.subr.mxu0 0.0
        %4028 = vmatpush1.xpose.msra.mxu0 0.0
        %4029 = vmatprep.subr.mxu0 0.0
        %4030 = vmatpush1.xpose.msra.mxu0 0.0
        %4031 = vmatprep.subr.mxu0 0.0
        %4032 = vmatpush1.xpose.msra.mxu0 0.0
        %4033 = vmatprep.subr.mxu0 0.0
        %4034 = vmatpush1.xpose.msra.mxu0 0.0
        %4035 = vmatprep.subr.mxu0 0.0
        %4036 = vmatpush1.xpose.msra.mxu0 0.0
        %4037 = vmatprep.subr.mxu0 0.0
        %4038 = vmatpush1.xpose.msra.mxu0 0.0
        %4039 = vmatprep.subr.mxu0 0.0
        %4040 = vmatpush1.xpose.msra.mxu0 0.0
        %4041 = vmatprep.subr.mxu0 0.0
        %4042 = vmatpush1.xpose.msra.mxu0 0.0
        %4043 = vmatprep.subr.mxu0 0.0
        %4044 = vmatpush1.xpose.msra.mxu0 0.0
        %4045 = vmatprep.subr.mxu0 0.0
        %4046 = vmatpush1.xpose.msra.mxu0 0.0
        %4047 = vmatprep.subr.mxu0 0.0
        %4048 = vmatpush1.xpose.msra.mxu0 0.0
        %4049 = vmatprep.subr.mxu0 0.0
        %4050 = vmatpush1.xpose.msra.mxu0 0.0
        %4051 = vmatprep.subr.mxu0 0.0
        %4052 = vmatpush1.xpose.msra.mxu0 0.0
        %4053 = vmatprep.subr.mxu0 0.0
        %4054 = vmatpush1.xpose.msra.mxu0 0.0
        %4055 = vmatprep.subr.mxu0 0.0
        %4056 = vmatpush1.xpose.msra.mxu0 0.0
        %4057 = vmatprep.subr.mxu0 0.0
        %4058 = vmatpush1.xpose.msra.mxu0 0.0
        %4059 = vmatprep.subr.mxu0 0.0
        %4060 = vmatpush1.xpose.msra.mxu0 0.0
        %4061 = vmatprep.subr.mxu0 0.0
        %4062 = vmatpush1.xpose.msra.mxu0 0.0
        %4063 = vmatprep.subr.mxu0 0.0
        %4064 = vmatpush1.xpose.msra.mxu0 0.0
        %4065 = vmatprep.subr.mxu0 0.0
        %4066 = vmatpush1.xpose.msra.mxu0 0.0
        %4067 = vmatprep.subr.mxu0 0.0
        %4068 = vmatpush1.xpose.msra.mxu0 0.0
        %4069 = vmatprep.subr.mxu0 0.0
        %4070 = vmatpush1.xpose.msra.mxu0 0.0
        %4071 = vmatprep.subr.mxu0 0.0
        %4072 = vmatpush1.xpose.msra.mxu0 0.0
        %4073 = vmatprep.subr.mxu0 0.0
        %4074 = vmatpush1.xpose.msra.mxu0 0.0
        %4075 = vmatprep.subr.mxu0 0.0
        %4076 = vmatpush1.xpose.msra.mxu0 0.0
        %4077 = vmatprep.subr.mxu0 0.0
        %4078 = vmatpush1.xpose.msra.mxu0 0.0
        %4079 = vmatprep.subr.mxu0 0.0
        %4080 = vmatpush1.xpose.msra.mxu0 0.0
        %4081 = vmatprep.mubr.f32.mxu0 0.0
        %v4082 = vand.u32 %v3912, 4294901760
        %4083 = vmatmul.mubr.f32.gmra.mrb[0].mxu0 %v4082
        %v4084 = vpop.f32.mrb[0].mxu0
        %v4085 = vadd.f32 %v3994, %v4084
        %v4086 = vpop.f32.mrb[0].mxu0
        %4087 = vmatprep.mubr.f32.mxu0 0.0
        %v4088 = vand.u32 %v3914, 4294901760
        %4089 = vmatmul.mubr.f32.gmra.mrb[0].mxu0 %v4088
        %v4090 = vpop.f32.mrb[0].mxu0
        %v4091 = vadd.f32 %v4004, %v4090
        %v4092 = vpop.f32.mrb[0].mxu0
        %4093 = vdwg.mxu0
        %4094 = vmatprep.subr.mxu0 0.0
        %v4095 = vand.u32 %v3916, 4294901760
        %v4096 = vsub.f32 %v3916, %v4095
        %4097 = vmatpush1.xpose.msra.mxu0 %v4096
        %4098 = vmatprep.subr.mxu0 0.0
        %v4099 = vand.u32 %v3918, 4294901760
        %v4100 = vsub.f32 %v3918, %v4099
        %4101 = vmatpush1.xpose.msra.mxu0 %v4100
        %4102 = vmatprep.subr.mxu0 0.0
        %4103 = vmatpush1.xpose.msra.mxu0 0.0
        %4104 = vmatprep.subr.mxu0 0.0
        %4105 = vmatpush1.xpose.msra.mxu0 0.0
        %4106 = vmatprep.subr.mxu0 0.0
        %4107 = vmatpush1.xpose.msra.mxu0 0.0
        %4108 = vmatprep.subr.mxu0 0.0
        %4109 = vmatpush1.xpose.msra.mxu0 0.0
        %4110 = vmatprep.subr.mxu0 0.0
        %4111 = vmatpush1.xpose.msra.mxu0 0.0
        %4112 = vmatprep.subr.mxu0 0.0
        %4113 = vmatpush1.xpose.msra.mxu0 0.0
        %4114 = vmatprep.subr.mxu0 0.0
        %4115 = vmatpush1.xpose.msra.mxu0 0.0
        %4116 = vmatprep.subr.mxu0 0.0
        %4117 = vmatpush1.xpose.msra.mxu0 0.0
        %4118 = vmatprep.subr.mxu0 0.0
        %4119 = vmatpush1.xpose.msra.mxu0 0.0
        %4120 = vmatprep.subr.mxu0 0.0
        %4121 = vmatpush1.xpose.msra.mxu0 0.0
        %4122 = vmatprep.subr.mxu0 0.0
        %4123 = vmatpush1.xpose.msra.mxu0 0.0
        %4124 = vmatprep.subr.mxu0 0.0
        %4125 = vmatpush1.xpose.msra.mxu0 0.0
        %4126 = vmatprep.subr.mxu0 0.0
        %4127 = vmatpush1.xpose.msra.mxu0 0.0
        %4128 = vmatprep.subr.mxu0 0.0
        %4129 = vmatpush1.xpose.msra.mxu0 0.0
        %4130 = vmatprep.subr.mxu0 0.0
        %4131 = vmatpush1.xpose.msra.mxu0 0.0
        %4132 = vmatprep.subr.mxu0 0.0
        %4133 = vmatpush1.xpose.msra.mxu0 0.0
        %4134 = vmatprep.subr.mxu0 0.0
        %4135 = vmatpush1.xpose.msra.mxu0 0.0
        %4136 = vmatprep.subr.mxu0 0.0
        %4137 = vmatpush1.xpose.msra.mxu0 0.0
        %4138 = vmatprep.subr.mxu0 0.0
        %4139 = vmatpush1.xpose.msra.mxu0 0.0
        %4140 = vmatprep.subr.mxu0 0.0
        %4141 = vmatpush1.xpose.msra.mxu0 0.0
        %4142 = vmatprep.subr.mxu0 0.0
        %4143 = vmatpush1.xpose.msra.mxu0 0.0
        %4144 = vmatprep.subr.mxu0 0.0
        %4145 = vmatpush1.xpose.msra.mxu0 0.0
        %4146 = vmatprep.subr.mxu0 0.0
        %4147 = vmatpush1.xpose.msra.mxu0 0.0
        %4148 = vmatprep.subr.mxu0 0.0
        %4149 = vmatpush1.xpose.msra.mxu0 0.0
        %4150 = vmatprep.subr.mxu0 0.0
        %4151 = vmatpush1.xpose.msra.mxu0 0.0
        %4152 = vmatprep.subr.mxu0 0.0
        %4153 = vmatpush1.xpose.msra.mxu0 0.0
        %4154 = vmatprep.subr.mxu0 0.0
        %4155 = vmatpush1.xpose.msra.mxu0 0.0
        %4156 = vmatprep.subr.mxu0 0.0
        %4157 = vmatpush1.xpose.msra.mxu0 0.0
        %4158 = vmatprep.subr.mxu0 0.0
        %4159 = vmatpush1.xpose.msra.mxu0 0.0
        %4160 = vmatprep.subr.mxu0 0.0
        %4161 = vmatpush1.xpose.msra.mxu0 0.0
        %4162 = vmatprep.mubr.f32.mxu0 0.0
        %v4163 = vand.u32 %v3912, 4294901760
        %v4164 = vsub.f32 %v3912, %v4163
        %4165 = vmatmul.mubr.f32.gmra.mrb[0].mxu0 %v4164
        %v4166 = vpop.f32.mrb[0].mxu0
        %v4167 = vadd.f32 %v4085, %v4166
        %v4168 = vpop.f32.mrb[0].mxu0
        %4169 = vmatprep.mubr.f32.mxu0 0.0
        %v4170 = vand.u32 %v3914, 4294901760
        %v4171 = vsub.f32 %v3914, %v4170
        %4172 = vmatmul.mubr.f32.gmra.mrb[0].mxu0 %v4171
        %v4173 = vpop.f32.mrb[0].mxu0
        %v4174 = vadd.f32 %v4091, %v4173
        %v4175 = vpop.f32.mrb[0].mxu0
        %4176 = vdwg.mxu0
        %4177 = vmatprep.subr.mxu0 0.0
        %v4178 = vand.u32 %v3916, 4294901760
        %4179 = vmatpush1.xpose.msra.mxu0 %v4178
        %4180 = vmatprep.subr.mxu0 0.0
        %v4181 = vand.u32 %v3918, 4294901760
        %4182 = vmatpush1.xpose.msra.mxu0 %v4181
        %4183 = vmatprep.subr.mxu0 0.0
        %4184 = vmatpush1.xpose.msra.mxu0 0.0
        %4185 = vmatprep.subr.mxu0 0.0
        %4186 = vmatpush1.xpose.msra.mxu0 0.0
        %4187 = vmatprep.subr.mxu0 0.0
        %4188 = vmatpush1.xpose.msra.mxu0 0.0
        %4189 = vmatprep.subr.mxu0 0.0
        %4190 = vmatpush1.xpose.msra.mxu0 0.0
        %4191 = vmatprep.subr.mxu0 0.0
        %4192 = vmatpush1.xpose.msra.mxu0 0.0
        %4193 = vmatprep.subr.mxu0 0.0
        %4194 = vmatpush1.xpose.msra.mxu0 0.0
        %4195 = vmatprep.subr.mxu0 0.0
        %4196 = vmatpush1.xpose.msra.mxu0 0.0
        %4197 = vmatprep.subr.mxu0 0.0
        %4198 = vmatpush1.xpose.msra.mxu0 0.0
        %4199 = vmatprep.subr.mxu0 0.0
        %4200 = vmatpush1.xpose.msra.mxu0 0.0
        %4201 = vmatprep.subr.mxu0 0.0
        %4202 = vmatpush1.xpose.msra.mxu0 0.0
        %4203 = vmatprep.subr.mxu0 0.0
        %4204 = vmatpush1.xpose.msra.mxu0 0.0
        %4205 = vmatprep.subr.mxu0 0.0
        %4206 = vmatpush1.xpose.msra.mxu0 0.0
        %4207 = vmatprep.subr.mxu0 0.0
        %4208 = vmatpush1.xpose.msra.mxu0 0.0
        %4209 = vmatprep.subr.mxu0 0.0
        %4210 = vmatpush1.xpose.msra.mxu0 0.0
        %4211 = vmatprep.subr.mxu0 0.0
        %4212 = vmatpush1.xpose.msra.mxu0 0.0
        %4213 = vmatprep.subr.mxu0 0.0
        %4214 = vmatpush1.xpose.msra.mxu0 0.0
        %4215 = vmatprep.subr.mxu0 0.0
        %4216 = vmatpush1.xpose.msra.mxu0 0.0
        %4217 = vmatprep.subr.mxu0 0.0
        %4218 = vmatpush1.xpose.msra.mxu0 0.0
        %4219 = vmatprep.subr.mxu0 0.0
        %4220 = vmatpush1.xpose.msra.mxu0 0.0
        %4221 = vmatprep.subr.mxu0 0.0
        %4222 = vmatpush1.xpose.msra.mxu0 0.0
        %4223 = vmatprep.subr.mxu0 0.0
        %4224 = vmatpush1.xpose.msra.mxu0 0.0
        %4225 = vmatprep.subr.mxu0 0.0
        %4226 = vmatpush1.xpose.msra.mxu0 0.0
        %4227 = vmatprep.subr.mxu0 0.0
        %4228 = vmatpush1.xpose.msra.mxu0 0.0
        %4229 = vmatprep.subr.mxu0 0.0
        %4230 = vmatpush1.xpose.msra.mxu0 0.0
        %4231 = vmatprep.subr.mxu0 0.0
        %4232 = vmatpush1.xpose.msra.mxu0 0.0
        %4233 = vmatprep.subr.mxu0 0.0
        %4234 = vmatpush1.xpose.msra.mxu0 0.0
        %4235 = vmatprep.subr.mxu0 0.0
        %4236 = vmatpush1.xpose.msra.mxu0 0.0
        %4237 = vmatprep.subr.mxu0 0.0
        %4238 = vmatpush1.xpose.msra.mxu0 0.0
        %4239 = vmatprep.subr.mxu0 0.0
        %4240 = vmatpush1.xpose.msra.mxu0 0.0
        %4241 = vmatprep.subr.mxu0 0.0
        %4242 = vmatpush1.xpose.msra.mxu0 0.0
        %4243 = vmatprep.mubr.f32.mxu0 0.0
        %v4244 = vand.u32 %v3912, 4294901760
        %v4245 = vsub.f32 %v3912, %v4244
        %v4246 = vand.u32 %v4245, 4294901760
        %4247 = vmatmul.mubr.f32.gmra.mrb[0].mxu0 %v4246
        %v4248 = vpop.f32.mrb[0].mxu0
        %v4249 = vadd.f32 %v4167, %v4248
        %v4250 = vpop.f32.mrb[0].mxu0
        %4251 = vmatprep.mubr.f32.mxu0 0.0
        %v4252 = vand.u32 %v3914, 4294901760
        %v4253 = vsub.f32 %v3914, %v4252
        %v4254 = vand.u32 %v4253, 4294901760
        %4255 = vmatmul.mubr.f32.gmra.mrb[0].mxu0 %v4254
        %v4256 = vpop.f32.mrb[0].mxu0
        %v4257 = vadd.f32 %v4174, %v4256
        %v4258 = vpop.f32.mrb[0].mxu0
        %4259 = vdwg.mxu0
        %4260 = vmatprep.subr.mxu0 0.0
        %v4261 = vand.u32 %v3916, 4294901760
        %v4262 = vsub.f32 %v3916, %v4261
        %v4263 = vand.u32 %v4262, 4294901760
        %4264 = vmatpush1.xpose.msra.mxu0 %v4263
        %4265 = vmatprep.subr.mxu0 0.0
        %v4266 = vand.u32 %v3918, 4294901760
        %v4267 = vsub.f32 %v3918, %v4266
        %v4268 = vand.u32 %v4267, 4294901760
        %4269 = vmatpush1.xpose.msra.mxu0 %v4268
        %4270 = vmatprep.subr.mxu0 0.0
        %4271 = vmatpush1.xpose.msra.mxu0 0.0
        %4272 = vmatprep.subr.mxu0 0.0
        %4273 = vmatpush1.xpose.msra.mxu0 0.0
        %4274 = vmatprep.subr.mxu0 0.0
        %4275 = vmatpush1.xpose.msra.mxu0 0.0
        %4276 = vmatprep.subr.mxu0 0.0
        %4277 = vmatpush1.xpose.msra.mxu0 0.0
        %4278 = vmatprep.subr.mxu0 0.0
        %4279 = vmatpush1.xpose.msra.mxu0 0.0
        %4280 = vmatprep.subr.mxu0 0.0
        %4281 = vmatpush1.xpose.msra.mxu0 0.0
        %4282 = vmatprep.subr.mxu0 0.0
        %4283 = vmatpush1.xpose.msra.mxu0 0.0
        %4284 = vmatprep.subr.mxu0 0.0
        %4285 = vmatpush1.xpose.msra.mxu0 0.0
        %4286 = vmatprep.subr.mxu0 0.0
        %4287 = vmatpush1.xpose.msra.mxu0 0.0
        %4288 = vmatprep.subr.mxu0 0.0
        %4289 = vmatpush1.xpose.msra.mxu0 0.0
        %4290 = vmatprep.subr.mxu0 0.0
        %4291 = vmatpush1.xpose.msra.mxu0 0.0
        %4292 = vmatprep.subr.mxu0 0.0
        %4293 = vmatpush1.xpose.msra.mxu0 0.0
        %4294 = vmatprep.subr.mxu0 0.0
        %4295 = vmatpush1.xpose.msra.mxu0 0.0
        %4296 = vmatprep.subr.mxu0 0.0
        %4297 = vmatpush1.xpose.msra.mxu0 0.0
        %4298 = vmatprep.subr.mxu0 0.0
        %4299 = vmatpush1.xpose.msra.mxu0 0.0
        %4300 = vmatprep.subr.mxu0 0.0
        %4301 = vmatpush1.xpose.msra.mxu0 0.0
        %4302 = vmatprep.subr.mxu0 0.0
        %4303 = vmatpush1.xpose.msra.mxu0 0.0
        %4304 = vmatprep.subr.mxu0 0.0
        %4305 = vmatpush1.xpose.msra.mxu0 0.0
        %4306 = vmatprep.subr.mxu0 0.0
        %4307 = vmatpush1.xpose.msra.mxu0 0.0
        %4308 = vmatprep.subr.mxu0 0.0
        %4309 = vmatpush1.xpose.msra.mxu0 0.0
        %4310 = vmatprep.subr.mxu0 0.0
        %4311 = vmatpush1.xpose.msra.mxu0 0.0
        %4312 = vmatprep.subr.mxu0 0.0
        %4313 = vmatpush1.xpose.msra.mxu0 0.0
        %4314 = vmatprep.subr.mxu0 0.0
        %4315 = vmatpush1.xpose.msra.mxu0 0.0
        %4316 = vmatprep.subr.mxu0 0.0
        %4317 = vmatpush1.xpose.msra.mxu0 0.0
        %4318 = vmatprep.subr.mxu0 0.0
        %4319 = vmatpush1.xpose.msra.mxu0 0.0
        %4320 = vmatprep.subr.mxu0 0.0
        %4321 = vmatpush1.xpose.msra.mxu0 0.0
        %4322 = vmatprep.subr.mxu0 0.0
        %4323 = vmatpush1.xpose.msra.mxu0 0.0
        %4324 = vmatprep.subr.mxu0 0.0
        %4325 = vmatpush1.xpose.msra.mxu0 0.0
        %4326 = vmatprep.subr.mxu0 0.0
        %4327 = vmatpush1.xpose.msra.mxu0 0.0
        %4328 = vmatprep.subr.mxu0 0.0
        %4329 = vmatpush1.xpose.msra.mxu0 0.0
        %4330 = vmatprep.mubr.f32.mxu0 0.0
        %v4331 = vand.u32 %v3912, 4294901760
        %4332 = vmatmul.mubr.f32.gmra.mrb[0].mxu0 %v4331
        %v4333 = vpop.f32.mrb[0].mxu0
        %v4334 = vadd.f32 %v4249, %v4333
        %v4335 = vpop.f32.mrb[0].mxu0
        %4336 = vmatprep.mubr.f32.mxu0 0.0
        %v4337 = vand.u32 %v3914, 4294901760
        %4338 = vmatmul.mubr.f32.gmra.mrb[0].mxu0 %v4337
        %v4339 = vpop.f32.mrb[0].mxu0
        %v4340 = vadd.f32 %v4257, %v4339
        %v4341 = vpop.f32.mrb[0].mxu0
        %4342 = vdwg.mxu0
        %4343 = vmatprep.subr.mxu0 0.0
        %v4344 = vand.u32 %v3916, 4294901760
        %4345 = vmatpush1.xpose.msra.mxu0 %v4344
        %4346 = vmatprep.subr.mxu0 0.0
        %v4347 = vand.u32 %v3918, 4294901760
        %4348 = vmatpush1.xpose.msra.mxu0 %v4347
        %4349 = vmatprep.subr.mxu0 0.0
        %4350 = vmatpush1.xpose.msra.mxu0 0.0
        %4351 = vmatprep.subr.mxu0 0.0
        %4352 = vmatpush1.xpose.msra.mxu0 0.0
        %4353 = vmatprep.subr.mxu0 0.0
        %4354 = vmatpush1.xpose.msra.mxu0 0.0
        %4355 = vmatprep.subr.mxu0 0.0
        %4356 = vmatpush1.xpose.msra.mxu0 0.0
        %4357 = vmatprep.subr.mxu0 0.0
        %4358 = vmatpush1.xpose.msra.mxu0 0.0
        %4359 = vmatprep.subr.mxu0 0.0
        %4360 = vmatpush1.xpose.msra.mxu0 0.0
        %4361 = vmatprep.subr.mxu0 0.0
        %4362 = vmatpush1.xpose.msra.mxu0 0.0
        %4363 = vmatprep.subr.mxu0 0.0
        %4364 = vmatpush1.xpose.msra.mxu0 0.0
        %4365 = vmatprep.subr.mxu0 0.0
        %4366 = vmatpush1.xpose.msra.mxu0 0.0
        %4367 = vmatprep.subr.mxu0 0.0
        %4368 = vmatpush1.xpose.msra.mxu0 0.0
        %4369 = vmatprep.subr.mxu0 0.0
        %4370 = vmatpush1.xpose.msra.mxu0 0.0
        %4371 = vmatprep.subr.mxu0 0.0
        %4372 = vmatpush1.xpose.msra.mxu0 0.0
        %4373 = vmatprep.subr.mxu0 0.0
        %4374 = vmatpush1.xpose.msra.mxu0 0.0
        %4375 = vmatprep.subr.mxu0 0.0
        %4376 = vmatpush1.xpose.msra.mxu0 0.0
        %4377 = vmatprep.subr.mxu0 0.0
        %4378 = vmatpush1.xpose.msra.mxu0 0.0
        %4379 = vmatprep.subr.mxu0 0.0
        %4380 = vmatpush1.xpose.msra.mxu0 0.0
        %4381 = vmatprep.subr.mxu0 0.0
        %4382 = vmatpush1.xpose.msra.mxu0 0.0
        %4383 = vmatprep.subr.mxu0 0.0
        %4384 = vmatpush1.xpose.msra.mxu0 0.0
        %4385 = vmatprep.subr.mxu0 0.0
        %4386 = vmatpush1.xpose.msra.mxu0 0.0
        %4387 = vmatprep.subr.mxu0 0.0
        %4388 = vmatpush1.xpose.msra.mxu0 0.0
        %4389 = vmatprep.subr.mxu0 0.0
        %4390 = vmatpush1.xpose.msra.mxu0 0.0
        %4391 = vmatprep.subr.mxu0 0.0
        %4392 = vmatpush1.xpose.msra.mxu0 0.0
        %4393 = vmatprep.subr.mxu0 0.0
        %4394 = vmatpush1.xpose.msra.mxu0 0.0
        %4395 = vmatprep.subr.mxu0 0.0
        %4396 = vmatpush1.xpose.msra.mxu0 0.0
        %4397 = vmatprep.subr.mxu0 0.0
        %4398 = vmatpush1.xpose.msra.mxu0 0.0
        %4399 = vmatprep.subr.mxu0 0.0
        %4400 = vmatpush1.xpose.msra.mxu0 0.0
        %4401 = vmatprep.subr.mxu0 0.0
        %4402 = vmatpush1.xpose.msra.mxu0 0.0
        %4403 = vmatprep.subr.mxu0 0.0
        %4404 = vmatpush1.xpose.msra.mxu0 0.0
        %4405 = vmatprep.subr.mxu0 0.0
        %4406 = vmatpush1.xpose.msra.mxu0 0.0
        %4407 = vmatprep.subr.mxu0 0.0
        %4408 = vmatpush1.xpose.msra.mxu0 0.0
        %4409 = vmatprep.mubr.f32.mxu0 0.0
        %v4410 = vand.u32 %v3912, 4294901760
        %4411 = vmatmul.mubr.f32.gmra.mrb[0].mxu0 %v4410
        %v4412 = vpop.f32.mrb[0].mxu0
        %v4413 = vadd.f32 %v4334, %v4412
        %v4414 = vpop.f32.mrb[0].mxu0
        %4415 = vmatprep.mubr.f32.mxu0 0.0
        %v4416 = vand.u32 %v3914, 4294901760
        %4417 = vmatmul.mubr.f32.gmra.mrb[0].mxu0 %v4416
        %v4418 = vpop.f32.mrb[0].mxu0
        %v4419 = vadd.f32 %v4340, %v4418
        %v4420 = vpop.f32.mrb[0].mxu0
        %4421 = vdwg.mxu0
        %v4422 = vsel %vm1319, %v4413, -inf
        %4423 = vmax.xlane.f32.xlu0 %v4422
        %v4424 = vpop.xlane.xlu0 %4423
        %v4425 = vsel %vm1319, %v4419, -inf
        %4426 = vmax.xlane.f32.xlu0 %v4425
        %v4427 = vpop.xlane.xlu0 %4426
        %v4428 = vsub.f32 %v4413, %v4424
        %v4429 = vsub.f32 %v4419, %v4427
        %v4430 = vmul.f32 %v4428, 1.442695
        %v4431 = vpow.pop %v4430
        %v4432 = vmul.f32 %v4429, 1.442695
        %v4433 = vpow.pop %v4432
        %v4434 = vsel %vm1319, %v4431, 0.0
        %4435 = vadd.xlane.f32.xlu0 %v4434
        %v4436 = vpop.xlane.xlu0 %4435
        %v4437 = vsel %vm1319, %v4433, 0.0
        %4438 = vadd.xlane.f32.xlu0 %v4437
        %v4439 = vpop.xlane.xlu0 %4438
        %v4440 = vrcp.pop %v4436
        %v4441 = vrcp.pop %v4439
        %v4442 = vmul.f32 %v4431, %v4440
        %v4443 = vmul.f32 %v4433, %v4441
        %4444 = vrot.lane.b32.xlu0 %v788, 48
        %v4445 = vpop.permute.xlu0 %4444
        %4446 = vrot.lane.b32.xlu0 %v794, 48
        %v4447 = vpop.permute.xlu0 %4446
        %v4451 = vsel %vm1319, %v4442, 0
        %v4454 = vsel %vm1319, %v4443, 0
        %4456 = vmatprep.subr.mxu0 0.0
        %v4457 = vand.u32 %v4445, 4294901760
        %4458 = vmatpush1.msra.mxu0 %v4457
        %4459 = vmatprep.subr.mxu0 0.0
        %v4460 = vand.u32 %v4447, 4294901760
        %4461 = vmatpush1.msra.mxu0 %v4460
        %4462 = vmatprep.subr.mxu0 0.0
        %4463 = vmatpush1.msra.mxu0 0.0
        %4464 = vmatprep.subr.mxu0 0.0
        %4465 = vmatpush1.msra.mxu0 0.0
        %4466 = vmatprep.subr.mxu0 0.0
        %4467 = vmatpush1.msra.mxu0 0.0
        %4468 = vmatprep.subr.mxu0 0.0
        %4469 = vmatpush1.msra.mxu0 0.0
        %4470 = vmatprep.subr.mxu0 0.0
        %4471 = vmatpush1.msra.mxu0 0.0
        %4472 = vmatprep.subr.mxu0 0.0
        %4473 = vmatpush1.msra.mxu0 0.0
        %4474 = vmatprep.subr.mxu0 0.0
        %4475 = vmatpush1.msra.mxu0 0.0
        %4476 = vmatprep.subr.mxu0 0.0
        %4477 = vmatpush1.msra.mxu0 0.0
        %4478 = vmatprep.subr.mxu0 0.0
        %4479 = vmatpush1.msra.mxu0 0.0
        %4480 = vmatprep.subr.mxu0 0.0
        %4481 = vmatpush1.msra.mxu0 0.0
        %4482 = vmatprep.subr.mxu0 0.0
        %4483 = vmatpush1.msra.mxu0 0.0
        %4484 = vmatprep.subr.mxu0 0.0
        %4485 = vmatpush1.msra.mxu0 0.0
        %4486 = vmatprep.subr.mxu0 0.0
        %4487 = vmatpush1.msra.mxu0 0.0
        %4488 = vmatprep.subr.mxu0 0.0
        %4489 = vmatpush1.msra.mxu0 0.0
        %4490 = vmatprep.subr.mxu0 0.0
        %4491 = vmatpush1.msra.mxu0 0.0
        %4492 = vmatprep.subr.mxu0 0.0
        %4493 = vmatpush1.msra.mxu0 0.0
        %4494 = vmatprep.subr.mxu0 0.0
        %4495 = vmatpush1.msra.mxu0 0.0
        %4496 = vmatprep.subr.mxu0 0.0
        %4497 = vmatpush1.msra.mxu0 0.0
        %4498 = vmatprep.subr.mxu0 0.0
        %4499 = vmatpush1.msra.mxu0 0.0
        %4500 = vmatprep.subr.mxu0 0.0
        %4501 = vmatpush1.msra.mxu0 0.0
        %4502 = vmatprep.subr.mxu0 0.0
        %4503 = vmatpush1.msra.mxu0 0.0
        %4504 = vmatprep.subr.mxu0 0.0
        %4505 = vmatpush1.msra.mxu0 0.0
        %4506 = vmatprep.subr.mxu0 0.0
        %4507 = vmatpush1.msra.mxu0 0.0
        %4508 = vmatprep.subr.mxu0 0.0
        %4509 = vmatpush1.msra.mxu0 0.0
        %4510 = vmatprep.subr.mxu0 0.0
        %4511 = vmatpush1.msra.mxu0 0.0
        %4512 = vmatprep.subr.mxu0 0.0
        %4513 = vmatpush1.msra.mxu0 0.0
        %4514 = vmatprep.subr.mxu0 0.0
        %4515 = vmatpush1.msra.mxu0 0.0
        %4516 = vmatprep.subr.mxu0 0.0
        %4517 = vmatpush1.msra.mxu0 0.0
        %4518 = vmatprep.subr.mxu0 0.0
        %4519 = vmatpush1.msra.mxu0 0.0
        %4520 = vmatprep.subr.mxu0 0.0
        %4521 = vmatpush1.msra.mxu0 0.0
        %4522 = vmatprep.mubr.f32.mxu0 0.0
        %v4523 = vand.u32 %v4451, 4294901760
        %v4524 = vsub.f32 %v4451, %v4523
        %v4525 = vand.u32 %v4524, 4294901760
        %v4526 = vsub.f32 %v4524, %v4525
        %v4527 = vand.u32 %v4526, 4294901760
        %4528 = vmatmul.mubr.f32.gmra.mrb[0].mxu0 %v4527
        %v4529 = vpop.f32.mrb[0].mxu0
        %v4530 = vadd.f32 0.0, %v4529
        %v4531 = vpop.f32.mrb[0].mxu0
        %4532 = vmatprep.mubr.f32.mxu0 0.0
        %v4533 = vand.u32 %v4454, 4294901760
        %v4534 = vsub.f32 %v4454, %v4533
        %v4535 = vand.u32 %v4534, 4294901760
        %v4536 = vsub.f32 %v4534, %v4535
        %v4537 = vand.u32 %v4536, 4294901760
        %4538 = vmatmul.mubr.f32.gmra.mrb[0].mxu0 %v4537
        %v4539 = vpop.f32.mrb[0].mxu0
        %v4540 = vadd.f32 0.0, %v4539
        %v4541 = vpop.f32.mrb[0].mxu0
        %4542 = vdwg.mxu0
        %4543 = vmatprep.subr.mxu0 0.0
        %v4544 = vand.u32 %v4445, 4294901760
        %v4545 = vsub.f32 %v4445, %v4544
        %v4546 = vand.u32 %v4545, 4294901760
        %v4547 = vsub.f32 %v4545, %v4546
        %v4548 = vand.u32 %v4547, 4294901760
        %4549 = vmatpush1.msra.mxu0 %v4548
        %4550 = vmatprep.subr.mxu0 0.0
        %v4551 = vand.u32 %v4447, 4294901760
        %v4552 = vsub.f32 %v4447, %v4551
        %v4553 = vand.u32 %v4552, 4294901760
        %v4554 = vsub.f32 %v4552, %v4553
        %v4555 = vand.u32 %v4554, 4294901760
        %4556 = vmatpush1.msra.mxu0 %v4555
        %4557 = vmatprep.subr.mxu0 0.0
        %4558 = vmatpush1.msra.mxu0 0.0
        %4559 = vmatprep.subr.mxu0 0.0
        %4560 = vmatpush1.msra.mxu0 0.0
        %4561 = vmatprep.subr.mxu0 0.0
        %4562 = vmatpush1.msra.mxu0 0.0
        %4563 = vmatprep.subr.mxu0 0.0
        %4564 = vmatpush1.msra.mxu0 0.0
        %4565 = vmatprep.subr.mxu0 0.0
        %4566 = vmatpush1.msra.mxu0 0.0
        %4567 = vmatprep.subr.mxu0 0.0
        %4568 = vmatpush1.msra.mxu0 0.0
        %4569 = vmatprep.subr.mxu0 0.0
        %4570 = vmatpush1.msra.mxu0 0.0
        %4571 = vmatprep.subr.mxu0 0.0
        %4572 = vmatpush1.msra.mxu0 0.0
        %4573 = vmatprep.subr.mxu0 0.0
        %4574 = vmatpush1.msra.mxu0 0.0
        %4575 = vmatprep.subr.mxu0 0.0
        %4576 = vmatpush1.msra.mxu0 0.0
        %4577 = vmatprep.subr.mxu0 0.0
        %4578 = vmatpush1.msra.mxu0 0.0
        %4579 = vmatprep.subr.mxu0 0.0
        %4580 = vmatpush1.msra.mxu0 0.0
        %4581 = vmatprep.subr.mxu0 0.0
        %4582 = vmatpush1.msra.mxu0 0.0
        %4583 = vmatprep.subr.mxu0 0.0
        %4584 = vmatpush1.msra.mxu0 0.0
        %4585 = vmatprep.subr.mxu0 0.0
        %4586 = vmatpush1.msra.mxu0 0.0
        %4587 = vmatprep.subr.mxu0 0.0
        %4588 = vmatpush1.msra.mxu0 0.0
        %4589 = vmatprep.subr.mxu0 0.0
        %4590 = vmatpush1.msra.mxu0 0.0
        %4591 = vmatprep.subr.mxu0 0.0
        %4592 = vmatpush1.msra.mxu0 0.0
        %4593 = vmatprep.subr.mxu0 0.0
        %4594 = vmatpush1.msra.mxu0 0.0
        %4595 = vmatprep.subr.mxu0 0.0
        %4596 = vmatpush1.msra.mxu0 0.0
        %4597 = vmatprep.subr.mxu0 0.0
        %4598 = vmatpush1.msra.mxu0 0.0
        %4599 = vmatprep.subr.mxu0 0.0
        %4600 = vmatpush1.msra.mxu0 0.0
        %4601 = vmatprep.subr.mxu0 0.0
        %4602 = vmatpush1.msra.mxu0 0.0
        %4603 = vmatprep.subr.mxu0 0.0
        %4604 = vmatpush1.msra.mxu0 0.0
        %4605 = vmatprep.subr.mxu0 0.0
        %4606 = vmatpush1.msra.mxu0 0.0
        %4607 = vmatprep.subr.mxu0 0.0
        %4608 = vmatpush1.msra.mxu0 0.0
        %4609 = vmatprep.subr.mxu0 0.0
        %4610 = vmatpush1.msra.mxu0 0.0
        %4611 = vmatprep.subr.mxu0 0.0
        %4612 = vmatpush1.msra.mxu0 0.0
        %4613 = vmatprep.subr.mxu0 0.0
        %4614 = vmatpush1.msra.mxu0 0.0
        %4615 = vmatprep.subr.mxu0 0.0
        %4616 = vmatpush1.msra.mxu0 0.0
        %4617 = vmatprep.mubr.f32.mxu0 0.0
        %v4618 = vand.u32 %v4451, 4294901760
        %4619 = vmatmul.mubr.f32.gmra.mrb[0].mxu0 %v4618
        %v4620 = vpop.f32.mrb[0].mxu0
        %v4621 = vadd.f32 %v4530, %v4620
        %v4622 = vpop.f32.mrb[0].mxu0
        %4623 = vmatprep.mubr.f32.mxu0 0.0
        %v4624 = vand.u32 %v4454, 4294901760
        %4625 = vmatmul.mubr.f32.gmra.mrb[0].mxu0 %v4624
        %v4626 = vpop.f32.mrb[0].mxu0
        %v4627 = vadd.f32 %v4540, %v4626
        %v4628 = vpop.f32.mrb[0].mxu0
        %4629 = vdwg.mxu0
        %4630 = vmatprep.subr.mxu0 0.0
        %v4631 = vand.u32 %v4445, 4294901760
        %v4632 = vsub.f32 %v4445, %v4631
        %4633 = vmatpush1.msra.mxu0 %v4632
        %4634 = vmatprep.subr.mxu0 0.0
        %v4635 = vand.u32 %v4447, 4294901760
        %v4636 = vsub.f32 %v4447, %v4635
        %4637 = vmatpush1.msra.mxu0 %v4636
        %4638 = vmatprep.subr.mxu0 0.0
        %4639 = vmatpush1.msra.mxu0 0.0
        %4640 = vmatprep.subr.mxu0 0.0
        %4641 = vmatpush1.msra.mxu0 0.0
        %4642 = vmatprep.subr.mxu0 0.0
        %4643 = vmatpush1.msra.mxu0 0.0
        %4644 = vmatprep.subr.mxu0 0.0
        %4645 = vmatpush1.msra.mxu0 0.0
        %4646 = vmatprep.subr.mxu0 0.0
        %4647 = vmatpush1.msra.mxu0 0.0
        %4648 = vmatprep.subr.mxu0 0.0
        %4649 = vmatpush1.msra.mxu0 0.0
        %4650 = vmatprep.subr.mxu0 0.0
        %4651 = vmatpush1.msra.mxu0 0.0
        %4652 = vmatprep.subr.mxu0 0.0
        %4653 = vmatpush1.msra.mxu0 0.0
        %4654 = vmatprep.subr.mxu0 0.0
        %4655 = vmatpush1.msra.mxu0 0.0
        %4656 = vmatprep.subr.mxu0 0.0
        %4657 = vmatpush1.msra.mxu0 0.0
        %4658 = vmatprep.subr.mxu0 0.0
        %4659 = vmatpush1.msra.mxu0 0.0
        %4660 = vmatprep.subr.mxu0 0.0
        %4661 = vmatpush1.msra.mxu0 0.0
        %4662 = vmatprep.subr.mxu0 0.0
        %4663 = vmatpush1.msra.mxu0 0.0
        %4664 = vmatprep.subr.mxu0 0.0
        %4665 = vmatpush1.msra.mxu0 0.0
        %4666 = vmatprep.subr.mxu0 0.0
        %4667 = vmatpush1.msra.mxu0 0.0
        %4668 = vmatprep.subr.mxu0 0.0
        %4669 = vmatpush1.msra.mxu0 0.0
        %4670 = vmatprep.subr.mxu0 0.0
        %4671 = vmatpush1.msra.mxu0 0.0
        %4672 = vmatprep.subr.mxu0 0.0
        %4673 = vmatpush1.msra.mxu0 0.0
        %4674 = vmatprep.subr.mxu0 0.0
        %4675 = vmatpush1.msra.mxu0 0.0
        %4676 = vmatprep.subr.mxu0 0.0
        %4677 = vmatpush1.msra.mxu0 0.0
        %4678 = vmatprep.subr.mxu0 0.0
        %4679 = vmatpush1.msra.mxu0 0.0
        %4680 = vmatprep.subr.mxu0 0.0
        %4681 = vmatpush1.msra.mxu0 0.0
        %4682 = vmatprep.subr.mxu0 0.0
        %4683 = vmatpush1.msra.mxu0 0.0
        %4684 = vmatprep.subr.mxu0 0.0
        %4685 = vmatpush1.msra.mxu0 0.0
        %4686 = vmatprep.subr.mxu0 0.0
        %4687 = vmatpush1.msra.mxu0 0.0
        %4688 = vmatprep.subr.mxu0 0.0
        %4689 = vmatpush1.msra.mxu0 0.0
        %4690 = vmatprep.subr.mxu0 0.0
        %4691 = vmatpush1.msra.mxu0 0.0
        %4692 = vmatprep.subr.mxu0 0.0
        %4693 = vmatpush1.msra.mxu0 0.0
        %4694 = vmatprep.subr.mxu0 0.0
        %4695 = vmatpush1.msra.mxu0 0.0
        %4696 = vmatprep.subr.mxu0 0.0
        %4697 = vmatpush1.msra.mxu0 0.0
        %4698 = vmatprep.mubr.f32.mxu0 0.0
        %v4699 = vand.u32 %v4451, 4294901760
        %v4700 = vsub.f32 %v4451, %v4699
        %4701 = vmatmul.mubr.f32.gmra.mrb[0].mxu0 %v4700
        %v4702 = vpop.f32.mrb[0].mxu0
        %v4703 = vadd.f32 %v4621, %v4702
        %v4704 = vpop.f32.mrb[0].mxu0
        %4705 = vmatprep.mubr.f32.mxu0 0.0
        %v4706 = vand.u32 %v4454, 4294901760
        %v4707 = vsub.f32 %v4454, %v4706
        %4708 = vmatmul.mubr.f32.gmra.mrb[0].mxu0 %v4707
        %v4709 = vpop.f32.mrb[0].mxu0
        %v4710 = vadd.f32 %v4627, %v4709
        %v4711 = vpop.f32.mrb[0].mxu0
        %4712 = vdwg.mxu0
        %4713 = vmatprep.subr.mxu0 0.0
        %v4714 = vand.u32 %v4445, 4294901760
        %4715 = vmatpush1.msra.mxu0 %v4714
        %4716 = vmatprep.subr.mxu0 0.0
        %v4717 = vand.u32 %v4447, 4294901760
        %4718 = vmatpush1.msra.mxu0 %v4717
        %4719 = vmatprep.subr.mxu0 0.0
        %4720 = vmatpush1.msra.mxu0 0.0
        %4721 = vmatprep.subr.mxu0 0.0
        %4722 = vmatpush1.msra.mxu0 0.0
        %4723 = vmatprep.subr.mxu0 0.0
        %4724 = vmatpush1.msra.mxu0 0.0
        %4725 = vmatprep.subr.mxu0 0.0
        %4726 = vmatpush1.msra.mxu0 0.0
        %4727 = vmatprep.subr.mxu0 0.0
        %4728 = vmatpush1.msra.mxu0 0.0
        %4729 = vmatprep.subr.mxu0 0.0
        %4730 = vmatpush1.msra.mxu0 0.0
        %4731 = vmatprep.subr.mxu0 0.0
        %4732 = vmatpush1.msra.mxu0 0.0
        %4733 = vmatprep.subr.mxu0 0.0
        %4734 = vmatpush1.msra.mxu0 0.0
        %4735 = vmatprep.subr.mxu0 0.0
        %4736 = vmatpush1.msra.mxu0 0.0
        %4737 = vmatprep.subr.mxu0 0.0
        %4738 = vmatpush1.msra.mxu0 0.0
        %4739 = vmatprep.subr.mxu0 0.0
        %4740 = vmatpush1.msra.mxu0 0.0
        %4741 = vmatprep.subr.mxu0 0.0
        %4742 = vmatpush1.msra.mxu0 0.0
        %4743 = vmatprep.subr.mxu0 0.0
        %4744 = vmatpush1.msra.mxu0 0.0
        %4745 = vmatprep.subr.mxu0 0.0
        %4746 = vmatpush1.msra.mxu0 0.0
        %4747 = vmatprep.subr.mxu0 0.0
        %4748 = vmatpush1.msra.mxu0 0.0
        %4749 = vmatprep.subr.mxu0 0.0
        %4750 = vmatpush1.msra.mxu0 0.0
        %4751 = vmatprep.subr.mxu0 0.0
        %4752 = vmatpush1.msra.mxu0 0.0
        %4753 = vmatprep.subr.mxu0 0.0
        %4754 = vmatpush1.msra.mxu0 0.0
        %4755 = vmatprep.subr.mxu0 0.0
        %4756 = vmatpush1.msra.mxu0 0.0
        %4757 = vmatprep.subr.mxu0 0.0
        %4758 = vmatpush1.msra.mxu0 0.0
        %4759 = vmatprep.subr.mxu0 0.0
        %4760 = vmatpush1.msra.mxu0 0.0
        %4761 = vmatprep.subr.mxu0 0.0
        %4762 = vmatpush1.msra.mxu0 0.0
        %4763 = vmatprep.subr.mxu0 0.0
        %4764 = vmatpush1.msra.mxu0 0.0
        %4765 = vmatprep.subr.mxu0 0.0
        %4766 = vmatpush1.msra.mxu0 0.0
        %4767 = vmatprep.subr.mxu0 0.0
        %4768 = vmatpush1.msra.mxu0 0.0
        %4769 = vmatprep.subr.mxu0 0.0
        %4770 = vmatpush1.msra.mxu0 0.0
        %4771 = vmatprep.subr.mxu0 0.0
        %4772 = vmatpush1.msra.mxu0 0.0
        %4773 = vmatprep.subr.mxu0 0.0
        %4774 = vmatpush1.msra.mxu0 0.0
        %4775 = vmatprep.subr.mxu0 0.0
        %4776 = vmatpush1.msra.mxu0 0.0
        %4777 = vmatprep.subr.mxu0 0.0
        %4778 = vmatpush1.msra.mxu0 0.0
        %4779 = vmatprep.mubr.f32.mxu0 0.0
        %v4780 = vand.u32 %v4451, 4294901760
        %v4781 = vsub.f32 %v4451, %v4780
        %v4782 = vand.u32 %v4781, 4294901760
        %4783 = vmatmul.mubr.f32.gmra.mrb[0].mxu0 %v4782
        %v4784 = vpop.f32.mrb[0].mxu0
        %v4785 = vadd.f32 %v4703, %v4784
        %v4786 = vpop.f32.mrb[0].mxu0
        %4787 = vmatprep.mubr.f32.mxu0 0.0
        %v4788 = vand.u32 %v4454, 4294901760
        %v4789 = vsub.f32 %v4454, %v4788
        %v4790 = vand.u32 %v4789, 4294901760
        %4791 = vmatmul.mubr.f32.gmra.mrb[0].mxu0 %v4790
        %v4792 = vpop.f32.mrb[0].mxu0
        %v4793 = vadd.f32 %v4710, %v4792
        %v4794 = vpop.f32.mrb[0].mxu0
        %4795 = vdwg.mxu0
        %4796 = vmatprep.subr.mxu0 0.0
        %v4797 = vand.u32 %v4445, 4294901760
        %v4798 = vsub.f32 %v4445, %v4797
        %v4799 = vand.u32 %v4798, 4294901760
        %4800 = vmatpush1.msra.mxu0 %v4799
        %4801 = vmatprep.subr.mxu0 0.0
        %v4802 = vand.u32 %v4447, 4294901760
        %v4803 = vsub.f32 %v4447, %v4802
        %v4804 = vand.u32 %v4803, 4294901760
        %4805 = vmatpush1.msra.mxu0 %v4804
        %4806 = vmatprep.subr.mxu0 0.0
        %4807 = vmatpush1.msra.mxu0 0.0
        %4808 = vmatprep.subr.mxu0 0.0
        %4809 = vmatpush1.msra.mxu0 0.0
        %4810 = vmatprep.subr.mxu0 0.0
        %4811 = vmatpush1.msra.mxu0 0.0
        %4812 = vmatprep.subr.mxu0 0.0
        %4813 = vmatpush1.msra.mxu0 0.0
        %4814 = vmatprep.subr.mxu0 0.0
        %4815 = vmatpush1.msra.mxu0 0.0
        %4816 = vmatprep.subr.mxu0 0.0
        %4817 = vmatpush1.msra.mxu0 0.0
        %4818 = vmatprep.subr.mxu0 0.0
        %4819 = vmatpush1.msra.mxu0 0.0
        %4820 = vmatprep.subr.mxu0 0.0
        %4821 = vmatpush1.msra.mxu0 0.0
        %4822 = vmatprep.subr.mxu0 0.0
        %4823 = vmatpush1.msra.mxu0 0.0
        %4824 = vmatprep.subr.mxu0 0.0
        %4825 = vmatpush1.msra.mxu0 0.0
        %4826 = vmatprep.subr.mxu0 0.0
        %4827 = vmatpush1.msra.mxu0 0.0
        %4828 = vmatprep.subr.mxu0 0.0
        %4829 = vmatpush1.msra.mxu0 0.0
        %4830 = vmatprep.subr.mxu0 0.0
        %4831 = vmatpush1.msra.mxu0 0.0
        %4832 = vmatprep.subr.mxu0 0.0
        %4833 = vmatpush1.msra.mxu0 0.0
        %4834 = vmatprep.subr.mxu0 0.0
        %4835 = vmatpush1.msra.mxu0 0.0
        %4836 = vmatprep.subr.mxu0 0.0
        %4837 = vmatpush1.msra.mxu0 0.0
        %4838 = vmatprep.subr.mxu0 0.0
        %4839 = vmatpush1.msra.mxu0 0.0
        %4840 = vmatprep.subr.mxu0 0.0
        %4841 = vmatpush1.msra.mxu0 0.0
        %4842 = vmatprep.subr.mxu0 0.0
        %4843 = vmatpush1.msra.mxu0 0.0
        %4844 = vmatprep.subr.mxu0 0.0
        %4845 = vmatpush1.msra.mxu0 0.0
        %4846 = vmatprep.subr.mxu0 0.0
        %4847 = vmatpush1.msra.mxu0 0.0
        %4848 = vmatprep.subr.mxu0 0.0
        %4849 = vmatpush1.msra.mxu0 0.0
        %4850 = vmatprep.subr.mxu0 0.0
        %4851 = vmatpush1.msra.mxu0 0.0
        %4852 = vmatprep.subr.mxu0 0.0
        %4853 = vmatpush1.msra.mxu0 0.0
        %4854 = vmatprep.subr.mxu0 0.0
        %4855 = vmatpush1.msra.mxu0 0.0
        %4856 = vmatprep.subr.mxu0 0.0
        %4857 = vmatpush1.msra.mxu0 0.0
        %4858 = vmatprep.subr.mxu0 0.0
        %4859 = vmatpush1.msra.mxu0 0.0
        %4860 = vmatprep.subr.mxu0 0.0
        %4861 = vmatpush1.msra.mxu0 0.0
        %4862 = vmatprep.subr.mxu0 0.0
        %4863 = vmatpush1.msra.mxu0 0.0
        %4864 = vmatprep.subr.mxu0 0.0
        %4865 = vmatpush1.msra.mxu0 0.0
        %4866 = vmatprep.mubr.f32.mxu0 0.0
        %v4867 = vand.u32 %v4451, 4294901760
        %4868 = vmatmul.mubr.f32.gmra.mrb[0].mxu0 %v4867
        %v4869 = vpop.f32.mrb[0].mxu0
        %v4870 = vadd.f32 %v4785, %v4869
        %v4871 = vpop.f32.mrb[0].mxu0
        %4872 = vmatprep.mubr.f32.mxu0 0.0
        %v4873 = vand.u32 %v4454, 4294901760
        %4874 = vmatmul.mubr.f32.gmra.mrb[0].mxu0 %v4873
        %v4875 = vpop.f32.mrb[0].mxu0
        %v4876 = vadd.f32 %v4793, %v4875
        %v4877 = vpop.f32.mrb[0].mxu0
        %4878 = vdwg.mxu0
        %4879 = vmatprep.subr.mxu0 0.0
        %v4880 = vand.u32 %v4445, 4294901760
        %4881 = vmatpush1.msra.mxu0 %v4880
        %4882 = vmatprep.subr.mxu0 0.0
        %v4883 = vand.u32 %v4447, 4294901760
        %4884 = vmatpush1.msra.mxu0 %v4883
        %4885 = vmatprep.subr.mxu0 0.0
        %4886 = vmatpush1.msra.mxu0 0.0
        %4887 = vmatprep.subr.mxu0 0.0
        %4888 = vmatpush1.msra.mxu0 0.0
        %4889 = vmatprep.subr.mxu0 0.0
        %4890 = vmatpush1.msra.mxu0 0.0
        %4891 = vmatprep.subr.mxu0 0.0
        %4892 = vmatpush1.msra.mxu0 0.0
        %4893 = vmatprep.subr.mxu0 0.0
        %4894 = vmatpush1.msra.mxu0 0.0
        %4895 = vmatprep.subr.mxu0 0.0
        %4896 = vmatpush1.msra.mxu0 0.0
        %4897 = vmatprep.subr.mxu0 0.0
        %4898 = vmatpush1.msra.mxu0 0.0
        %4899 = vmatprep.subr.mxu0 0.0
        %4900 = vmatpush1.msra.mxu0 0.0
        %4901 = vmatprep.subr.mxu0 0.0
        %4902 = vmatpush1.msra.mxu0 0.0
        %4903 = vmatprep.subr.mxu0 0.0
        %4904 = vmatpush1.msra.mxu0 0.0
        %4905 = vmatprep.subr.mxu0 0.0
        %4906 = vmatpush1.msra.mxu0 0.0
        %4907 = vmatprep.subr.mxu0 0.0
        %4908 = vmatpush1.msra.mxu0 0.0
        %4909 = vmatprep.subr.mxu0 0.0
        %4910 = vmatpush1.msra.mxu0 0.0
        %4911 = vmatprep.subr.mxu0 0.0
        %4912 = vmatpush1.msra.mxu0 0.0
        %4913 = vmatprep.subr.mxu0 0.0
        %4914 = vmatpush1.msra.mxu0 0.0
        %4915 = vmatprep.subr.mxu0 0.0
        %4916 = vmatpush1.msra.mxu0 0.0
        %4917 = vmatprep.subr.mxu0 0.0
        %4918 = vmatpush1.msra.mxu0 0.0
        %4919 = vmatprep.subr.mxu0 0.0
        %4920 = vmatpush1.msra.mxu0 0.0
        %4921 = vmatprep.subr.mxu0 0.0
        %4922 = vmatpush1.msra.mxu0 0.0
        %4923 = vmatprep.subr.mxu0 0.0
        %4924 = vmatpush1.msra.mxu0 0.0
        %4925 = vmatprep.subr.mxu0 0.0
        %4926 = vmatpush1.msra.mxu0 0.0
        %4927 = vmatprep.subr.mxu0 0.0
        %4928 = vmatpush1.msra.mxu0 0.0
        %4929 = vmatprep.subr.mxu0 0.0
        %4930 = vmatpush1.msra.mxu0 0.0
        %4931 = vmatprep.subr.mxu0 0.0
        %4932 = vmatpush1.msra.mxu0 0.0
        %4933 = vmatprep.subr.mxu0 0.0
        %4934 = vmatpush1.msra.mxu0 0.0
        %4935 = vmatprep.subr.mxu0 0.0
        %4936 = vmatpush1.msra.mxu0 0.0
        %4937 = vmatprep.subr.mxu0 0.0
        %4938 = vmatpush1.msra.mxu0 0.0
        %4939 = vmatprep.subr.mxu0 0.0
        %4940 = vmatpush1.msra.mxu0 0.0
        %4941 = vmatprep.subr.mxu0 0.0
        %4942 = vmatpush1.msra.mxu0 0.0
        %4943 = vmatprep.subr.mxu0 0.0
        %4944 = vmatpush1.msra.mxu0 0.0
        %4945 = vmatprep.mubr.f32.mxu0 0.0
        %v4946 = vand.u32 %v4451, 4294901760
        %4947 = vmatmul.mubr.f32.gmra.mrb[0].mxu0 %v4946
        %v4948 = vpop.f32.mrb[0].mxu0
        %v4949 = vadd.f32 %v4870, %v4948
        %v4950 = vpop.f32.mrb[0].mxu0
        %4951 = vmatprep.mubr.f32.mxu0 0.0
        %v4952 = vand.u32 %v4454, 4294901760
        %4953 = vmatmul.mubr.f32.gmra.mrb[0].mxu0 %v4952
        %v4954 = vpop.f32.mrb[0].mxu0
        %v4955 = vadd.f32 %v4876, %v4954
        %v4956 = vpop.f32.mrb[0].mxu0
        %4957 = vdwg.mxu0
        %v4959 = vsel %vm808, %v4949, 0
        %v4962 = vsel %vm808, %v4955, 0
        %4964 = vmatprep.subr.mxu0 0.0
        %v4965 = vand.u32 %v254, 4294901760
        %4966 = vmatpush1.msra.mxu0 %v4965
        %4967 = vmatprep.subr.mxu0 0.0
        %4968 = vmatpush1.msra.mxu0 0.0
        %4969 = vmatprep.subr.mxu0 0.0
        %4970 = vmatpush1.msra.mxu0 0.0
        %4971 = vmatprep.subr.mxu0 0.0
        %4972 = vmatpush1.msra.mxu0 0.0
        %4973 = vmatprep.subr.mxu0 0.0
        %4974 = vmatpush1.msra.mxu0 0.0
        %4975 = vmatprep.subr.mxu0 0.0
        %4976 = vmatpush1.msra.mxu0 0.0
        %4977 = vmatprep.subr.mxu0 0.0
        %4978 = vmatpush1.msra.mxu0 0.0
        %4979 = vmatprep.subr.mxu0 0.0
        %4980 = vmatpush1.msra.mxu0 0.0
        %4981 = vmatprep.subr.mxu0 0.0
        %4982 = vmatpush1.msra.mxu0 0.0
        %4983 = vmatprep.subr.mxu0 0.0
        %4984 = vmatpush1.msra.mxu0 0.0
        %4985 = vmatprep.subr.mxu0 0.0
        %4986 = vmatpush1.msra.mxu0 0.0
        %4987 = vmatprep.subr.mxu0 0.0
        %4988 = vmatpush1.msra.mxu0 0.0
        %4989 = vmatprep.subr.mxu0 0.0
        %4990 = vmatpush1.msra.mxu0 0.0
        %4991 = vmatprep.subr.mxu0 0.0
        %4992 = vmatpush1.msra.mxu0 0.0
        %4993 = vmatprep.subr.mxu0 0.0
        %4994 = vmatpush1.msra.mxu0 0.0
        %4995 = vmatprep.subr.mxu0 0.0
        %4996 = vmatpush1.msra.mxu0 0.0
        %4997 = vmatprep.subr.mxu0 0.0
        %4998 = vmatpush1.msra.mxu0 0.0
        %4999 = vmatprep.subr.mxu0 0.0
        %5000 = vmatpush1.msra.mxu0 0.0
        %5001 = vmatprep.subr.mxu0 0.0
        %5002 = vmatpush1.msra.mxu0 0.0
        %5003 = vmatprep.subr.mxu0 0.0
        %5004 = vmatpush1.msra.mxu0 0.0
        %5005 = vmatprep.subr.mxu0 0.0
        %5006 = vmatpush1.msra.mxu0 0.0
        %5007 = vmatprep.subr.mxu0 0.0
        %5008 = vmatpush1.msra.mxu0 0.0
        %5009 = vmatprep.subr.mxu0 0.0
        %5010 = vmatpush1.msra.mxu0 0.0
        %5011 = vmatprep.subr.mxu0 0.0
        %5012 = vmatpush1.msra.mxu0 0.0
        %5013 = vmatprep.subr.mxu0 0.0
        %5014 = vmatpush1.msra.mxu0 0.0
        %5015 = vmatprep.subr.mxu0 0.0
        %5016 = vmatpush1.msra.mxu0 0.0
        %5017 = vmatprep.subr.mxu0 0.0
        %5018 = vmatpush1.msra.mxu0 0.0
        %5019 = vmatprep.subr.mxu0 0.0
        %5020 = vmatpush1.msra.mxu0 0.0
        %5021 = vmatprep.subr.mxu0 0.0
        %5022 = vmatpush1.msra.mxu0 0.0
        %5023 = vmatprep.subr.mxu0 0.0
        %5024 = vmatpush1.msra.mxu0 0.0
        %5025 = vmatprep.subr.mxu0 0.0
        %5026 = vmatpush1.msra.mxu0 0.0
        %5027 = vmatprep.subr.mxu0 0.0
        %5028 = vmatpush1.msra.mxu0 0.0
        %5029 = vmatprep.mubr.f32.mxu0 0.0
        %v5030 = vand.u32 %v4959, 4294901760
        %v5031 = vsub.f32 %v4959, %v5030
        %v5032 = vand.u32 %v5031, 4294901760
        %v5033 = vsub.f32 %v5031, %v5032
        %v5034 = vand.u32 %v5033, 4294901760
        %5035 = vmatmul.mubr.f32.gmra.mrb[0].mxu0 %v5034
        %v5036 = vpop.f32.mrb[0].mxu0
        %v5037 = vadd.f32 0.0, %v5036
        %v5038 = vpop.f32.mrb[0].mxu0
        %5039 = vmatprep.mubr.f32.mxu0 0.0
        %v5040 = vand.u32 %v4962, 4294901760
        %v5041 = vsub.f32 %v4962, %v5040
        %v5042 = vand.u32 %v5041, 4294901760
        %v5043 = vsub.f32 %v5041, %v5042
        %v5044 = vand.u32 %v5043, 4294901760
        %5045 = vmatmul.mubr.f32.gmra.mrb[0].mxu0 %v5044
        %v5046 = vpop.f32.mrb[0].mxu0
        %v5047 = vadd.f32 0.0, %v5046
        %v5048 = vpop.f32.mrb[0].mxu0
        %5049 = vdwg.mxu0
        %5050 = vmatprep.subr.mxu0 0.0
        %v5051 = vand.u32 %v254, 4294901760
        %v5052 = vsub.f32 %v254, %v5051
        %v5053 = vand.u32 %v5052, 4294901760
        %v5054 = vsub.f32 %v5052, %v5053
        %v5055 = vand.u32 %v5054, 4294901760
        %5056 = vmatpush1.msra.mxu0 %v5055
        %5057 = vmatprep.subr.mxu0 0.0
        %5058 = vmatpush1.msra.mxu0 0.0
        %5059 = vmatprep.subr.mxu0 0.0
        %5060 = vmatpush1.msra.mxu0 0.0
        %5061 = vmatprep.subr.mxu0 0.0
        %5062 = vmatpush1.msra.mxu0 0.0
        %5063 = vmatprep.subr.mxu0 0.0
        %5064 = vmatpush1.msra.mxu0 0.0
        %5065 = vmatprep.subr.mxu0 0.0
        %5066 = vmatpush1.msra.mxu0 0.0
        %5067 = vmatprep.subr.mxu0 0.0
        %5068 = vmatpush1.msra.mxu0 0.0
        %5069 = vmatprep.subr.mxu0 0.0
        %5070 = vmatpush1.msra.mxu0 0.0
        %5071 = vmatprep.subr.mxu0 0.0
        %5072 = vmatpush1.msra.mxu0 0.0
        %5073 = vmatprep.subr.mxu0 0.0
        %5074 = vmatpush1.msra.mxu0 0.0
        %5075 = vmatprep.subr.mxu0 0.0
        %5076 = vmatpush1.msra.mxu0 0.0
        %5077 = vmatprep.subr.mxu0 0.0
        %5078 = vmatpush1.msra.mxu0 0.0
        %5079 = vmatprep.subr.mxu0 0.0
        %5080 = vmatpush1.msra.mxu0 0.0
        %5081 = vmatprep.subr.mxu0 0.0
        %5082 = vmatpush1.msra.mxu0 0.0
        %5083 = vmatprep.subr.mxu0 0.0
        %5084 = vmatpush1.msra.mxu0 0.0
        %5085 = vmatprep.subr.mxu0 0.0
        %5086 = vmatpush1.msra.mxu0 0.0
        %5087 = vmatprep.subr.mxu0 0.0
        %5088 = vmatpush1.msra.mxu0 0.0
        %5089 = vmatprep.subr.mxu0 0.0
        %5090 = vmatpush1.msra.mxu0 0.0
        %5091 = vmatprep.subr.mxu0 0.0
        %5092 = vmatpush1.msra.mxu0 0.0
        %5093 = vmatprep.subr.mxu0 0.0
        %5094 = vmatpush1.msra.mxu0 0.0
        %5095 = vmatprep.subr.mxu0 0.0
        %5096 = vmatpush1.msra.mxu0 0.0
        %5097 = vmatprep.subr.mxu0 0.0
        %5098 = vmatpush1.msra.mxu0 0.0
        %5099 = vmatprep.subr.mxu0 0.0
        %5100 = vmatpush1.msra.mxu0 0.0
        %5101 = vmatprep.subr.mxu0 0.0
        %5102 = vmatpush1.msra.mxu0 0.0
        %5103 = vmatprep.subr.mxu0 0.0
        %5104 = vmatpush1.msra.mxu0 0.0
        %5105 = vmatprep.subr.mxu0 0.0
        %5106 = vmatpush1.msra.mxu0 0.0
        %5107 = vmatprep.subr.mxu0 0.0
        %5108 = vmatpush1.msra.mxu0 0.0
        %5109 = vmatprep.subr.mxu0 0.0
        %5110 = vmatpush1.msra.mxu0 0.0
        %5111 = vmatprep.subr.mxu0 0.0
        %5112 = vmatpush1.msra.mxu0 0.0
        %5113 = vmatprep.subr.mxu0 0.0
        %5114 = vmatpush1.msra.mxu0 0.0
        %5115 = vmatprep.subr.mxu0 0.0
        %5116 = vmatpush1.msra.mxu0 0.0
        %5117 = vmatprep.subr.mxu0 0.0
        %5118 = vmatpush1.msra.mxu0 0.0
        %5119 = vmatprep.mubr.f32.mxu0 0.0
        %v5120 = vand.u32 %v4959, 4294901760
        %5121 = vmatmul.mubr.f32.gmra.mrb[0].mxu0 %v5120
        %v5122 = vpop.f32.mrb[0].mxu0
        %v5123 = vadd.f32 %v5037, %v5122
        %v5124 = vpop.f32.mrb[0].mxu0
        %5125 = vmatprep.mubr.f32.mxu0 0.0
        %v5126 = vand.u32 %v4962, 4294901760
        %5127 = vmatmul.mubr.f32.gmra.mrb[0].mxu0 %v5126
        %v5128 = vpop.f32.mrb[0].mxu0
        %v5129 = vadd.f32 %v5047, %v5128
        %v5130 = vpop.f32.mrb[0].mxu0
        %5131 = vdwg.mxu0
        %5132 = vmatprep.subr.mxu0 0.0
        %v5133 = vand.u32 %v254, 4294901760
        %v5134 = vsub.f32 %v254, %v5133
        %5135 = vmatpush1.msra.mxu0 %v5134
        %5136 = vmatprep.subr.mxu0 0.0
        %5137 = vmatpush1.msra.mxu0 0.0
        %5138 = vmatprep.subr.mxu0 0.0
        %5139 = vmatpush1.msra.mxu0 0.0
        %5140 = vmatprep.subr.mxu0 0.0
        %5141 = vmatpush1.msra.mxu0 0.0
        %5142 = vmatprep.subr.mxu0 0.0
        %5143 = vmatpush1.msra.mxu0 0.0
        %5144 = vmatprep.subr.mxu0 0.0
        %5145 = vmatpush1.msra.mxu0 0.0
        %5146 = vmatprep.subr.mxu0 0.0
        %5147 = vmatpush1.msra.mxu0 0.0
        %5148 = vmatprep.subr.mxu0 0.0
        %5149 = vmatpush1.msra.mxu0 0.0
        %5150 = vmatprep.subr.mxu0 0.0
        %5151 = vmatpush1.msra.mxu0 0.0
        %5152 = vmatprep.subr.mxu0 0.0
        %5153 = vmatpush1.msra.mxu0 0.0
        %5154 = vmatprep.subr.mxu0 0.0
        %5155 = vmatpush1.msra.mxu0 0.0
        %5156 = vmatprep.subr.mxu0 0.0
        %5157 = vmatpush1.msra.mxu0 0.0
        %5158 = vmatprep.subr.mxu0 0.0
        %5159 = vmatpush1.msra.mxu0 0.0
        %5160 = vmatprep.subr.mxu0 0.0
        %5161 = vmatpush1.msra.mxu0 0.0
        %5162 = vmatprep.subr.mxu0 0.0
        %5163 = vmatpush1.msra.mxu0 0.0
        %5164 = vmatprep.subr.mxu0 0.0
        %5165 = vmatpush1.msra.mxu0 0.0
        %5166 = vmatprep.subr.mxu0 0.0
        %5167 = vmatpush1.msra.mxu0 0.0
        %5168 = vmatprep.subr.mxu0 0.0
        %5169 = vmatpush1.msra.mxu0 0.0
        %5170 = vmatprep.subr.mxu0 0.0
        %5171 = vmatpush1.msra.mxu0 0.0
        %5172 = vmatprep.subr.mxu0 0.0
        %5173 = vmatpush1.msra.mxu0 0.0
        %5174 = vmatprep.subr.mxu0 0.0
        %5175 = vmatpush1.msra.mxu0 0.0
        %5176 = vmatprep.subr.mxu0 0.0
        %5177 = vmatpush1.msra.mxu0 0.0
        %5178 = vmatprep.subr.mxu0 0.0
        %5179 = vmatpush1.msra.mxu0 0.0
        %5180 = vmatprep.subr.mxu0 0.0
        %5181 = vmatpush1.msra.mxu0 0.0
        %5182 = vmatprep.subr.mxu0 0.0
        %5183 = vmatpush1.msra.mxu0 0.0
        %5184 = vmatprep.subr.mxu0 0.0
        %5185 = vmatpush1.msra.mxu0 0.0
        %5186 = vmatprep.subr.mxu0 0.0
        %5187 = vmatpush1.msra.mxu0 0.0
        %5188 = vmatprep.subr.mxu0 0.0
        %5189 = vmatpush1.msra.mxu0 0.0
        %5190 = vmatprep.subr.mxu0 0.0
        %5191 = vmatpush1.msra.mxu0 0.0
        %5192 = vmatprep.subr.mxu0 0.0
        %5193 = vmatpush1.msra.mxu0 0.0
        %5194 = vmatprep.subr.mxu0 0.0
        %5195 = vmatpush1.msra.mxu0 0.0
        %5196 = vmatprep.subr.mxu0 0.0
        %5197 = vmatpush1.msra.mxu0 0.0
        %5198 = vmatprep.mubr.f32.mxu0 0.0
        %v5199 = vand.u32 %v4959, 4294901760
        %v5200 = vsub.f32 %v4959, %v5199
        %5201 = vmatmul.mubr.f32.gmra.mrb[0].mxu0 %v5200
        %v5202 = vpop.f32.mrb[0].mxu0
        %v5203 = vadd.f32 %v5123, %v5202
        %v5204 = vpop.f32.mrb[0].mxu0
        %5205 = vmatprep.mubr.f32.mxu0 0.0
        %v5206 = vand.u32 %v4962, 4294901760
        %v5207 = vsub.f32 %v4962, %v5206
        %5208 = vmatmul.mubr.f32.gmra.mrb[0].mxu0 %v5207
        %v5209 = vpop.f32.mrb[0].mxu0
        %v5210 = vadd.f32 %v5129, %v5209
        %v5211 = vpop.f32.mrb[0].mxu0
        %5212 = vdwg.mxu0
        %5213 = vmatprep.subr.mxu0 0.0
        %v5214 = vand.u32 %v254, 4294901760
        %5215 = vmatpush1.msra.mxu0 %v5214
        %5216 = vmatprep.subr.mxu0 0.0
        %5217 = vmatpush1.msra.mxu0 0.0
        %5218 = vmatprep.subr.mxu0 0.0
        %5219 = vmatpush1.msra.mxu0 0.0
        %5220 = vmatprep.subr.mxu0 0.0
        %5221 = vmatpush1.msra.mxu0 0.0
        %5222 = vmatprep.subr.mxu0 0.0
        %5223 = vmatpush1.msra.mxu0 0.0
        %5224 = vmatprep.subr.mxu0 0.0
        %5225 = vmatpush1.msra.mxu0 0.0
        %5226 = vmatprep.subr.mxu0 0.0
        %5227 = vmatpush1.msra.mxu0 0.0
        %5228 = vmatprep.subr.mxu0 0.0
        %5229 = vmatpush1.msra.mxu0 0.0
        %5230 = vmatprep.subr.mxu0 0.0
        %5231 = vmatpush1.msra.mxu0 0.0
        %5232 = vmatprep.subr.mxu0 0.0
        %5233 = vmatpush1.msra.mxu0 0.0
        %5234 = vmatprep.subr.mxu0 0.0
        %5235 = vmatpush1.msra.mxu0 0.0
        %5236 = vmatprep.subr.mxu0 0.0
        %5237 = vmatpush1.msra.mxu0 0.0
        %5238 = vmatprep.subr.mxu0 0.0
        %5239 = vmatpush1.msra.mxu0 0.0
        %5240 = vmatprep.subr.mxu0 0.0
        %5241 = vmatpush1.msra.mxu0 0.0
        %5242 = vmatprep.subr.mxu0 0.0
        %5243 = vmatpush1.msra.mxu0 0.0
        %5244 = vmatprep.subr.mxu0 0.0
        %5245 = vmatpush1.msra.mxu0 0.0
        %5246 = vmatprep.subr.mxu0 0.0
        %5247 = vmatpush1.msra.mxu0 0.0
        %5248 = vmatprep.subr.mxu0 0.0
        %5249 = vmatpush1.msra.mxu0 0.0
        %5250 = vmatprep.subr.mxu0 0.0
        %5251 = vmatpush1.msra.mxu0 0.0
        %5252 = vmatprep.subr.mxu0 0.0
        %5253 = vmatpush1.msra.mxu0 0.0
        %5254 = vmatprep.subr.mxu0 0.0
        %5255 = vmatpush1.msra.mxu0 0.0
        %5256 = vmatprep.subr.mxu0 0.0
        %5257 = vmatpush1.msra.mxu0 0.0
        %5258 = vmatprep.subr.mxu0 0.0
        %5259 = vmatpush1.msra.mxu0 0.0
        %5260 = vmatprep.subr.mxu0 0.0
        %5261 = vmatpush1.msra.mxu0 0.0
        %5262 = vmatprep.subr.mxu0 0.0
        %5263 = vmatpush1.msra.mxu0 0.0
        %5264 = vmatprep.subr.mxu0 0.0
        %5265 = vmatpush1.msra.mxu0 0.0
        %5266 = vmatprep.subr.mxu0 0.0
        %5267 = vmatpush1.msra.mxu0 0.0
        %5268 = vmatprep.subr.mxu0 0.0
        %5269 = vmatpush1.msra.mxu0 0.0
        %5270 = vmatprep.subr.mxu0 0.0
        %5271 = vmatpush1.msra.mxu0 0.0
        %5272 = vmatprep.subr.mxu0 0.0
        %5273 = vmatpush1.msra.mxu0 0.0
        %5274 = vmatprep.subr.mxu0 0.0
        %5275 = vmatpush1.msra.mxu0 0.0
        %5276 = vmatprep.subr.mxu0 0.0
        %5277 = vmatpush1.msra.mxu0 0.0
        %5278 = vmatprep.mubr.f32.mxu0 0.0
        %v5279 = vand.u32 %v4959, 4294901760
        %v5280 = vsub.f32 %v4959, %v5279
        %v5281 = vand.u32 %v5280, 4294901760
        %5282 = vmatmul.mubr.f32.gmra.mrb[0].mxu0 %v5281
        %v5283 = vpop.f32.mrb[0].mxu0
        %v5284 = vadd.f32 %v5203, %v5283
        %v5285 = vpop.f32.mrb[0].mxu0
        %5286 = vmatprep.mubr.f32.mxu0 0.0
        %v5287 = vand.u32 %v4962, 4294901760
        %v5288 = vsub.f32 %v4962, %v5287
        %v5289 = vand.u32 %v5288, 4294901760
        %5290 = vmatmul.mubr.f32.gmra.mrb[0].mxu0 %v5289
        %v5291 = vpop.f32.mrb[0].mxu0
        %v5292 = vadd.f32 %v5210, %v5291
        %v5293 = vpop.f32.mrb[0].mxu0
        %5294 = vdwg.mxu0
        %5295 = vmatprep.subr.mxu0 0.0
        %v5296 = vand.u32 %v254, 4294901760
        %v5297 = vsub.f32 %v254, %v5296
        %v5298 = vand.u32 %v5297, 4294901760
        %5299 = vmatpush1.msra.mxu0 %v5298
        %5300 = vmatprep.subr.mxu0 0.0
        %5301 = vmatpush1.msra.mxu0 0.0
        %5302 = vmatprep.subr.mxu0 0.0
        %5303 = vmatpush1.msra.mxu0 0.0
        %5304 = vmatprep.subr.mxu0 0.0
        %5305 = vmatpush1.msra.mxu0 0.0
        %5306 = vmatprep.subr.mxu0 0.0
        %5307 = vmatpush1.msra.mxu0 0.0
        %5308 = vmatprep.subr.mxu0 0.0
        %5309 = vmatpush1.msra.mxu0 0.0
        %5310 = vmatprep.subr.mxu0 0.0
        %5311 = vmatpush1.msra.mxu0 0.0
        %5312 = vmatprep.subr.mxu0 0.0
        %5313 = vmatpush1.msra.mxu0 0.0
        %5314 = vmatprep.subr.mxu0 0.0
        %5315 = vmatpush1.msra.mxu0 0.0
        %5316 = vmatprep.subr.mxu0 0.0
        %5317 = vmatpush1.msra.mxu0 0.0
        %5318 = vmatprep.subr.mxu0 0.0
        %5319 = vmatpush1.msra.mxu0 0.0
        %5320 = vmatprep.subr.mxu0 0.0
        %5321 = vmatpush1.msra.mxu0 0.0
        %5322 = vmatprep.subr.mxu0 0.0
        %5323 = vmatpush1.msra.mxu0 0.0
        %5324 = vmatprep.subr.mxu0 0.0
        %5325 = vmatpush1.msra.mxu0 0.0
        %5326 = vmatprep.subr.mxu0 0.0
        %5327 = vmatpush1.msra.mxu0 0.0
        %5328 = vmatprep.subr.mxu0 0.0
        %5329 = vmatpush1.msra.mxu0 0.0
        %5330 = vmatprep.subr.mxu0 0.0
        %5331 = vmatpush1.msra.mxu0 0.0
        %5332 = vmatprep.subr.mxu0 0.0
        %5333 = vmatpush1.msra.mxu0 0.0
        %5334 = vmatprep.subr.mxu0 0.0
        %5335 = vmatpush1.msra.mxu0 0.0
        %5336 = vmatprep.subr.mxu0 0.0
        %5337 = vmatpush1.msra.mxu0 0.0
        %5338 = vmatprep.subr.mxu0 0.0
        %5339 = vmatpush1.msra.mxu0 0.0
        %5340 = vmatprep.subr.mxu0 0.0
        %5341 = vmatpush1.msra.mxu0 0.0
        %5342 = vmatprep.subr.mxu0 0.0
        %5343 = vmatpush1.msra.mxu0 0.0
        %5344 = vmatprep.subr.mxu0 0.0
        %5345 = vmatpush1.msra.mxu0 0.0
        %5346 = vmatprep.subr.mxu0 0.0
        %5347 = vmatpush1.msra.mxu0 0.0
        %5348 = vmatprep.subr.mxu0 0.0
        %5349 = vmatpush1.msra.mxu0 0.0
        %5350 = vmatprep.subr.mxu0 0.0
        %5351 = vmatpush1.msra.mxu0 0.0
        %5352 = vmatprep.subr.mxu0 0.0
        %5353 = vmatpush1.msra.mxu0 0.0
        %5354 = vmatprep.subr.mxu0 0.0
        %5355 = vmatpush1.msra.mxu0 0.0
        %5356 = vmatprep.subr.mxu0 0.0
        %5357 = vmatpush1.msra.mxu0 0.0
        %5358 = vmatprep.subr.mxu0 0.0
        %5359 = vmatpush1.msra.mxu0 0.0
        %5360 = vmatprep.subr.mxu0 0.0
        %5361 = vmatpush1.msra.mxu0 0.0
        %5362 = vmatprep.mubr.f32.mxu0 0.0
        %v5363 = vand.u32 %v4959, 4294901760
        %5364 = vmatmul.mubr.f32.gmra.mrb[0].mxu0 %v5363
        %v5365 = vpop.f32.mrb[0].mxu0
        %v5366 = vadd.f32 %v5284, %v5365
        %v5367 = vpop.f32.mrb[0].mxu0
        %5368 = vmatprep.mubr.f32.mxu0 0.0
        %v5369 = vand.u32 %v4962, 4294901760
        %5370 = vmatmul.mubr.f32.gmra.mrb[0].mxu0 %v5369
        %v5371 = vpop.f32.mrb[0].mxu0
        %v5372 = vadd.f32 %v5292, %v5371
        %v5373 = vpop.f32.mrb[0].mxu0
        %5374 = vdwg.mxu0
        %5375 = vmatprep.subr.mxu0 0.0
        %v5376 = vand.u32 %v254, 4294901760
        %5377 = vmatpush1.msra.mxu0 %v5376
        %5378 = vmatprep.subr.mxu0 0.0
        %5379 = vmatpush1.msra.mxu0 0.0
        %5380 = vmatprep.subr.mxu0 0.0
        %5381 = vmatpush1.msra.mxu0 0.0
        %5382 = vmatprep.subr.mxu0 0.0
        %5383 = vmatpush1.msra.mxu0 0.0
        %5384 = vmatprep.subr.mxu0 0.0
        %5385 = vmatpush1.msra.mxu0 0.0
        %5386 = vmatprep.subr.mxu0 0.0
        %5387 = vmatpush1.msra.mxu0 0.0
        %5388 = vmatprep.subr.mxu0 0.0
        %5389 = vmatpush1.msra.mxu0 0.0
        %5390 = vmatprep.subr.mxu0 0.0
        %5391 = vmatpush1.msra.mxu0 0.0
        %5392 = vmatprep.subr.mxu0 0.0
        %5393 = vmatpush1.msra.mxu0 0.0
        %5394 = vmatprep.subr.mxu0 0.0
        %5395 = vmatpush1.msra.mxu0 0.0
        %5396 = vmatprep.subr.mxu0 0.0
        %5397 = vmatpush1.msra.mxu0 0.0
        %5398 = vmatprep.subr.mxu0 0.0
        %5399 = vmatpush1.msra.mxu0 0.0
        %5400 = vmatprep.subr.mxu0 0.0
        %5401 = vmatpush1.msra.mxu0 0.0
        %5402 = vmatprep.subr.mxu0 0.0
        %5403 = vmatpush1.msra.mxu0 0.0
        %5404 = vmatprep.subr.mxu0 0.0
        %5405 = vmatpush1.msra.mxu0 0.0
        %5406 = vmatprep.subr.mxu0 0.0
        %5407 = vmatpush1.msra.mxu0 0.0
        %5408 = vmatprep.subr.mxu0 0.0
        %5409 = vmatpush1.msra.mxu0 0.0
        %5410 = vmatprep.subr.mxu0 0.0
        %5411 = vmatpush1.msra.mxu0 0.0
        %5412 = vmatprep.subr.mxu0 0.0
        %5413 = vmatpush1.msra.mxu0 0.0
        %5414 = vmatprep.subr.mxu0 0.0
        %5415 = vmatpush1.msra.mxu0 0.0
        %5416 = vmatprep.subr.mxu0 0.0
        %5417 = vmatpush1.msra.mxu0 0.0
        %5418 = vmatprep.subr.mxu0 0.0
        %5419 = vmatpush1.msra.mxu0 0.0
        %5420 = vmatprep.subr.mxu0 0.0
        %5421 = vmatpush1.msra.mxu0 0.0
        %5422 = vmatprep.subr.mxu0 0.0
        %5423 = vmatpush1.msra.mxu0 0.0
        %5424 = vmatprep.subr.mxu0 0.0
        %5425 = vmatpush1.msra.mxu0 0.0
        %5426 = vmatprep.subr.mxu0 0.0
        %5427 = vmatpush1.msra.mxu0 0.0
        %5428 = vmatprep.subr.mxu0 0.0
        %5429 = vmatpush1.msra.mxu0 0.0
        %5430 = vmatprep.subr.mxu0 0.0
        %5431 = vmatpush1.msra.mxu0 0.0
        %5432 = vmatprep.subr.mxu0 0.0
        %5433 = vmatpush1.msra.mxu0 0.0
        %5434 = vmatprep.subr.mxu0 0.0
        %5435 = vmatpush1.msra.mxu0 0.0
        %5436 = vmatprep.subr.mxu0 0.0
        %5437 = vmatpush1.msra.mxu0 0.0
        %5438 = vmatprep.subr.mxu0 0.0
        %5439 = vmatpush1.msra.mxu0 0.0
        %5440 = vmatprep.mubr.f32.mxu0 0.0
        %v5441 = vand.u32 %v4959, 4294901760
        %5442 = vmatmul.mubr.f32.gmra.mrb[0].mxu0 %v5441
        %v5443 = vpop.f32.mrb[0].mxu0
        %v5444 = vadd.f32 %v5366, %v5443
        %v5445 = vpop.f32.mrb[0].mxu0
        %5446 = vmatprep.mubr.f32.mxu0 0.0
        %v5447 = vand.u32 %v4962, 4294901760
        %5448 = vmatmul.mubr.f32.gmra.mrb[0].mxu0 %v5447
        %v5449 = vpop.f32.mrb[0].mxu0
        %v5450 = vadd.f32 %v5372, %v5449
        %v5451 = vpop.f32.mrb[0].mxu0
        %5452 = vdwg.mxu0
        %v5453 = vadd.f32 %v3902, %v5444
        %v5454 = vadd.f32 %v3903, %v5450
        %5455 = vrot.lane.b32.xlu0 %v788, 104
        %v5456 = vpop.permute.xlu0 %5455
        %5457 = vrot.lane.b32.xlu0 %v794, 104
        %v5458 = vpop.permute.xlu0 %5457
        %5459 = vrot.lane.b32.xlu0 %v788, 72
        %v5460 = vpop.permute.xlu0 %5459
        %5461 = vrot.lane.b32.xlu0 %v794, 72
        %v5462 = vpop.permute.xlu0 %5461
        %v5463 = vsel %vm808, %v5456, 0
        %v5465 = vsel %vm808, %v5458, 0
        %v5467 = vsel %vm808, %v5460, 0
        %v5469 = vsel %vm808, %v5462, 0
        %5471 = vmatprep.subr.mxu0 0.0
        %v5472 = vand.u32 %v5467, 4294901760
        %5473 = vmatpush1.xpose.msra.mxu0 %v5472
        %5474 = vmatprep.subr.mxu0 0.0
        %v5475 = vand.u32 %v5469, 4294901760
        %5476 = vmatpush1.xpose.msra.mxu0 %v5475
        %5477 = vmatprep.subr.mxu0 0.0
        %5478 = vmatpush1.xpose.msra.mxu0 0.0
        %5479 = vmatprep.subr.mxu0 0.0
        %5480 = vmatpush1.xpose.msra.mxu0 0.0
        %5481 = vmatprep.subr.mxu0 0.0
        %5482 = vmatpush1.xpose.msra.mxu0 0.0
        %5483 = vmatprep.subr.mxu0 0.0
        %5484 = vmatpush1.xpose.msra.mxu0 0.0
        %5485 = vmatprep.subr.mxu0 0.0
        %5486 = vmatpush1.xpose.msra.mxu0 0.0
        %5487 = vmatprep.subr.mxu0 0.0
        %5488 = vmatpush1.xpose.msra.mxu0 0.0
        %5489 = vmatprep.subr.mxu0 0.0
        %5490 = vmatpush1.xpose.msra.mxu0 0.0
        %5491 = vmatprep.subr.mxu0 0.0
        %5492 = vmatpush1.xpose.msra.mxu0 0.0
        %5493 = vmatprep.subr.mxu0 0.0
        %5494 = vmatpush1.xpose.msra.mxu0 0.0
        %5495 = vmatprep.subr.mxu0 0.0
        %5496 = vmatpush1.xpose.msra.mxu0 0.0
        %5497 = vmatprep.subr.mxu0 0.0
        %5498 = vmatpush1.xpose.msra.mxu0 0.0
        %5499 = vmatprep.subr.mxu0 0.0
        %5500 = vmatpush1.xpose.msra.mxu0 0.0
        %5501 = vmatprep.subr.mxu0 0.0
        %5502 = vmatpush1.xpose.msra.mxu0 0.0
        %5503 = vmatprep.subr.mxu0 0.0
        %5504 = vmatpush1.xpose.msra.mxu0 0.0
        %5505 = vmatprep.subr.mxu0 0.0
        %5506 = vmatpush1.xpose.msra.mxu0 0.0
        %5507 = vmatprep.subr.mxu0 0.0
        %5508 = vmatpush1.xpose.msra.mxu0 0.0
        %5509 = vmatprep.subr.mxu0 0.0
        %5510 = vmatpush1.xpose.msra.mxu0 0.0
        %5511 = vmatprep.subr.mxu0 0.0
        %5512 = vmatpush1.xpose.msra.mxu0 0.0
        %5513 = vmatprep.subr.mxu0 0.0
        %5514 = vmatpush1.xpose.msra.mxu0 0.0
        %5515 = vmatprep.subr.mxu0 0.0
        %5516 = vmatpush1.xpose.msra.mxu0 0.0
        %5517 = vmatprep.subr.mxu0 0.0
        %5518 = vmatpush1.xpose.msra.mxu0 0.0
        %5519 = vmatprep.subr.mxu0 0.0
        %5520 = vmatpush1.xpose.msra.mxu0 0.0
        %5521 = vmatprep.subr.mxu0 0.0
        %5522 = vmatpush1.xpose.msra.mxu0 0.0
        %5523 = vmatprep.subr.mxu0 0.0
        %5524 = vmatpush1.xpose.msra.mxu0 0.0
        %5525 = vmatprep.subr.mxu0 0.0
        %5526 = vmatpush1.xpose.msra.mxu0 0.0
        %5527 = vmatprep.subr.mxu0 0.0
        %5528 = vmatpush1.xpose.msra.mxu0 0.0
        %5529 = vmatprep.subr.mxu0 0.0
        %5530 = vmatpush1.xpose.msra.mxu0 0.0
        %5531 = vmatprep.subr.mxu0 0.0
        %5532 = vmatpush1.xpose.msra.mxu0 0.0
        %5533 = vmatprep.subr.mxu0 0.0
        %5534 = vmatpush1.xpose.msra.mxu0 0.0
        %5535 = vmatprep.subr.mxu0 0.0
        %5536 = vmatpush1.xpose.msra.mxu0 0.0
        %5537 = vmatprep.mubr.f32.mxu0 0.0
        %v5538 = vand.u32 %v5463, 4294901760
        %v5539 = vsub.f32 %v5463, %v5538
        %v5540 = vand.u32 %v5539, 4294901760
        %v5541 = vsub.f32 %v5539, %v5540
        %v5542 = vand.u32 %v5541, 4294901760
        %5543 = vmatmul.mubr.f32.gmra.mrb[0].mxu0 %v5542
        %v5544 = vpop.f32.mrb[0].mxu0
        %v5545 = vadd.f32 0.0, %v5544
        %v5546 = vpop.f32.mrb[0].mxu0
        %5547 = vmatprep.mubr.f32.mxu0 0.0
        %v5548 = vand.u32 %v5465, 4294901760
        %v5549 = vsub.f32 %v5465, %v5548
        %v5550 = vand.u32 %v5549, 4294901760
        %v5551 = vsub.f32 %v5549, %v5550
        %v5552 = vand.u32 %v5551, 4294901760
        %5553 = vmatmul.mubr.f32.gmra.mrb[0].mxu0 %v5552
        %v5554 = vpop.f32.mrb[0].mxu0
        %v5555 = vadd.f32 0.0, %v5554
        %v5556 = vpop.f32.mrb[0].mxu0
        %5557 = vdwg.mxu0
        %5558 = vmatprep.subr.mxu0 0.0
        %v5559 = vand.u32 %v5467, 4294901760
        %v5560 = vsub.f32 %v5467, %v5559
        %v5561 = vand.u32 %v5560, 4294901760
        %v5562 = vsub.f32 %v5560, %v5561
        %v5563 = vand.u32 %v5562, 4294901760
        %5564 = vmatpush1.xpose.msra.mxu0 %v5563
        %5565 = vmatprep.subr.mxu0 0.0
        %v5566 = vand.u32 %v5469, 4294901760
        %v5567 = vsub.f32 %v5469, %v5566
        %v5568 = vand.u32 %v5567, 4294901760
        %v5569 = vsub.f32 %v5567, %v5568
        %v5570 = vand.u32 %v5569, 4294901760
        %5571 = vmatpush1.xpose.msra.mxu0 %v5570
        %5572 = vmatprep.subr.mxu0 0.0
        %5573 = vmatpush1.xpose.msra.mxu0 0.0
        %5574 = vmatprep.subr.mxu0 0.0
        %5575 = vmatpush1.xpose.msra.mxu0 0.0
        %5576 = vmatprep.subr.mxu0 0.0
        %5577 = vmatpush1.xpose.msra.mxu0 0.0
        %5578 = vmatprep.subr.mxu0 0.0
        %5579 = vmatpush1.xpose.msra.mxu0 0.0
        %5580 = vmatprep.subr.mxu0 0.0
        %5581 = vmatpush1.xpose.msra.mxu0 0.0
        %5582 = vmatprep.subr.mxu0 0.0
        %5583 = vmatpush1.xpose.msra.mxu0 0.0
        %5584 = vmatprep.subr.mxu0 0.0
        %5585 = vmatpush1.xpose.msra.mxu0 0.0
        %5586 = vmatprep.subr.mxu0 0.0
        %5587 = vmatpush1.xpose.msra.mxu0 0.0
        %5588 = vmatprep.subr.mxu0 0.0
        %5589 = vmatpush1.xpose.msra.mxu0 0.0
        %5590 = vmatprep.subr.mxu0 0.0
        %5591 = vmatpush1.xpose.msra.mxu0 0.0
        %5592 = vmatprep.subr.mxu0 0.0
        %5593 = vmatpush1.xpose.msra.mxu0 0.0
        %5594 = vmatprep.subr.mxu0 0.0
        %5595 = vmatpush1.xpose.msra.mxu0 0.0
        %5596 = vmatprep.subr.mxu0 0.0
        %5597 = vmatpush1.xpose.msra.mxu0 0.0
        %5598 = vmatprep.subr.mxu0 0.0
        %5599 = vmatpush1.xpose.msra.mxu0 0.0
        %5600 = vmatprep.subr.mxu0 0.0
        %5601 = vmatpush1.xpose.msra.mxu0 0.0
        %5602 = vmatprep.subr.mxu0 0.0
        %5603 = vmatpush1.xpose.msra.mxu0 0.0
        %5604 = vmatprep.subr.mxu0 0.0
        %5605 = vmatpush1.xpose.msra.mxu0 0.0
        %5606 = vmatprep.subr.mxu0 0.0
        %5607 = vmatpush1.xpose.msra.mxu0 0.0
        %5608 = vmatprep.subr.mxu0 0.0
        %5609 = vmatpush1.xpose.msra.mxu0 0.0
        %5610 = vmatprep.subr.mxu0 0.0
        %5611 = vmatpush1.xpose.msra.mxu0 0.0
        %5612 = vmatprep.subr.mxu0 0.0
        %5613 = vmatpush1.xpose.msra.mxu0 0.0
        %5614 = vmatprep.subr.mxu0 0.0
        %5615 = vmatpush1.xpose.msra.mxu0 0.0
        %5616 = vmatprep.subr.mxu0 0.0
        %5617 = vmatpush1.xpose.msra.mxu0 0.0
        %5618 = vmatprep.subr.mxu0 0.0
        %5619 = vmatpush1.xpose.msra.mxu0 0.0
        %5620 = vmatprep.subr.mxu0 0.0
        %5621 = vmatpush1.xpose.msra.mxu0 0.0
        %5622 = vmatprep.subr.mxu0 0.0
        %5623 = vmatpush1.xpose.msra.mxu0 0.0
        %5624 = vmatprep.subr.mxu0 0.0
        %5625 = vmatpush1.xpose.msra.mxu0 0.0
        %5626 = vmatprep.subr.mxu0 0.0
        %5627 = vmatpush1.xpose.msra.mxu0 0.0
        %5628 = vmatprep.subr.mxu0 0.0
        %5629 = vmatpush1.xpose.msra.mxu0 0.0
        %5630 = vmatprep.subr.mxu0 0.0
        %5631 = vmatpush1.xpose.msra.mxu0 0.0
        %5632 = vmatprep.mubr.f32.mxu0 0.0
        %v5633 = vand.u32 %v5463, 4294901760
        %5634 = vmatmul.mubr.f32.gmra.mrb[0].mxu0 %v5633
        %v5635 = vpop.f32.mrb[0].mxu0
        %v5636 = vadd.f32 %v5545, %v5635
        %v5637 = vpop.f32.mrb[0].mxu0
        %5638 = vmatprep.mubr.f32.mxu0 0.0
        %v5639 = vand.u32 %v5465, 4294901760
        %5640 = vmatmul.mubr.f32.gmra.mrb[0].mxu0 %v5639
        %v5641 = vpop.f32.mrb[0].mxu0
        %v5642 = vadd.f32 %v5555, %v5641
        %v5643 = vpop.f32.mrb[0].mxu0
        %5644 = vdwg.mxu0
        %5645 = vmatprep.subr.mxu0 0.0
        %v5646 = vand.u32 %v5467, 4294901760
        %v5647 = vsub.f32 %v5467, %v5646
        %5648 = vmatpush1.xpose.msra.mxu0 %v5647
        %5649 = vmatprep.subr.mxu0 0.0
        %v5650 = vand.u32 %v5469, 4294901760
        %v5651 = vsub.f32 %v5469, %v5650
        %5652 = vmatpush1.xpose.msra.mxu0 %v5651
        %5653 = vmatprep.subr.mxu0 0.0
        %5654 = vmatpush1.xpose.msra.mxu0 0.0
        %5655 = vmatprep.subr.mxu0 0.0
        %5656 = vmatpush1.xpose.msra.mxu0 0.0
        %5657 = vmatprep.subr.mxu0 0.0
        %5658 = vmatpush1.xpose.msra.mxu0 0.0
        %5659 = vmatprep.subr.mxu0 0.0
        %5660 = vmatpush1.xpose.msra.mxu0 0.0
        %5661 = vmatprep.subr.mxu0 0.0
        %5662 = vmatpush1.xpose.msra.mxu0 0.0
        %5663 = vmatprep.subr.mxu0 0.0
        %5664 = vmatpush1.xpose.msra.mxu0 0.0
        %5665 = vmatprep.subr.mxu0 0.0
        %5666 = vmatpush1.xpose.msra.mxu0 0.0
        %5667 = vmatprep.subr.mxu0 0.0
        %5668 = vmatpush1.xpose.msra.mxu0 0.0
        %5669 = vmatprep.subr.mxu0 0.0
        %5670 = vmatpush1.xpose.msra.mxu0 0.0
        %5671 = vmatprep.subr.mxu0 0.0
        %5672 = vmatpush1.xpose.msra.mxu0 0.0
        %5673 = vmatprep.subr.mxu0 0.0
        %5674 = vmatpush1.xpose.msra.mxu0 0.0
        %5675 = vmatprep.subr.mxu0 0.0
        %5676 = vmatpush1.xpose.msra.mxu0 0.0
        %5677 = vmatprep.subr.mxu0 0.0
        %5678 = vmatpush1.xpose.msra.mxu0 0.0
        %5679 = vmatprep.subr.mxu0 0.0
        %5680 = vmatpush1.xpose.msra.mxu0 0.0
        %5681 = vmatprep.subr.mxu0 0.0
        %5682 = vmatpush1.xpose.msra.mxu0 0.0
        %5683 = vmatprep.subr.mxu0 0.0
        %5684 = vmatpush1.xpose.msra.mxu0 0.0
        %5685 = vmatprep.subr.mxu0 0.0
        %5686 = vmatpush1.xpose.msra.mxu0 0.0
        %5687 = vmatprep.subr.mxu0 0.0
        %5688 = vmatpush1.xpose.msra.mxu0 0.0
        %5689 = vmatprep.subr.mxu0 0.0
        %5690 = vmatpush1.xpose.msra.mxu0 0.0
        %5691 = vmatprep.subr.mxu0 0.0
        %5692 = vmatpush1.xpose.msra.mxu0 0.0
        %5693 = vmatprep.subr.mxu0 0.0
        %5694 = vmatpush1.xpose.msra.mxu0 0.0
        %5695 = vmatprep.subr.mxu0 0.0
        %5696 = vmatpush1.xpose.msra.mxu0 0.0
        %5697 = vmatprep.subr.mxu0 0.0
        %5698 = vmatpush1.xpose.msra.mxu0 0.0
        %5699 = vmatprep.subr.mxu0 0.0
        %5700 = vmatpush1.xpose.msra.mxu0 0.0
        %5701 = vmatprep.subr.mxu0 0.0
        %5702 = vmatpush1.xpose.msra.mxu0 0.0
        %5703 = vmatprep.subr.mxu0 0.0
        %5704 = vmatpush1.xpose.msra.mxu0 0.0
        %5705 = vmatprep.subr.mxu0 0.0
        %5706 = vmatpush1.xpose.msra.mxu0 0.0
        %5707 = vmatprep.subr.mxu0 0.0
        %5708 = vmatpush1.xpose.msra.mxu0 0.0
        %5709 = vmatprep.subr.mxu0 0.0
        %5710 = vmatpush1.xpose.msra.mxu0 0.0
        %5711 = vmatprep.subr.mxu0 0.0
        %5712 = vmatpush1.xpose.msra.mxu0 0.0
        %5713 = vmatprep.mubr.f32.mxu0 0.0
        %v5714 = vand.u32 %v5463, 4294901760
        %v5715 = vsub.f32 %v5463, %v5714
        %5716 = vmatmul.mubr.f32.gmra.mrb[0].mxu0 %v5715
        %v5717 = vpop.f32.mrb[0].mxu0
        %v5718 = vadd.f32 %v5636, %v5717
        %v5719 = vpop.f32.mrb[0].mxu0
        %5720 = vmatprep.mubr.f32.mxu0 0.0
        %v5721 = vand.u32 %v5465, 4294901760
        %v5722 = vsub.f32 %v5465, %v5721
        %5723 = vmatmul.mubr.f32.gmra.mrb[0].mxu0 %v5722
        %v5724 = vpop.f32.mrb[0].mxu0
        %v5725 = vadd.f32 %v5642, %v5724
        %v5726 = vpop.f32.mrb[0].mxu0
        %5727 = vdwg.mxu0
        %5728 = vmatprep.subr.mxu0 0.0
        %v5729 = vand.u32 %v5467, 4294901760
        %5730 = vmatpush1.xpose.msra.mxu0 %v5729
        %5731 = vmatprep.subr.mxu0 0.0
        %v5732 = vand.u32 %v5469, 4294901760
        %5733 = vmatpush1.xpose.msra.mxu0 %v5732
        %5734 = vmatprep.subr.mxu0 0.0
        %5735 = vmatpush1.xpose.msra.mxu0 0.0
        %5736 = vmatprep.subr.mxu0 0.0
        %5737 = vmatpush1.xpose.msra.mxu0 0.0
        %5738 = vmatprep.subr.mxu0 0.0
        %5739 = vmatpush1.xpose.msra.mxu0 0.0
        %5740 = vmatprep.subr.mxu0 0.0
        %5741 = vmatpush1.xpose.msra.mxu0 0.0
        %5742 = vmatprep.subr.mxu0 0.0
        %5743 = vmatpush1.xpose.msra.mxu0 0.0
        %5744 = vmatprep.subr.mxu0 0.0
        %5745 = vmatpush1.xpose.msra.mxu0 0.0
        %5746 = vmatprep.subr.mxu0 0.0
        %5747 = vmatpush1.xpose.msra.mxu0 0.0
        %5748 = vmatprep.subr.mxu0 0.0
        %5749 = vmatpush1.xpose.msra.mxu0 0.0
        %5750 = vmatprep.subr.mxu0 0.0
        %5751 = vmatpush1.xpose.msra.mxu0 0.0
        %5752 = vmatprep.subr.mxu0 0.0
        %5753 = vmatpush1.xpose.msra.mxu0 0.0
        %5754 = vmatprep.subr.mxu0 0.0
        %5755 = vmatpush1.xpose.msra.mxu0 0.0
        %5756 = vmatprep.subr.mxu0 0.0
        %5757 = vmatpush1.xpose.msra.mxu0 0.0
        %5758 = vmatprep.subr.mxu0 0.0
        %5759 = vmatpush1.xpose.msra.mxu0 0.0
        %5760 = vmatprep.subr.mxu0 0.0
        %5761 = vmatpush1.xpose.msra.mxu0 0.0
        %5762 = vmatprep.subr.mxu0 0.0
        %5763 = vmatpush1.xpose.msra.mxu0 0.0
        %5764 = vmatprep.subr.mxu0 0.0
        %5765 = vmatpush1.xpose.msra.mxu0 0.0
        %5766 = vmatprep.subr.mxu0 0.0
        %5767 = vmatpush1.xpose.msra.mxu0 0.0
        %5768 = vmatprep.subr.mxu0 0.0
        %5769 = vmatpush1.xpose.msra.mxu0 0.0
        %5770 = vmatprep.subr.mxu0 0.0
        %5771 = vmatpush1.xpose.msra.mxu0 0.0
        %5772 = vmatprep.subr.mxu0 0.0
        %5773 = vmatpush1.xpose.msra.mxu0 0.0
        %5774 = vmatprep.subr.mxu0 0.0
        %5775 = vmatpush1.xpose.msra.mxu0 0.0
        %5776 = vmatprep.subr.mxu0 0.0
        %5777 = vmatpush1.xpose.msra.mxu0 0.0
        %5778 = vmatprep.subr.mxu0 0.0
        %5779 = vmatpush1.xpose.msra.mxu0 0.0
        %5780 = vmatprep.subr.mxu0 0.0
        %5781 = vmatpush1.xpose.msra.mxu0 0.0
        %5782 = vmatprep.subr.mxu0 0.0
        %5783 = vmatpush1.xpose.msra.mxu0 0.0
        %5784 = vmatprep.subr.mxu0 0.0
        %5785 = vmatpush1.xpose.msra.mxu0 0.0
        %5786 = vmatprep.subr.mxu0 0.0
        %5787 = vmatpush1.xpose.msra.mxu0 0.0
        %5788 = vmatprep.subr.mxu0 0.0
        %5789 = vmatpush1.xpose.msra.mxu0 0.0
        %5790 = vmatprep.subr.mxu0 0.0
        %5791 = vmatpush1.xpose.msra.mxu0 0.0
        %5792 = vmatprep.subr.mxu0 0.0
        %5793 = vmatpush1.xpose.msra.mxu0 0.0
        %5794 = vmatprep.mubr.f32.mxu0 0.0
        %v5795 = vand.u32 %v5463, 4294901760
        %v5796 = vsub.f32 %v5463, %v5795
        %v5797 = vand.u32 %v5796, 4294901760
        %5798 = vmatmul.mubr.f32.gmra.mrb[0].mxu0 %v5797
        %v5799 = vpop.f32.mrb[0].mxu0
        %v5800 = vadd.f32 %v5718, %v5799
        %v5801 = vpop.f32.mrb[0].mxu0
        %5802 = vmatprep.mubr.f32.mxu0 0.0
        %v5803 = vand.u32 %v5465, 4294901760
        %v5804 = vsub.f32 %v5465, %v5803
        %v5805 = vand.u32 %v5804, 4294901760
        %5806 = vmatmul.mubr.f32.gmra.mrb[0].mxu0 %v5805
        %v5807 = vpop.f32.mrb[0].mxu0
        %v5808 = vadd.f32 %v5725, %v5807
        %v5809 = vpop.f32.mrb[0].mxu0
        %5810 = vdwg.mxu0
        %5811 = vmatprep.subr.mxu0 0.0
        %v5812 = vand.u32 %v5467, 4294901760
        %v5813 = vsub.f32 %v5467, %v5812
        %v5814 = vand.u32 %v5813, 4294901760
        %5815 = vmatpush1.xpose.msra.mxu0 %v5814
        %5816 = vmatprep.subr.mxu0 0.0
        %v5817 = vand.u32 %v5469, 4294901760
        %v5818 = vsub.f32 %v5469, %v5817
        %v5819 = vand.u32 %v5818, 4294901760
        %5820 = vmatpush1.xpose.msra.mxu0 %v5819
        %5821 = vmatprep.subr.mxu0 0.0
        %5822 = vmatpush1.xpose.msra.mxu0 0.0
        %5823 = vmatprep.subr.mxu0 0.0
        %5824 = vmatpush1.xpose.msra.mxu0 0.0
        %5825 = vmatprep.subr.mxu0 0.0
        %5826 = vmatpush1.xpose.msra.mxu0 0.0
        %5827 = vmatprep.subr.mxu0 0.0
        %5828 = vmatpush1.xpose.msra.mxu0 0.0
        %5829 = vmatprep.subr.mxu0 0.0
        %5830 = vmatpush1.xpose.msra.mxu0 0.0
        %5831 = vmatprep.subr.mxu0 0.0
        %5832 = vmatpush1.xpose.msra.mxu0 0.0
        %5833 = vmatprep.subr.mxu0 0.0
        %5834 = vmatpush1.xpose.msra.mxu0 0.0
        %5835 = vmatprep.subr.mxu0 0.0
        %5836 = vmatpush1.xpose.msra.mxu0 0.0
        %5837 = vmatprep.subr.mxu0 0.0
        %5838 = vmatpush1.xpose.msra.mxu0 0.0
        %5839 = vmatprep.subr.mxu0 0.0
        %5840 = vmatpush1.xpose.msra.mxu0 0.0
        %5841 = vmatprep.subr.mxu0 0.0
        %5842 = vmatpush1.xpose.msra.mxu0 0.0
        %5843 = vmatprep.subr.mxu0 0.0
        %5844 = vmatpush1.xpose.msra.mxu0 0.0
        %5845 = vmatprep.subr.mxu0 0.0
        %5846 = vmatpush1.xpose.msra.mxu0 0.0
        %5847 = vmatprep.subr.mxu0 0.0
        %5848 = vmatpush1.xpose.msra.mxu0 0.0
        %5849 = vmatprep.subr.mxu0 0.0
        %5850 = vmatpush1.xpose.msra.mxu0 0.0
        %5851 = vmatprep.subr.mxu0 0.0
        %5852 = vmatpush1.xpose.msra.mxu0 0.0
        %5853 = vmatprep.subr.mxu0 0.0
        %5854 = vmatpush1.xpose.msra.mxu0 0.0
        %5855 = vmatprep.subr.mxu0 0.0
        %5856 = vmatpush1.xpose.msra.mxu0 0.0
        %5857 = vmatprep.subr.mxu0 0.0
        %5858 = vmatpush1.xpose.msra.mxu0 0.0
        %5859 = vmatprep.subr.mxu0 0.0
        %5860 = vmatpush1.xpose.msra.mxu0 0.0
        %5861 = vmatprep.subr.mxu0 0.0
        %5862 = vmatpush1.xpose.msra.mxu0 0.0
        %5863 = vmatprep.subr.mxu0 0.0
        %5864 = vmatpush1.xpose.msra.mxu0 0.0
        %5865 = vmatprep.subr.mxu0 0.0
        %5866 = vmatpush1.xpose.msra.mxu0 0.0
        %5867 = vmatprep.subr.mxu0 0.0
        %5868 = vmatpush1.xpose.msra.mxu0 0.0
        %5869 = vmatprep.subr.mxu0 0.0
        %5870 = vmatpush1.xpose.msra.mxu0 0.0
        %5871 = vmatprep.subr.mxu0 0.0
        %5872 = vmatpush1.xpose.msra.mxu0 0.0
        %5873 = vmatprep.subr.mxu0 0.0
        %5874 = vmatpush1.xpose.msra.mxu0 0.0
        %5875 = vmatprep.subr.mxu0 0.0
        %5876 = vmatpush1.xpose.msra.mxu0 0.0
        %5877 = vmatprep.subr.mxu0 0.0
        %5878 = vmatpush1.xpose.msra.mxu0 0.0
        %5879 = vmatprep.subr.mxu0 0.0
        %5880 = vmatpush1.xpose.msra.mxu0 0.0
        %5881 = vmatprep.mubr.f32.mxu0 0.0
        %v5882 = vand.u32 %v5463, 4294901760
        %5883 = vmatmul.mubr.f32.gmra.mrb[0].mxu0 %v5882
        %v5884 = vpop.f32.mrb[0].mxu0
        %v5885 = vadd.f32 %v5800, %v5884
        %v5886 = vpop.f32.mrb[0].mxu0
        %5887 = vmatprep.mubr.f32.mxu0 0.0
        %v5888 = vand.u32 %v5465, 4294901760
        %5889 = vmatmul.mubr.f32.gmra.mrb[0].mxu0 %v5888
        %v5890 = vpop.f32.mrb[0].mxu0
        %v5891 = vadd.f32 %v5808, %v5890
        %v5892 = vpop.f32.mrb[0].mxu0
        %5893 = vdwg.mxu0
        %5894 = vmatprep.subr.mxu0 0.0
        %v5895 = vand.u32 %v5467, 4294901760
        %5896 = vmatpush1.xpose.msra.mxu0 %v5895
        %5897 = vmatprep.subr.mxu0 0.0
        %v5898 = vand.u32 %v5469, 4294901760
        %5899 = vmatpush1.xpose.msra.mxu0 %v5898
        %5900 = vmatprep.subr.mxu0 0.0
        %5901 = vmatpush1.xpose.msra.mxu0 0.0
        %5902 = vmatprep.subr.mxu0 0.0
        %5903 = vmatpush1.xpose.msra.mxu0 0.0
        %5904 = vmatprep.subr.mxu0 0.0
        %5905 = vmatpush1.xpose.msra.mxu0 0.0
        %5906 = vmatprep.subr.mxu0 0.0
        %5907 = vmatpush1.xpose.msra.mxu0 0.0
        %5908 = vmatprep.subr.mxu0 0.0
        %5909 = vmatpush1.xpose.msra.mxu0 0.0
        %5910 = vmatprep.subr.mxu0 0.0
        %5911 = vmatpush1.xpose.msra.mxu0 0.0
        %5912 = vmatprep.subr.mxu0 0.0
        %5913 = vmatpush1.xpose.msra.mxu0 0.0
        %5914 = vmatprep.subr.mxu0 0.0
        %5915 = vmatpush1.xpose.msra.mxu0 0.0
        %5916 = vmatprep.subr.mxu0 0.0
        %5917 = vmatpush1.xpose.msra.mxu0 0.0
        %5918 = vmatprep.subr.mxu0 0.0
        %5919 = vmatpush1.xpose.msra.mxu0 0.0
        %5920 = vmatprep.subr.mxu0 0.0
        %5921 = vmatpush1.xpose.msra.mxu0 0.0
        %5922 = vmatprep.subr.mxu0 0.0
        %5923 = vmatpush1.xpose.msra.mxu0 0.0
        %5924 = vmatprep.subr.mxu0 0.0
        %5925 = vmatpush1.xpose.msra.mxu0 0.0
        %5926 = vmatprep.subr.mxu0 0.0
        %5927 = vmatpush1.xpose.msra.mxu0 0.0
        %5928 = vmatprep.subr.mxu0 0.0
        %5929 = vmatpush1.xpose.msra.mxu0 0.0
        %5930 = vmatprep.subr.mxu0 0.0
        %5931 = vmatpush1.xpose.msra.mxu0 0.0
        %5932 = vmatprep.subr.mxu0 0.0
        %5933 = vmatpush1.xpose.msra.mxu0 0.0
        %5934 = vmatprep.subr.mxu0 0.0
        %5935 = vmatpush1.xpose.msra.mxu0 0.0
        %5936 = vmatprep.subr.mxu0 0.0
        %5937 = vmatpush1.xpose.msra.mxu0 0.0
        %5938 = vmatprep.subr.mxu0 0.0
        %5939 = vmatpush1.xpose.msra.mxu0 0.0
        %5940 = vmatprep.subr.mxu0 0.0
        %5941 = vmatpush1.xpose.msra.mxu0 0.0
        %5942 = vmatprep.subr.mxu0 0.0
        %5943 = vmatpush1.xpose.msra.mxu0 0.0
        %5944 = vmatprep.subr.mxu0 0.0
        %5945 = vmatpush1.xpose.msra.mxu0 0.0
        %5946 = vmatprep.subr.mxu0 0.0
        %5947 = vmatpush1.xpose.msra.mxu0 0.0
        %5948 = vmatprep.subr.mxu0 0.0
        %5949 = vmatpush1.xpose.msra.mxu0 0.0
        %5950 = vmatprep.subr.mxu0 0.0
        %5951 = vmatpush1.xpose.msra.mxu0 0.0
        %5952 = vmatprep.subr.mxu0 0.0
        %5953 = vmatpush1.xpose.msra.mxu0 0.0
        %5954 = vmatprep.subr.mxu0 0.0
        %5955 = vmatpush1.xpose.msra.mxu0 0.0
        %5956 = vmatprep.subr.mxu0 0.0
        %5957 = vmatpush1.xpose.msra.mxu0 0.0
        %5958 = vmatprep.subr.mxu0 0.0
        %5959 = vmatpush1.xpose.msra.mxu0 0.0
        %5960 = vmatprep.mubr.f32.mxu0 0.0
        %v5961 = vand.u32 %v5463, 4294901760
        %5962 = vmatmul.mubr.f32.gmra.mrb[0].mxu0 %v5961
        %v5963 = vpop.f32.mrb[0].mxu0
        %v5964 = vadd.f32 %v5885, %v5963
        %v5965 = vpop.f32.mrb[0].mxu0
        %5966 = vmatprep.mubr.f32.mxu0 0.0
        %v5967 = vand.u32 %v5465, 4294901760
        %5968 = vmatmul.mubr.f32.gmra.mrb[0].mxu0 %v5967
        %v5969 = vpop.f32.mrb[0].mxu0
        %v5970 = vadd.f32 %v5891, %v5969
        %v5971 = vpop.f32.mrb[0].mxu0
        %5972 = vdwg.mxu0
        %v5973 = vsel %vm1319, %v5964, -inf
        %5974 = vmax.xlane.f32.xlu0 %v5973
        %v5975 = vpop.xlane.xlu0 %5974
        %v5976 = vsel %vm1319, %v5970, -inf
        %5977 = vmax.xlane.f32.xlu0 %v5976
        %v5978 = vpop.xlane.xlu0 %5977
        %v5979 = vsub.f32 %v5964, %v5975
        %v5980 = vsub.f32 %v5970, %v5978
        %v5981 = vmul.f32 %v5979, 1.442695
        %v5982 = vpow.pop %v5981
        %v5983 = vmul.f32 %v5980, 1.442695
        %v5984 = vpow.pop %v5983
        %v5985 = vsel %vm1319, %v5982, 0.0
        %5986 = vadd.xlane.f32.xlu0 %v5985
        %v5987 = vpop.xlane.xlu0 %5986
        %v5988 = vsel %vm1319, %v5984, 0.0
        %5989 = vadd.xlane.f32.xlu0 %v5988
        %v5990 = vpop.xlane.xlu0 %5989
        %v5991 = vrcp.pop %v5987
        %v5992 = vrcp.pop %v5990
        %v5993 = vmul.f32 %v5982, %v5991
        %v5994 = vmul.f32 %v5984, %v5992
        %5995 = vrot.lane.b32.xlu0 %v788, 40
        %v5996 = vpop.permute.xlu0 %5995
        %5997 = vrot.lane.b32.xlu0 %v794, 40
        %v5998 = vpop.permute.xlu0 %5997
        %v6002 = vsel %vm1319, %v5993, 0
        %v6005 = vsel %vm1319, %v5994, 0
        %6007 = vmatprep.subr.mxu0 0.0
        %v6008 = vand.u32 %v5996, 4294901760
        %6009 = vmatpush1.msra.mxu0 %v6008
        %6010 = vmatprep.subr.mxu0 0.0
        %v6011 = vand.u32 %v5998, 4294901760
        %6012 = vmatpush1.msra.mxu0 %v6011
        %6013 = vmatprep.subr.mxu0 0.0
        %6014 = vmatpush1.msra.mxu0 0.0
        %6015 = vmatprep.subr.mxu0 0.0
        %6016 = vmatpush1.msra.mxu0 0.0
        %6017 = vmatprep.subr.mxu0 0.0
        %6018 = vmatpush1.msra.mxu0 0.0
        %6019 = vmatprep.subr.mxu0 0.0
        %6020 = vmatpush1.msra.mxu0 0.0
        %6021 = vmatprep.subr.mxu0 0.0
        %6022 = vmatpush1.msra.mxu0 0.0
        %6023 = vmatprep.subr.mxu0 0.0
        %6024 = vmatpush1.msra.mxu0 0.0
        %6025 = vmatprep.subr.mxu0 0.0
        %6026 = vmatpush1.msra.mxu0 0.0
        %6027 = vmatprep.subr.mxu0 0.0
        %6028 = vmatpush1.msra.mxu0 0.0
        %6029 = vmatprep.subr.mxu0 0.0
        %6030 = vmatpush1.msra.mxu0 0.0
        %6031 = vmatprep.subr.mxu0 0.0
        %6032 = vmatpush1.msra.mxu0 0.0
        %6033 = vmatprep.subr.mxu0 0.0
        %6034 = vmatpush1.msra.mxu0 0.0
        %6035 = vmatprep.subr.mxu0 0.0
        %6036 = vmatpush1.msra.mxu0 0.0
        %6037 = vmatprep.subr.mxu0 0.0
        %6038 = vmatpush1.msra.mxu0 0.0
        %6039 = vmatprep.subr.mxu0 0.0
        %6040 = vmatpush1.msra.mxu0 0.0
        %6041 = vmatprep.subr.mxu0 0.0
        %6042 = vmatpush1.msra.mxu0 0.0
        %6043 = vmatprep.subr.mxu0 0.0
        %6044 = vmatpush1.msra.mxu0 0.0
        %6045 = vmatprep.subr.mxu0 0.0
        %6046 = vmatpush1.msra.mxu0 0.0
        %6047 = vmatprep.subr.mxu0 0.0
        %6048 = vmatpush1.msra.mxu0 0.0
        %6049 = vmatprep.subr.mxu0 0.0
        %6050 = vmatpush1.msra.mxu0 0.0
        %6051 = vmatprep.subr.mxu0 0.0
        %6052 = vmatpush1.msra.mxu0 0.0
        %6053 = vmatprep.subr.mxu0 0.0
        %6054 = vmatpush1.msra.mxu0 0.0
        %6055 = vmatprep.subr.mxu0 0.0
        %6056 = vmatpush1.msra.mxu0 0.0
        %6057 = vmatprep.subr.mxu0 0.0
        %6058 = vmatpush1.msra.mxu0 0.0
        %6059 = vmatprep.subr.mxu0 0.0
        %6060 = vmatpush1.msra.mxu0 0.0
        %6061 = vmatprep.subr.mxu0 0.0
        %6062 = vmatpush1.msra.mxu0 0.0
        %6063 = vmatprep.subr.mxu0 0.0
        %6064 = vmatpush1.msra.mxu0 0.0
        %6065 = vmatprep.subr.mxu0 0.0
        %6066 = vmatpush1.msra.mxu0 0.0
        %6067 = vmatprep.subr.mxu0 0.0
        %6068 = vmatpush1.msra.mxu0 0.0
        %6069 = vmatprep.subr.mxu0 0.0
        %6070 = vmatpush1.msra.mxu0 0.0
        %6071 = vmatprep.subr.mxu0 0.0
        %6072 = vmatpush1.msra.mxu0 0.0
        %6073 = vmatprep.mubr.f32.mxu0 0.0
        %v6074 = vand.u32 %v6002, 4294901760
        %v6075 = vsub.f32 %v6002, %v6074
        %v6076 = vand.u32 %v6075, 4294901760
        %v6077 = vsub.f32 %v6075, %v6076
        %v6078 = vand.u32 %v6077, 4294901760
        %6079 = vmatmul.mubr.f32.gmra.mrb[0].mxu0 %v6078
        %v6080 = vpop.f32.mrb[0].mxu0
        %v6081 = vadd.f32 0.0, %v6080
        %v6082 = vpop.f32.mrb[0].mxu0
        %6083 = vmatprep.mubr.f32.mxu0 0.0
        %v6084 = vand.u32 %v6005, 4294901760
        %v6085 = vsub.f32 %v6005, %v6084
        %v6086 = vand.u32 %v6085, 4294901760
        %v6087 = vsub.f32 %v6085, %v6086
        %v6088 = vand.u32 %v6087, 4294901760
        %6089 = vmatmul.mubr.f32.gmra.mrb[0].mxu0 %v6088
        %v6090 = vpop.f32.mrb[0].mxu0
        %v6091 = vadd.f32 0.0, %v6090
        %v6092 = vpop.f32.mrb[0].mxu0
        %6093 = vdwg.mxu0
        %6094 = vmatprep.subr.mxu0 0.0
        %v6095 = vand.u32 %v5996, 4294901760
        %v6096 = vsub.f32 %v5996, %v6095
        %v6097 = vand.u32 %v6096, 4294901760
        %v6098 = vsub.f32 %v6096, %v6097
        %v6099 = vand.u32 %v6098, 4294901760
        %6100 = vmatpush1.msra.mxu0 %v6099
        %6101 = vmatprep.subr.mxu0 0.0
        %v6102 = vand.u32 %v5998, 4294901760
        %v6103 = vsub.f32 %v5998, %v6102
        %v6104 = vand.u32 %v6103, 4294901760
        %v6105 = vsub.f32 %v6103, %v6104
        %v6106 = vand.u32 %v6105, 4294901760
        %6107 = vmatpush1.msra.mxu0 %v6106
        %6108 = vmatprep.subr.mxu0 0.0
        %6109 = vmatpush1.msra.mxu0 0.0
        %6110 = vmatprep.subr.mxu0 0.0
        %6111 = vmatpush1.msra.mxu0 0.0
        %6112 = vmatprep.subr.mxu0 0.0
        %6113 = vmatpush1.msra.mxu0 0.0
        %6114 = vmatprep.subr.mxu0 0.0
        %6115 = vmatpush1.msra.mxu0 0.0
        %6116 = vmatprep.subr.mxu0 0.0
        %6117 = vmatpush1.msra.mxu0 0.0
        %6118 = vmatprep.subr.mxu0 0.0
        %6119 = vmatpush1.msra.mxu0 0.0
        %6120 = vmatprep.subr.mxu0 0.0
        %6121 = vmatpush1.msra.mxu0 0.0
        %6122 = vmatprep.subr.mxu0 0.0
        %6123 = vmatpush1.msra.mxu0 0.0
        %6124 = vmatprep.subr.mxu0 0.0
        %6125 = vmatpush1.msra.mxu0 0.0
        %6126 = vmatprep.subr.mxu0 0.0
        %6127 = vmatpush1.msra.mxu0 0.0
        %6128 = vmatprep.subr.mxu0 0.0
        %6129 = vmatpush1.msra.mxu0 0.0
        %6130 = vmatprep.subr.mxu0 0.0
        %6131 = vmatpush1.msra.mxu0 0.0
        %6132 = vmatprep.subr.mxu0 0.0
        %6133 = vmatpush1.msra.mxu0 0.0
        %6134 = vmatprep.subr.mxu0 0.0
        %6135 = vmatpush1.msra.mxu0 0.0
        %6136 = vmatprep.subr.mxu0 0.0
        %6137 = vmatpush1.msra.mxu0 0.0
        %6138 = vmatprep.subr.mxu0 0.0
        %6139 = vmatpush1.msra.mxu0 0.0
        %6140 = vmatprep.subr.mxu0 0.0
        %6141 = vmatpush1.msra.mxu0 0.0
        %6142 = vmatprep.subr.mxu0 0.0
        %6143 = vmatpush1.msra.mxu0 0.0
        %6144 = vmatprep.subr.mxu0 0.0
        %6145 = vmatpush1.msra.mxu0 0.0
        %6146 = vmatprep.subr.mxu0 0.0
        %6147 = vmatpush1.msra.mxu0 0.0
        %6148 = vmatprep.subr.mxu0 0.0
        %6149 = vmatpush1.msra.mxu0 0.0
        %6150 = vmatprep.subr.mxu0 0.0
        %6151 = vmatpush1.msra.mxu0 0.0
        %6152 = vmatprep.subr.mxu0 0.0
        %6153 = vmatpush1.msra.mxu0 0.0
        %6154 = vmatprep.subr.mxu0 0.0
        %6155 = vmatpush1.msra.mxu0 0.0
        %6156 = vmatprep.subr.mxu0 0.0
        %6157 = vmatpush1.msra.mxu0 0.0
        %6158 = vmatprep.subr.mxu0 0.0
        %6159 = vmatpush1.msra.mxu0 0.0
        %6160 = vmatprep.subr.mxu0 0.0
        %6161 = vmatpush1.msra.mxu0 0.0
        %6162 = vmatprep.subr.mxu0 0.0
        %6163 = vmatpush1.msra.mxu0 0.0
        %6164 = vmatprep.subr.mxu0 0.0
        %6165 = vmatpush1.msra.mxu0 0.0
        %6166 = vmatprep.subr.mxu0 0.0
        %6167 = vmatpush1.msra.mxu0 0.0
        %6168 = vmatprep.mubr.f32.mxu0 0.0
        %v6169 = vand.u32 %v6002, 4294901760
        %6170 = vmatmul.mubr.f32.gmra.mrb[0].mxu0 %v6169
        %v6171 = vpop.f32.mrb[0].mxu0
        %v6172 = vadd.f32 %v6081, %v6171
        %v6173 = vpop.f32.mrb[0].mxu0
        %6174 = vmatprep.mubr.f32.mxu0 0.0
        %v6175 = vand.u32 %v6005, 4294901760
        %6176 = vmatmul.mubr.f32.gmra.mrb[0].mxu0 %v6175
        %v6177 = vpop.f32.mrb[0].mxu0
        %v6178 = vadd.f32 %v6091, %v6177
        %v6179 = vpop.f32.mrb[0].mxu0
        %6180 = vdwg.mxu0
        %6181 = vmatprep.subr.mxu0 0.0
        %v6182 = vand.u32 %v5996, 4294901760
        %v6183 = vsub.f32 %v5996, %v6182
        %6184 = vmatpush1.msra.mxu0 %v6183
        %6185 = vmatprep.subr.mxu0 0.0
        %v6186 = vand.u32 %v5998, 4294901760
        %v6187 = vsub.f32 %v5998, %v6186
        %6188 = vmatpush1.msra.mxu0 %v6187
        %6189 = vmatprep.subr.mxu0 0.0
        %6190 = vmatpush1.msra.mxu0 0.0
        %6191 = vmatprep.subr.mxu0 0.0
        %6192 = vmatpush1.msra.mxu0 0.0
        %6193 = vmatprep.subr.mxu0 0.0
        %6194 = vmatpush1.msra.mxu0 0.0
        %6195 = vmatprep.subr.mxu0 0.0
        %6196 = vmatpush1.msra.mxu0 0.0
        %6197 = vmatprep.subr.mxu0 0.0
        %6198 = vmatpush1.msra.mxu0 0.0
        %6199 = vmatprep.subr.mxu0 0.0
        %6200 = vmatpush1.msra.mxu0 0.0
        %6201 = vmatprep.subr.mxu0 0.0
        %6202 = vmatpush1.msra.mxu0 0.0
        %6203 = vmatprep.subr.mxu0 0.0
        %6204 = vmatpush1.msra.mxu0 0.0
        %6205 = vmatprep.subr.mxu0 0.0
        %6206 = vmatpush1.msra.mxu0 0.0
        %6207 = vmatprep.subr.mxu0 0.0
        %6208 = vmatpush1.msra.mxu0 0.0
        %6209 = vmatprep.subr.mxu0 0.0
        %6210 = vmatpush1.msra.mxu0 0.0
        %6211 = vmatprep.subr.mxu0 0.0
        %6212 = vmatpush1.msra.mxu0 0.0
        %6213 = vmatprep.subr.mxu0 0.0
        %6214 = vmatpush1.msra.mxu0 0.0
        %6215 = vmatprep.subr.mxu0 0.0
        %6216 = vmatpush1.msra.mxu0 0.0
        %6217 = vmatprep.subr.mxu0 0.0
        %6218 = vmatpush1.msra.mxu0 0.0
        %6219 = vmatprep.subr.mxu0 0.0
        %6220 = vmatpush1.msra.mxu0 0.0
        %6221 = vmatprep.subr.mxu0 0.0
        %6222 = vmatpush1.msra.mxu0 0.0
        %6223 = vmatprep.subr.mxu0 0.0
        %6224 = vmatpush1.msra.mxu0 0.0
        %6225 = vmatprep.subr.mxu0 0.0
        %6226 = vmatpush1.msra.mxu0 0.0
        %6227 = vmatprep.subr.mxu0 0.0
        %6228 = vmatpush1.msra.mxu0 0.0
        %6229 = vmatprep.subr.mxu0 0.0
        %6230 = vmatpush1.msra.mxu0 0.0
        %6231 = vmatprep.subr.mxu0 0.0
        %6232 = vmatpush1.msra.mxu0 0.0
        %6233 = vmatprep.subr.mxu0 0.0
        %6234 = vmatpush1.msra.mxu0 0.0
        %6235 = vmatprep.subr.mxu0 0.0
        %6236 = vmatpush1.msra.mxu0 0.0
        %6237 = vmatprep.subr.mxu0 0.0
        %6238 = vmatpush1.msra.mxu0 0.0
        %6239 = vmatprep.subr.mxu0 0.0
        %6240 = vmatpush1.msra.mxu0 0.0
        %6241 = vmatprep.subr.mxu0 0.0
        %6242 = vmatpush1.msra.mxu0 0.0
        %6243 = vmatprep.subr.mxu0 0.0
        %6244 = vmatpush1.msra.mxu0 0.0
        %6245 = vmatprep.subr.mxu0 0.0
        %6246 = vmatpush1.msra.mxu0 0.0
        %6247 = vmatprep.subr.mxu0 0.0
        %6248 = vmatpush1.msra.mxu0 0.0
        %6249 = vmatprep.mubr.f32.mxu0 0.0
        %v6250 = vand.u32 %v6002, 4294901760
        %v6251 = vsub.f32 %v6002, %v6250
        %6252 = vmatmul.mubr.f32.gmra.mrb[0].mxu0 %v6251
        %v6253 = vpop.f32.mrb[0].mxu0
        %v6254 = vadd.f32 %v6172, %v6253
        %v6255 = vpop.f32.mrb[0].mxu0
        %6256 = vmatprep.mubr.f32.mxu0 0.0
        %v6257 = vand.u32 %v6005, 4294901760
        %v6258 = vsub.f32 %v6005, %v6257
        %6259 = vmatmul.mubr.f32.gmra.mrb[0].mxu0 %v6258
        %v6260 = vpop.f32.mrb[0].mxu0
        %v6261 = vadd.f32 %v6178, %v6260
        %v6262 = vpop.f32.mrb[0].mxu0
        %6263 = vdwg.mxu0
        %6264 = vmatprep.subr.mxu0 0.0
        %v6265 = vand.u32 %v5996, 4294901760
        %6266 = vmatpush1.msra.mxu0 %v6265
        %6267 = vmatprep.subr.mxu0 0.0
        %v6268 = vand.u32 %v5998, 4294901760
        %6269 = vmatpush1.msra.mxu0 %v6268
        %6270 = vmatprep.subr.mxu0 0.0
        %6271 = vmatpush1.msra.mxu0 0.0
        %6272 = vmatprep.subr.mxu0 0.0
        %6273 = vmatpush1.msra.mxu0 0.0
        %6274 = vmatprep.subr.mxu0 0.0
        %6275 = vmatpush1.msra.mxu0 0.0
        %6276 = vmatprep.subr.mxu0 0.0
        %6277 = vmatpush1.msra.mxu0 0.0
        %6278 = vmatprep.subr.mxu0 0.0
        %6279 = vmatpush1.msra.mxu0 0.0
        %6280 = vmatprep.subr.mxu0 0.0
        %6281 = vmatpush1.msra.mxu0 0.0
        %6282 = vmatprep.subr.mxu0 0.0
        %6283 = vmatpush1.msra.mxu0 0.0
        %6284 = vmatprep.subr.mxu0 0.0
        %6285 = vmatpush1.msra.mxu0 0.0
        %6286 = vmatprep.subr.mxu0 0.0
        %6287 = vmatpush1.msra.mxu0 0.0
        %6288 = vmatprep.subr.mxu0 0.0
        %6289 = vmatpush1.msra.mxu0 0.0
        %6290 = vmatprep.subr.mxu0 0.0
        %6291 = vmatpush1.msra.mxu0 0.0
        %6292 = vmatprep.subr.mxu0 0.0
        %6293 = vmatpush1.msra.mxu0 0.0
        %6294 = vmatprep.subr.mxu0 0.0
        %6295 = vmatpush1.msra.mxu0 0.0
        %6296 = vmatprep.subr.mxu0 0.0
        %6297 = vmatpush1.msra.mxu0 0.0
        %6298 = vmatprep.subr.mxu0 0.0
        %6299 = vmatpush1.msra.mxu0 0.0
        %6300 = vmatprep.subr.mxu0 0.0
        %6301 = vmatpush1.msra.mxu0 0.0
        %6302 = vmatprep.subr.mxu0 0.0
        %6303 = vmatpush1.msra.mxu0 0.0
        %6304 = vmatprep.subr.mxu0 0.0
        %6305 = vmatpush1.msra.mxu0 0.0
        %6306 = vmatprep.subr.mxu0 0.0
        %6307 = vmatpush1.msra.mxu0 0.0
        %6308 = vmatprep.subr.mxu0 0.0
        %6309 = vmatpush1.msra.mxu0 0.0
        %6310 = vmatprep.subr.mxu0 0.0
        %6311 = vmatpush1.msra.mxu0 0.0
        %6312 = vmatprep.subr.mxu0 0.0
        %6313 = vmatpush1.msra.mxu0 0.0
        %6314 = vmatprep.subr.mxu0 0.0
        %6315 = vmatpush1.msra.mxu0 0.0
        %6316 = vmatprep.subr.mxu0 0.0
        %6317 = vmatpush1.msra.mxu0 0.0
        %6318 = vmatprep.subr.mxu0 0.0
        %6319 = vmatpush1.msra.mxu0 0.0
        %6320 = vmatprep.subr.mxu0 0.0
        %6321 = vmatpush1.msra.mxu0 0.0
        %6322 = vmatprep.subr.mxu0 0.0
        %6323 = vmatpush1.msra.mxu0 0.0
        %6324 = vmatprep.subr.mxu0 0.0
        %6325 = vmatpush1.msra.mxu0 0.0
        %6326 = vmatprep.subr.mxu0 0.0
        %6327 = vmatpush1.msra.mxu0 0.0
        %6328 = vmatprep.subr.mxu0 0.0
        %6329 = vmatpush1.msra.mxu0 0.0
        %6330 = vmatprep.mubr.f32.mxu0 0.0
        %v6331 = vand.u32 %v6002, 4294901760
        %v6332 = vsub.f32 %v6002, %v6331
        %v6333 = vand.u32 %v6332, 4294901760
        %6334 = vmatmul.mubr.f32.gmra.mrb[0].mxu0 %v6333
        %v6335 = vpop.f32.mrb[0].mxu0
        %v6336 = vadd.f32 %v6254, %v6335
        %v6337 = vpop.f32.mrb[0].mxu0
        %6338 = vmatprep.mubr.f32.mxu0 0.0
        %v6339 = vand.u32 %v6005, 4294901760
        %v6340 = vsub.f32 %v6005, %v6339
        %v6341 = vand.u32 %v6340, 4294901760
        %6342 = vmatmul.mubr.f32.gmra.mrb[0].mxu0 %v6341
        %v6343 = vpop.f32.mrb[0].mxu0
        %v6344 = vadd.f32 %v6261, %v6343
        %v6345 = vpop.f32.mrb[0].mxu0
        %6346 = vdwg.mxu0
        %6347 = vmatprep.subr.mxu0 0.0
        %v6348 = vand.u32 %v5996, 4294901760
        %v6349 = vsub.f32 %v5996, %v6348
        %v6350 = vand.u32 %v6349, 4294901760
        %6351 = vmatpush1.msra.mxu0 %v6350
        %6352 = vmatprep.subr.mxu0 0.0
        %v6353 = vand.u32 %v5998, 4294901760
        %v6354 = vsub.f32 %v5998, %v6353
        %v6355 = vand.u32 %v6354, 4294901760
        %6356 = vmatpush1.msra.mxu0 %v6355
        %6357 = vmatprep.subr.mxu0 0.0
        %6358 = vmatpush1.msra.mxu0 0.0
        %6359 = vmatprep.subr.mxu0 0.0
        %6360 = vmatpush1.msra.mxu0 0.0
        %6361 = vmatprep.subr.mxu0 0.0
        %6362 = vmatpush1.msra.mxu0 0.0
        %6363 = vmatprep.subr.mxu0 0.0
        %6364 = vmatpush1.msra.mxu0 0.0
        %6365 = vmatprep.subr.mxu0 0.0
        %6366 = vmatpush1.msra.mxu0 0.0
        %6367 = vmatprep.subr.mxu0 0.0
        %6368 = vmatpush1.msra.mxu0 0.0
        %6369 = vmatprep.subr.mxu0 0.0
        %6370 = vmatpush1.msra.mxu0 0.0
        %6371 = vmatprep.subr.mxu0 0.0
        %6372 = vmatpush1.msra.mxu0 0.0
        %6373 = vmatprep.subr.mxu0 0.0
        %6374 = vmatpush1.msra.mxu0 0.0
        %6375 = vmatprep.subr.mxu0 0.0
        %6376 = vmatpush1.msra.mxu0 0.0
        %6377 = vmatprep.subr.mxu0 0.0
        %6378 = vmatpush1.msra.mxu0 0.0
        %6379 = vmatprep.subr.mxu0 0.0
        %6380 = vmatpush1.msra.mxu0 0.0
        %6381 = vmatprep.subr.mxu0 0.0
        %6382 = vmatpush1.msra.mxu0 0.0
        %6383 = vmatprep.subr.mxu0 0.0
        %6384 = vmatpush1.msra.mxu0 0.0
        %6385 = vmatprep.subr.mxu0 0.0
        %6386 = vmatpush1.msra.mxu0 0.0
        %6387 = vmatprep.subr.mxu0 0.0
        %6388 = vmatpush1.msra.mxu0 0.0
        %6389 = vmatprep.subr.mxu0 0.0
        %6390 = vmatpush1.msra.mxu0 0.0
        %6391 = vmatprep.subr.mxu0 0.0
        %6392 = vmatpush1.msra.mxu0 0.0
        %6393 = vmatprep.subr.mxu0 0.0
        %6394 = vmatpush1.msra.mxu0 0.0
        %6395 = vmatprep.subr.mxu0 0.0
        %6396 = vmatpush1.msra.mxu0 0.0
        %6397 = vmatprep.subr.mxu0 0.0
        %6398 = vmatpush1.msra.mxu0 0.0
        %6399 = vmatprep.subr.mxu0 0.0
        %6400 = vmatpush1.msra.mxu0 0.0
        %6401 = vmatprep.subr.mxu0 0.0
        %6402 = vmatpush1.msra.mxu0 0.0
        %6403 = vmatprep.subr.mxu0 0.0
        %6404 = vmatpush1.msra.mxu0 0.0
        %6405 = vmatprep.subr.mxu0 0.0
        %6406 = vmatpush1.msra.mxu0 0.0
        %6407 = vmatprep.subr.mxu0 0.0
        %6408 = vmatpush1.msra.mxu0 0.0
        %6409 = vmatprep.subr.mxu0 0.0
        %6410 = vmatpush1.msra.mxu0 0.0
        %6411 = vmatprep.subr.mxu0 0.0
        %6412 = vmatpush1.msra.mxu0 0.0
        %6413 = vmatprep.subr.mxu0 0.0
        %6414 = vmatpush1.msra.mxu0 0.0
        %6415 = vmatprep.subr.mxu0 0.0
        %6416 = vmatpush1.msra.mxu0 0.0
        %6417 = vmatprep.mubr.f32.mxu0 0.0
        %v6418 = vand.u32 %v6002, 4294901760
        %6419 = vmatmul.mubr.f32.gmra.mrb[0].mxu0 %v6418
        %v6420 = vpop.f32.mrb[0].mxu0
        %v6421 = vadd.f32 %v6336, %v6420
        %v6422 = vpop.f32.mrb[0].mxu0
        %6423 = vmatprep.mubr.f32.mxu0 0.0
        %v6424 = vand.u32 %v6005, 4294901760
        %6425 = vmatmul.mubr.f32.gmra.mrb[0].mxu0 %v6424
        %v6426 = vpop.f32.mrb[0].mxu0
        %v6427 = vadd.f32 %v6344, %v6426
        %v6428 = vpop.f32.mrb[0].mxu0
        %6429 = vdwg.mxu0
        %6430 = vmatprep.subr.mxu0 0.0
        %v6431 = vand.u32 %v5996, 4294901760
        %6432 = vmatpush1.msra.mxu0 %v6431
        %6433 = vmatprep.subr.mxu0 0.0
        %v6434 = vand.u32 %v5998, 4294901760
        %6435 = vmatpush1.msra.mxu0 %v6434
        %6436 = vmatprep.subr.mxu0 0.0
        %6437 = vmatpush1.msra.mxu0 0.0
        %6438 = vmatprep.subr.mxu0 0.0
        %6439 = vmatpush1.msra.mxu0 0.0
        %6440 = vmatprep.subr.mxu0 0.0
        %6441 = vmatpush1.msra.mxu0 0.0
        %6442 = vmatprep.subr.mxu0 0.0
        %6443 = vmatpush1.msra.mxu0 0.0
        %6444 = vmatprep.subr.mxu0 0.0
        %6445 = vmatpush1.msra.mxu0 0.0
        %6446 = vmatprep.subr.mxu0 0.0
        %6447 = vmatpush1.msra.mxu0 0.0
        %6448 = vmatprep.subr.mxu0 0.0
        %6449 = vmatpush1.msra.mxu0 0.0
        %6450 = vmatprep.subr.mxu0 0.0
        %6451 = vmatpush1.msra.mxu0 0.0
        %6452 = vmatprep.subr.mxu0 0.0
        %6453 = vmatpush1.msra.mxu0 0.0
        %6454 = vmatprep.subr.mxu0 0.0
        %6455 = vmatpush1.msra.mxu0 0.0
        %6456 = vmatprep.subr.mxu0 0.0
        %6457 = vmatpush1.msra.mxu0 0.0
        %6458 = vmatprep.subr.mxu0 0.0
        %6459 = vmatpush1.msra.mxu0 0.0
        %6460 = vmatprep.subr.mxu0 0.0
        %6461 = vmatpush1.msra.mxu0 0.0
        %6462 = vmatprep.subr.mxu0 0.0
        %6463 = vmatpush1.msra.mxu0 0.0
        %6464 = vmatprep.subr.mxu0 0.0
        %6465 = vmatpush1.msra.mxu0 0.0
        %6466 = vmatprep.subr.mxu0 0.0
        %6467 = vmatpush1.msra.mxu0 0.0
        %6468 = vmatprep.subr.mxu0 0.0
        %6469 = vmatpush1.msra.mxu0 0.0
        %6470 = vmatprep.subr.mxu0 0.0
        %6471 = vmatpush1.msra.mxu0 0.0
        %6472 = vmatprep.subr.mxu0 0.0
        %6473 = vmatpush1.msra.mxu0 0.0
        %6474 = vmatprep.subr.mxu0 0.0
        %6475 = vmatpush1.msra.mxu0 0.0
        %6476 = vmatprep.subr.mxu0 0.0
        %6477 = vmatpush1.msra.mxu0 0.0
        %6478 = vmatprep.subr.mxu0 0.0
        %6479 = vmatpush1.msra.mxu0 0.0
        %6480 = vmatprep.subr.mxu0 0.0
        %6481 = vmatpush1.msra.mxu0 0.0
        %6482 = vmatprep.subr.mxu0 0.0
        %6483 = vmatpush1.msra.mxu0 0.0
        %6484 = vmatprep.subr.mxu0 0.0
        %6485 = vmatpush1.msra.mxu0 0.0
        %6486 = vmatprep.subr.mxu0 0.0
        %6487 = vmatpush1.msra.mxu0 0.0
        %6488 = vmatprep.subr.mxu0 0.0
        %6489 = vmatpush1.msra.mxu0 0.0
        %6490 = vmatprep.subr.mxu0 0.0
        %6491 = vmatpush1.msra.mxu0 0.0
        %6492 = vmatprep.subr.mxu0 0.0
        %6493 = vmatpush1.msra.mxu0 0.0
        %6494 = vmatprep.subr.mxu0 0.0
        %6495 = vmatpush1.msra.mxu0 0.0
        %6496 = vmatprep.mubr.f32.mxu0 0.0
        %v6497 = vand.u32 %v6002, 4294901760
        %6498 = vmatmul.mubr.f32.gmra.mrb[0].mxu0 %v6497
        %v6499 = vpop.f32.mrb[0].mxu0
        %v6500 = vadd.f32 %v6421, %v6499
        %v6501 = vpop.f32.mrb[0].mxu0
        %6502 = vmatprep.mubr.f32.mxu0 0.0
        %v6503 = vand.u32 %v6005, 4294901760
        %6504 = vmatmul.mubr.f32.gmra.mrb[0].mxu0 %v6503
        %v6505 = vpop.f32.mrb[0].mxu0
        %v6506 = vadd.f32 %v6427, %v6505
        %v6507 = vpop.f32.mrb[0].mxu0
        %6508 = vdwg.mxu0
        %v6510 = vsel %vm808, %v6500, 0
        %v6513 = vsel %vm808, %v6506, 0
        %6515 = vmatprep.subr.mxu0 0.0
        %v6516 = vand.u32 %v255, 4294901760
        %6517 = vmatpush1.msra.mxu0 %v6516
        %6518 = vmatprep.subr.mxu0 0.0
        %6519 = vmatpush1.msra.mxu0 0.0
        %6520 = vmatprep.subr.mxu0 0.0
        %6521 = vmatpush1.msra.mxu0 0.0
        %6522 = vmatprep.subr.mxu0 0.0
        %6523 = vmatpush1.msra.mxu0 0.0
        %6524 = vmatprep.subr.mxu0 0.0
        %6525 = vmatpush1.msra.mxu0 0.0
        %6526 = vmatprep.subr.mxu0 0.0
        %6527 = vmatpush1.msra.mxu0 0.0
        %6528 = vmatprep.subr.mxu0 0.0
        %6529 = vmatpush1.msra.mxu0 0.0
        %6530 = vmatprep.subr.mxu0 0.0
        %6531 = vmatpush1.msra.mxu0 0.0
        %6532 = vmatprep.subr.mxu0 0.0
        %6533 = vmatpush1.msra.mxu0 0.0
        %6534 = vmatprep.subr.mxu0 0.0
        %6535 = vmatpush1.msra.mxu0 0.0
        %6536 = vmatprep.subr.mxu0 0.0
        %6537 = vmatpush1.msra.mxu0 0.0
        %6538 = vmatprep.subr.mxu0 0.0
        %6539 = vmatpush1.msra.mxu0 0.0
        %6540 = vmatprep.subr.mxu0 0.0
        %6541 = vmatpush1.msra.mxu0 0.0
        %6542 = vmatprep.subr.mxu0 0.0
        %6543 = vmatpush1.msra.mxu0 0.0
        %6544 = vmatprep.subr.mxu0 0.0
        %6545 = vmatpush1.msra.mxu0 0.0
        %6546 = vmatprep.subr.mxu0 0.0
        %6547 = vmatpush1.msra.mxu0 0.0
        %6548 = vmatprep.subr.mxu0 0.0
        %6549 = vmatpush1.msra.mxu0 0.0
        %6550 = vmatprep.subr.mxu0 0.0
        %6551 = vmatpush1.msra.mxu0 0.0
        %6552 = vmatprep.subr.mxu0 0.0
        %6553 = vmatpush1.msra.mxu0 0.0
        %6554 = vmatprep.subr.mxu0 0.0
        %6555 = vmatpush1.msra.mxu0 0.0
        %6556 = vmatprep.subr.mxu0 0.0
        %6557 = vmatpush1.msra.mxu0 0.0
        %6558 = vmatprep.subr.mxu0 0.0
        %6559 = vmatpush1.msra.mxu0 0.0
        %6560 = vmatprep.subr.mxu0 0.0
        %6561 = vmatpush1.msra.mxu0 0.0
        %6562 = vmatprep.subr.mxu0 0.0
        %6563 = vmatpush1.msra.mxu0 0.0
        %6564 = vmatprep.subr.mxu0 0.0
        %6565 = vmatpush1.msra.mxu0 0.0
        %6566 = vmatprep.subr.mxu0 0.0
        %6567 = vmatpush1.msra.mxu0 0.0
        %6568 = vmatprep.subr.mxu0 0.0
        %6569 = vmatpush1.msra.mxu0 0.0
        %6570 = vmatprep.subr.mxu0 0.0
        %6571 = vmatpush1.msra.mxu0 0.0
        %6572 = vmatprep.subr.mxu0 0.0
        %6573 = vmatpush1.msra.mxu0 0.0
        %6574 = vmatprep.subr.mxu0 0.0
        %6575 = vmatpush1.msra.mxu0 0.0
        %6576 = vmatprep.subr.mxu0 0.0
        %6577 = vmatpush1.msra.mxu0 0.0
        %6578 = vmatprep.subr.mxu0 0.0
        %6579 = vmatpush1.msra.mxu0 0.0
        %6580 = vmatprep.mubr.f32.mxu0 0.0
        %v6581 = vand.u32 %v6510, 4294901760
        %v6582 = vsub.f32 %v6510, %v6581
        %v6583 = vand.u32 %v6582, 4294901760
        %v6584 = vsub.f32 %v6582, %v6583
        %v6585 = vand.u32 %v6584, 4294901760
        %6586 = vmatmul.mubr.f32.gmra.mrb[0].mxu0 %v6585
        %v6587 = vpop.f32.mrb[0].mxu0
        %v6588 = vadd.f32 0.0, %v6587
        %v6589 = vpop.f32.mrb[0].mxu0
        %6590 = vmatprep.mubr.f32.mxu0 0.0
        %v6591 = vand.u32 %v6513, 4294901760
        %v6592 = vsub.f32 %v6513, %v6591
        %v6593 = vand.u32 %v6592, 4294901760
        %v6594 = vsub.f32 %v6592, %v6593
        %v6595 = vand.u32 %v6594, 4294901760
        %6596 = vmatmul.mubr.f32.gmra.mrb[0].mxu0 %v6595
        %v6597 = vpop.f32.mrb[0].mxu0
        %v6598 = vadd.f32 0.0, %v6597
        %v6599 = vpop.f32.mrb[0].mxu0
        %6600 = vdwg.mxu0
        %6601 = vmatprep.subr.mxu0 0.0
        %v6602 = vand.u32 %v255, 4294901760
        %v6603 = vsub.f32 %v255, %v6602
        %v6604 = vand.u32 %v6603, 4294901760
        %v6605 = vsub.f32 %v6603, %v6604
        %v6606 = vand.u32 %v6605, 4294901760
        %6607 = vmatpush1.msra.mxu0 %v6606
        %6608 = vmatprep.subr.mxu0 0.0
        %6609 = vmatpush1.msra.mxu0 0.0
        %6610 = vmatprep.subr.mxu0 0.0
        %6611 = vmatpush1.msra.mxu0 0.0
        %6612 = vmatprep.subr.mxu0 0.0
        %6613 = vmatpush1.msra.mxu0 0.0
        %6614 = vmatprep.subr.mxu0 0.0
        %6615 = vmatpush1.msra.mxu0 0.0
        %6616 = vmatprep.subr.mxu0 0.0
        %6617 = vmatpush1.msra.mxu0 0.0
        %6618 = vmatprep.subr.mxu0 0.0
        %6619 = vmatpush1.msra.mxu0 0.0
        %6620 = vmatprep.subr.mxu0 0.0
        %6621 = vmatpush1.msra.mxu0 0.0
        %6622 = vmatprep.subr.mxu0 0.0
        %6623 = vmatpush1.msra.mxu0 0.0
        %6624 = vmatprep.subr.mxu0 0.0
        %6625 = vmatpush1.msra.mxu0 0.0
        %6626 = vmatprep.subr.mxu0 0.0
        %6627 = vmatpush1.msra.mxu0 0.0
        %6628 = vmatprep.subr.mxu0 0.0
        %6629 = vmatpush1.msra.mxu0 0.0
        %6630 = vmatprep.subr.mxu0 0.0
        %6631 = vmatpush1.msra.mxu0 0.0
        %6632 = vmatprep.subr.mxu0 0.0
        %6633 = vmatpush1.msra.mxu0 0.0
        %6634 = vmatprep.subr.mxu0 0.0
        %6635 = vmatpush1.msra.mxu0 0.0
        %6636 = vmatprep.subr.mxu0 0.0
        %6637 = vmatpush1.msra.mxu0 0.0
        %6638 = vmatprep.subr.mxu0 0.0
        %6639 = vmatpush1.msra.mxu0 0.0
        %6640 = vmatprep.subr.mxu0 0.0
        %6641 = vmatpush1.msra.mxu0 0.0
        %6642 = vmatprep.subr.mxu0 0.0
        %6643 = vmatpush1.msra.mxu0 0.0
        %6644 = vmatprep.subr.mxu0 0.0
        %6645 = vmatpush1.msra.mxu0 0.0
        %6646 = vmatprep.subr.mxu0 0.0
        %6647 = vmatpush1.msra.mxu0 0.0
        %6648 = vmatprep.subr.mxu0 0.0
        %6649 = vmatpush1.msra.mxu0 0.0
        %6650 = vmatprep.subr.mxu0 0.0
        %6651 = vmatpush1.msra.mxu0 0.0
        %6652 = vmatprep.subr.mxu0 0.0
        %6653 = vmatpush1.msra.mxu0 0.0
        %6654 = vmatprep.subr.mxu0 0.0
        %6655 = vmatpush1.msra.mxu0 0.0
        %6656 = vmatprep.subr.mxu0 0.0
        %6657 = vmatpush1.msra.mxu0 0.0
        %6658 = vmatprep.subr.mxu0 0.0
        %6659 = vmatpush1.msra.mxu0 0.0
        %6660 = vmatprep.subr.mxu0 0.0
        %6661 = vmatpush1.msra.mxu0 0.0
        %6662 = vmatprep.subr.mxu0 0.0
        %6663 = vmatpush1.msra.mxu0 0.0
        %6664 = vmatprep.subr.mxu0 0.0
        %6665 = vmatpush1.msra.mxu0 0.0
        %6666 = vmatprep.subr.mxu0 0.0
        %6667 = vmatpush1.msra.mxu0 0.0
        %6668 = vmatprep.subr.mxu0 0.0
        %6669 = vmatpush1.msra.mxu0 0.0
        %6670 = vmatprep.mubr.f32.mxu0 0.0
        %v6671 = vand.u32 %v6510, 4294901760
        %6672 = vmatmul.mubr.f32.gmra.mrb[0].mxu0 %v6671
        %v6673 = vpop.f32.mrb[0].mxu0
        %v6674 = vadd.f32 %v6588, %v6673
        %v6675 = vpop.f32.mrb[0].mxu0
        %6676 = vmatprep.mubr.f32.mxu0 0.0
        %v6677 = vand.u32 %v6513, 4294901760
        %6678 = vmatmul.mubr.f32.gmra.mrb[0].mxu0 %v6677
        %v6679 = vpop.f32.mrb[0].mxu0
        %v6680 = vadd.f32 %v6598, %v6679
        %v6681 = vpop.f32.mrb[0].mxu0
        %6682 = vdwg.mxu0
        %6683 = vmatprep.subr.mxu0 0.0
        %v6684 = vand.u32 %v255, 4294901760
        %v6685 = vsub.f32 %v255, %v6684
        %6686 = vmatpush1.msra.mxu0 %v6685
        %6687 = vmatprep.subr.mxu0 0.0
        %6688 = vmatpush1.msra.mxu0 0.0
        %6689 = vmatprep.subr.mxu0 0.0
        %6690 = vmatpush1.msra.mxu0 0.0
        %6691 = vmatprep.subr.mxu0 0.0
        %6692 = vmatpush1.msra.mxu0 0.0
        %6693 = vmatprep.subr.mxu0 0.0
        %6694 = vmatpush1.msra.mxu0 0.0
        %6695 = vmatprep.subr.mxu0 0.0
        %6696 = vmatpush1.msra.mxu0 0.0
        %6697 = vmatprep.subr.mxu0 0.0
        %6698 = vmatpush1.msra.mxu0 0.0
        %6699 = vmatprep.subr.mxu0 0.0
        %6700 = vmatpush1.msra.mxu0 0.0
        %6701 = vmatprep.subr.mxu0 0.0
        %6702 = vmatpush1.msra.mxu0 0.0
        %6703 = vmatprep.subr.mxu0 0.0
        %6704 = vmatpush1.msra.mxu0 0.0
        %6705 = vmatprep.subr.mxu0 0.0
        %6706 = vmatpush1.msra.mxu0 0.0
        %6707 = vmatprep.subr.mxu0 0.0
        %6708 = vmatpush1.msra.mxu0 0.0
        %6709 = vmatprep.subr.mxu0 0.0
        %6710 = vmatpush1.msra.mxu0 0.0
        %6711 = vmatprep.subr.mxu0 0.0
        %6712 = vmatpush1.msra.mxu0 0.0
        %6713 = vmatprep.subr.mxu0 0.0
        %6714 = vmatpush1.msra.mxu0 0.0
        %6715 = vmatprep.subr.mxu0 0.0
        %6716 = vmatpush1.msra.mxu0 0.0
        %6717 = vmatprep.subr.mxu0 0.0
        %6718 = vmatpush1.msra.mxu0 0.0
        %6719 = vmatprep.subr.mxu0 0.0
        %6720 = vmatpush1.msra.mxu0 0.0
        %6721 = vmatprep.subr.mxu0 0.0
        %6722 = vmatpush1.msra.mxu0 0.0
        %6723 = vmatprep.subr.mxu0 0.0
        %6724 = vmatpush1.msra.mxu0 0.0
        %6725 = vmatprep.subr.mxu0 0.0
        %6726 = vmatpush1.msra.mxu0 0.0
        %6727 = vmatprep.subr.mxu0 0.0
        %6728 = vmatpush1.msra.mxu0 0.0
        %6729 = vmatprep.subr.mxu0 0.0
        %6730 = vmatpush1.msra.mxu0 0.0
        %6731 = vmatprep.subr.mxu0 0.0
        %6732 = vmatpush1.msra.mxu0 0.0
        %6733 = vmatprep.subr.mxu0 0.0
        %6734 = vmatpush1.msra.mxu0 0.0
        %6735 = vmatprep.subr.mxu0 0.0
        %6736 = vmatpush1.msra.mxu0 0.0
        %6737 = vmatprep.subr.mxu0 0.0
        %6738 = vmatpush1.msra.mxu0 0.0
        %6739 = vmatprep.subr.mxu0 0.0
        %6740 = vmatpush1.msra.mxu0 0.0
        %6741 = vmatprep.subr.mxu0 0.0
        %6742 = vmatpush1.msra.mxu0 0.0
        %6743 = vmatprep.subr.mxu0 0.0
        %6744 = vmatpush1.msra.mxu0 0.0
        %6745 = vmatprep.subr.mxu0 0.0
        %6746 = vmatpush1.msra.mxu0 0.0
        %6747 = vmatprep.subr.mxu0 0.0
        %6748 = vmatpush1.msra.mxu0 0.0
        %6749 = vmatprep.mubr.f32.mxu0 0.0
        %v6750 = vand.u32 %v6510, 4294901760
        %v6751 = vsub.f32 %v6510, %v6750
        %6752 = vmatmul.mubr.f32.gmra.mrb[0].mxu0 %v6751
        %v6753 = vpop.f32.mrb[0].mxu0
        %v6754 = vadd.f32 %v6674, %v6753
        %v6755 = vpop.f32.mrb[0].mxu0
        %6756 = vmatprep.mubr.f32.mxu0 0.0
        %v6757 = vand.u32 %v6513, 4294901760
        %v6758 = vsub.f32 %v6513, %v6757
        %6759 = vmatmul.mubr.f32.gmra.mrb[0].mxu0 %v6758
        %v6760 = vpop.f32.mrb[0].mxu0
        %v6761 = vadd.f32 %v6680, %v6760
        %v6762 = vpop.f32.mrb[0].mxu0
        %6763 = vdwg.mxu0
        %6764 = vmatprep.subr.mxu0 0.0
        %v6765 = vand.u32 %v255, 4294901760
        %6766 = vmatpush1.msra.mxu0 %v6765
        %6767 = vmatprep.subr.mxu0 0.0
        %6768 = vmatpush1.msra.mxu0 0.0
        %6769 = vmatprep.subr.mxu0 0.0
        %6770 = vmatpush1.msra.mxu0 0.0
        %6771 = vmatprep.subr.mxu0 0.0
        %6772 = vmatpush1.msra.mxu0 0.0
        %6773 = vmatprep.subr.mxu0 0.0
        %6774 = vmatpush1.msra.mxu0 0.0
        %6775 = vmatprep.subr.mxu0 0.0
        %6776 = vmatpush1.msra.mxu0 0.0
        %6777 = vmatprep.subr.mxu0 0.0
        %6778 = vmatpush1.msra.mxu0 0.0
        %6779 = vmatprep.subr.mxu0 0.0
        %6780 = vmatpush1.msra.mxu0 0.0
        %6781 = vmatprep.subr.mxu0 0.0
        %6782 = vmatpush1.msra.mxu0 0.0
        %6783 = vmatprep.subr.mxu0 0.0
        %6784 = vmatpush1.msra.mxu0 0.0
        %6785 = vmatprep.subr.mxu0 0.0
        %6786 = vmatpush1.msra.mxu0 0.0
        %6787 = vmatprep.subr.mxu0 0.0
        %6788 = vmatpush1.msra.mxu0 0.0
        %6789 = vmatprep.subr.mxu0 0.0
        %6790 = vmatpush1.msra.mxu0 0.0
        %6791 = vmatprep.subr.mxu0 0.0
        %6792 = vmatpush1.msra.mxu0 0.0
        %6793 = vmatprep.subr.mxu0 0.0
        %6794 = vmatpush1.msra.mxu0 0.0
        %6795 = vmatprep.subr.mxu0 0.0
        %6796 = vmatpush1.msra.mxu0 0.0
        %6797 = vmatprep.subr.mxu0 0.0
        %6798 = vmatpush1.msra.mxu0 0.0
        %6799 = vmatprep.subr.mxu0 0.0
        %6800 = vmatpush1.msra.mxu0 0.0
        %6801 = vmatprep.subr.mxu0 0.0
        %6802 = vmatpush1.msra.mxu0 0.0
        %6803 = vmatprep.subr.mxu0 0.0
        %6804 = vmatpush1.msra.mxu0 0.0
        %6805 = vmatprep.subr.mxu0 0.0
        %6806 = vmatpush1.msra.mxu0 0.0
        %6807 = vmatprep.subr.mxu0 0.0
        %6808 = vmatpush1.msra.mxu0 0.0
        %6809 = vmatprep.subr.mxu0 0.0
        %6810 = vmatpush1.msra.mxu0 0.0
        %6811 = vmatprep.subr.mxu0 0.0
        %6812 = vmatpush1.msra.mxu0 0.0
        %6813 = vmatprep.subr.mxu0 0.0
        %6814 = vmatpush1.msra.mxu0 0.0
        %6815 = vmatprep.subr.mxu0 0.0
        %6816 = vmatpush1.msra.mxu0 0.0
        %6817 = vmatprep.subr.mxu0 0.0
        %6818 = vmatpush1.msra.mxu0 0.0
        %6819 = vmatprep.subr.mxu0 0.0
        %6820 = vmatpush1.msra.mxu0 0.0
        %6821 = vmatprep.subr.mxu0 0.0
        %6822 = vmatpush1.msra.mxu0 0.0
        %6823 = vmatprep.subr.mxu0 0.0
        %6824 = vmatpush1.msra.mxu0 0.0
        %6825 = vmatprep.subr.mxu0 0.0
        %6826 = vmatpush1.msra.mxu0 0.0
        %6827 = vmatprep.subr.mxu0 0.0
        %6828 = vmatpush1.msra.mxu0 0.0
        %6829 = vmatprep.mubr.f32.mxu0 0.0
        %v6830 = vand.u32 %v6510, 4294901760
        %v6831 = vsub.f32 %v6510, %v6830
        %v6832 = vand.u32 %v6831, 4294901760
        %6833 = vmatmul.mubr.f32.gmra.mrb[0].mxu0 %v6832
        %v6834 = vpop.f32.mrb[0].mxu0
        %v6835 = vadd.f32 %v6754, %v6834
        %v6836 = vpop.f32.mrb[0].mxu0
        %6837 = vmatprep.mubr.f32.mxu0 0.0
        %v6838 = vand.u32 %v6513, 4294901760
        %v6839 = vsub.f32 %v6513, %v6838
        %v6840 = vand.u32 %v6839, 4294901760
        %6841 = vmatmul.mubr.f32.gmra.mrb[0].mxu0 %v6840
        %v6842 = vpop.f32.mrb[0].mxu0
        %v6843 = vadd.f32 %v6761, %v6842
        %v6844 = vpop.f32.mrb[0].mxu0
        %6845 = vdwg.mxu0
        %6846 = vmatprep.subr.mxu0 0.0
        %v6847 = vand.u32 %v255, 4294901760
        %v6848 = vsub.f32 %v255, %v6847
        %v6849 = vand.u32 %v6848, 4294901760
        %6850 = vmatpush1.msra.mxu0 %v6849
        %6851 = vmatprep.subr.mxu0 0.0
        %6852 = vmatpush1.msra.mxu0 0.0
        %6853 = vmatprep.subr.mxu0 0.0
        %6854 = vmatpush1.msra.mxu0 0.0
        %6855 = vmatprep.subr.mxu0 0.0
        %6856 = vmatpush1.msra.mxu0 0.0
        %6857 = vmatprep.subr.mxu0 0.0
        %6858 = vmatpush1.msra.mxu0 0.0
        %6859 = vmatprep.subr.mxu0 0.0
        %6860 = vmatpush1.msra.mxu0 0.0
        %6861 = vmatprep.subr.mxu0 0.0
        %6862 = vmatpush1.msra.mxu0 0.0
        %6863 = vmatprep.subr.mxu0 0.0
        %6864 = vmatpush1.msra.mxu0 0.0
        %6865 = vmatprep.subr.mxu0 0.0
        %6866 = vmatpush1.msra.mxu0 0.0
        %6867 = vmatprep.subr.mxu0 0.0
        %6868 = vmatpush1.msra.mxu0 0.0
        %6869 = vmatprep.subr.mxu0 0.0
        %6870 = vmatpush1.msra.mxu0 0.0
        %6871 = vmatprep.subr.mxu0 0.0
        %6872 = vmatpush1.msra.mxu0 0.0
        %6873 = vmatprep.subr.mxu0 0.0
        %6874 = vmatpush1.msra.mxu0 0.0
        %6875 = vmatprep.subr.mxu0 0.0
        %6876 = vmatpush1.msra.mxu0 0.0
        %6877 = vmatprep.subr.mxu0 0.0
        %6878 = vmatpush1.msra.mxu0 0.0
        %6879 = vmatprep.subr.mxu0 0.0
        %6880 = vmatpush1.msra.mxu0 0.0
        %6881 = vmatprep.subr.mxu0 0.0
        %6882 = vmatpush1.msra.mxu0 0.0
        %6883 = vmatprep.subr.mxu0 0.0
        %6884 = vmatpush1.msra.mxu0 0.0
        %6885 = vmatprep.subr.mxu0 0.0
        %6886 = vmatpush1.msra.mxu0 0.0
        %6887 = vmatprep.subr.mxu0 0.0
        %6888 = vmatpush1.msra.mxu0 0.0
        %6889 = vmatprep.subr.mxu0 0.0
        %6890 = vmatpush1.msra.mxu0 0.0
        %6891 = vmatprep.subr.mxu0 0.0
        %6892 = vmatpush1.msra.mxu0 0.0
        %6893 = vmatprep.subr.mxu0 0.0
        %6894 = vmatpush1.msra.mxu0 0.0
        %6895 = vmatprep.subr.mxu0 0.0
        %6896 = vmatpush1.msra.mxu0 0.0
        %6897 = vmatprep.subr.mxu0 0.0
        %6898 = vmatpush1.msra.mxu0 0.0
        %6899 = vmatprep.subr.mxu0 0.0
        %6900 = vmatpush1.msra.mxu0 0.0
        %6901 = vmatprep.subr.mxu0 0.0
        %6902 = vmatpush1.msra.mxu0 0.0
        %6903 = vmatprep.subr.mxu0 0.0
        %6904 = vmatpush1.msra.mxu0 0.0
        %6905 = vmatprep.subr.mxu0 0.0
        %6906 = vmatpush1.msra.mxu0 0.0
        %6907 = vmatprep.subr.mxu0 0.0
        %6908 = vmatpush1.msra.mxu0 0.0
        %6909 = vmatprep.subr.mxu0 0.0
        %6910 = vmatpush1.msra.mxu0 0.0
        %6911 = vmatprep.subr.mxu0 0.0
        %6912 = vmatpush1.msra.mxu0 0.0
        %6913 = vmatprep.mubr.f32.mxu0 0.0
        %v6914 = vand.u32 %v6510, 4294901760
        %6915 = vmatmul.mubr.f32.gmra.mrb[0].mxu0 %v6914
        %v6916 = vpop.f32.mrb[0].mxu0
        %v6917 = vadd.f32 %v6835, %v6916
        %v6918 = vpop.f32.mrb[0].mxu0
        %6919 = vmatprep.mubr.f32.mxu0 0.0
        %v6920 = vand.u32 %v6513, 4294901760
        %6921 = vmatmul.mubr.f32.gmra.mrb[0].mxu0 %v6920
        %v6922 = vpop.f32.mrb[0].mxu0
        %v6923 = vadd.f32 %v6843, %v6922
        %v6924 = vpop.f32.mrb[0].mxu0
        %6925 = vdwg.mxu0
        %6926 = vmatprep.subr.mxu0 0.0
        %v6927 = vand.u32 %v255, 4294901760
        %6928 = vmatpush1.msra.mxu0 %v6927
        %6929 = vmatprep.subr.mxu0 0.0
        %6930 = vmatpush1.msra.mxu0 0.0
        %6931 = vmatprep.subr.mxu0 0.0
        %6932 = vmatpush1.msra.mxu0 0.0
        %6933 = vmatprep.subr.mxu0 0.0
        %6934 = vmatpush1.msra.mxu0 0.0
        %6935 = vmatprep.subr.mxu0 0.0
        %6936 = vmatpush1.msra.mxu0 0.0
        %6937 = vmatprep.subr.mxu0 0.0
        %6938 = vmatpush1.msra.mxu0 0.0
        %6939 = vmatprep.subr.mxu0 0.0
        %6940 = vmatpush1.msra.mxu0 0.0
        %6941 = vmatprep.subr.mxu0 0.0
        %6942 = vmatpush1.msra.mxu0 0.0
        %6943 = vmatprep.subr.mxu0 0.0
        %6944 = vmatpush1.msra.mxu0 0.0
        %6945 = vmatprep.subr.mxu0 0.0
        %6946 = vmatpush1.msra.mxu0 0.0
        %6947 = vmatprep.subr.mxu0 0.0
        %6948 = vmatpush1.msra.mxu0 0.0
        %6949 = vmatprep.subr.mxu0 0.0
        %6950 = vmatpush1.msra.mxu0 0.0
        %6951 = vmatprep.subr.mxu0 0.0
        %6952 = vmatpush1.msra.mxu0 0.0
        %6953 = vmatprep.subr.mxu0 0.0
        %6954 = vmatpush1.msra.mxu0 0.0
        %6955 = vmatprep.subr.mxu0 0.0
        %6956 = vmatpush1.msra.mxu0 0.0
        %6957 = vmatprep.subr.mxu0 0.0
        %6958 = vmatpush1.msra.mxu0 0.0
        %6959 = vmatprep.subr.mxu0 0.0
        %6960 = vmatpush1.msra.mxu0 0.0
        %6961 = vmatprep.subr.mxu0 0.0
        %6962 = vmatpush1.msra.mxu0 0.0
        %6963 = vmatprep.subr.mxu0 0.0
        %6964 = vmatpush1.msra.mxu0 0.0
        %6965 = vmatprep.subr.mxu0 0.0
        %6966 = vmatpush1.msra.mxu0 0.0
        %6967 = vmatprep.subr.mxu0 0.0
        %6968 = vmatpush1.msra.mxu0 0.0
        %6969 = vmatprep.subr.mxu0 0.0
        %6970 = vmatpush1.msra.mxu0 0.0
        %6971 = vmatprep.subr.mxu0 0.0
        %6972 = vmatpush1.msra.mxu0 0.0
        %6973 = vmatprep.subr.mxu0 0.0
        %6974 = vmatpush1.msra.mxu0 0.0
        %6975 = vmatprep.subr.mxu0 0.0
        %6976 = vmatpush1.msra.mxu0 0.0
        %6977 = vmatprep.subr.mxu0 0.0
        %6978 = vmatpush1.msra.mxu0 0.0
        %6979 = vmatprep.subr.mxu0 0.0
        %6980 = vmatpush1.msra.mxu0 0.0
        %6981 = vmatprep.subr.mxu0 0.0
        %6982 = vmatpush1.msra.mxu0 0.0
        %6983 = vmatprep.subr.mxu0 0.0
        %6984 = vmatpush1.msra.mxu0 0.0
        %6985 = vmatprep.subr.mxu0 0.0
        %6986 = vmatpush1.msra.mxu0 0.0
        %6987 = vmatprep.subr.mxu0 0.0
        %6988 = vmatpush1.msra.mxu0 0.0
        %6989 = vmatprep.subr.mxu0 0.0
        %6990 = vmatpush1.msra.mxu0 0.0
        %6991 = vmatprep.mubr.f32.mxu0 0.0
        %v6992 = vand.u32 %v6510, 4294901760
        %6993 = vmatmul.mubr.f32.gmra.mrb[0].mxu0 %v6992
        %v6994 = vpop.f32.mrb[0].mxu0
        %v6995 = vadd.f32 %v6917, %v6994
        %v6996 = vpop.f32.mrb[0].mxu0
        %6997 = vmatprep.mubr.f32.mxu0 0.0
        %v6998 = vand.u32 %v6513, 4294901760
        %6999 = vmatmul.mubr.f32.gmra.mrb[0].mxu0 %v6998
        %v7000 = vpop.f32.mrb[0].mxu0
        %v7001 = vadd.f32 %v6923, %v7000
        %v7002 = vpop.f32.mrb[0].mxu0
        %7003 = vdwg.mxu0
        %v7004 = vadd.f32 %v5453, %v6995
        %v7005 = vadd.f32 %v5454, %v7001
        %7010 = vrot.lane.b32.xlu0 %v252, 96
        %v7011 = vpop.permute.xlu0 %7010
        %7012 = vrot.lane.b32.xlu0 %v253, 96
        %v7013 = vpop.permute.xlu0 %7012
        %7014 = vrot.lane.b32.xlu0 %v254, 96
        %v7015 = vpop.permute.xlu0 %7014
        %7016 = vrot.lane.b32.xlu0 %v255, 96
        %v7017 = vpop.permute.xlu0 %7016
        %v7023 = vsel %vm262, %v7004, 0
        %v7026 = vsel %vm262, %v7005, 0
        %7028 = vmatprep.subr.mxu0 0.0
        %v7029 = vand.u32 %v7011, 4294901760
        %7030 = vmatpush1.msra.mxu0 %v7029
        %7031 = vmatprep.subr.mxu0 0.0
        %v7032 = vand.u32 %v7013, 4294901760
        %7033 = vmatpush1.msra.mxu0 %v7032
        %7034 = vmatprep.subr.mxu0 0.0
        %v7035 = vand.u32 %v7015, 4294901760
        %7036 = vmatpush1.msra.mxu0 %v7035
        %7037 = vmatprep.subr.mxu0 0.0
        %v7038 = vand.u32 %v7017, 4294901760
        %7039 = vmatpush1.msra.mxu0 %v7038
        %7040 = vmatprep.subr.mxu0 0.0
        %7041 = vmatpush1.msra.mxu0 0.0
        %7042 = vmatprep.subr.mxu0 0.0
        %7043 = vmatpush1.msra.mxu0 0.0
        %7044 = vmatprep.subr.mxu0 0.0
        %7045 = vmatpush1.msra.mxu0 0.0
        %7046 = vmatprep.subr.mxu0 0.0
        %7047 = vmatpush1.msra.mxu0 0.0
        %7048 = vmatprep.subr.mxu0 0.0
        %7049 = vmatpush1.msra.mxu0 0.0
        %7050 = vmatprep.subr.mxu0 0.0
        %7051 = vmatpush1.msra.mxu0 0.0
        %7052 = vmatprep.subr.mxu0 0.0
        %7053 = vmatpush1.msra.mxu0 0.0
        %7054 = vmatprep.subr.mxu0 0.0
        %7055 = vmatpush1.msra.mxu0 0.0
        %7056 = vmatprep.subr.mxu0 0.0
        %7057 = vmatpush1.msra.mxu0 0.0
        %7058 = vmatprep.subr.mxu0 0.0
        %7059 = vmatpush1.msra.mxu0 0.0
        %7060 = vmatprep.subr.mxu0 0.0
        %7061 = vmatpush1.msra.mxu0 0.0
        %7062 = vmatprep.subr.mxu0 0.0
        %7063 = vmatpush1.msra.mxu0 0.0
        %7064 = vmatprep.subr.mxu0 0.0
        %7065 = vmatpush1.msra.mxu0 0.0
        %7066 = vmatprep.subr.mxu0 0.0
        %7067 = vmatpush1.msra.mxu0 0.0
        %7068 = vmatprep.subr.mxu0 0.0
        %7069 = vmatpush1.msra.mxu0 0.0
        %7070 = vmatprep.subr.mxu0 0.0
        %7071 = vmatpush1.msra.mxu0 0.0
        %7072 = vmatprep.subr.mxu0 0.0
        %7073 = vmatpush1.msra.mxu0 0.0
        %7074 = vmatprep.subr.mxu0 0.0
        %7075 = vmatpush1.msra.mxu0 0.0
        %7076 = vmatprep.subr.mxu0 0.0
        %7077 = vmatpush1.msra.mxu0 0.0
        %7078 = vmatprep.subr.mxu0 0.0
        %7079 = vmatpush1.msra.mxu0 0.0
        %7080 = vmatprep.subr.mxu0 0.0
        %7081 = vmatpush1.msra.mxu0 0.0
        %7082 = vmatprep.subr.mxu0 0.0
        %7083 = vmatpush1.msra.mxu0 0.0
        %7084 = vmatprep.subr.mxu0 0.0
        %7085 = vmatpush1.msra.mxu0 0.0
        %7086 = vmatprep.subr.mxu0 0.0
        %7087 = vmatpush1.msra.mxu0 0.0
        %7088 = vmatprep.subr.mxu0 0.0
        %7089 = vmatpush1.msra.mxu0 0.0
        %7090 = vmatprep.subr.mxu0 0.0
        %7091 = vmatpush1.msra.mxu0 0.0
        %7092 = vmatprep.subr.mxu0 0.0
        %7093 = vmatpush1.msra.mxu0 0.0
        %7094 = vmatprep.subr.mxu0 0.0
        %7095 = vmatpush1.msra.mxu0 0.0
        %7096 = vmatprep.mubr.f32.mxu0 0.0
        %v7097 = vand.u32 %v7023, 4294901760
        %v7098 = vsub.f32 %v7023, %v7097
        %v7099 = vand.u32 %v7098, 4294901760
        %v7100 = vsub.f32 %v7098, %v7099
        %v7101 = vand.u32 %v7100, 4294901760
        %7102 = vmatmul.mubr.f32.gmra.mrb[0].mxu0 %v7101
        %v7103 = vpop.f32.mrb[0].mxu0
        %v7104 = vadd.f32 %v7004, %v7103
        %v7105 = vpop.f32.mrb[0].mxu0
        %7106 = vmatprep.mubr.f32.mxu0 0.0
        %v7107 = vand.u32 %v7026, 4294901760
        %v7108 = vsub.f32 %v7026, %v7107
        %v7109 = vand.u32 %v7108, 4294901760
        %v7110 = vsub.f32 %v7108, %v7109
        %v7111 = vand.u32 %v7110, 4294901760
        %7112 = vmatmul.mubr.f32.gmra.mrb[0].mxu0 %v7111
        %v7113 = vpop.f32.mrb[0].mxu0
        %v7114 = vadd.f32 %v7005, %v7113
        %v7115 = vpop.f32.mrb[0].mxu0
        %7116 = vdwg.mxu0
        %7117 = vmatprep.subr.mxu0 0.0
        %v7118 = vand.u32 %v7011, 4294901760
        %v7119 = vsub.f32 %v7011, %v7118
        %v7120 = vand.u32 %v7119, 4294901760
        %v7121 = vsub.f32 %v7119, %v7120
        %v7122 = vand.u32 %v7121, 4294901760
        %7123 = vmatpush1.msra.mxu0 %v7122
        %7124 = vmatprep.subr.mxu0 0.0
        %v7125 = vand.u32 %v7013, 4294901760
        %v7126 = vsub.f32 %v7013, %v7125
        %v7127 = vand.u32 %v7126, 4294901760
        %v7128 = vsub.f32 %v7126, %v7127
        %v7129 = vand.u32 %v7128, 4294901760
        %7130 = vmatpush1.msra.mxu0 %v7129
        %7131 = vmatprep.subr.mxu0 0.0
        %v7132 = vand.u32 %v7015, 4294901760
        %v7133 = vsub.f32 %v7015, %v7132
        %v7134 = vand.u32 %v7133, 4294901760
        %v7135 = vsub.f32 %v7133, %v7134
        %v7136 = vand.u32 %v7135, 4294901760
        %7137 = vmatpush1.msra.mxu0 %v7136
        %7138 = vmatprep.subr.mxu0 0.0
        %v7139 = vand.u32 %v7017, 4294901760
        %v7140 = vsub.f32 %v7017, %v7139
        %v7141 = vand.u32 %v7140, 4294901760
        %v7142 = vsub.f32 %v7140, %v7141
        %v7143 = vand.u32 %v7142, 4294901760
        %7144 = vmatpush1.msra.mxu0 %v7143
        %7145 = vmatprep.subr.mxu0 0.0
        %7146 = vmatpush1.msra.mxu0 0.0
        %7147 = vmatprep.subr.mxu0 0.0
        %7148 = vmatpush1.msra.mxu0 0.0
        %7149 = vmatprep.subr.mxu0 0.0
        %7150 = vmatpush1.msra.mxu0 0.0
        %7151 = vmatprep.subr.mxu0 0.0
        %7152 = vmatpush1.msra.mxu0 0.0
        %7153 = vmatprep.subr.mxu0 0.0
        %7154 = vmatpush1.msra.mxu0 0.0
        %7155 = vmatprep.subr.mxu0 0.0
        %7156 = vmatpush1.msra.mxu0 0.0
        %7157 = vmatprep.subr.mxu0 0.0
        %7158 = vmatpush1.msra.mxu0 0.0
        %7159 = vmatprep.subr.mxu0 0.0
        %7160 = vmatpush1.msra.mxu0 0.0
        %7161 = vmatprep.subr.mxu0 0.0
        %7162 = vmatpush1.msra.mxu0 0.0
        %7163 = vmatprep.subr.mxu0 0.0
        %7164 = vmatpush1.msra.mxu0 0.0
        %7165 = vmatprep.subr.mxu0 0.0
        %7166 = vmatpush1.msra.mxu0 0.0
        %7167 = vmatprep.subr.mxu0 0.0
        %7168 = vmatpush1.msra.mxu0 0.0
        %7169 = vmatprep.subr.mxu0 0.0
        %7170 = vmatpush1.msra.mxu0 0.0
        %7171 = vmatprep.subr.mxu0 0.0
        %7172 = vmatpush1.msra.mxu0 0.0
        %7173 = vmatprep.subr.mxu0 0.0
        %7174 = vmatpush1.msra.mxu0 0.0
        %7175 = vmatprep.subr.mxu0 0.0
        %7176 = vmatpush1.msra.mxu0 0.0
        %7177 = vmatprep.subr.mxu0 0.0
        %7178 = vmatpush1.msra.mxu0 0.0
        %7179 = vmatprep.subr.mxu0 0.0
        %7180 = vmatpush1.msra.mxu0 0.0
        %7181 = vmatprep.subr.mxu0 0.0
        %7182 = vmatpush1.msra.mxu0 0.0
        %7183 = vmatprep.subr.mxu0 0.0
        %7184 = vmatpush1.msra.mxu0 0.0
        %7185 = vmatprep.subr.mxu0 0.0
        %7186 = vmatpush1.msra.mxu0 0.0
        %7187 = vmatprep.subr.mxu0 0.0
        %7188 = vmatpush1.msra.mxu0 0.0
        %7189 = vmatprep.subr.mxu0 0.0
        %7190 = vmatpush1.msra.mxu0 0.0
        %7191 = vmatprep.subr.mxu0 0.0
        %7192 = vmatpush1.msra.mxu0 0.0
        %7193 = vmatprep.subr.mxu0 0.0
        %7194 = vmatpush1.msra.mxu0 0.0
        %7195 = vmatprep.subr.mxu0 0.0
        %7196 = vmatpush1.msra.mxu0 0.0
        %7197 = vmatprep.subr.mxu0 0.0
        %7198 = vmatpush1.msra.mxu0 0.0
        %7199 = vmatprep.subr.mxu0 0.0
        %7200 = vmatpush1.msra.mxu0 0.0
        %7201 = vmatprep.mubr.f32.mxu0 0.0
        %v7202 = vand.u32 %v7023, 4294901760
        %7203 = vmatmul.mubr.f32.gmra.mrb[0].mxu0 %v7202
        %v7204 = vpop.f32.mrb[0].mxu0
        %v7205 = vadd.f32 %v7104, %v7204
        %v7206 = vpop.f32.mrb[0].mxu0
        %7207 = vmatprep.mubr.f32.mxu0 0.0
        %v7208 = vand.u32 %v7026, 4294901760
        %7209 = vmatmul.mubr.f32.gmra.mrb[0].mxu0 %v7208
        %v7210 = vpop.f32.mrb[0].mxu0
        %v7211 = vadd.f32 %v7114, %v7210
        %v7212 = vpop.f32.mrb[0].mxu0
        %7213 = vdwg.mxu0
        %7214 = vmatprep.subr.mxu0 0.0
        %v7215 = vand.u32 %v7011, 4294901760
        %v7216 = vsub.f32 %v7011, %v7215
        %7217 = vmatpush1.msra.mxu0 %v7216
        %7218 = vmatprep.subr.mxu0 0.0
        %v7219 = vand.u32 %v7013, 4294901760
        %v7220 = vsub.f32 %v7013, %v7219
        %7221 = vmatpush1.msra.mxu0 %v7220
        %7222 = vmatprep.subr.mxu0 0.0
        %v7223 = vand.u32 %v7015, 4294901760
        %v7224 = vsub.f32 %v7015, %v7223
        %7225 = vmatpush1.msra.mxu0 %v7224
        %7226 = vmatprep.subr.mxu0 0.0
        %v7227 = vand.u32 %v7017, 4294901760
        %v7228 = vsub.f32 %v7017, %v7227
        %7229 = vmatpush1.msra.mxu0 %v7228
        %7230 = vmatprep.subr.mxu0 0.0
        %7231 = vmatpush1.msra.mxu0 0.0
        %7232 = vmatprep.subr.mxu0 0.0
        %7233 = vmatpush1.msra.mxu0 0.0
        %7234 = vmatprep.subr.mxu0 0.0
        %7235 = vmatpush1.msra.mxu0 0.0
        %7236 = vmatprep.subr.mxu0 0.0
        %7237 = vmatpush1.msra.mxu0 0.0
        %7238 = vmatprep.subr.mxu0 0.0
        %7239 = vmatpush1.msra.mxu0 0.0
        %7240 = vmatprep.subr.mxu0 0.0
        %7241 = vmatpush1.msra.mxu0 0.0
        %7242 = vmatprep.subr.mxu0 0.0
        %7243 = vmatpush1.msra.mxu0 0.0
        %7244 = vmatprep.subr.mxu0 0.0
        %7245 = vmatpush1.msra.mxu0 0.0
        %7246 = vmatprep.subr.mxu0 0.0
        %7247 = vmatpush1.msra.mxu0 0.0
        %7248 = vmatprep.subr.mxu0 0.0
        %7249 = vmatpush1.msra.mxu0 0.0
        %7250 = vmatprep.subr.mxu0 0.0
        %7251 = vmatpush1.msra.mxu0 0.0
        %7252 = vmatprep.subr.mxu0 0.0
        %7253 = vmatpush1.msra.mxu0 0.0
        %7254 = vmatprep.subr.mxu0 0.0
        %7255 = vmatpush1.msra.mxu0 0.0
        %7256 = vmatprep.subr.mxu0 0.0
        %7257 = vmatpush1.msra.mxu0 0.0
        %7258 = vmatprep.subr.mxu0 0.0
        %7259 = vmatpush1.msra.mxu0 0.0
        %7260 = vmatprep.subr.mxu0 0.0
        %7261 = vmatpush1.msra.mxu0 0.0
        %7262 = vmatprep.subr.mxu0 0.0
        %7263 = vmatpush1.msra.mxu0 0.0
        %7264 = vmatprep.subr.mxu0 0.0
        %7265 = vmatpush1.msra.mxu0 0.0
        %7266 = vmatprep.subr.mxu0 0.0
        %7267 = vmatpush1.msra.mxu0 0.0
        %7268 = vmatprep.subr.mxu0 0.0
        %7269 = vmatpush1.msra.mxu0 0.0
        %7270 = vmatprep.subr.mxu0 0.0
        %7271 = vmatpush1.msra.mxu0 0.0
        %7272 = vmatprep.subr.mxu0 0.0
        %7273 = vmatpush1.msra.mxu0 0.0
        %7274 = vmatprep.subr.mxu0 0.0
        %7275 = vmatpush1.msra.mxu0 0.0
        %7276 = vmatprep.subr.mxu0 0.0
        %7277 = vmatpush1.msra.mxu0 0.0
        %7278 = vmatprep.subr.mxu0 0.0
        %7279 = vmatpush1.msra.mxu0 0.0
        %7280 = vmatprep.subr.mxu0 0.0
        %7281 = vmatpush1.msra.mxu0 0.0
        %7282 = vmatprep.subr.mxu0 0.0
        %7283 = vmatpush1.msra.mxu0 0.0
        %7284 = vmatprep.subr.mxu0 0.0
        %7285 = vmatpush1.msra.mxu0 0.0
        %7286 = vmatprep.mubr.f32.mxu0 0.0
        %v7287 = vand.u32 %v7023, 4294901760
        %v7288 = vsub.f32 %v7023, %v7287
        %7289 = vmatmul.mubr.f32.gmra.mrb[0].mxu0 %v7288
        %v7290 = vpop.f32.mrb[0].mxu0
        %v7291 = vadd.f32 %v7205, %v7290
        %v7292 = vpop.f32.mrb[0].mxu0
        %7293 = vmatprep.mubr.f32.mxu0 0.0
        %v7294 = vand.u32 %v7026, 4294901760
        %v7295 = vsub.f32 %v7026, %v7294
        %7296 = vmatmul.mubr.f32.gmra.mrb[0].mxu0 %v7295
        %v7297 = vpop.f32.mrb[0].mxu0
        %v7298 = vadd.f32 %v7211, %v7297
        %v7299 = vpop.f32.mrb[0].mxu0
        %7300 = vdwg.mxu0
        %7301 = vmatprep.subr.mxu0 0.0
        %v7302 = vand.u32 %v7011, 4294901760
        %7303 = vmatpush1.msra.mxu0 %v7302
        %7304 = vmatprep.subr.mxu0 0.0
        %v7305 = vand.u32 %v7013, 4294901760
        %7306 = vmatpush1.msra.mxu0 %v7305
        %7307 = vmatprep.subr.mxu0 0.0
        %v7308 = vand.u32 %v7015, 4294901760
        %7309 = vmatpush1.msra.mxu0 %v7308
        %7310 = vmatprep.subr.mxu0 0.0
        %v7311 = vand.u32 %v7017, 4294901760
        %7312 = vmatpush1.msra.mxu0 %v7311
        %7313 = vmatprep.subr.mxu0 0.0
        %7314 = vmatpush1.msra.mxu0 0.0
        %7315 = vmatprep.subr.mxu0 0.0
        %7316 = vmatpush1.msra.mxu0 0.0
        %7317 = vmatprep.subr.mxu0 0.0
        %7318 = vmatpush1.msra.mxu0 0.0
        %7319 = vmatprep.subr.mxu0 0.0
        %7320 = vmatpush1.msra.mxu0 0.0
        %7321 = vmatprep.subr.mxu0 0.0
        %7322 = vmatpush1.msra.mxu0 0.0
        %7323 = vmatprep.subr.mxu0 0.0
        %7324 = vmatpush1.msra.mxu0 0.0
        %7325 = vmatprep.subr.mxu0 0.0
        %7326 = vmatpush1.msra.mxu0 0.0
        %7327 = vmatprep.subr.mxu0 0.0
        %7328 = vmatpush1.msra.mxu0 0.0
        %7329 = vmatprep.subr.mxu0 0.0
        %7330 = vmatpush1.msra.mxu0 0.0
        %7331 = vmatprep.subr.mxu0 0.0
        %7332 = vmatpush1.msra.mxu0 0.0
        %7333 = vmatprep.subr.mxu0 0.0
        %7334 = vmatpush1.msra.mxu0 0.0
        %7335 = vmatprep.subr.mxu0 0.0
        %7336 = vmatpush1.msra.mxu0 0.0
        %7337 = vmatprep.subr.mxu0 0.0
        %7338 = vmatpush1.msra.mxu0 0.0
        %7339 = vmatprep.subr.mxu0 0.0
        %7340 = vmatpush1.msra.mxu0 0.0
        %7341 = vmatprep.subr.mxu0 0.0
        %7342 = vmatpush1.msra.mxu0 0.0
        %7343 = vmatprep.subr.mxu0 0.0
        %7344 = vmatpush1.msra.mxu0 0.0
        %7345 = vmatprep.subr.mxu0 0.0
        %7346 = vmatpush1.msra.mxu0 0.0
        %7347 = vmatprep.subr.mxu0 0.0
        %7348 = vmatpush1.msra.mxu0 0.0
        %7349 = vmatprep.subr.mxu0 0.0
        %7350 = vmatpush1.msra.mxu0 0.0
        %7351 = vmatprep.subr.mxu0 0.0
        %7352 = vmatpush1.msra.mxu0 0.0
        %7353 = vmatprep.subr.mxu0 0.0
        %7354 = vmatpush1.msra.mxu0 0.0
        %7355 = vmatprep.subr.mxu0 0.0
        %7356 = vmatpush1.msra.mxu0 0.0
        %7357 = vmatprep.subr.mxu0 0.0
        %7358 = vmatpush1.msra.mxu0 0.0
        %7359 = vmatprep.subr.mxu0 0.0
        %7360 = vmatpush1.msra.mxu0 0.0
        %7361 = vmatprep.subr.mxu0 0.0
        %7362 = vmatpush1.msra.mxu0 0.0
        %7363 = vmatprep.subr.mxu0 0.0
        %7364 = vmatpush1.msra.mxu0 0.0
        %7365 = vmatprep.subr.mxu0 0.0
        %7366 = vmatpush1.msra.mxu0 0.0
        %7367 = vmatprep.subr.mxu0 0.0
        %7368 = vmatpush1.msra.mxu0 0.0
        %7369 = vmatprep.mubr.f32.mxu0 0.0
        %v7370 = vand.u32 %v7023, 4294901760
        %v7371 = vsub.f32 %v7023, %v7370
        %v7372 = vand.u32 %v7371, 4294901760
        %7373 = vmatmul.mubr.f32.gmra.mrb[0].mxu0 %v7372
        %v7374 = vpop.f32.mrb[0].mxu0
        %v7375 = vadd.f32 %v7291, %v7374
        %v7376 = vpop.f32.mrb[0].mxu0
        %7377 = vmatprep.mubr.f32.mxu0 0.0
        %v7378 = vand.u32 %v7026, 4294901760
        %v7379 = vsub.f32 %v7026, %v7378
        %v7380 = vand.u32 %v7379, 4294901760
        %7381 = vmatmul.mubr.f32.gmra.mrb[0].mxu0 %v7380
        %v7382 = vpop.f32.mrb[0].mxu0
        %v7383 = vadd.f32 %v7298, %v7382
        %v7384 = vpop.f32.mrb[0].mxu0
        %7385 = vdwg.mxu0
        %7386 = vmatprep.subr.mxu0 0.0
        %v7387 = vand.u32 %v7011, 4294901760
        %v7388 = vsub.f32 %v7011, %v7387
        %v7389 = vand.u32 %v7388, 4294901760
        %7390 = vmatpush1.msra.mxu0 %v7389
        %7391 = vmatprep.subr.mxu0 0.0
        %v7392 = vand.u32 %v7013, 4294901760
        %v7393 = vsub.f32 %v7013, %v7392
        %v7394 = vand.u32 %v7393, 4294901760
        %7395 = vmatpush1.msra.mxu0 %v7394
        %7396 = vmatprep.subr.mxu0 0.0
        %v7397 = vand.u32 %v7015, 4294901760
        %v7398 = vsub.f32 %v7015, %v7397
        %v7399 = vand.u32 %v7398, 4294901760
        %7400 = vmatpush1.msra.mxu0 %v7399
        %7401 = vmatprep.subr.mxu0 0.0
        %v7402 = vand.u32 %v7017, 4294901760
        %v7403 = vsub.f32 %v7017, %v7402
        %v7404 = vand.u32 %v7403, 4294901760
        %7405 = vmatpush1.msra.mxu0 %v7404
        %7406 = vmatprep.subr.mxu0 0.0
        %7407 = vmatpush1.msra.mxu0 0.0
        %7408 = vmatprep.subr.mxu0 0.0
        %7409 = vmatpush1.msra.mxu0 0.0
        %7410 = vmatprep.subr.mxu0 0.0
        %7411 = vmatpush1.msra.mxu0 0.0
        %7412 = vmatprep.subr.mxu0 0.0
        %7413 = vmatpush1.msra.mxu0 0.0
        %7414 = vmatprep.subr.mxu0 0.0
        %7415 = vmatpush1.msra.mxu0 0.0
        %7416 = vmatprep.subr.mxu0 0.0
        %7417 = vmatpush1.msra.mxu0 0.0
        %7418 = vmatprep.subr.mxu0 0.0
        %7419 = vmatpush1.msra.mxu0 0.0
        %7420 = vmatprep.subr.mxu0 0.0
        %7421 = vmatpush1.msra.mxu0 0.0
        %7422 = vmatprep.subr.mxu0 0.0
        %7423 = vmatpush1.msra.mxu0 0.0
        %7424 = vmatprep.subr.mxu0 0.0
        %7425 = vmatpush1.msra.mxu0 0.0
        %7426 = vmatprep.subr.mxu0 0.0
        %7427 = vmatpush1.msra.mxu0 0.0
        %7428 = vmatprep.subr.mxu0 0.0
        %7429 = vmatpush1.msra.mxu0 0.0
        %7430 = vmatprep.subr.mxu0 0.0
        %7431 = vmatpush1.msra.mxu0 0.0
        %7432 = vmatprep.subr.mxu0 0.0
        %7433 = vmatpush1.msra.mxu0 0.0
        %7434 = vmatprep.subr.mxu0 0.0
        %7435 = vmatpush1.msra.mxu0 0.0
        %7436 = vmatprep.subr.mxu0 0.0
        %7437 = vmatpush1.msra.mxu0 0.0
        %7438 = vmatprep.subr.mxu0 0.0
        %7439 = vmatpush1.msra.mxu0 0.0
        %7440 = vmatprep.subr.mxu0 0.0
        %7441 = vmatpush1.msra.mxu0 0.0
        %7442 = vmatprep.subr.mxu0 0.0
        %7443 = vmatpush1.msra.mxu0 0.0
        %7444 = vmatprep.subr.mxu0 0.0
        %7445 = vmatpush1.msra.mxu0 0.0
        %7446 = vmatprep.subr.mxu0 0.0
        %7447 = vmatpush1.msra.mxu0 0.0
        %7448 = vmatprep.subr.mxu0 0.0
        %7449 = vmatpush1.msra.mxu0 0.0
        %7450 = vmatprep.subr.mxu0 0.0
        %7451 = vmatpush1.msra.mxu0 0.0
        %7452 = vmatprep.subr.mxu0 0.0
        %7453 = vmatpush1.msra.mxu0 0.0
        %7454 = vmatprep.subr.mxu0 0.0
        %7455 = vmatpush1.msra.mxu0 0.0
        %7456 = vmatprep.subr.mxu0 0.0
        %7457 = vmatpush1.msra.mxu0 0.0
        %7458 = vmatprep.subr.mxu0 0.0
        %7459 = vmatpush1.msra.mxu0 0.0
        %7460 = vmatprep.subr.mxu0 0.0
        %7461 = vmatpush1.msra.mxu0 0.0
        %7462 = vmatprep.mubr.f32.mxu0 0.0
        %v7463 = vand.u32 %v7023, 4294901760
        %7464 = vmatmul.mubr.f32.gmra.mrb[0].mxu0 %v7463
        %v7465 = vpop.f32.mrb[0].mxu0
        %v7466 = vadd.f32 %v7375, %v7465
        %v7467 = vpop.f32.mrb[0].mxu0
        %7468 = vmatprep.mubr.f32.mxu0 0.0
        %v7469 = vand.u32 %v7026, 4294901760
        %7470 = vmatmul.mubr.f32.gmra.mrb[0].mxu0 %v7469
        %v7471 = vpop.f32.mrb[0].mxu0
        %v7472 = vadd.f32 %v7383, %v7471
        %v7473 = vpop.f32.mrb[0].mxu0
        %7474 = vdwg.mxu0
        %7475 = vmatprep.subr.mxu0 0.0
        %v7476 = vand.u32 %v7011, 4294901760
        %7477 = vmatpush1.msra.mxu0 %v7476
        %7478 = vmatprep.subr.mxu0 0.0
        %v7479 = vand.u32 %v7013, 4294901760
        %7480 = vmatpush1.msra.mxu0 %v7479
        %7481 = vmatprep.subr.mxu0 0.0
        %v7482 = vand.u32 %v7015, 4294901760
        %7483 = vmatpush1.msra.mxu0 %v7482
        %7484 = vmatprep.subr.mxu0 0.0
        %v7485 = vand.u32 %v7017, 4294901760
        %7486 = vmatpush1.msra.mxu0 %v7485
        %7487 = vmatprep.subr.mxu0 0.0
        %7488 = vmatpush1.msra.mxu0 0.0
        %7489 = vmatprep.subr.mxu0 0.0
        %7490 = vmatpush1.msra.mxu0 0.0
        %7491 = vmatprep.subr.mxu0 0.0
        %7492 = vmatpush1.msra.mxu0 0.0
        %7493 = vmatprep.subr.mxu0 0.0
        %7494 = vmatpush1.msra.mxu0 0.0
        %7495 = vmatprep.subr.mxu0 0.0
        %7496 = vmatpush1.msra.mxu0 0.0
        %7497 = vmatprep.subr.mxu0 0.0
        %7498 = vmatpush1.msra.mxu0 0.0
        %7499 = vmatprep.subr.mxu0 0.0
        %7500 = vmatpush1.msra.mxu0 0.0
        %7501 = vmatprep.subr.mxu0 0.0
        %7502 = vmatpush1.msra.mxu0 0.0
        %7503 = vmatprep.subr.mxu0 0.0
        %7504 = vmatpush1.msra.mxu0 0.0
        %7505 = vmatprep.subr.mxu0 0.0
        %7506 = vmatpush1.msra.mxu0 0.0
        %7507 = vmatprep.subr.mxu0 0.0
        %7508 = vmatpush1.msra.mxu0 0.0
        %7509 = vmatprep.subr.mxu0 0.0
        %7510 = vmatpush1.msra.mxu0 0.0
        %7511 = vmatprep.subr.mxu0 0.0
        %7512 = vmatpush1.msra.mxu0 0.0
        %7513 = vmatprep.subr.mxu0 0.0
        %7514 = vmatpush1.msra.mxu0 0.0
        %7515 = vmatprep.subr.mxu0 0.0
        %7516 = vmatpush1.msra.mxu0 0.0
        %7517 = vmatprep.subr.mxu0 0.0
        %7518 = vmatpush1.msra.mxu0 0.0
        %7519 = vmatprep.subr.mxu0 0.0
        %7520 = vmatpush1.msra.mxu0 0.0
        %7521 = vmatprep.subr.mxu0 0.0
        %7522 = vmatpush1.msra.mxu0 0.0
        %7523 = vmatprep.subr.mxu0 0.0
        %7524 = vmatpush1.msra.mxu0 0.0
        %7525 = vmatprep.subr.mxu0 0.0
        %7526 = vmatpush1.msra.mxu0 0.0
        %7527 = vmatprep.subr.mxu0 0.0
        %7528 = vmatpush1.msra.mxu0 0.0
        %7529 = vmatprep.subr.mxu0 0.0
        %7530 = vmatpush1.msra.mxu0 0.0
        %7531 = vmatprep.subr.mxu0 0.0
        %7532 = vmatpush1.msra.mxu0 0.0
        %7533 = vmatprep.subr.mxu0 0.0
        %7534 = vmatpush1.msra.mxu0 0.0
        %7535 = vmatprep.subr.mxu0 0.0
        %7536 = vmatpush1.msra.mxu0 0.0
        %7537 = vmatprep.subr.mxu0 0.0
        %7538 = vmatpush1.msra.mxu0 0.0
        %7539 = vmatprep.subr.mxu0 0.0
        %7540 = vmatpush1.msra.mxu0 0.0
        %7541 = vmatprep.subr.mxu0 0.0
        %7542 = vmatpush1.msra.mxu0 0.0
        %7543 = vmatprep.mubr.f32.mxu0 0.0
        %v7544 = vand.u32 %v7023, 4294901760
        %7545 = vmatmul.mubr.f32.gmra.mrb[0].mxu0 %v7544
        %v7546 = vpop.f32.mrb[0].mxu0
        %v7547 = vadd.f32 %v7466, %v7546
        %v7548 = vpop.f32.mrb[0].mxu0
        %7549 = vmatprep.mubr.f32.mxu0 0.0
        %v7550 = vand.u32 %v7026, 4294901760
        %7551 = vmatmul.mubr.f32.gmra.mrb[0].mxu0 %v7550
        %v7552 = vpop.f32.mrb[0].mxu0
        %v7553 = vadd.f32 %v7472, %v7552
        %v7554 = vpop.f32.mrb[0].mxu0
        %7555 = vdwg.mxu0
        %7556 = vst.msk [vmem:[%s244] sm:$0xff] %vm262, %v7547
        %7557 = vst.msk [vmem:[%s244 + $0x8] sm:$0xff] %vm262, %v7553
        %s7558 = sand.u32 %s119, 1
        %s7559 = scalar_lea.sflag [#allocation4], %s7558
        %s7560 = sand.u32 %s119, 1
        %s7561 = smul.addr %s7560, 16
        %s7562 = scalar_lea.vmem [#allocation8], %s7561
        // Predicated region
        $region49: #{tpu_custom_call.1} parent=35 // pred_check
          %p7563 = pneg %p129
        $region50: #{tpu_custom_call.1} parent=35 // pred_check_branch
          %7565 = sbr.rel (%p7563) target = $region52
        $region51: #{tpu_custom_call.1} parent=35 // pred_region
          %s7567 = ssub.s32 256, 256
          %7568 = vsyncadd %s7559, %s7567
          %s7569 = smul.addr %s22, 2
          %s7570 = smul.addr %s7569, 128
          %s7571 = scalar_lea.hbm %s4, %s7570
          %s7572 = sshll.u32 %s7562, 4
          %s7573 = int_to_ptr.vmem [resolvable:$true] %s7572
          %7578 = dma.vmem_to_hbm [thread:$0]  %s7573, 256, %s7571, %s7559, 128, 128, 8
        $region52: #{tpu_custom_call.1} parent=35 // pred_fallthru
          _
      $region36: #{tpu_custom_call.1} parent=5 // pred_fallthru
        _
      %p7579 = scmp.le.s32.totalorder 2, %s17
      // Predicated region
      $region53: #{tpu_custom_call.1} parent=5 // pred_check
        %p7580 = pneg %p7579
      $region54: #{tpu_custom_call.1} parent=5 // pred_check_branch
        %7582 = sbr.rel (%p7580) target = $region56
      $region55: #{tpu_custom_call.1} parent=5 // pred_region
        %s7583 = ssub.s32 %s17, 2
        // Predicated region
        $region57: #{tpu_custom_call.1} parent=55 // pred_check
          %p7584 = pneg %p135
        $region58: #{tpu_custom_call.1} parent=55 // pred_check_branch
          %7586 = sbr.rel (%p7584) target = $region60
        $region59: #{tpu_custom_call.1} parent=55 // pred_region
          %s7587 = sand.u32 %s120, 1
          %s7588 = scalar_lea.sflag [#allocation4], %s7587
          %s7589 = sand.u32 %s120, 1
          %s7590 = smul.addr %s7589, 16
          %s7591 = scalar_lea.vmem [#allocation8], %s7590
          %7592 = dma.done %s7588, 256
        $region60: #{tpu_custom_call.1} parent=55 // pred_fallthru
          _
      $region56: #{tpu_custom_call.1} parent=5 // pred_fallthru
        _
    $region6: #{tpu_custom_call.1} parent=1 // loop_footer
      %s21 = sadd.s32 1, %s17
    $region7: #{tpu_custom_call.1} parent=1 // loop_footer_branch
      %16 = sbr.rel target = $region3
    $region8: #{tpu_custom_call.1} parent=1 // loop_exit
      _
    %7593 = vsyncpa [#allocation3], 1
    %s7594 = scalar_lea.sflag [#allocation3], 1
    %7595 = vsyncpa %s7594, 1
    %7596 = vsyncpa [#allocation6], 1
    %7597 = vsyncpa [#allocation4], 1
    %s7598 = scalar_lea.sflag [#allocation4], 1
    %7599 = vsyncpa %s7598, 1

</llo_original>
